<compile_context>
chip_gen: v7x
topology: tpu7x:2x2x1
jax: 0.10.0
libtpu: 0.0.40
codegen_flags: <defaults>
</compile_context>

<pallas_src>
import jax
import jax.numpy as jnp
from jax import lax
from jax.experimental import pallas as pl
from jax.experimental.pallas import tpu as pltpu

# Layer widths.
D_IN, H1, H2, H3, D_OUT = 2, 16, 16, 8, 1
LANES = 128
SLAB_ROWS = 8 * LANES  # 1024 batch rows = one (8, 128) f32 vreg slab

# Flat-parameter layout (static offsets; weights stored (in, out) row-major).
# NOTE: loading a real PyTorch checkpoint requires transposing its (out, in)
# nn.Linear weights into this (in, out) layout before packing.
OFF_FC1_W = 0
OFF_FC1_B = OFF_FC1_W + D_IN * H1
OFF_FC2_W = OFF_FC1_B + H1
OFF_FC2_B = OFF_FC2_W + H1 * H2
OFF_FC3_W = OFF_FC2_B + H2
OFF_FC3_B = OFF_FC3_W + H2 * H3
OFF_Q_WA = OFF_FC3_B + H3
OFF_Q_BA = OFF_Q_WA + H3 * D_OUT
OFF_Q_WB = OFF_Q_BA + D_OUT
OFF_Q_BB = OFF_Q_WB + H3 * D_OUT
N_PARAMS = OFF_Q_BB + D_OUT  # = 474


# ----------------------------------------------------------------------------
# Kernel: whole forward as unrolled VPU FMAs over one (8, 128) slab at a time.
#   p_ref   : (N_PARAMS,) f32 in SMEM (scalar reads, broadcast into VPU ops)
#   x_ref   : (2, S, 128) f32 in VMEM (batch on sublane x lane)
#   out_ref : (1, S, 128) f32 in VMEM
# ----------------------------------------------------------------------------
def _net_kernel(p_ref, x_ref, out_ref):
    s = x_ref.shape[1]          # sublane extent of this tile (static)
    n_slabs = s // 8            # 8-sublane slabs per tile (static)

    def slab_body(i, carry):
        # Aligned 8-sublane window: every intermediate below is exactly 1 vreg,
        # capping live-vreg pressure at ~40 regardless of tile size.
        r = pl.multiple_of(i * 8, 8)
        x0 = x_ref[0, pl.ds(r, 8), :]   # (8, 128) slab, input feature 0
        x1 = x_ref[1, pl.ds(r, 8), :]

        # Stage 1: h1 = tanh(fc1(x)),  2 -> 16 (unrolled broadcast-FMAs).
        h1 = []
        for j in range(H1):
            acc = x0 * p_ref[OFF_FC1_W + 0 * H1 + j]
            acc = acc + x1 * p_ref[OFF_FC1_W + 1 * H1 + j]
            h1.append(jnp.tanh(acc + p_ref[OFF_FC1_B + j]))

        # Stage 2: h2 = tanh(fc2(h1)),  16 -> 16.
        h2 = []
        for j in range(H2):
            acc = h1[0] * p_ref[OFF_FC2_W + 0 * H2 + j]
            for k in range(1, H1):
                acc = acc + h1[k] * p_ref[OFF_FC2_W + k * H2 + j]
            h2.append(jnp.tanh(acc + p_ref[OFF_FC2_B + j]))

        # Stage 3: h3 = tanh(fc3(h2)),  16 -> 8.
        h3 = []
        for j in range(H3):
            acc = h2[0] * p_ref[OFF_FC3_W + 0 * H3 + j]
            for k in range(1, H2):
                acc = acc + h2[k] * p_ref[OFF_FC3_W + k * H3 + j]
            h3.append(jnp.tanh(acc + p_ref[OFF_FC3_B + j]))

        # Quasi(8 -> 1): (h3 @ wa + ba) * (h3 @ wb + bb).
        a = h3[0] * p_ref[OFF_Q_WA + 0]
        b = h3[0] * p_ref[OFF_Q_WB + 0]
        for k in range(1, H3):
            a = a + h3[k] * p_ref[OFF_Q_WA + k]
            b = b + h3[k] * p_ref[OFF_Q_WB + k]
        a = a + p_ref[OFF_Q_BA]
        b = b + p_ref[OFF_Q_BB]

        # Full-width (8, 128) aligned store — lane-dense, unmasked.
        out_ref[0, pl.ds(r, 8), :] = a * b
        return carry

    # fori_loop (not a Python for) bounds the live ranges; modest unroll keeps
    # the LLO scheduler busy without re-inflating vreg pressure.
    lax.fori_loop(0, n_slabs, slab_body, 0, unroll=2)


# ----------------------------------------------------------------------------
# Wrapper: layout plumbing (batch -> lanes), slab-granular padding, tile/grid
# sizing (big tiles, >=2 grid steps for v7x's two TensorCores).
# ----------------------------------------------------------------------------
def spirals_tttq3_forward(x, params_flat, *, max_tile_rows=32768,
                          min_grid_steps=2):
    """x: (N, 2) float32; params_flat: (N_PARAMS,) float32. Returns (N, 1)."""
    n, d_in = x.shape
    assert d_in == D_IN
    assert max_tile_rows % SLAB_ROWS == 0

    # Pad only to 1024-row slabs (padded rows cost real VALU cycles), then pick
    # a grid-step count g: >= min_grid_steps (v7x dual-TC sharding) when there
    # is enough work, more if a tile would exceed max_tile_rows, never more
    # than the number of slabs. At most g-1 extra padding slabs are added so
    # the block shape divides the array exactly (keeps stores unmasked).
    total_slabs = pl.cdiv(n, SLAB_ROWS)
    max_slabs_per_tile = max_tile_rows // SLAB_ROWS
    g = min(max(min_grid_steps, pl.cdiv(total_slabs, max_slabs_per_tile)),
            total_slabs)
    slabs_per_tile = pl.cdiv(total_slabs, g)
    n_pad = g * slabs_per_tile * SLAB_ROWS
    if n_pad != n:
        x = jnp.pad(x, ((0, n_pad - n), (0, 0)))

    rows = n_pad // LANES          # sublane-axis extent of re-laid-out batch
    s = slabs_per_tile * 8         # sublanes per grid-step tile

    # TODO(synk): this transpose is a separate XLA relayout pass over the
    # input; accept a (2, N) layout upstream to remove it when integrating.
    x_t = x.T.reshape(D_IN, rows, LANES)   # batch on (sublane, lane)

    out = pl.pallas_call(
        _net_kernel,
        out_shape=jax.ShapeDtypeStruct((1, rows, LANES), jnp.float32),
        grid_spec=pltpu.PrefetchScalarGridSpec(
            num_scalar_prefetch=0,
            grid=(g,),
            in_specs=[
                pl.BlockSpec(memory_space=pltpu.MemorySpace.SMEM),    # packed params
                pl.BlockSpec((D_IN, s, LANES), lambda i: (0, i, 0)),  # batch tile
            ],
            out_specs=pl.BlockSpec((1, s, LANES), lambda i: (0, i, 0)),
        ),
        compiler_params=pltpu.CompilerParams(
            dimension_semantics=("parallel",),  # shards batch tiles across TCs (v7x)
        ),
        cost_estimate=pl.CostEstimate(
            flops=2 * (D_IN * H1 + H1 * H2 + H2 * H3 + 2 * H3 + 1) * n_pad,
            transcendentals=(H1 + H2 + H3) * n_pad,
            bytes_accessed=(D_IN + D_OUT) * 4 * n_pad + 4 * N_PARAMS,
        ),
    )(params_flat, x_t)

    return out.reshape(n_pad, 1)[:n]


# ----------------------------------------------------------------------------
# Deterministic parameter init (PyTorch nn.Linear-style uniform bounds),
# packing into the flat SMEM vector, and a pure-JAX reference.
# ----------------------------------------------------------------------------
def init_params(key):
    def linear(key, fan_in, fan_out):
        kw, kb = jax.random.split(key)
        bound = 1.0 / (fan_in ** 0.5)
        w = jax.random.uniform(kw, (fan_in, fan_out), jnp.float32, -bound, bound)
        b = jax.random.uniform(kb, (fan_out,), jnp.float32, -bound, bound)
        return w, b

    keys = jax.random.split(key, 5)
    p = {}
    p["fc1_w"], p["fc1_b"] = linear(keys[0], D_IN, H1)
    p["fc2_w"], p["fc2_b"] = linear(keys[1], H1, H2)
    p["fc3_w"], p["fc3_b"] = linear(keys[2], H2, H3)
    p["q_wa"], p["q_ba"] = linear(keys[3], H3, D_OUT)
    p["q_wb"], p["q_bb"] = linear(keys[4], H3, D_OUT)
    return p


def pack_params(p):
    flat = jnp.concatenate([
        p["fc1_w"].ravel(), p["fc1_b"].ravel(),
        p["fc2_w"].ravel(), p["fc2_b"].ravel(),
        p["fc3_w"].ravel(), p["fc3_b"].ravel(),
        p["q_wa"].ravel(), p["q_ba"].ravel(),
        p["q_wb"].ravel(), p["q_bb"].ravel(),
    ]).astype(jnp.float32)
    assert flat.shape == (N_PARAMS,)
    return flat


def reference_forward(x, p):
    h1 = jnp.tanh(x @ p["fc1_w"] + p["fc1_b"])
    h2 = jnp.tanh(h1 @ p["fc2_w"] + p["fc2_b"])
    h3 = jnp.tanh(h2 @ p["fc3_w"] + p["fc3_b"])
    a = h3 @ p["q_wa"] + p["q_ba"]
    b = h3 @ p["q_wb"] + p["q_bb"]
    return a * b


if __name__ == "__main__":
    key = jax.random.PRNGKey(0)
    k_x, k_p = jax.random.split(key)

    n = 2500  # arbitrary (non-slab-multiple) batch of 2-D spiral points
    x = jax.random.normal(k_x, (n, D_IN), jnp.float32)
    params = init_params(k_p)
    params_flat = pack_params(params)

    # n=2500 -> 3 slabs -> 2 grid steps of 2 slabs each (4096 padded rows):
    # exercises the inner slab loop, multi-step grid and the padding path.
    out = spirals_tttq3_forward(x, params_flat)
    out = jax.block_until_ready(out)

    ref = reference_forward(x, params)
    assert out.shape == (n, D_OUT)
    assert jnp.allclose(out, ref, atol=1e-4, rtol=1e-4), float(
        jnp.max(jnp.abs(out - ref)))

    print("KERNEL_OK")
</pallas_src>

<mosaic_0001>
module attributes {stable_mosaic.version = 11 : i64} {
  func.func @_net_kernel(%arg0: i32, %arg1: memref<474xf32, #tpu.memory_space<smem>>, %arg2: memref<2x16x128xf32, #tpu.memory_space<vmem>>, %arg3: memref<1x16x128xf32, #tpu.memory_space<vmem>>) attributes {dimension_semantics = [#tpu.dimension_semantics<parallel>], iteration_bounds = array<i64: 2>, scalar_prefetch = 0 : i64, scratch_operands = 0 : i64, tpu.core_type = #tpu.core_type<tc>, window_params = [{transform_indices = @transform_0, window_bounds = array<i64: 474>}, {transform_indices = @transform_1, window_bounds = array<i64: 2, 16, 128>}, {transform_indices = @transform_2, window_bounds = array<i64: 1, 16, 128>}]} {
    %c0_i32 = arith.constant 0 : i32
    %c8_i32 = arith.constant 8 : i32
    %0 = arith.muli %c0_i32, %c8_i32 : i32
    %1 = tpu.assume_multiple %0, 8 : i32
    %c0 = arith.constant 0 : index
    %2 = arith.index_cast %1 : i32 to index
    %c0_0 = arith.constant 0 : index
    %3 = vector.load %arg2[%c0, %2, %c0_0] : memref<2x16x128xf32, #tpu.memory_space<vmem>>, vector<1x8x128xf32>
    %4 = vector.shape_cast %3 : vector<1x8x128xf32> to vector<8x128xf32>
    %c1 = arith.constant 1 : index
    %5 = arith.index_cast %1 : i32 to index
    %c0_1 = arith.constant 0 : index
    %6 = vector.load %arg2[%c1, %5, %c0_1] : memref<2x16x128xf32, #tpu.memory_space<vmem>>, vector<1x8x128xf32>
    %7 = vector.shape_cast %6 : vector<1x8x128xf32> to vector<8x128xf32>
    %c0_2 = arith.constant 0 : index
    %8 = memref.load %arg1[%c0_2] : memref<474xf32, #tpu.memory_space<smem>>
    %9 = vector.broadcast %8 : f32 to vector<8x128xf32>
    %10 = arith.mulf %4, %9 : vector<8x128xf32>
    %c16 = arith.constant 16 : index
    %11 = memref.load %arg1[%c16] : memref<474xf32, #tpu.memory_space<smem>>
    %12 = vector.broadcast %11 : f32 to vector<8x128xf32>
    %13 = arith.mulf %7, %12 : vector<8x128xf32>
    %14 = arith.addf %10, %13 : vector<8x128xf32>
    %c32 = arith.constant 32 : index
    %15 = memref.load %arg1[%c32] : memref<474xf32, #tpu.memory_space<smem>>
    %16 = vector.broadcast %15 : f32 to vector<8x128xf32>
    %17 = arith.addf %14, %16 : vector<8x128xf32>
    %18 = math.tanh %17 : vector<8x128xf32>
    %c1_3 = arith.constant 1 : index
    %19 = memref.load %arg1[%c1_3] : memref<474xf32, #tpu.memory_space<smem>>
    %20 = vector.broadcast %19 : f32 to vector<8x128xf32>
    %21 = arith.mulf %4, %20 : vector<8x128xf32>
    %c17 = arith.constant 17 : index
    %22 = memref.load %arg1[%c17] : memref<474xf32, #tpu.memory_space<smem>>
    %23 = vector.broadcast %22 : f32 to vector<8x128xf32>
    %24 = arith.mulf %7, %23 : vector<8x128xf32>
    %25 = arith.addf %21, %24 : vector<8x128xf32>
    %c33 = arith.constant 33 : index
    %26 = memref.load %arg1[%c33] : memref<474xf32, #tpu.memory_space<smem>>
    %27 = vector.broadcast %26 : f32 to vector<8x128xf32>
    %28 = arith.addf %25, %27 : vector<8x128xf32>
    %29 = math.tanh %28 : vector<8x128xf32>
    %c2 = arith.constant 2 : index
    %30 = memref.load %arg1[%c2] : memref<474xf32, #tpu.memory_space<smem>>
    %31 = vector.broadcast %30 : f32 to vector<8x128xf32>
    %32 = arith.mulf %4, %31 : vector<8x128xf32>
    %c18 = arith.constant 18 : index
    %33 = memref.load %arg1[%c18] : memref<474xf32, #tpu.memory_space<smem>>
    %34 = vector.broadcast %33 : f32 to vector<8x128xf32>
    %35 = arith.mulf %7, %34 : vector<8x128xf32>
    %36 = arith.addf %32, %35 : vector<8x128xf32>
    %c34 = arith.constant 34 : index
    %37 = memref.load %arg1[%c34] : memref<474xf32, #tpu.memory_space<smem>>
    %38 = vector.broadcast %37 : f32 to vector<8x128xf32>
    %39 = arith.addf %36, %38 : vector<8x128xf32>
    %40 = math.tanh %39 : vector<8x128xf32>
    %c3 = arith.constant 3 : index
    %41 = memref.load %arg1[%c3] : memref<474xf32, #tpu.memory_space<smem>>
    %42 = vector.broadcast %41 : f32 to vector<8x128xf32>
    %43 = arith.mulf %4, %42 : vector<8x128xf32>
    %c19 = arith.constant 19 : index
    %44 = memref.load %arg1[%c19] : memref<474xf32, #tpu.memory_space<smem>>
    %45 = vector.broadcast %44 : f32 to vector<8x128xf32>
    %46 = arith.mulf %7, %45 : vector<8x128xf32>
    %47 = arith.addf %43, %46 : vector<8x128xf32>
    %c35 = arith.constant 35 : index
    %48 = memref.load %arg1[%c35] : memref<474xf32, #tpu.memory_space<smem>>
    %49 = vector.broadcast %48 : f32 to vector<8x128xf32>
    %50 = arith.addf %47, %49 : vector<8x128xf32>
    %51 = math.tanh %50 : vector<8x128xf32>
    %c4 = arith.constant 4 : index
    %52 = memref.load %arg1[%c4] : memref<474xf32, #tpu.memory_space<smem>>
    %53 = vector.broadcast %52 : f32 to vector<8x128xf32>
    %54 = arith.mulf %4, %53 : vector<8x128xf32>
    %c20 = arith.constant 20 : index
    %55 = memref.load %arg1[%c20] : memref<474xf32, #tpu.memory_space<smem>>
    %56 = vector.broadcast %55 : f32 to vector<8x128xf32>
    %57 = arith.mulf %7, %56 : vector<8x128xf32>
    %58 = arith.addf %54, %57 : vector<8x128xf32>
    %c36 = arith.constant 36 : index
    %59 = memref.load %arg1[%c36] : memref<474xf32, #tpu.memory_space<smem>>
    %60 = vector.broadcast %59 : f32 to vector<8x128xf32>
    %61 = arith.addf %58, %60 : vector<8x128xf32>
    %62 = math.tanh %61 : vector<8x128xf32>
    %c5 = arith.constant 5 : index
    %63 = memref.load %arg1[%c5] : memref<474xf32, #tpu.memory_space<smem>>
    %64 = vector.broadcast %63 : f32 to vector<8x128xf32>
    %65 = arith.mulf %4, %64 : vector<8x128xf32>
    %c21 = arith.constant 21 : index
    %66 = memref.load %arg1[%c21] : memref<474xf32, #tpu.memory_space<smem>>
    %67 = vector.broadcast %66 : f32 to vector<8x128xf32>
    %68 = arith.mulf %7, %67 : vector<8x128xf32>
    %69 = arith.addf %65, %68 : vector<8x128xf32>
    %c37 = arith.constant 37 : index
    %70 = memref.load %arg1[%c37] : memref<474xf32, #tpu.memory_space<smem>>
    %71 = vector.broadcast %70 : f32 to vector<8x128xf32>
    %72 = arith.addf %69, %71 : vector<8x128xf32>
    %73 = math.tanh %72 : vector<8x128xf32>
    %c6 = arith.constant 6 : index
    %74 = memref.load %arg1[%c6] : memref<474xf32, #tpu.memory_space<smem>>
    %75 = vector.broadcast %74 : f32 to vector<8x128xf32>
    %76 = arith.mulf %4, %75 : vector<8x128xf32>
    %c22 = arith.constant 22 : index
    %77 = memref.load %arg1[%c22] : memref<474xf32, #tpu.memory_space<smem>>
    %78 = vector.broadcast %77 : f32 to vector<8x128xf32>
    %79 = arith.mulf %7, %78 : vector<8x128xf32>
    %80 = arith.addf %76, %79 : vector<8x128xf32>
    %c38 = arith.constant 38 : index
    %81 = memref.load %arg1[%c38] : memref<474xf32, #tpu.memory_space<smem>>
    %82 = vector.broadcast %81 : f32 to vector<8x128xf32>
    %83 = arith.addf %80, %82 : vector<8x128xf32>
    %84 = math.tanh %83 : vector<8x128xf32>
    %c7 = arith.constant 7 : index
    %85 = memref.load %arg1[%c7] : memref<474xf32, #tpu.memory_space<smem>>
    %86 = vector.broadcast %85 : f32 to vector<8x128xf32>
    %87 = arith.mulf %4, %86 : vector<8x128xf32>
    %c23 = arith.constant 23 : index
    %88 = memref.load %arg1[%c23] : memref<474xf32, #tpu.memory_space<smem>>
    %89 = vector.broadcast %88 : f32 to vector<8x128xf32>
    %90 = arith.mulf %7, %89 : vector<8x128xf32>
    %91 = arith.addf %87, %90 : vector<8x128xf32>
    %c39 = arith.constant 39 : index
    %92 = memref.load %arg1[%c39] : memref<474xf32, #tpu.memory_space<smem>>
    %93 = vector.broadcast %92 : f32 to vector<8x128xf32>
    %94 = arith.addf %91, %93 : vector<8x128xf32>
    %95 = math.tanh %94 : vector<8x128xf32>
    %c8 = arith.constant 8 : index
    %96 = memref.load %arg1[%c8] : memref<474xf32, #tpu.memory_space<smem>>
    %97 = vector.broadcast %96 : f32 to vector<8x128xf32>
    %98 = arith.mulf %4, %97 : vector<8x128xf32>
    %c24 = arith.constant 24 : index
    %99 = memref.load %arg1[%c24] : memref<474xf32, #tpu.memory_space<smem>>
    %100 = vector.broadcast %99 : f32 to vector<8x128xf32>
    %101 = arith.mulf %7, %100 : vector<8x128xf32>
    %102 = arith.addf %98, %101 : vector<8x128xf32>
    %c40 = arith.constant 40 : index
    %103 = memref.load %arg1[%c40] : memref<474xf32, #tpu.memory_space<smem>>
    %104 = vector.broadcast %103 : f32 to vector<8x128xf32>
    %105 = arith.addf %102, %104 : vector<8x128xf32>
    %106 = math.tanh %105 : vector<8x128xf32>
    %c9 = arith.constant 9 : index
    %107 = memref.load %arg1[%c9] : memref<474xf32, #tpu.memory_space<smem>>
    %108 = vector.broadcast %107 : f32 to vector<8x128xf32>
    %109 = arith.mulf %4, %108 : vector<8x128xf32>
    %c25 = arith.constant 25 : index
    %110 = memref.load %arg1[%c25] : memref<474xf32, #tpu.memory_space<smem>>
    %111 = vector.broadcast %110 : f32 to vector<8x128xf32>
    %112 = arith.mulf %7, %111 : vector<8x128xf32>
    %113 = arith.addf %109, %112 : vector<8x128xf32>
    %c41 = arith.constant 41 : index
    %114 = memref.load %arg1[%c41] : memref<474xf32, #tpu.memory_space<smem>>
    %115 = vector.broadcast %114 : f32 to vector<8x128xf32>
    %116 = arith.addf %113, %115 : vector<8x128xf32>
    %117 = math.tanh %116 : vector<8x128xf32>
    %c10 = arith.constant 10 : index
    %118 = memref.load %arg1[%c10] : memref<474xf32, #tpu.memory_space<smem>>
    %119 = vector.broadcast %118 : f32 to vector<8x128xf32>
    %120 = arith.mulf %4, %119 : vector<8x128xf32>
    %c26 = arith.constant 26 : index
    %121 = memref.load %arg1[%c26] : memref<474xf32, #tpu.memory_space<smem>>
    %122 = vector.broadcast %121 : f32 to vector<8x128xf32>
    %123 = arith.mulf %7, %122 : vector<8x128xf32>
    %124 = arith.addf %120, %123 : vector<8x128xf32>
    %c42 = arith.constant 42 : index
    %125 = memref.load %arg1[%c42] : memref<474xf32, #tpu.memory_space<smem>>
    %126 = vector.broadcast %125 : f32 to vector<8x128xf32>
    %127 = arith.addf %124, %126 : vector<8x128xf32>
    %128 = math.tanh %127 : vector<8x128xf32>
    %c11 = arith.constant 11 : index
    %129 = memref.load %arg1[%c11] : memref<474xf32, #tpu.memory_space<smem>>
    %130 = vector.broadcast %129 : f32 to vector<8x128xf32>
    %131 = arith.mulf %4, %130 : vector<8x128xf32>
    %c27 = arith.constant 27 : index
    %132 = memref.load %arg1[%c27] : memref<474xf32, #tpu.memory_space<smem>>
    %133 = vector.broadcast %132 : f32 to vector<8x128xf32>
    %134 = arith.mulf %7, %133 : vector<8x128xf32>
    %135 = arith.addf %131, %134 : vector<8x128xf32>
    %c43 = arith.constant 43 : index
    %136 = memref.load %arg1[%c43] : memref<474xf32, #tpu.memory_space<smem>>
    %137 = vector.broadcast %136 : f32 to vector<8x128xf32>
    %138 = arith.addf %135, %137 : vector<8x128xf32>
    %139 = math.tanh %138 : vector<8x128xf32>
    %c12 = arith.constant 12 : index
    %140 = memref.load %arg1[%c12] : memref<474xf32, #tpu.memory_space<smem>>
    %141 = vector.broadcast %140 : f32 to vector<8x128xf32>
    %142 = arith.mulf %4, %141 : vector<8x128xf32>
    %c28 = arith.constant 28 : index
    %143 = memref.load %arg1[%c28] : memref<474xf32, #tpu.memory_space<smem>>
    %144 = vector.broadcast %143 : f32 to vector<8x128xf32>
    %145 = arith.mulf %7, %144 : vector<8x128xf32>
    %146 = arith.addf %142, %145 : vector<8x128xf32>
    %c44 = arith.constant 44 : index
    %147 = memref.load %arg1[%c44] : memref<474xf32, #tpu.memory_space<smem>>
    %148 = vector.broadcast %147 : f32 to vector<8x128xf32>
    %149 = arith.addf %146, %148 : vector<8x128xf32>
    %150 = math.tanh %149 : vector<8x128xf32>
    %c13 = arith.constant 13 : index
    %151 = memref.load %arg1[%c13] : memref<474xf32, #tpu.memory_space<smem>>
    %152 = vector.broadcast %151 : f32 to vector<8x128xf32>
    %153 = arith.mulf %4, %152 : vector<8x128xf32>
    %c29 = arith.constant 29 : index
    %154 = memref.load %arg1[%c29] : memref<474xf32, #tpu.memory_space<smem>>
    %155 = vector.broadcast %154 : f32 to vector<8x128xf32>
    %156 = arith.mulf %7, %155 : vector<8x128xf32>
    %157 = arith.addf %153, %156 : vector<8x128xf32>
    %c45 = arith.constant 45 : index
    %158 = memref.load %arg1[%c45] : memref<474xf32, #tpu.memory_space<smem>>
    %159 = vector.broadcast %158 : f32 to vector<8x128xf32>
    %160 = arith.addf %157, %159 : vector<8x128xf32>
    %161 = math.tanh %160 : vector<8x128xf32>
    %c14 = arith.constant 14 : index
    %162 = memref.load %arg1[%c14] : memref<474xf32, #tpu.memory_space<smem>>
    %163 = vector.broadcast %162 : f32 to vector<8x128xf32>
    %164 = arith.mulf %4, %163 : vector<8x128xf32>
    %c30 = arith.constant 30 : index
    %165 = memref.load %arg1[%c30] : memref<474xf32, #tpu.memory_space<smem>>
    %166 = vector.broadcast %165 : f32 to vector<8x128xf32>
    %167 = arith.mulf %7, %166 : vector<8x128xf32>
    %168 = arith.addf %164, %167 : vector<8x128xf32>
    %c46 = arith.constant 46 : index
    %169 = memref.load %arg1[%c46] : memref<474xf32, #tpu.memory_space<smem>>
    %170 = vector.broadcast %169 : f32 to vector<8x128xf32>
    %171 = arith.addf %168, %170 : vector<8x128xf32>
    %172 = math.tanh %171 : vector<8x128xf32>
    %c15 = arith.constant 15 : index
    %173 = memref.load %arg1[%c15] : memref<474xf32, #tpu.memory_space<smem>>
    %174 = vector.broadcast %173 : f32 to vector<8x128xf32>
    %175 = arith.mulf %4, %174 : vector<8x128xf32>
    %c31 = arith.constant 31 : index
    %176 = memref.load %arg1[%c31] : memref<474xf32, #tpu.memory_space<smem>>
    %177 = vector.broadcast %176 : f32 to vector<8x128xf32>
    %178 = arith.mulf %7, %177 : vector<8x128xf32>
    %179 = arith.addf %175, %178 : vector<8x128xf32>
    %c47 = arith.constant 47 : index
    %180 = memref.load %arg1[%c47] : memref<474xf32, #tpu.memory_space<smem>>
    %181 = vector.broadcast %180 : f32 to vector<8x128xf32>
    %182 = arith.addf %179, %181 : vector<8x128xf32>
    %183 = math.tanh %182 : vector<8x128xf32>
    %c48 = arith.constant 48 : index
    %184 = memref.load %arg1[%c48] : memref<474xf32, #tpu.memory_space<smem>>
    %185 = vector.broadcast %184 : f32 to vector<8x128xf32>
    %186 = arith.mulf %18, %185 : vector<8x128xf32>
    %c64 = arith.constant 64 : index
    %187 = memref.load %arg1[%c64] : memref<474xf32, #tpu.memory_space<smem>>
    %188 = vector.broadcast %187 : f32 to vector<8x128xf32>
    %189 = arith.mulf %29, %188 : vector<8x128xf32>
    %190 = arith.addf %186, %189 : vector<8x128xf32>
    %c80 = arith.constant 80 : index
    %191 = memref.load %arg1[%c80] : memref<474xf32, #tpu.memory_space<smem>>
    %192 = vector.broadcast %191 : f32 to vector<8x128xf32>
    %193 = arith.mulf %40, %192 : vector<8x128xf32>
    %194 = arith.addf %190, %193 : vector<8x128xf32>
    %c96 = arith.constant 96 : index
    %195 = memref.load %arg1[%c96] : memref<474xf32, #tpu.memory_space<smem>>
    %196 = vector.broadcast %195 : f32 to vector<8x128xf32>
    %197 = arith.mulf %51, %196 : vector<8x128xf32>
    %198 = arith.addf %194, %197 : vector<8x128xf32>
    %c112 = arith.constant 112 : index
    %199 = memref.load %arg1[%c112] : memref<474xf32, #tpu.memory_space<smem>>
    %200 = vector.broadcast %199 : f32 to vector<8x128xf32>
    %201 = arith.mulf %62, %200 : vector<8x128xf32>
    %202 = arith.addf %198, %201 : vector<8x128xf32>
    %c128 = arith.constant 128 : index
    %203 = memref.load %arg1[%c128] : memref<474xf32, #tpu.memory_space<smem>>
    %204 = vector.broadcast %203 : f32 to vector<8x128xf32>
    %205 = arith.mulf %73, %204 : vector<8x128xf32>
    %206 = arith.addf %202, %205 : vector<8x128xf32>
    %c144 = arith.constant 144 : index
    %207 = memref.load %arg1[%c144] : memref<474xf32, #tpu.memory_space<smem>>
    %208 = vector.broadcast %207 : f32 to vector<8x128xf32>
    %209 = arith.mulf %84, %208 : vector<8x128xf32>
    %210 = arith.addf %206, %209 : vector<8x128xf32>
    %c160 = arith.constant 160 : index
    %211 = memref.load %arg1[%c160] : memref<474xf32, #tpu.memory_space<smem>>
    %212 = vector.broadcast %211 : f32 to vector<8x128xf32>
    %213 = arith.mulf %95, %212 : vector<8x128xf32>
    %214 = arith.addf %210, %213 : vector<8x128xf32>
    %c176 = arith.constant 176 : index
    %215 = memref.load %arg1[%c176] : memref<474xf32, #tpu.memory_space<smem>>
    %216 = vector.broadcast %215 : f32 to vector<8x128xf32>
    %217 = arith.mulf %106, %216 : vector<8x128xf32>
    %218 = arith.addf %214, %217 : vector<8x128xf32>
    %c192 = arith.constant 192 : index
    %219 = memref.load %arg1[%c192] : memref<474xf32, #tpu.memory_space<smem>>
    %220 = vector.broadcast %219 : f32 to vector<8x128xf32>
    %221 = arith.mulf %117, %220 : vector<8x128xf32>
    %222 = arith.addf %218, %221 : vector<8x128xf32>
    %c208 = arith.constant 208 : index
    %223 = memref.load %arg1[%c208] : memref<474xf32, #tpu.memory_space<smem>>
    %224 = vector.broadcast %223 : f32 to vector<8x128xf32>
    %225 = arith.mulf %128, %224 : vector<8x128xf32>
    %226 = arith.addf %222, %225 : vector<8x128xf32>
    %c224 = arith.constant 224 : index
    %227 = memref.load %arg1[%c224] : memref<474xf32, #tpu.memory_space<smem>>
    %228 = vector.broadcast %227 : f32 to vector<8x128xf32>
    %229 = arith.mulf %139, %228 : vector<8x128xf32>
    %230 = arith.addf %226, %229 : vector<8x128xf32>
    %c240 = arith.constant 240 : index
    %231 = memref.load %arg1[%c240] : memref<474xf32, #tpu.memory_space<smem>>
    %232 = vector.broadcast %231 : f32 to vector<8x128xf32>
    %233 = arith.mulf %150, %232 : vector<8x128xf32>
    %234 = arith.addf %230, %233 : vector<8x128xf32>
    %c256 = arith.constant 256 : index
    %235 = memref.load %arg1[%c256] : memref<474xf32, #tpu.memory_space<smem>>
    %236 = vector.broadcast %235 : f32 to vector<8x128xf32>
    %237 = arith.mulf %161, %236 : vector<8x128xf32>
    %238 = arith.addf %234, %237 : vector<8x128xf32>
    %c272 = arith.constant 272 : index
    %239 = memref.load %arg1[%c272] : memref<474xf32, #tpu.memory_space<smem>>
    %240 = vector.broadcast %239 : f32 to vector<8x128xf32>
    %241 = arith.mulf %172, %240 : vector<8x128xf32>
    %242 = arith.addf %238, %241 : vector<8x128xf32>
    %c288 = arith.constant 288 : index
    %243 = memref.load %arg1[%c288] : memref<474xf32, #tpu.memory_space<smem>>
    %244 = vector.broadcast %243 : f32 to vector<8x128xf32>
    %245 = arith.mulf %183, %244 : vector<8x128xf32>
    %246 = arith.addf %242, %245 : vector<8x128xf32>
    %c304 = arith.constant 304 : index
    %247 = memref.load %arg1[%c304] : memref<474xf32, #tpu.memory_space<smem>>
    %248 = vector.broadcast %247 : f32 to vector<8x128xf32>
    %249 = arith.addf %246, %248 : vector<8x128xf32>
    %250 = math.tanh %249 : vector<8x128xf32>
    %c49 = arith.constant 49 : index
    %251 = memref.load %arg1[%c49] : memref<474xf32, #tpu.memory_space<smem>>
    %252 = vector.broadcast %251 : f32 to vector<8x128xf32>
    %253 = arith.mulf %18, %252 : vector<8x128xf32>
    %c65 = arith.constant 65 : index
    %254 = memref.load %arg1[%c65] : memref<474xf32, #tpu.memory_space<smem>>
    %255 = vector.broadcast %254 : f32 to vector<8x128xf32>
    %256 = arith.mulf %29, %255 : vector<8x128xf32>
    %257 = arith.addf %253, %256 : vector<8x128xf32>
    %c81 = arith.constant 81 : index
    %258 = memref.load %arg1[%c81] : memref<474xf32, #tpu.memory_space<smem>>
    %259 = vector.broadcast %258 : f32 to vector<8x128xf32>
    %260 = arith.mulf %40, %259 : vector<8x128xf32>
    %261 = arith.addf %257, %260 : vector<8x128xf32>
    %c97 = arith.constant 97 : index
    %262 = memref.load %arg1[%c97] : memref<474xf32, #tpu.memory_space<smem>>
    %263 = vector.broadcast %262 : f32 to vector<8x128xf32>
    %264 = arith.mulf %51, %263 : vector<8x128xf32>
    %265 = arith.addf %261, %264 : vector<8x128xf32>
    %c113 = arith.constant 113 : index
    %266 = memref.load %arg1[%c113] : memref<474xf32, #tpu.memory_space<smem>>
    %267 = vector.broadcast %266 : f32 to vector<8x128xf32>
    %268 = arith.mulf %62, %267 : vector<8x128xf32>
    %269 = arith.addf %265, %268 : vector<8x128xf32>
    %c129 = arith.constant 129 : index
    %270 = memref.load %arg1[%c129] : memref<474xf32, #tpu.memory_space<smem>>
    %271 = vector.broadcast %270 : f32 to vector<8x128xf32>
    %272 = arith.mulf %73, %271 : vector<8x128xf32>
    %273 = arith.addf %269, %272 : vector<8x128xf32>
    %c145 = arith.constant 145 : index
    %274 = memref.load %arg1[%c145] : memref<474xf32, #tpu.memory_space<smem>>
    %275 = vector.broadcast %274 : f32 to vector<8x128xf32>
    %276 = arith.mulf %84, %275 : vector<8x128xf32>
    %277 = arith.addf %273, %276 : vector<8x128xf32>
    %c161 = arith.constant 161 : index
    %278 = memref.load %arg1[%c161] : memref<474xf32, #tpu.memory_space<smem>>
    %279 = vector.broadcast %278 : f32 to vector<8x128xf32>
    %280 = arith.mulf %95, %279 : vector<8x128xf32>
    %281 = arith.addf %277, %280 : vector<8x128xf32>
    %c177 = arith.constant 177 : index
    %282 = memref.load %arg1[%c177] : memref<474xf32, #tpu.memory_space<smem>>
    %283 = vector.broadcast %282 : f32 to vector<8x128xf32>
    %284 = arith.mulf %106, %283 : vector<8x128xf32>
    %285 = arith.addf %281, %284 : vector<8x128xf32>
    %c193 = arith.constant 193 : index
    %286 = memref.load %arg1[%c193] : memref<474xf32, #tpu.memory_space<smem>>
    %287 = vector.broadcast %286 : f32 to vector<8x128xf32>
    %288 = arith.mulf %117, %287 : vector<8x128xf32>
    %289 = arith.addf %285, %288 : vector<8x128xf32>
    %c209 = arith.constant 209 : index
    %290 = memref.load %arg1[%c209] : memref<474xf32, #tpu.memory_space<smem>>
    %291 = vector.broadcast %290 : f32 to vector<8x128xf32>
    %292 = arith.mulf %128, %291 : vector<8x128xf32>
    %293 = arith.addf %289, %292 : vector<8x128xf32>
    %c225 = arith.constant 225 : index
    %294 = memref.load %arg1[%c225] : memref<474xf32, #tpu.memory_space<smem>>
    %295 = vector.broadcast %294 : f32 to vector<8x128xf32>
    %296 = arith.mulf %139, %295 : vector<8x128xf32>
    %297 = arith.addf %293, %296 : vector<8x128xf32>
    %c241 = arith.constant 241 : index
    %298 = memref.load %arg1[%c241] : memref<474xf32, #tpu.memory_space<smem>>
    %299 = vector.broadcast %298 : f32 to vector<8x128xf32>
    %300 = arith.mulf %150, %299 : vector<8x128xf32>
    %301 = arith.addf %297, %300 : vector<8x128xf32>
    %c257 = arith.constant 257 : index
    %302 = memref.load %arg1[%c257] : memref<474xf32, #tpu.memory_space<smem>>
    %303 = vector.broadcast %302 : f32 to vector<8x128xf32>
    %304 = arith.mulf %161, %303 : vector<8x128xf32>
    %305 = arith.addf %301, %304 : vector<8x128xf32>
    %c273 = arith.constant 273 : index
    %306 = memref.load %arg1[%c273] : memref<474xf32, #tpu.memory_space<smem>>
    %307 = vector.broadcast %306 : f32 to vector<8x128xf32>
    %308 = arith.mulf %172, %307 : vector<8x128xf32>
    %309 = arith.addf %305, %308 : vector<8x128xf32>
    %c289 = arith.constant 289 : index
    %310 = memref.load %arg1[%c289] : memref<474xf32, #tpu.memory_space<smem>>
    %311 = vector.broadcast %310 : f32 to vector<8x128xf32>
    %312 = arith.mulf %183, %311 : vector<8x128xf32>
    %313 = arith.addf %309, %312 : vector<8x128xf32>
    %c305 = arith.constant 305 : index
    %314 = memref.load %arg1[%c305] : memref<474xf32, #tpu.memory_space<smem>>
    %315 = vector.broadcast %314 : f32 to vector<8x128xf32>
    %316 = arith.addf %313, %315 : vector<8x128xf32>
    %317 = math.tanh %316 : vector<8x128xf32>
    %c50 = arith.constant 50 : index
    %318 = memref.load %arg1[%c50] : memref<474xf32, #tpu.memory_space<smem>>
    %319 = vector.broadcast %318 : f32 to vector<8x128xf32>
    %320 = arith.mulf %18, %319 : vector<8x128xf32>
    %c66 = arith.constant 66 : index
    %321 = memref.load %arg1[%c66] : memref<474xf32, #tpu.memory_space<smem>>
    %322 = vector.broadcast %321 : f32 to vector<8x128xf32>
    %323 = arith.mulf %29, %322 : vector<8x128xf32>
    %324 = arith.addf %320, %323 : vector<8x128xf32>
    %c82 = arith.constant 82 : index
    %325 = memref.load %arg1[%c82] : memref<474xf32, #tpu.memory_space<smem>>
    %326 = vector.broadcast %325 : f32 to vector<8x128xf32>
    %327 = arith.mulf %40, %326 : vector<8x128xf32>
    %328 = arith.addf %324, %327 : vector<8x128xf32>
    %c98 = arith.constant 98 : index
    %329 = memref.load %arg1[%c98] : memref<474xf32, #tpu.memory_space<smem>>
    %330 = vector.broadcast %329 : f32 to vector<8x128xf32>
    %331 = arith.mulf %51, %330 : vector<8x128xf32>
    %332 = arith.addf %328, %331 : vector<8x128xf32>
    %c114 = arith.constant 114 : index
    %333 = memref.load %arg1[%c114] : memref<474xf32, #tpu.memory_space<smem>>
    %334 = vector.broadcast %333 : f32 to vector<8x128xf32>
    %335 = arith.mulf %62, %334 : vector<8x128xf32>
    %336 = arith.addf %332, %335 : vector<8x128xf32>
    %c130 = arith.constant 130 : index
    %337 = memref.load %arg1[%c130] : memref<474xf32, #tpu.memory_space<smem>>
    %338 = vector.broadcast %337 : f32 to vector<8x128xf32>
    %339 = arith.mulf %73, %338 : vector<8x128xf32>
    %340 = arith.addf %336, %339 : vector<8x128xf32>
    %c146 = arith.constant 146 : index
    %341 = memref.load %arg1[%c146] : memref<474xf32, #tpu.memory_space<smem>>
    %342 = vector.broadcast %341 : f32 to vector<8x128xf32>
    %343 = arith.mulf %84, %342 : vector<8x128xf32>
    %344 = arith.addf %340, %343 : vector<8x128xf32>
    %c162 = arith.constant 162 : index
    %345 = memref.load %arg1[%c162] : memref<474xf32, #tpu.memory_space<smem>>
    %346 = vector.broadcast %345 : f32 to vector<8x128xf32>
    %347 = arith.mulf %95, %346 : vector<8x128xf32>
    %348 = arith.addf %344, %347 : vector<8x128xf32>
    %c178 = arith.constant 178 : index
    %349 = memref.load %arg1[%c178] : memref<474xf32, #tpu.memory_space<smem>>
    %350 = vector.broadcast %349 : f32 to vector<8x128xf32>
    %351 = arith.mulf %106, %350 : vector<8x128xf32>
    %352 = arith.addf %348, %351 : vector<8x128xf32>
    %c194 = arith.constant 194 : index
    %353 = memref.load %arg1[%c194] : memref<474xf32, #tpu.memory_space<smem>>
    %354 = vector.broadcast %353 : f32 to vector<8x128xf32>
    %355 = arith.mulf %117, %354 : vector<8x128xf32>
    %356 = arith.addf %352, %355 : vector<8x128xf32>
    %c210 = arith.constant 210 : index
    %357 = memref.load %arg1[%c210] : memref<474xf32, #tpu.memory_space<smem>>
    %358 = vector.broadcast %357 : f32 to vector<8x128xf32>
    %359 = arith.mulf %128, %358 : vector<8x128xf32>
    %360 = arith.addf %356, %359 : vector<8x128xf32>
    %c226 = arith.constant 226 : index
    %361 = memref.load %arg1[%c226] : memref<474xf32, #tpu.memory_space<smem>>
    %362 = vector.broadcast %361 : f32 to vector<8x128xf32>
    %363 = arith.mulf %139, %362 : vector<8x128xf32>
    %364 = arith.addf %360, %363 : vector<8x128xf32>
    %c242 = arith.constant 242 : index
    %365 = memref.load %arg1[%c242] : memref<474xf32, #tpu.memory_space<smem>>
    %366 = vector.broadcast %365 : f32 to vector<8x128xf32>
    %367 = arith.mulf %150, %366 : vector<8x128xf32>
    %368 = arith.addf %364, %367 : vector<8x128xf32>
    %c258 = arith.constant 258 : index
    %369 = memref.load %arg1[%c258] : memref<474xf32, #tpu.memory_space<smem>>
    %370 = vector.broadcast %369 : f32 to vector<8x128xf32>
    %371 = arith.mulf %161, %370 : vector<8x128xf32>
    %372 = arith.addf %368, %371 : vector<8x128xf32>
    %c274 = arith.constant 274 : index
    %373 = memref.load %arg1[%c274] : memref<474xf32, #tpu.memory_space<smem>>
    %374 = vector.broadcast %373 : f32 to vector<8x128xf32>
    %375 = arith.mulf %172, %374 : vector<8x128xf32>
    %376 = arith.addf %372, %375 : vector<8x128xf32>
    %c290 = arith.constant 290 : index
    %377 = memref.load %arg1[%c290] : memref<474xf32, #tpu.memory_space<smem>>
    %378 = vector.broadcast %377 : f32 to vector<8x128xf32>
    %379 = arith.mulf %183, %378 : vector<8x128xf32>
    %380 = arith.addf %376, %379 : vector<8x128xf32>
    %c306 = arith.constant 306 : index
    %381 = memref.load %arg1[%c306] : memref<474xf32, #tpu.memory_space<smem>>
    %382 = vector.broadcast %381 : f32 to vector<8x128xf32>
    %383 = arith.addf %380, %382 : vector<8x128xf32>
    %384 = math.tanh %383 : vector<8x128xf32>
    %c51 = arith.constant 51 : index
    %385 = memref.load %arg1[%c51] : memref<474xf32, #tpu.memory_space<smem>>
    %386 = vector.broadcast %385 : f32 to vector<8x128xf32>
    %387 = arith.mulf %18, %386 : vector<8x128xf32>
    %c67 = arith.constant 67 : index
    %388 = memref.load %arg1[%c67] : memref<474xf32, #tpu.memory_space<smem>>
    %389 = vector.broadcast %388 : f32 to vector<8x128xf32>
    %390 = arith.mulf %29, %389 : vector<8x128xf32>
    %391 = arith.addf %387, %390 : vector<8x128xf32>
    %c83 = arith.constant 83 : index
    %392 = memref.load %arg1[%c83] : memref<474xf32, #tpu.memory_space<smem>>
    %393 = vector.broadcast %392 : f32 to vector<8x128xf32>
    %394 = arith.mulf %40, %393 : vector<8x128xf32>
    %395 = arith.addf %391, %394 : vector<8x128xf32>
    %c99 = arith.constant 99 : index
    %396 = memref.load %arg1[%c99] : memref<474xf32, #tpu.memory_space<smem>>
    %397 = vector.broadcast %396 : f32 to vector<8x128xf32>
    %398 = arith.mulf %51, %397 : vector<8x128xf32>
    %399 = arith.addf %395, %398 : vector<8x128xf32>
    %c115 = arith.constant 115 : index
    %400 = memref.load %arg1[%c115] : memref<474xf32, #tpu.memory_space<smem>>
    %401 = vector.broadcast %400 : f32 to vector<8x128xf32>
    %402 = arith.mulf %62, %401 : vector<8x128xf32>
    %403 = arith.addf %399, %402 : vector<8x128xf32>
    %c131 = arith.constant 131 : index
    %404 = memref.load %arg1[%c131] : memref<474xf32, #tpu.memory_space<smem>>
    %405 = vector.broadcast %404 : f32 to vector<8x128xf32>
    %406 = arith.mulf %73, %405 : vector<8x128xf32>
    %407 = arith.addf %403, %406 : vector<8x128xf32>
    %c147 = arith.constant 147 : index
    %408 = memref.load %arg1[%c147] : memref<474xf32, #tpu.memory_space<smem>>
    %409 = vector.broadcast %408 : f32 to vector<8x128xf32>
    %410 = arith.mulf %84, %409 : vector<8x128xf32>
    %411 = arith.addf %407, %410 : vector<8x128xf32>
    %c163 = arith.constant 163 : index
    %412 = memref.load %arg1[%c163] : memref<474xf32, #tpu.memory_space<smem>>
    %413 = vector.broadcast %412 : f32 to vector<8x128xf32>
    %414 = arith.mulf %95, %413 : vector<8x128xf32>
    %415 = arith.addf %411, %414 : vector<8x128xf32>
    %c179 = arith.constant 179 : index
    %416 = memref.load %arg1[%c179] : memref<474xf32, #tpu.memory_space<smem>>
    %417 = vector.broadcast %416 : f32 to vector<8x128xf32>
    %418 = arith.mulf %106, %417 : vector<8x128xf32>
    %419 = arith.addf %415, %418 : vector<8x128xf32>
    %c195 = arith.constant 195 : index
    %420 = memref.load %arg1[%c195] : memref<474xf32, #tpu.memory_space<smem>>
    %421 = vector.broadcast %420 : f32 to vector<8x128xf32>
    %422 = arith.mulf %117, %421 : vector<8x128xf32>
    %423 = arith.addf %419, %422 : vector<8x128xf32>
    %c211 = arith.constant 211 : index
    %424 = memref.load %arg1[%c211] : memref<474xf32, #tpu.memory_space<smem>>
    %425 = vector.broadcast %424 : f32 to vector<8x128xf32>
    %426 = arith.mulf %128, %425 : vector<8x128xf32>
    %427 = arith.addf %423, %426 : vector<8x128xf32>
    %c227 = arith.constant 227 : index
    %428 = memref.load %arg1[%c227] : memref<474xf32, #tpu.memory_space<smem>>
    %429 = vector.broadcast %428 : f32 to vector<8x128xf32>
    %430 = arith.mulf %139, %429 : vector<8x128xf32>
    %431 = arith.addf %427, %430 : vector<8x128xf32>
    %c243 = arith.constant 243 : index
    %432 = memref.load %arg1[%c243] : memref<474xf32, #tpu.memory_space<smem>>
    %433 = vector.broadcast %432 : f32 to vector<8x128xf32>
    %434 = arith.mulf %150, %433 : vector<8x128xf32>
    %435 = arith.addf %431, %434 : vector<8x128xf32>
    %c259 = arith.constant 259 : index
    %436 = memref.load %arg1[%c259] : memref<474xf32, #tpu.memory_space<smem>>
    %437 = vector.broadcast %436 : f32 to vector<8x128xf32>
    %438 = arith.mulf %161, %437 : vector<8x128xf32>
    %439 = arith.addf %435, %438 : vector<8x128xf32>
    %c275 = arith.constant 275 : index
    %440 = memref.load %arg1[%c275] : memref<474xf32, #tpu.memory_space<smem>>
    %441 = vector.broadcast %440 : f32 to vector<8x128xf32>
    %442 = arith.mulf %172, %441 : vector<8x128xf32>
    %443 = arith.addf %439, %442 : vector<8x128xf32>
    %c291 = arith.constant 291 : index
    %444 = memref.load %arg1[%c291] : memref<474xf32, #tpu.memory_space<smem>>
    %445 = vector.broadcast %444 : f32 to vector<8x128xf32>
    %446 = arith.mulf %183, %445 : vector<8x128xf32>
    %447 = arith.addf %443, %446 : vector<8x128xf32>
    %c307 = arith.constant 307 : index
    %448 = memref.load %arg1[%c307] : memref<474xf32, #tpu.memory_space<smem>>
    %449 = vector.broadcast %448 : f32 to vector<8x128xf32>
    %450 = arith.addf %447, %449 : vector<8x128xf32>
    %451 = math.tanh %450 : vector<8x128xf32>
    %c52 = arith.constant 52 : index
    %452 = memref.load %arg1[%c52] : memref<474xf32, #tpu.memory_space<smem>>
    %453 = vector.broadcast %452 : f32 to vector<8x128xf32>
    %454 = arith.mulf %18, %453 : vector<8x128xf32>
    %c68 = arith.constant 68 : index
    %455 = memref.load %arg1[%c68] : memref<474xf32, #tpu.memory_space<smem>>
    %456 = vector.broadcast %455 : f32 to vector<8x128xf32>
    %457 = arith.mulf %29, %456 : vector<8x128xf32>
    %458 = arith.addf %454, %457 : vector<8x128xf32>
    %c84 = arith.constant 84 : index
    %459 = memref.load %arg1[%c84] : memref<474xf32, #tpu.memory_space<smem>>
    %460 = vector.broadcast %459 : f32 to vector<8x128xf32>
    %461 = arith.mulf %40, %460 : vector<8x128xf32>
    %462 = arith.addf %458, %461 : vector<8x128xf32>
    %c100 = arith.constant 100 : index
    %463 = memref.load %arg1[%c100] : memref<474xf32, #tpu.memory_space<smem>>
    %464 = vector.broadcast %463 : f32 to vector<8x128xf32>
    %465 = arith.mulf %51, %464 : vector<8x128xf32>
    %466 = arith.addf %462, %465 : vector<8x128xf32>
    %c116 = arith.constant 116 : index
    %467 = memref.load %arg1[%c116] : memref<474xf32, #tpu.memory_space<smem>>
    %468 = vector.broadcast %467 : f32 to vector<8x128xf32>
    %469 = arith.mulf %62, %468 : vector<8x128xf32>
    %470 = arith.addf %466, %469 : vector<8x128xf32>
    %c132 = arith.constant 132 : index
    %471 = memref.load %arg1[%c132] : memref<474xf32, #tpu.memory_space<smem>>
    %472 = vector.broadcast %471 : f32 to vector<8x128xf32>
    %473 = arith.mulf %73, %472 : vector<8x128xf32>
    %474 = arith.addf %470, %473 : vector<8x128xf32>
    %c148 = arith.constant 148 : index
    %475 = memref.load %arg1[%c148] : memref<474xf32, #tpu.memory_space<smem>>
    %476 = vector.broadcast %475 : f32 to vector<8x128xf32>
    %477 = arith.mulf %84, %476 : vector<8x128xf32>
    %478 = arith.addf %474, %477 : vector<8x128xf32>
    %c164 = arith.constant 164 : index
    %479 = memref.load %arg1[%c164] : memref<474xf32, #tpu.memory_space<smem>>
    %480 = vector.broadcast %479 : f32 to vector<8x128xf32>
    %481 = arith.mulf %95, %480 : vector<8x128xf32>
    %482 = arith.addf %478, %481 : vector<8x128xf32>
    %c180 = arith.constant 180 : index
    %483 = memref.load %arg1[%c180] : memref<474xf32, #tpu.memory_space<smem>>
    %484 = vector.broadcast %483 : f32 to vector<8x128xf32>
    %485 = arith.mulf %106, %484 : vector<8x128xf32>
    %486 = arith.addf %482, %485 : vector<8x128xf32>
    %c196 = arith.constant 196 : index
    %487 = memref.load %arg1[%c196] : memref<474xf32, #tpu.memory_space<smem>>
    %488 = vector.broadcast %487 : f32 to vector<8x128xf32>
    %489 = arith.mulf %117, %488 : vector<8x128xf32>
    %490 = arith.addf %486, %489 : vector<8x128xf32>
    %c212 = arith.constant 212 : index
    %491 = memref.load %arg1[%c212] : memref<474xf32, #tpu.memory_space<smem>>
    %492 = vector.broadcast %491 : f32 to vector<8x128xf32>
    %493 = arith.mulf %128, %492 : vector<8x128xf32>
    %494 = arith.addf %490, %493 : vector<8x128xf32>
    %c228 = arith.constant 228 : index
    %495 = memref.load %arg1[%c228] : memref<474xf32, #tpu.memory_space<smem>>
    %496 = vector.broadcast %495 : f32 to vector<8x128xf32>
    %497 = arith.mulf %139, %496 : vector<8x128xf32>
    %498 = arith.addf %494, %497 : vector<8x128xf32>
    %c244 = arith.constant 244 : index
    %499 = memref.load %arg1[%c244] : memref<474xf32, #tpu.memory_space<smem>>
    %500 = vector.broadcast %499 : f32 to vector<8x128xf32>
    %501 = arith.mulf %150, %500 : vector<8x128xf32>
    %502 = arith.addf %498, %501 : vector<8x128xf32>
    %c260 = arith.constant 260 : index
    %503 = memref.load %arg1[%c260] : memref<474xf32, #tpu.memory_space<smem>>
    %504 = vector.broadcast %503 : f32 to vector<8x128xf32>
    %505 = arith.mulf %161, %504 : vector<8x128xf32>
    %506 = arith.addf %502, %505 : vector<8x128xf32>
    %c276 = arith.constant 276 : index
    %507 = memref.load %arg1[%c276] : memref<474xf32, #tpu.memory_space<smem>>
    %508 = vector.broadcast %507 : f32 to vector<8x128xf32>
    %509 = arith.mulf %172, %508 : vector<8x128xf32>
    %510 = arith.addf %506, %509 : vector<8x128xf32>
    %c292 = arith.constant 292 : index
    %511 = memref.load %arg1[%c292] : memref<474xf32, #tpu.memory_space<smem>>
    %512 = vector.broadcast %511 : f32 to vector<8x128xf32>
    %513 = arith.mulf %183, %512 : vector<8x128xf32>
    %514 = arith.addf %510, %513 : vector<8x128xf32>
    %c308 = arith.constant 308 : index
    %515 = memref.load %arg1[%c308] : memref<474xf32, #tpu.memory_space<smem>>
    %516 = vector.broadcast %515 : f32 to vector<8x128xf32>
    %517 = arith.addf %514, %516 : vector<8x128xf32>
    %518 = math.tanh %517 : vector<8x128xf32>
    %c53 = arith.constant 53 : index
    %519 = memref.load %arg1[%c53] : memref<474xf32, #tpu.memory_space<smem>>
    %520 = vector.broadcast %519 : f32 to vector<8x128xf32>
    %521 = arith.mulf %18, %520 : vector<8x128xf32>
    %c69 = arith.constant 69 : index
    %522 = memref.load %arg1[%c69] : memref<474xf32, #tpu.memory_space<smem>>
    %523 = vector.broadcast %522 : f32 to vector<8x128xf32>
    %524 = arith.mulf %29, %523 : vector<8x128xf32>
    %525 = arith.addf %521, %524 : vector<8x128xf32>
    %c85 = arith.constant 85 : index
    %526 = memref.load %arg1[%c85] : memref<474xf32, #tpu.memory_space<smem>>
    %527 = vector.broadcast %526 : f32 to vector<8x128xf32>
    %528 = arith.mulf %40, %527 : vector<8x128xf32>
    %529 = arith.addf %525, %528 : vector<8x128xf32>
    %c101 = arith.constant 101 : index
    %530 = memref.load %arg1[%c101] : memref<474xf32, #tpu.memory_space<smem>>
    %531 = vector.broadcast %530 : f32 to vector<8x128xf32>
    %532 = arith.mulf %51, %531 : vector<8x128xf32>
    %533 = arith.addf %529, %532 : vector<8x128xf32>
    %c117 = arith.constant 117 : index
    %534 = memref.load %arg1[%c117] : memref<474xf32, #tpu.memory_space<smem>>
    %535 = vector.broadcast %534 : f32 to vector<8x128xf32>
    %536 = arith.mulf %62, %535 : vector<8x128xf32>
    %537 = arith.addf %533, %536 : vector<8x128xf32>
    %c133 = arith.constant 133 : index
    %538 = memref.load %arg1[%c133] : memref<474xf32, #tpu.memory_space<smem>>
    %539 = vector.broadcast %538 : f32 to vector<8x128xf32>
    %540 = arith.mulf %73, %539 : vector<8x128xf32>
    %541 = arith.addf %537, %540 : vector<8x128xf32>
    %c149 = arith.constant 149 : index
    %542 = memref.load %arg1[%c149] : memref<474xf32, #tpu.memory_space<smem>>
    %543 = vector.broadcast %542 : f32 to vector<8x128xf32>
    %544 = arith.mulf %84, %543 : vector<8x128xf32>
    %545 = arith.addf %541, %544 : vector<8x128xf32>
    %c165 = arith.constant 165 : index
    %546 = memref.load %arg1[%c165] : memref<474xf32, #tpu.memory_space<smem>>
    %547 = vector.broadcast %546 : f32 to vector<8x128xf32>
    %548 = arith.mulf %95, %547 : vector<8x128xf32>
    %549 = arith.addf %545, %548 : vector<8x128xf32>
    %c181 = arith.constant 181 : index
    %550 = memref.load %arg1[%c181] : memref<474xf32, #tpu.memory_space<smem>>
    %551 = vector.broadcast %550 : f32 to vector<8x128xf32>
    %552 = arith.mulf %106, %551 : vector<8x128xf32>
    %553 = arith.addf %549, %552 : vector<8x128xf32>
    %c197 = arith.constant 197 : index
    %554 = memref.load %arg1[%c197] : memref<474xf32, #tpu.memory_space<smem>>
    %555 = vector.broadcast %554 : f32 to vector<8x128xf32>
    %556 = arith.mulf %117, %555 : vector<8x128xf32>
    %557 = arith.addf %553, %556 : vector<8x128xf32>
    %c213 = arith.constant 213 : index
    %558 = memref.load %arg1[%c213] : memref<474xf32, #tpu.memory_space<smem>>
    %559 = vector.broadcast %558 : f32 to vector<8x128xf32>
    %560 = arith.mulf %128, %559 : vector<8x128xf32>
    %561 = arith.addf %557, %560 : vector<8x128xf32>
    %c229 = arith.constant 229 : index
    %562 = memref.load %arg1[%c229] : memref<474xf32, #tpu.memory_space<smem>>
    %563 = vector.broadcast %562 : f32 to vector<8x128xf32>
    %564 = arith.mulf %139, %563 : vector<8x128xf32>
    %565 = arith.addf %561, %564 : vector<8x128xf32>
    %c245 = arith.constant 245 : index
    %566 = memref.load %arg1[%c245] : memref<474xf32, #tpu.memory_space<smem>>
    %567 = vector.broadcast %566 : f32 to vector<8x128xf32>
    %568 = arith.mulf %150, %567 : vector<8x128xf32>
    %569 = arith.addf %565, %568 : vector<8x128xf32>
    %c261 = arith.constant 261 : index
    %570 = memref.load %arg1[%c261] : memref<474xf32, #tpu.memory_space<smem>>
    %571 = vector.broadcast %570 : f32 to vector<8x128xf32>
    %572 = arith.mulf %161, %571 : vector<8x128xf32>
    %573 = arith.addf %569, %572 : vector<8x128xf32>
    %c277 = arith.constant 277 : index
    %574 = memref.load %arg1[%c277] : memref<474xf32, #tpu.memory_space<smem>>
    %575 = vector.broadcast %574 : f32 to vector<8x128xf32>
    %576 = arith.mulf %172, %575 : vector<8x128xf32>
    %577 = arith.addf %573, %576 : vector<8x128xf32>
    %c293 = arith.constant 293 : index
    %578 = memref.load %arg1[%c293] : memref<474xf32, #tpu.memory_space<smem>>
    %579 = vector.broadcast %578 : f32 to vector<8x128xf32>
    %580 = arith.mulf %183, %579 : vector<8x128xf32>
    %581 = arith.addf %577, %580 : vector<8x128xf32>
    %c309 = arith.constant 309 : index
    %582 = memref.load %arg1[%c309] : memref<474xf32, #tpu.memory_space<smem>>
    %583 = vector.broadcast %582 : f32 to vector<8x128xf32>
    %584 = arith.addf %581, %583 : vector<8x128xf32>
    %585 = math.tanh %584 : vector<8x128xf32>
    %c54 = arith.constant 54 : index
    %586 = memref.load %arg1[%c54] : memref<474xf32, #tpu.memory_space<smem>>
    %587 = vector.broadcast %586 : f32 to vector<8x128xf32>
    %588 = arith.mulf %18, %587 : vector<8x128xf32>
    %c70 = arith.constant 70 : index
    %589 = memref.load %arg1[%c70] : memref<474xf32, #tpu.memory_space<smem>>
    %590 = vector.broadcast %589 : f32 to vector<8x128xf32>
    %591 = arith.mulf %29, %590 : vector<8x128xf32>
    %592 = arith.addf %588, %591 : vector<8x128xf32>
    %c86 = arith.constant 86 : index
    %593 = memref.load %arg1[%c86] : memref<474xf32, #tpu.memory_space<smem>>
    %594 = vector.broadcast %593 : f32 to vector<8x128xf32>
    %595 = arith.mulf %40, %594 : vector<8x128xf32>
    %596 = arith.addf %592, %595 : vector<8x128xf32>
    %c102 = arith.constant 102 : index
    %597 = memref.load %arg1[%c102] : memref<474xf32, #tpu.memory_space<smem>>
    %598 = vector.broadcast %597 : f32 to vector<8x128xf32>
    %599 = arith.mulf %51, %598 : vector<8x128xf32>
    %600 = arith.addf %596, %599 : vector<8x128xf32>
    %c118 = arith.constant 118 : index
    %601 = memref.load %arg1[%c118] : memref<474xf32, #tpu.memory_space<smem>>
    %602 = vector.broadcast %601 : f32 to vector<8x128xf32>
    %603 = arith.mulf %62, %602 : vector<8x128xf32>
    %604 = arith.addf %600, %603 : vector<8x128xf32>
    %c134 = arith.constant 134 : index
    %605 = memref.load %arg1[%c134] : memref<474xf32, #tpu.memory_space<smem>>
    %606 = vector.broadcast %605 : f32 to vector<8x128xf32>
    %607 = arith.mulf %73, %606 : vector<8x128xf32>
    %608 = arith.addf %604, %607 : vector<8x128xf32>
    %c150 = arith.constant 150 : index
    %609 = memref.load %arg1[%c150] : memref<474xf32, #tpu.memory_space<smem>>
    %610 = vector.broadcast %609 : f32 to vector<8x128xf32>
    %611 = arith.mulf %84, %610 : vector<8x128xf32>
    %612 = arith.addf %608, %611 : vector<8x128xf32>
    %c166 = arith.constant 166 : index
    %613 = memref.load %arg1[%c166] : memref<474xf32, #tpu.memory_space<smem>>
    %614 = vector.broadcast %613 : f32 to vector<8x128xf32>
    %615 = arith.mulf %95, %614 : vector<8x128xf32>
    %616 = arith.addf %612, %615 : vector<8x128xf32>
    %c182 = arith.constant 182 : index
    %617 = memref.load %arg1[%c182] : memref<474xf32, #tpu.memory_space<smem>>
    %618 = vector.broadcast %617 : f32 to vector<8x128xf32>
    %619 = arith.mulf %106, %618 : vector<8x128xf32>
    %620 = arith.addf %616, %619 : vector<8x128xf32>
    %c198 = arith.constant 198 : index
    %621 = memref.load %arg1[%c198] : memref<474xf32, #tpu.memory_space<smem>>
    %622 = vector.broadcast %621 : f32 to vector<8x128xf32>
    %623 = arith.mulf %117, %622 : vector<8x128xf32>
    %624 = arith.addf %620, %623 : vector<8x128xf32>
    %c214 = arith.constant 214 : index
    %625 = memref.load %arg1[%c214] : memref<474xf32, #tpu.memory_space<smem>>
    %626 = vector.broadcast %625 : f32 to vector<8x128xf32>
    %627 = arith.mulf %128, %626 : vector<8x128xf32>
    %628 = arith.addf %624, %627 : vector<8x128xf32>
    %c230 = arith.constant 230 : index
    %629 = memref.load %arg1[%c230] : memref<474xf32, #tpu.memory_space<smem>>
    %630 = vector.broadcast %629 : f32 to vector<8x128xf32>
    %631 = arith.mulf %139, %630 : vector<8x128xf32>
    %632 = arith.addf %628, %631 : vector<8x128xf32>
    %c246 = arith.constant 246 : index
    %633 = memref.load %arg1[%c246] : memref<474xf32, #tpu.memory_space<smem>>
    %634 = vector.broadcast %633 : f32 to vector<8x128xf32>
    %635 = arith.mulf %150, %634 : vector<8x128xf32>
    %636 = arith.addf %632, %635 : vector<8x128xf32>
    %c262 = arith.constant 262 : index
    %637 = memref.load %arg1[%c262] : memref<474xf32, #tpu.memory_space<smem>>
    %638 = vector.broadcast %637 : f32 to vector<8x128xf32>
    %639 = arith.mulf %161, %638 : vector<8x128xf32>
    %640 = arith.addf %636, %639 : vector<8x128xf32>
    %c278 = arith.constant 278 : index
    %641 = memref.load %arg1[%c278] : memref<474xf32, #tpu.memory_space<smem>>
    %642 = vector.broadcast %641 : f32 to vector<8x128xf32>
    %643 = arith.mulf %172, %642 : vector<8x128xf32>
    %644 = arith.addf %640, %643 : vector<8x128xf32>
    %c294 = arith.constant 294 : index
    %645 = memref.load %arg1[%c294] : memref<474xf32, #tpu.memory_space<smem>>
    %646 = vector.broadcast %645 : f32 to vector<8x128xf32>
    %647 = arith.mulf %183, %646 : vector<8x128xf32>
    %648 = arith.addf %644, %647 : vector<8x128xf32>
    %c310 = arith.constant 310 : index
    %649 = memref.load %arg1[%c310] : memref<474xf32, #tpu.memory_space<smem>>
    %650 = vector.broadcast %649 : f32 to vector<8x128xf32>
    %651 = arith.addf %648, %650 : vector<8x128xf32>
    %652 = math.tanh %651 : vector<8x128xf32>
    %c55 = arith.constant 55 : index
    %653 = memref.load %arg1[%c55] : memref<474xf32, #tpu.memory_space<smem>>
    %654 = vector.broadcast %653 : f32 to vector<8x128xf32>
    %655 = arith.mulf %18, %654 : vector<8x128xf32>
    %c71 = arith.constant 71 : index
    %656 = memref.load %arg1[%c71] : memref<474xf32, #tpu.memory_space<smem>>
    %657 = vector.broadcast %656 : f32 to vector<8x128xf32>
    %658 = arith.mulf %29, %657 : vector<8x128xf32>
    %659 = arith.addf %655, %658 : vector<8x128xf32>
    %c87 = arith.constant 87 : index
    %660 = memref.load %arg1[%c87] : memref<474xf32, #tpu.memory_space<smem>>
    %661 = vector.broadcast %660 : f32 to vector<8x128xf32>
    %662 = arith.mulf %40, %661 : vector<8x128xf32>
    %663 = arith.addf %659, %662 : vector<8x128xf32>
    %c103 = arith.constant 103 : index
    %664 = memref.load %arg1[%c103] : memref<474xf32, #tpu.memory_space<smem>>
    %665 = vector.broadcast %664 : f32 to vector<8x128xf32>
    %666 = arith.mulf %51, %665 : vector<8x128xf32>
    %667 = arith.addf %663, %666 : vector<8x128xf32>
    %c119 = arith.constant 119 : index
    %668 = memref.load %arg1[%c119] : memref<474xf32, #tpu.memory_space<smem>>
    %669 = vector.broadcast %668 : f32 to vector<8x128xf32>
    %670 = arith.mulf %62, %669 : vector<8x128xf32>
    %671 = arith.addf %667, %670 : vector<8x128xf32>
    %c135 = arith.constant 135 : index
    %672 = memref.load %arg1[%c135] : memref<474xf32, #tpu.memory_space<smem>>
    %673 = vector.broadcast %672 : f32 to vector<8x128xf32>
    %674 = arith.mulf %73, %673 : vector<8x128xf32>
    %675 = arith.addf %671, %674 : vector<8x128xf32>
    %c151 = arith.constant 151 : index
    %676 = memref.load %arg1[%c151] : memref<474xf32, #tpu.memory_space<smem>>
    %677 = vector.broadcast %676 : f32 to vector<8x128xf32>
    %678 = arith.mulf %84, %677 : vector<8x128xf32>
    %679 = arith.addf %675, %678 : vector<8x128xf32>
    %c167 = arith.constant 167 : index
    %680 = memref.load %arg1[%c167] : memref<474xf32, #tpu.memory_space<smem>>
    %681 = vector.broadcast %680 : f32 to vector<8x128xf32>
    %682 = arith.mulf %95, %681 : vector<8x128xf32>
    %683 = arith.addf %679, %682 : vector<8x128xf32>
    %c183 = arith.constant 183 : index
    %684 = memref.load %arg1[%c183] : memref<474xf32, #tpu.memory_space<smem>>
    %685 = vector.broadcast %684 : f32 to vector<8x128xf32>
    %686 = arith.mulf %106, %685 : vector<8x128xf32>
    %687 = arith.addf %683, %686 : vector<8x128xf32>
    %c199 = arith.constant 199 : index
    %688 = memref.load %arg1[%c199] : memref<474xf32, #tpu.memory_space<smem>>
    %689 = vector.broadcast %688 : f32 to vector<8x128xf32>
    %690 = arith.mulf %117, %689 : vector<8x128xf32>
    %691 = arith.addf %687, %690 : vector<8x128xf32>
    %c215 = arith.constant 215 : index
    %692 = memref.load %arg1[%c215] : memref<474xf32, #tpu.memory_space<smem>>
    %693 = vector.broadcast %692 : f32 to vector<8x128xf32>
    %694 = arith.mulf %128, %693 : vector<8x128xf32>
    %695 = arith.addf %691, %694 : vector<8x128xf32>
    %c231 = arith.constant 231 : index
    %696 = memref.load %arg1[%c231] : memref<474xf32, #tpu.memory_space<smem>>
    %697 = vector.broadcast %696 : f32 to vector<8x128xf32>
    %698 = arith.mulf %139, %697 : vector<8x128xf32>
    %699 = arith.addf %695, %698 : vector<8x128xf32>
    %c247 = arith.constant 247 : index
    %700 = memref.load %arg1[%c247] : memref<474xf32, #tpu.memory_space<smem>>
    %701 = vector.broadcast %700 : f32 to vector<8x128xf32>
    %702 = arith.mulf %150, %701 : vector<8x128xf32>
    %703 = arith.addf %699, %702 : vector<8x128xf32>
    %c263 = arith.constant 263 : index
    %704 = memref.load %arg1[%c263] : memref<474xf32, #tpu.memory_space<smem>>
    %705 = vector.broadcast %704 : f32 to vector<8x128xf32>
    %706 = arith.mulf %161, %705 : vector<8x128xf32>
    %707 = arith.addf %703, %706 : vector<8x128xf32>
    %c279 = arith.constant 279 : index
    %708 = memref.load %arg1[%c279] : memref<474xf32, #tpu.memory_space<smem>>
    %709 = vector.broadcast %708 : f32 to vector<8x128xf32>
    %710 = arith.mulf %172, %709 : vector<8x128xf32>
    %711 = arith.addf %707, %710 : vector<8x128xf32>
    %c295 = arith.constant 295 : index
    %712 = memref.load %arg1[%c295] : memref<474xf32, #tpu.memory_space<smem>>
    %713 = vector.broadcast %712 : f32 to vector<8x128xf32>
    %714 = arith.mulf %183, %713 : vector<8x128xf32>
    %715 = arith.addf %711, %714 : vector<8x128xf32>
    %c311 = arith.constant 311 : index
    %716 = memref.load %arg1[%c311] : memref<474xf32, #tpu.memory_space<smem>>
    %717 = vector.broadcast %716 : f32 to vector<8x128xf32>
    %718 = arith.addf %715, %717 : vector<8x128xf32>
    %719 = math.tanh %718 : vector<8x128xf32>
    %c56 = arith.constant 56 : index
    %720 = memref.load %arg1[%c56] : memref<474xf32, #tpu.memory_space<smem>>
    %721 = vector.broadcast %720 : f32 to vector<8x128xf32>
    %722 = arith.mulf %18, %721 : vector<8x128xf32>
    %c72 = arith.constant 72 : index
    %723 = memref.load %arg1[%c72] : memref<474xf32, #tpu.memory_space<smem>>
    %724 = vector.broadcast %723 : f32 to vector<8x128xf32>
    %725 = arith.mulf %29, %724 : vector<8x128xf32>
    %726 = arith.addf %722, %725 : vector<8x128xf32>
    %c88 = arith.constant 88 : index
    %727 = memref.load %arg1[%c88] : memref<474xf32, #tpu.memory_space<smem>>
    %728 = vector.broadcast %727 : f32 to vector<8x128xf32>
    %729 = arith.mulf %40, %728 : vector<8x128xf32>
    %730 = arith.addf %726, %729 : vector<8x128xf32>
    %c104 = arith.constant 104 : index
    %731 = memref.load %arg1[%c104] : memref<474xf32, #tpu.memory_space<smem>>
    %732 = vector.broadcast %731 : f32 to vector<8x128xf32>
    %733 = arith.mulf %51, %732 : vector<8x128xf32>
    %734 = arith.addf %730, %733 : vector<8x128xf32>
    %c120 = arith.constant 120 : index
    %735 = memref.load %arg1[%c120] : memref<474xf32, #tpu.memory_space<smem>>
    %736 = vector.broadcast %735 : f32 to vector<8x128xf32>
    %737 = arith.mulf %62, %736 : vector<8x128xf32>
    %738 = arith.addf %734, %737 : vector<8x128xf32>
    %c136 = arith.constant 136 : index
    %739 = memref.load %arg1[%c136] : memref<474xf32, #tpu.memory_space<smem>>
    %740 = vector.broadcast %739 : f32 to vector<8x128xf32>
    %741 = arith.mulf %73, %740 : vector<8x128xf32>
    %742 = arith.addf %738, %741 : vector<8x128xf32>
    %c152 = arith.constant 152 : index
    %743 = memref.load %arg1[%c152] : memref<474xf32, #tpu.memory_space<smem>>
    %744 = vector.broadcast %743 : f32 to vector<8x128xf32>
    %745 = arith.mulf %84, %744 : vector<8x128xf32>
    %746 = arith.addf %742, %745 : vector<8x128xf32>
    %c168 = arith.constant 168 : index
    %747 = memref.load %arg1[%c168] : memref<474xf32, #tpu.memory_space<smem>>
    %748 = vector.broadcast %747 : f32 to vector<8x128xf32>
    %749 = arith.mulf %95, %748 : vector<8x128xf32>
    %750 = arith.addf %746, %749 : vector<8x128xf32>
    %c184 = arith.constant 184 : index
    %751 = memref.load %arg1[%c184] : memref<474xf32, #tpu.memory_space<smem>>
    %752 = vector.broadcast %751 : f32 to vector<8x128xf32>
    %753 = arith.mulf %106, %752 : vector<8x128xf32>
    %754 = arith.addf %750, %753 : vector<8x128xf32>
    %c200 = arith.constant 200 : index
    %755 = memref.load %arg1[%c200] : memref<474xf32, #tpu.memory_space<smem>>
    %756 = vector.broadcast %755 : f32 to vector<8x128xf32>
    %757 = arith.mulf %117, %756 : vector<8x128xf32>
    %758 = arith.addf %754, %757 : vector<8x128xf32>
    %c216 = arith.constant 216 : index
    %759 = memref.load %arg1[%c216] : memref<474xf32, #tpu.memory_space<smem>>
    %760 = vector.broadcast %759 : f32 to vector<8x128xf32>
    %761 = arith.mulf %128, %760 : vector<8x128xf32>
    %762 = arith.addf %758, %761 : vector<8x128xf32>
    %c232 = arith.constant 232 : index
    %763 = memref.load %arg1[%c232] : memref<474xf32, #tpu.memory_space<smem>>
    %764 = vector.broadcast %763 : f32 to vector<8x128xf32>
    %765 = arith.mulf %139, %764 : vector<8x128xf32>
    %766 = arith.addf %762, %765 : vector<8x128xf32>
    %c248 = arith.constant 248 : index
    %767 = memref.load %arg1[%c248] : memref<474xf32, #tpu.memory_space<smem>>
    %768 = vector.broadcast %767 : f32 to vector<8x128xf32>
    %769 = arith.mulf %150, %768 : vector<8x128xf32>
    %770 = arith.addf %766, %769 : vector<8x128xf32>
    %c264 = arith.constant 264 : index
    %771 = memref.load %arg1[%c264] : memref<474xf32, #tpu.memory_space<smem>>
    %772 = vector.broadcast %771 : f32 to vector<8x128xf32>
    %773 = arith.mulf %161, %772 : vector<8x128xf32>
    %774 = arith.addf %770, %773 : vector<8x128xf32>
    %c280 = arith.constant 280 : index
    %775 = memref.load %arg1[%c280] : memref<474xf32, #tpu.memory_space<smem>>
    %776 = vector.broadcast %775 : f32 to vector<8x128xf32>
    %777 = arith.mulf %172, %776 : vector<8x128xf32>
    %778 = arith.addf %774, %777 : vector<8x128xf32>
    %c296 = arith.constant 296 : index
    %779 = memref.load %arg1[%c296] : memref<474xf32, #tpu.memory_space<smem>>
    %780 = vector.broadcast %779 : f32 to vector<8x128xf32>
    %781 = arith.mulf %183, %780 : vector<8x128xf32>
    %782 = arith.addf %778, %781 : vector<8x128xf32>
    %c312 = arith.constant 312 : index
    %783 = memref.load %arg1[%c312] : memref<474xf32, #tpu.memory_space<smem>>
    %784 = vector.broadcast %783 : f32 to vector<8x128xf32>
    %785 = arith.addf %782, %784 : vector<8x128xf32>
    %786 = math.tanh %785 : vector<8x128xf32>
    %c57 = arith.constant 57 : index
    %787 = memref.load %arg1[%c57] : memref<474xf32, #tpu.memory_space<smem>>
    %788 = vector.broadcast %787 : f32 to vector<8x128xf32>
    %789 = arith.mulf %18, %788 : vector<8x128xf32>
    %c73 = arith.constant 73 : index
    %790 = memref.load %arg1[%c73] : memref<474xf32, #tpu.memory_space<smem>>
    %791 = vector.broadcast %790 : f32 to vector<8x128xf32>
    %792 = arith.mulf %29, %791 : vector<8x128xf32>
    %793 = arith.addf %789, %792 : vector<8x128xf32>
    %c89 = arith.constant 89 : index
    %794 = memref.load %arg1[%c89] : memref<474xf32, #tpu.memory_space<smem>>
    %795 = vector.broadcast %794 : f32 to vector<8x128xf32>
    %796 = arith.mulf %40, %795 : vector<8x128xf32>
    %797 = arith.addf %793, %796 : vector<8x128xf32>
    %c105 = arith.constant 105 : index
    %798 = memref.load %arg1[%c105] : memref<474xf32, #tpu.memory_space<smem>>
    %799 = vector.broadcast %798 : f32 to vector<8x128xf32>
    %800 = arith.mulf %51, %799 : vector<8x128xf32>
    %801 = arith.addf %797, %800 : vector<8x128xf32>
    %c121 = arith.constant 121 : index
    %802 = memref.load %arg1[%c121] : memref<474xf32, #tpu.memory_space<smem>>
    %803 = vector.broadcast %802 : f32 to vector<8x128xf32>
    %804 = arith.mulf %62, %803 : vector<8x128xf32>
    %805 = arith.addf %801, %804 : vector<8x128xf32>
    %c137 = arith.constant 137 : index
    %806 = memref.load %arg1[%c137] : memref<474xf32, #tpu.memory_space<smem>>
    %807 = vector.broadcast %806 : f32 to vector<8x128xf32>
    %808 = arith.mulf %73, %807 : vector<8x128xf32>
    %809 = arith.addf %805, %808 : vector<8x128xf32>
    %c153 = arith.constant 153 : index
    %810 = memref.load %arg1[%c153] : memref<474xf32, #tpu.memory_space<smem>>
    %811 = vector.broadcast %810 : f32 to vector<8x128xf32>
    %812 = arith.mulf %84, %811 : vector<8x128xf32>
    %813 = arith.addf %809, %812 : vector<8x128xf32>
    %c169 = arith.constant 169 : index
    %814 = memref.load %arg1[%c169] : memref<474xf32, #tpu.memory_space<smem>>
    %815 = vector.broadcast %814 : f32 to vector<8x128xf32>
    %816 = arith.mulf %95, %815 : vector<8x128xf32>
    %817 = arith.addf %813, %816 : vector<8x128xf32>
    %c185 = arith.constant 185 : index
    %818 = memref.load %arg1[%c185] : memref<474xf32, #tpu.memory_space<smem>>
    %819 = vector.broadcast %818 : f32 to vector<8x128xf32>
    %820 = arith.mulf %106, %819 : vector<8x128xf32>
    %821 = arith.addf %817, %820 : vector<8x128xf32>
    %c201 = arith.constant 201 : index
    %822 = memref.load %arg1[%c201] : memref<474xf32, #tpu.memory_space<smem>>
    %823 = vector.broadcast %822 : f32 to vector<8x128xf32>
    %824 = arith.mulf %117, %823 : vector<8x128xf32>
    %825 = arith.addf %821, %824 : vector<8x128xf32>
    %c217 = arith.constant 217 : index
    %826 = memref.load %arg1[%c217] : memref<474xf32, #tpu.memory_space<smem>>
    %827 = vector.broadcast %826 : f32 to vector<8x128xf32>
    %828 = arith.mulf %128, %827 : vector<8x128xf32>
    %829 = arith.addf %825, %828 : vector<8x128xf32>
    %c233 = arith.constant 233 : index
    %830 = memref.load %arg1[%c233] : memref<474xf32, #tpu.memory_space<smem>>
    %831 = vector.broadcast %830 : f32 to vector<8x128xf32>
    %832 = arith.mulf %139, %831 : vector<8x128xf32>
    %833 = arith.addf %829, %832 : vector<8x128xf32>
    %c249 = arith.constant 249 : index
    %834 = memref.load %arg1[%c249] : memref<474xf32, #tpu.memory_space<smem>>
    %835 = vector.broadcast %834 : f32 to vector<8x128xf32>
    %836 = arith.mulf %150, %835 : vector<8x128xf32>
    %837 = arith.addf %833, %836 : vector<8x128xf32>
    %c265 = arith.constant 265 : index
    %838 = memref.load %arg1[%c265] : memref<474xf32, #tpu.memory_space<smem>>
    %839 = vector.broadcast %838 : f32 to vector<8x128xf32>
    %840 = arith.mulf %161, %839 : vector<8x128xf32>
    %841 = arith.addf %837, %840 : vector<8x128xf32>
    %c281 = arith.constant 281 : index
    %842 = memref.load %arg1[%c281] : memref<474xf32, #tpu.memory_space<smem>>
    %843 = vector.broadcast %842 : f32 to vector<8x128xf32>
    %844 = arith.mulf %172, %843 : vector<8x128xf32>
    %845 = arith.addf %841, %844 : vector<8x128xf32>
    %c297 = arith.constant 297 : index
    %846 = memref.load %arg1[%c297] : memref<474xf32, #tpu.memory_space<smem>>
    %847 = vector.broadcast %846 : f32 to vector<8x128xf32>
    %848 = arith.mulf %183, %847 : vector<8x128xf32>
    %849 = arith.addf %845, %848 : vector<8x128xf32>
    %c313 = arith.constant 313 : index
    %850 = memref.load %arg1[%c313] : memref<474xf32, #tpu.memory_space<smem>>
    %851 = vector.broadcast %850 : f32 to vector<8x128xf32>
    %852 = arith.addf %849, %851 : vector<8x128xf32>
    %853 = math.tanh %852 : vector<8x128xf32>
    %c58 = arith.constant 58 : index
    %854 = memref.load %arg1[%c58] : memref<474xf32, #tpu.memory_space<smem>>
    %855 = vector.broadcast %854 : f32 to vector<8x128xf32>
    %856 = arith.mulf %18, %855 : vector<8x128xf32>
    %c74 = arith.constant 74 : index
    %857 = memref.load %arg1[%c74] : memref<474xf32, #tpu.memory_space<smem>>
    %858 = vector.broadcast %857 : f32 to vector<8x128xf32>
    %859 = arith.mulf %29, %858 : vector<8x128xf32>
    %860 = arith.addf %856, %859 : vector<8x128xf32>
    %c90 = arith.constant 90 : index
    %861 = memref.load %arg1[%c90] : memref<474xf32, #tpu.memory_space<smem>>
    %862 = vector.broadcast %861 : f32 to vector<8x128xf32>
    %863 = arith.mulf %40, %862 : vector<8x128xf32>
    %864 = arith.addf %860, %863 : vector<8x128xf32>
    %c106 = arith.constant 106 : index
    %865 = memref.load %arg1[%c106] : memref<474xf32, #tpu.memory_space<smem>>
    %866 = vector.broadcast %865 : f32 to vector<8x128xf32>
    %867 = arith.mulf %51, %866 : vector<8x128xf32>
    %868 = arith.addf %864, %867 : vector<8x128xf32>
    %c122 = arith.constant 122 : index
    %869 = memref.load %arg1[%c122] : memref<474xf32, #tpu.memory_space<smem>>
    %870 = vector.broadcast %869 : f32 to vector<8x128xf32>
    %871 = arith.mulf %62, %870 : vector<8x128xf32>
    %872 = arith.addf %868, %871 : vector<8x128xf32>
    %c138 = arith.constant 138 : index
    %873 = memref.load %arg1[%c138] : memref<474xf32, #tpu.memory_space<smem>>
    %874 = vector.broadcast %873 : f32 to vector<8x128xf32>
    %875 = arith.mulf %73, %874 : vector<8x128xf32>
    %876 = arith.addf %872, %875 : vector<8x128xf32>
    %c154 = arith.constant 154 : index
    %877 = memref.load %arg1[%c154] : memref<474xf32, #tpu.memory_space<smem>>
    %878 = vector.broadcast %877 : f32 to vector<8x128xf32>
    %879 = arith.mulf %84, %878 : vector<8x128xf32>
    %880 = arith.addf %876, %879 : vector<8x128xf32>
    %c170 = arith.constant 170 : index
    %881 = memref.load %arg1[%c170] : memref<474xf32, #tpu.memory_space<smem>>
    %882 = vector.broadcast %881 : f32 to vector<8x128xf32>
    %883 = arith.mulf %95, %882 : vector<8x128xf32>
    %884 = arith.addf %880, %883 : vector<8x128xf32>
    %c186 = arith.constant 186 : index
    %885 = memref.load %arg1[%c186] : memref<474xf32, #tpu.memory_space<smem>>
    %886 = vector.broadcast %885 : f32 to vector<8x128xf32>
    %887 = arith.mulf %106, %886 : vector<8x128xf32>
    %888 = arith.addf %884, %887 : vector<8x128xf32>
    %c202 = arith.constant 202 : index
    %889 = memref.load %arg1[%c202] : memref<474xf32, #tpu.memory_space<smem>>
    %890 = vector.broadcast %889 : f32 to vector<8x128xf32>
    %891 = arith.mulf %117, %890 : vector<8x128xf32>
    %892 = arith.addf %888, %891 : vector<8x128xf32>
    %c218 = arith.constant 218 : index
    %893 = memref.load %arg1[%c218] : memref<474xf32, #tpu.memory_space<smem>>
    %894 = vector.broadcast %893 : f32 to vector<8x128xf32>
    %895 = arith.mulf %128, %894 : vector<8x128xf32>
    %896 = arith.addf %892, %895 : vector<8x128xf32>
    %c234 = arith.constant 234 : index
    %897 = memref.load %arg1[%c234] : memref<474xf32, #tpu.memory_space<smem>>
    %898 = vector.broadcast %897 : f32 to vector<8x128xf32>
    %899 = arith.mulf %139, %898 : vector<8x128xf32>
    %900 = arith.addf %896, %899 : vector<8x128xf32>
    %c250 = arith.constant 250 : index
    %901 = memref.load %arg1[%c250] : memref<474xf32, #tpu.memory_space<smem>>
    %902 = vector.broadcast %901 : f32 to vector<8x128xf32>
    %903 = arith.mulf %150, %902 : vector<8x128xf32>
    %904 = arith.addf %900, %903 : vector<8x128xf32>
    %c266 = arith.constant 266 : index
    %905 = memref.load %arg1[%c266] : memref<474xf32, #tpu.memory_space<smem>>
    %906 = vector.broadcast %905 : f32 to vector<8x128xf32>
    %907 = arith.mulf %161, %906 : vector<8x128xf32>
    %908 = arith.addf %904, %907 : vector<8x128xf32>
    %c282 = arith.constant 282 : index
    %909 = memref.load %arg1[%c282] : memref<474xf32, #tpu.memory_space<smem>>
    %910 = vector.broadcast %909 : f32 to vector<8x128xf32>
    %911 = arith.mulf %172, %910 : vector<8x128xf32>
    %912 = arith.addf %908, %911 : vector<8x128xf32>
    %c298 = arith.constant 298 : index
    %913 = memref.load %arg1[%c298] : memref<474xf32, #tpu.memory_space<smem>>
    %914 = vector.broadcast %913 : f32 to vector<8x128xf32>
    %915 = arith.mulf %183, %914 : vector<8x128xf32>
    %916 = arith.addf %912, %915 : vector<8x128xf32>
    %c314 = arith.constant 314 : index
    %917 = memref.load %arg1[%c314] : memref<474xf32, #tpu.memory_space<smem>>
    %918 = vector.broadcast %917 : f32 to vector<8x128xf32>
    %919 = arith.addf %916, %918 : vector<8x128xf32>
    %920 = math.tanh %919 : vector<8x128xf32>
    %c59 = arith.constant 59 : index
    %921 = memref.load %arg1[%c59] : memref<474xf32, #tpu.memory_space<smem>>
    %922 = vector.broadcast %921 : f32 to vector<8x128xf32>
    %923 = arith.mulf %18, %922 : vector<8x128xf32>
    %c75 = arith.constant 75 : index
    %924 = memref.load %arg1[%c75] : memref<474xf32, #tpu.memory_space<smem>>
    %925 = vector.broadcast %924 : f32 to vector<8x128xf32>
    %926 = arith.mulf %29, %925 : vector<8x128xf32>
    %927 = arith.addf %923, %926 : vector<8x128xf32>
    %c91 = arith.constant 91 : index
    %928 = memref.load %arg1[%c91] : memref<474xf32, #tpu.memory_space<smem>>
    %929 = vector.broadcast %928 : f32 to vector<8x128xf32>
    %930 = arith.mulf %40, %929 : vector<8x128xf32>
    %931 = arith.addf %927, %930 : vector<8x128xf32>
    %c107 = arith.constant 107 : index
    %932 = memref.load %arg1[%c107] : memref<474xf32, #tpu.memory_space<smem>>
    %933 = vector.broadcast %932 : f32 to vector<8x128xf32>
    %934 = arith.mulf %51, %933 : vector<8x128xf32>
    %935 = arith.addf %931, %934 : vector<8x128xf32>
    %c123 = arith.constant 123 : index
    %936 = memref.load %arg1[%c123] : memref<474xf32, #tpu.memory_space<smem>>
    %937 = vector.broadcast %936 : f32 to vector<8x128xf32>
    %938 = arith.mulf %62, %937 : vector<8x128xf32>
    %939 = arith.addf %935, %938 : vector<8x128xf32>
    %c139 = arith.constant 139 : index
    %940 = memref.load %arg1[%c139] : memref<474xf32, #tpu.memory_space<smem>>
    %941 = vector.broadcast %940 : f32 to vector<8x128xf32>
    %942 = arith.mulf %73, %941 : vector<8x128xf32>
    %943 = arith.addf %939, %942 : vector<8x128xf32>
    %c155 = arith.constant 155 : index
    %944 = memref.load %arg1[%c155] : memref<474xf32, #tpu.memory_space<smem>>
    %945 = vector.broadcast %944 : f32 to vector<8x128xf32>
    %946 = arith.mulf %84, %945 : vector<8x128xf32>
    %947 = arith.addf %943, %946 : vector<8x128xf32>
    %c171 = arith.constant 171 : index
    %948 = memref.load %arg1[%c171] : memref<474xf32, #tpu.memory_space<smem>>
    %949 = vector.broadcast %948 : f32 to vector<8x128xf32>
    %950 = arith.mulf %95, %949 : vector<8x128xf32>
    %951 = arith.addf %947, %950 : vector<8x128xf32>
    %c187 = arith.constant 187 : index
    %952 = memref.load %arg1[%c187] : memref<474xf32, #tpu.memory_space<smem>>
    %953 = vector.broadcast %952 : f32 to vector<8x128xf32>
    %954 = arith.mulf %106, %953 : vector<8x128xf32>
    %955 = arith.addf %951, %954 : vector<8x128xf32>
    %c203 = arith.constant 203 : index
    %956 = memref.load %arg1[%c203] : memref<474xf32, #tpu.memory_space<smem>>
    %957 = vector.broadcast %956 : f32 to vector<8x128xf32>
    %958 = arith.mulf %117, %957 : vector<8x128xf32>
    %959 = arith.addf %955, %958 : vector<8x128xf32>
    %c219 = arith.constant 219 : index
    %960 = memref.load %arg1[%c219] : memref<474xf32, #tpu.memory_space<smem>>
    %961 = vector.broadcast %960 : f32 to vector<8x128xf32>
    %962 = arith.mulf %128, %961 : vector<8x128xf32>
    %963 = arith.addf %959, %962 : vector<8x128xf32>
    %c235 = arith.constant 235 : index
    %964 = memref.load %arg1[%c235] : memref<474xf32, #tpu.memory_space<smem>>
    %965 = vector.broadcast %964 : f32 to vector<8x128xf32>
    %966 = arith.mulf %139, %965 : vector<8x128xf32>
    %967 = arith.addf %963, %966 : vector<8x128xf32>
    %c251 = arith.constant 251 : index
    %968 = memref.load %arg1[%c251] : memref<474xf32, #tpu.memory_space<smem>>
    %969 = vector.broadcast %968 : f32 to vector<8x128xf32>
    %970 = arith.mulf %150, %969 : vector<8x128xf32>
    %971 = arith.addf %967, %970 : vector<8x128xf32>
    %c267 = arith.constant 267 : index
    %972 = memref.load %arg1[%c267] : memref<474xf32, #tpu.memory_space<smem>>
    %973 = vector.broadcast %972 : f32 to vector<8x128xf32>
    %974 = arith.mulf %161, %973 : vector<8x128xf32>
    %975 = arith.addf %971, %974 : vector<8x128xf32>
    %c283 = arith.constant 283 : index
    %976 = memref.load %arg1[%c283] : memref<474xf32, #tpu.memory_space<smem>>
    %977 = vector.broadcast %976 : f32 to vector<8x128xf32>
    %978 = arith.mulf %172, %977 : vector<8x128xf32>
    %979 = arith.addf %975, %978 : vector<8x128xf32>
    %c299 = arith.constant 299 : index
    %980 = memref.load %arg1[%c299] : memref<474xf32, #tpu.memory_space<smem>>
    %981 = vector.broadcast %980 : f32 to vector<8x128xf32>
    %982 = arith.mulf %183, %981 : vector<8x128xf32>
    %983 = arith.addf %979, %982 : vector<8x128xf32>
    %c315 = arith.constant 315 : index
    %984 = memref.load %arg1[%c315] : memref<474xf32, #tpu.memory_space<smem>>
    %985 = vector.broadcast %984 : f32 to vector<8x128xf32>
    %986 = arith.addf %983, %985 : vector<8x128xf32>
    %987 = math.tanh %986 : vector<8x128xf32>
    %c60 = arith.constant 60 : index
    %988 = memref.load %arg1[%c60] : memref<474xf32, #tpu.memory_space<smem>>
    %989 = vector.broadcast %988 : f32 to vector<8x128xf32>
    %990 = arith.mulf %18, %989 : vector<8x128xf32>
    %c76 = arith.constant 76 : index
    %991 = memref.load %arg1[%c76] : memref<474xf32, #tpu.memory_space<smem>>
    %992 = vector.broadcast %991 : f32 to vector<8x128xf32>
    %993 = arith.mulf %29, %992 : vector<8x128xf32>
    %994 = arith.addf %990, %993 : vector<8x128xf32>
    %c92 = arith.constant 92 : index
    %995 = memref.load %arg1[%c92] : memref<474xf32, #tpu.memory_space<smem>>
    %996 = vector.broadcast %995 : f32 to vector<8x128xf32>
    %997 = arith.mulf %40, %996 : vector<8x128xf32>
    %998 = arith.addf %994, %997 : vector<8x128xf32>
    %c108 = arith.constant 108 : index
    %999 = memref.load %arg1[%c108] : memref<474xf32, #tpu.memory_space<smem>>
    %1000 = vector.broadcast %999 : f32 to vector<8x128xf32>
    %1001 = arith.mulf %51, %1000 : vector<8x128xf32>
    %1002 = arith.addf %998, %1001 : vector<8x128xf32>
    %c124 = arith.constant 124 : index
    %1003 = memref.load %arg1[%c124] : memref<474xf32, #tpu.memory_space<smem>>
    %1004 = vector.broadcast %1003 : f32 to vector<8x128xf32>
    %1005 = arith.mulf %62, %1004 : vector<8x128xf32>
    %1006 = arith.addf %1002, %1005 : vector<8x128xf32>
    %c140 = arith.constant 140 : index
    %1007 = memref.load %arg1[%c140] : memref<474xf32, #tpu.memory_space<smem>>
    %1008 = vector.broadcast %1007 : f32 to vector<8x128xf32>
    %1009 = arith.mulf %73, %1008 : vector<8x128xf32>
    %1010 = arith.addf %1006, %1009 : vector<8x128xf32>
    %c156 = arith.constant 156 : index
    %1011 = memref.load %arg1[%c156] : memref<474xf32, #tpu.memory_space<smem>>
    %1012 = vector.broadcast %1011 : f32 to vector<8x128xf32>
    %1013 = arith.mulf %84, %1012 : vector<8x128xf32>
    %1014 = arith.addf %1010, %1013 : vector<8x128xf32>
    %c172 = arith.constant 172 : index
    %1015 = memref.load %arg1[%c172] : memref<474xf32, #tpu.memory_space<smem>>
    %1016 = vector.broadcast %1015 : f32 to vector<8x128xf32>
    %1017 = arith.mulf %95, %1016 : vector<8x128xf32>
    %1018 = arith.addf %1014, %1017 : vector<8x128xf32>
    %c188 = arith.constant 188 : index
    %1019 = memref.load %arg1[%c188] : memref<474xf32, #tpu.memory_space<smem>>
    %1020 = vector.broadcast %1019 : f32 to vector<8x128xf32>
    %1021 = arith.mulf %106, %1020 : vector<8x128xf32>
    %1022 = arith.addf %1018, %1021 : vector<8x128xf32>
    %c204 = arith.constant 204 : index
    %1023 = memref.load %arg1[%c204] : memref<474xf32, #tpu.memory_space<smem>>
    %1024 = vector.broadcast %1023 : f32 to vector<8x128xf32>
    %1025 = arith.mulf %117, %1024 : vector<8x128xf32>
    %1026 = arith.addf %1022, %1025 : vector<8x128xf32>
    %c220 = arith.constant 220 : index
    %1027 = memref.load %arg1[%c220] : memref<474xf32, #tpu.memory_space<smem>>
    %1028 = vector.broadcast %1027 : f32 to vector<8x128xf32>
    %1029 = arith.mulf %128, %1028 : vector<8x128xf32>
    %1030 = arith.addf %1026, %1029 : vector<8x128xf32>
    %c236 = arith.constant 236 : index
    %1031 = memref.load %arg1[%c236] : memref<474xf32, #tpu.memory_space<smem>>
    %1032 = vector.broadcast %1031 : f32 to vector<8x128xf32>
    %1033 = arith.mulf %139, %1032 : vector<8x128xf32>
    %1034 = arith.addf %1030, %1033 : vector<8x128xf32>
    %c252 = arith.constant 252 : index
    %1035 = memref.load %arg1[%c252] : memref<474xf32, #tpu.memory_space<smem>>
    %1036 = vector.broadcast %1035 : f32 to vector<8x128xf32>
    %1037 = arith.mulf %150, %1036 : vector<8x128xf32>
    %1038 = arith.addf %1034, %1037 : vector<8x128xf32>
    %c268 = arith.constant 268 : index
    %1039 = memref.load %arg1[%c268] : memref<474xf32, #tpu.memory_space<smem>>
    %1040 = vector.broadcast %1039 : f32 to vector<8x128xf32>
    %1041 = arith.mulf %161, %1040 : vector<8x128xf32>
    %1042 = arith.addf %1038, %1041 : vector<8x128xf32>
    %c284 = arith.constant 284 : index
    %1043 = memref.load %arg1[%c284] : memref<474xf32, #tpu.memory_space<smem>>
    %1044 = vector.broadcast %1043 : f32 to vector<8x128xf32>
    %1045 = arith.mulf %172, %1044 : vector<8x128xf32>
    %1046 = arith.addf %1042, %1045 : vector<8x128xf32>
    %c300 = arith.constant 300 : index
    %1047 = memref.load %arg1[%c300] : memref<474xf32, #tpu.memory_space<smem>>
    %1048 = vector.broadcast %1047 : f32 to vector<8x128xf32>
    %1049 = arith.mulf %183, %1048 : vector<8x128xf32>
    %1050 = arith.addf %1046, %1049 : vector<8x128xf32>
    %c316 = arith.constant 316 : index
    %1051 = memref.load %arg1[%c316] : memref<474xf32, #tpu.memory_space<smem>>
    %1052 = vector.broadcast %1051 : f32 to vector<8x128xf32>
    %1053 = arith.addf %1050, %1052 : vector<8x128xf32>
    %1054 = math.tanh %1053 : vector<8x128xf32>
    %c61 = arith.constant 61 : index
    %1055 = memref.load %arg1[%c61] : memref<474xf32, #tpu.memory_space<smem>>
    %1056 = vector.broadcast %1055 : f32 to vector<8x128xf32>
    %1057 = arith.mulf %18, %1056 : vector<8x128xf32>
    %c77 = arith.constant 77 : index
    %1058 = memref.load %arg1[%c77] : memref<474xf32, #tpu.memory_space<smem>>
    %1059 = vector.broadcast %1058 : f32 to vector<8x128xf32>
    %1060 = arith.mulf %29, %1059 : vector<8x128xf32>
    %1061 = arith.addf %1057, %1060 : vector<8x128xf32>
    %c93 = arith.constant 93 : index
    %1062 = memref.load %arg1[%c93] : memref<474xf32, #tpu.memory_space<smem>>
    %1063 = vector.broadcast %1062 : f32 to vector<8x128xf32>
    %1064 = arith.mulf %40, %1063 : vector<8x128xf32>
    %1065 = arith.addf %1061, %1064 : vector<8x128xf32>
    %c109 = arith.constant 109 : index
    %1066 = memref.load %arg1[%c109] : memref<474xf32, #tpu.memory_space<smem>>
    %1067 = vector.broadcast %1066 : f32 to vector<8x128xf32>
    %1068 = arith.mulf %51, %1067 : vector<8x128xf32>
    %1069 = arith.addf %1065, %1068 : vector<8x128xf32>
    %c125 = arith.constant 125 : index
    %1070 = memref.load %arg1[%c125] : memref<474xf32, #tpu.memory_space<smem>>
    %1071 = vector.broadcast %1070 : f32 to vector<8x128xf32>
    %1072 = arith.mulf %62, %1071 : vector<8x128xf32>
    %1073 = arith.addf %1069, %1072 : vector<8x128xf32>
    %c141 = arith.constant 141 : index
    %1074 = memref.load %arg1[%c141] : memref<474xf32, #tpu.memory_space<smem>>
    %1075 = vector.broadcast %1074 : f32 to vector<8x128xf32>
    %1076 = arith.mulf %73, %1075 : vector<8x128xf32>
    %1077 = arith.addf %1073, %1076 : vector<8x128xf32>
    %c157 = arith.constant 157 : index
    %1078 = memref.load %arg1[%c157] : memref<474xf32, #tpu.memory_space<smem>>
    %1079 = vector.broadcast %1078 : f32 to vector<8x128xf32>
    %1080 = arith.mulf %84, %1079 : vector<8x128xf32>
    %1081 = arith.addf %1077, %1080 : vector<8x128xf32>
    %c173 = arith.constant 173 : index
    %1082 = memref.load %arg1[%c173] : memref<474xf32, #tpu.memory_space<smem>>
    %1083 = vector.broadcast %1082 : f32 to vector<8x128xf32>
    %1084 = arith.mulf %95, %1083 : vector<8x128xf32>
    %1085 = arith.addf %1081, %1084 : vector<8x128xf32>
    %c189 = arith.constant 189 : index
    %1086 = memref.load %arg1[%c189] : memref<474xf32, #tpu.memory_space<smem>>
    %1087 = vector.broadcast %1086 : f32 to vector<8x128xf32>
    %1088 = arith.mulf %106, %1087 : vector<8x128xf32>
    %1089 = arith.addf %1085, %1088 : vector<8x128xf32>
    %c205 = arith.constant 205 : index
    %1090 = memref.load %arg1[%c205] : memref<474xf32, #tpu.memory_space<smem>>
    %1091 = vector.broadcast %1090 : f32 to vector<8x128xf32>
    %1092 = arith.mulf %117, %1091 : vector<8x128xf32>
    %1093 = arith.addf %1089, %1092 : vector<8x128xf32>
    %c221 = arith.constant 221 : index
    %1094 = memref.load %arg1[%c221] : memref<474xf32, #tpu.memory_space<smem>>
    %1095 = vector.broadcast %1094 : f32 to vector<8x128xf32>
    %1096 = arith.mulf %128, %1095 : vector<8x128xf32>
    %1097 = arith.addf %1093, %1096 : vector<8x128xf32>
    %c237 = arith.constant 237 : index
    %1098 = memref.load %arg1[%c237] : memref<474xf32, #tpu.memory_space<smem>>
    %1099 = vector.broadcast %1098 : f32 to vector<8x128xf32>
    %1100 = arith.mulf %139, %1099 : vector<8x128xf32>
    %1101 = arith.addf %1097, %1100 : vector<8x128xf32>
    %c253 = arith.constant 253 : index
    %1102 = memref.load %arg1[%c253] : memref<474xf32, #tpu.memory_space<smem>>
    %1103 = vector.broadcast %1102 : f32 to vector<8x128xf32>
    %1104 = arith.mulf %150, %1103 : vector<8x128xf32>
    %1105 = arith.addf %1101, %1104 : vector<8x128xf32>
    %c269 = arith.constant 269 : index
    %1106 = memref.load %arg1[%c269] : memref<474xf32, #tpu.memory_space<smem>>
    %1107 = vector.broadcast %1106 : f32 to vector<8x128xf32>
    %1108 = arith.mulf %161, %1107 : vector<8x128xf32>
    %1109 = arith.addf %1105, %1108 : vector<8x128xf32>
    %c285 = arith.constant 285 : index
    %1110 = memref.load %arg1[%c285] : memref<474xf32, #tpu.memory_space<smem>>
    %1111 = vector.broadcast %1110 : f32 to vector<8x128xf32>
    %1112 = arith.mulf %172, %1111 : vector<8x128xf32>
    %1113 = arith.addf %1109, %1112 : vector<8x128xf32>
    %c301 = arith.constant 301 : index
    %1114 = memref.load %arg1[%c301] : memref<474xf32, #tpu.memory_space<smem>>
    %1115 = vector.broadcast %1114 : f32 to vector<8x128xf32>
    %1116 = arith.mulf %183, %1115 : vector<8x128xf32>
    %1117 = arith.addf %1113, %1116 : vector<8x128xf32>
    %c317 = arith.constant 317 : index
    %1118 = memref.load %arg1[%c317] : memref<474xf32, #tpu.memory_space<smem>>
    %1119 = vector.broadcast %1118 : f32 to vector<8x128xf32>
    %1120 = arith.addf %1117, %1119 : vector<8x128xf32>
    %1121 = math.tanh %1120 : vector<8x128xf32>
    %c62 = arith.constant 62 : index
    %1122 = memref.load %arg1[%c62] : memref<474xf32, #tpu.memory_space<smem>>
    %1123 = vector.broadcast %1122 : f32 to vector<8x128xf32>
    %1124 = arith.mulf %18, %1123 : vector<8x128xf32>
    %c78 = arith.constant 78 : index
    %1125 = memref.load %arg1[%c78] : memref<474xf32, #tpu.memory_space<smem>>
    %1126 = vector.broadcast %1125 : f32 to vector<8x128xf32>
    %1127 = arith.mulf %29, %1126 : vector<8x128xf32>
    %1128 = arith.addf %1124, %1127 : vector<8x128xf32>
    %c94 = arith.constant 94 : index
    %1129 = memref.load %arg1[%c94] : memref<474xf32, #tpu.memory_space<smem>>
    %1130 = vector.broadcast %1129 : f32 to vector<8x128xf32>
    %1131 = arith.mulf %40, %1130 : vector<8x128xf32>
    %1132 = arith.addf %1128, %1131 : vector<8x128xf32>
    %c110 = arith.constant 110 : index
    %1133 = memref.load %arg1[%c110] : memref<474xf32, #tpu.memory_space<smem>>
    %1134 = vector.broadcast %1133 : f32 to vector<8x128xf32>
    %1135 = arith.mulf %51, %1134 : vector<8x128xf32>
    %1136 = arith.addf %1132, %1135 : vector<8x128xf32>
    %c126 = arith.constant 126 : index
    %1137 = memref.load %arg1[%c126] : memref<474xf32, #tpu.memory_space<smem>>
    %1138 = vector.broadcast %1137 : f32 to vector<8x128xf32>
    %1139 = arith.mulf %62, %1138 : vector<8x128xf32>
    %1140 = arith.addf %1136, %1139 : vector<8x128xf32>
    %c142 = arith.constant 142 : index
    %1141 = memref.load %arg1[%c142] : memref<474xf32, #tpu.memory_space<smem>>
    %1142 = vector.broadcast %1141 : f32 to vector<8x128xf32>
    %1143 = arith.mulf %73, %1142 : vector<8x128xf32>
    %1144 = arith.addf %1140, %1143 : vector<8x128xf32>
    %c158 = arith.constant 158 : index
    %1145 = memref.load %arg1[%c158] : memref<474xf32, #tpu.memory_space<smem>>
    %1146 = vector.broadcast %1145 : f32 to vector<8x128xf32>
    %1147 = arith.mulf %84, %1146 : vector<8x128xf32>
    %1148 = arith.addf %1144, %1147 : vector<8x128xf32>
    %c174 = arith.constant 174 : index
    %1149 = memref.load %arg1[%c174] : memref<474xf32, #tpu.memory_space<smem>>
    %1150 = vector.broadcast %1149 : f32 to vector<8x128xf32>
    %1151 = arith.mulf %95, %1150 : vector<8x128xf32>
    %1152 = arith.addf %1148, %1151 : vector<8x128xf32>
    %c190 = arith.constant 190 : index
    %1153 = memref.load %arg1[%c190] : memref<474xf32, #tpu.memory_space<smem>>
    %1154 = vector.broadcast %1153 : f32 to vector<8x128xf32>
    %1155 = arith.mulf %106, %1154 : vector<8x128xf32>
    %1156 = arith.addf %1152, %1155 : vector<8x128xf32>
    %c206 = arith.constant 206 : index
    %1157 = memref.load %arg1[%c206] : memref<474xf32, #tpu.memory_space<smem>>
    %1158 = vector.broadcast %1157 : f32 to vector<8x128xf32>
    %1159 = arith.mulf %117, %1158 : vector<8x128xf32>
    %1160 = arith.addf %1156, %1159 : vector<8x128xf32>
    %c222 = arith.constant 222 : index
    %1161 = memref.load %arg1[%c222] : memref<474xf32, #tpu.memory_space<smem>>
    %1162 = vector.broadcast %1161 : f32 to vector<8x128xf32>
    %1163 = arith.mulf %128, %1162 : vector<8x128xf32>
    %1164 = arith.addf %1160, %1163 : vector<8x128xf32>
    %c238 = arith.constant 238 : index
    %1165 = memref.load %arg1[%c238] : memref<474xf32, #tpu.memory_space<smem>>
    %1166 = vector.broadcast %1165 : f32 to vector<8x128xf32>
    %1167 = arith.mulf %139, %1166 : vector<8x128xf32>
    %1168 = arith.addf %1164, %1167 : vector<8x128xf32>
    %c254 = arith.constant 254 : index
    %1169 = memref.load %arg1[%c254] : memref<474xf32, #tpu.memory_space<smem>>
    %1170 = vector.broadcast %1169 : f32 to vector<8x128xf32>
    %1171 = arith.mulf %150, %1170 : vector<8x128xf32>
    %1172 = arith.addf %1168, %1171 : vector<8x128xf32>
    %c270 = arith.constant 270 : index
    %1173 = memref.load %arg1[%c270] : memref<474xf32, #tpu.memory_space<smem>>
    %1174 = vector.broadcast %1173 : f32 to vector<8x128xf32>
    %1175 = arith.mulf %161, %1174 : vector<8x128xf32>
    %1176 = arith.addf %1172, %1175 : vector<8x128xf32>
    %c286 = arith.constant 286 : index
    %1177 = memref.load %arg1[%c286] : memref<474xf32, #tpu.memory_space<smem>>
    %1178 = vector.broadcast %1177 : f32 to vector<8x128xf32>
    %1179 = arith.mulf %172, %1178 : vector<8x128xf32>
    %1180 = arith.addf %1176, %1179 : vector<8x128xf32>
    %c302 = arith.constant 302 : index
    %1181 = memref.load %arg1[%c302] : memref<474xf32, #tpu.memory_space<smem>>
    %1182 = vector.broadcast %1181 : f32 to vector<8x128xf32>
    %1183 = arith.mulf %183, %1182 : vector<8x128xf32>
    %1184 = arith.addf %1180, %1183 : vector<8x128xf32>
    %c318 = arith.constant 318 : index
    %1185 = memref.load %arg1[%c318] : memref<474xf32, #tpu.memory_space<smem>>
    %1186 = vector.broadcast %1185 : f32 to vector<8x128xf32>
    %1187 = arith.addf %1184, %1186 : vector<8x128xf32>
    %1188 = math.tanh %1187 : vector<8x128xf32>
    %c63 = arith.constant 63 : index
    %1189 = memref.load %arg1[%c63] : memref<474xf32, #tpu.memory_space<smem>>
    %1190 = vector.broadcast %1189 : f32 to vector<8x128xf32>
    %1191 = arith.mulf %18, %1190 : vector<8x128xf32>
    %c79 = arith.constant 79 : index
    %1192 = memref.load %arg1[%c79] : memref<474xf32, #tpu.memory_space<smem>>
    %1193 = vector.broadcast %1192 : f32 to vector<8x128xf32>
    %1194 = arith.mulf %29, %1193 : vector<8x128xf32>
    %1195 = arith.addf %1191, %1194 : vector<8x128xf32>
    %c95 = arith.constant 95 : index
    %1196 = memref.load %arg1[%c95] : memref<474xf32, #tpu.memory_space<smem>>
    %1197 = vector.broadcast %1196 : f32 to vector<8x128xf32>
    %1198 = arith.mulf %40, %1197 : vector<8x128xf32>
    %1199 = arith.addf %1195, %1198 : vector<8x128xf32>
    %c111 = arith.constant 111 : index
    %1200 = memref.load %arg1[%c111] : memref<474xf32, #tpu.memory_space<smem>>
    %1201 = vector.broadcast %1200 : f32 to vector<8x128xf32>
    %1202 = arith.mulf %51, %1201 : vector<8x128xf32>
    %1203 = arith.addf %1199, %1202 : vector<8x128xf32>
    %c127 = arith.constant 127 : index
    %1204 = memref.load %arg1[%c127] : memref<474xf32, #tpu.memory_space<smem>>
    %1205 = vector.broadcast %1204 : f32 to vector<8x128xf32>
    %1206 = arith.mulf %62, %1205 : vector<8x128xf32>
    %1207 = arith.addf %1203, %1206 : vector<8x128xf32>
    %c143 = arith.constant 143 : index
    %1208 = memref.load %arg1[%c143] : memref<474xf32, #tpu.memory_space<smem>>
    %1209 = vector.broadcast %1208 : f32 to vector<8x128xf32>
    %1210 = arith.mulf %73, %1209 : vector<8x128xf32>
    %1211 = arith.addf %1207, %1210 : vector<8x128xf32>
    %c159 = arith.constant 159 : index
    %1212 = memref.load %arg1[%c159] : memref<474xf32, #tpu.memory_space<smem>>
    %1213 = vector.broadcast %1212 : f32 to vector<8x128xf32>
    %1214 = arith.mulf %84, %1213 : vector<8x128xf32>
    %1215 = arith.addf %1211, %1214 : vector<8x128xf32>
    %c175 = arith.constant 175 : index
    %1216 = memref.load %arg1[%c175] : memref<474xf32, #tpu.memory_space<smem>>
    %1217 = vector.broadcast %1216 : f32 to vector<8x128xf32>
    %1218 = arith.mulf %95, %1217 : vector<8x128xf32>
    %1219 = arith.addf %1215, %1218 : vector<8x128xf32>
    %c191 = arith.constant 191 : index
    %1220 = memref.load %arg1[%c191] : memref<474xf32, #tpu.memory_space<smem>>
    %1221 = vector.broadcast %1220 : f32 to vector<8x128xf32>
    %1222 = arith.mulf %106, %1221 : vector<8x128xf32>
    %1223 = arith.addf %1219, %1222 : vector<8x128xf32>
    %c207 = arith.constant 207 : index
    %1224 = memref.load %arg1[%c207] : memref<474xf32, #tpu.memory_space<smem>>
    %1225 = vector.broadcast %1224 : f32 to vector<8x128xf32>
    %1226 = arith.mulf %117, %1225 : vector<8x128xf32>
    %1227 = arith.addf %1223, %1226 : vector<8x128xf32>
    %c223 = arith.constant 223 : index
    %1228 = memref.load %arg1[%c223] : memref<474xf32, #tpu.memory_space<smem>>
    %1229 = vector.broadcast %1228 : f32 to vector<8x128xf32>
    %1230 = arith.mulf %128, %1229 : vector<8x128xf32>
    %1231 = arith.addf %1227, %1230 : vector<8x128xf32>
    %c239 = arith.constant 239 : index
    %1232 = memref.load %arg1[%c239] : memref<474xf32, #tpu.memory_space<smem>>
    %1233 = vector.broadcast %1232 : f32 to vector<8x128xf32>
    %1234 = arith.mulf %139, %1233 : vector<8x128xf32>
    %1235 = arith.addf %1231, %1234 : vector<8x128xf32>
    %c255 = arith.constant 255 : index
    %1236 = memref.load %arg1[%c255] : memref<474xf32, #tpu.memory_space<smem>>
    %1237 = vector.broadcast %1236 : f32 to vector<8x128xf32>
    %1238 = arith.mulf %150, %1237 : vector<8x128xf32>
    %1239 = arith.addf %1235, %1238 : vector<8x128xf32>
    %c271 = arith.constant 271 : index
    %1240 = memref.load %arg1[%c271] : memref<474xf32, #tpu.memory_space<smem>>
    %1241 = vector.broadcast %1240 : f32 to vector<8x128xf32>
    %1242 = arith.mulf %161, %1241 : vector<8x128xf32>
    %1243 = arith.addf %1239, %1242 : vector<8x128xf32>
    %c287 = arith.constant 287 : index
    %1244 = memref.load %arg1[%c287] : memref<474xf32, #tpu.memory_space<smem>>
    %1245 = vector.broadcast %1244 : f32 to vector<8x128xf32>
    %1246 = arith.mulf %172, %1245 : vector<8x128xf32>
    %1247 = arith.addf %1243, %1246 : vector<8x128xf32>
    %c303 = arith.constant 303 : index
    %1248 = memref.load %arg1[%c303] : memref<474xf32, #tpu.memory_space<smem>>
    %1249 = vector.broadcast %1248 : f32 to vector<8x128xf32>
    %1250 = arith.mulf %183, %1249 : vector<8x128xf32>
    %1251 = arith.addf %1247, %1250 : vector<8x128xf32>
    %c319 = arith.constant 319 : index
    %1252 = memref.load %arg1[%c319] : memref<474xf32, #tpu.memory_space<smem>>
    %1253 = vector.broadcast %1252 : f32 to vector<8x128xf32>
    %1254 = arith.addf %1251, %1253 : vector<8x128xf32>
    %1255 = math.tanh %1254 : vector<8x128xf32>
    %c320 = arith.constant 320 : index
    %1256 = memref.load %arg1[%c320] : memref<474xf32, #tpu.memory_space<smem>>
    %1257 = vector.broadcast %1256 : f32 to vector<8x128xf32>
    %1258 = arith.mulf %250, %1257 : vector<8x128xf32>
    %c328 = arith.constant 328 : index
    %1259 = memref.load %arg1[%c328] : memref<474xf32, #tpu.memory_space<smem>>
    %1260 = vector.broadcast %1259 : f32 to vector<8x128xf32>
    %1261 = arith.mulf %317, %1260 : vector<8x128xf32>
    %1262 = arith.addf %1258, %1261 : vector<8x128xf32>
    %c336 = arith.constant 336 : index
    %1263 = memref.load %arg1[%c336] : memref<474xf32, #tpu.memory_space<smem>>
    %1264 = vector.broadcast %1263 : f32 to vector<8x128xf32>
    %1265 = arith.mulf %384, %1264 : vector<8x128xf32>
    %1266 = arith.addf %1262, %1265 : vector<8x128xf32>
    %c344 = arith.constant 344 : index
    %1267 = memref.load %arg1[%c344] : memref<474xf32, #tpu.memory_space<smem>>
    %1268 = vector.broadcast %1267 : f32 to vector<8x128xf32>
    %1269 = arith.mulf %451, %1268 : vector<8x128xf32>
    %1270 = arith.addf %1266, %1269 : vector<8x128xf32>
    %c352 = arith.constant 352 : index
    %1271 = memref.load %arg1[%c352] : memref<474xf32, #tpu.memory_space<smem>>
    %1272 = vector.broadcast %1271 : f32 to vector<8x128xf32>
    %1273 = arith.mulf %518, %1272 : vector<8x128xf32>
    %1274 = arith.addf %1270, %1273 : vector<8x128xf32>
    %c360 = arith.constant 360 : index
    %1275 = memref.load %arg1[%c360] : memref<474xf32, #tpu.memory_space<smem>>
    %1276 = vector.broadcast %1275 : f32 to vector<8x128xf32>
    %1277 = arith.mulf %585, %1276 : vector<8x128xf32>
    %1278 = arith.addf %1274, %1277 : vector<8x128xf32>
    %c368 = arith.constant 368 : index
    %1279 = memref.load %arg1[%c368] : memref<474xf32, #tpu.memory_space<smem>>
    %1280 = vector.broadcast %1279 : f32 to vector<8x128xf32>
    %1281 = arith.mulf %652, %1280 : vector<8x128xf32>
    %1282 = arith.addf %1278, %1281 : vector<8x128xf32>
    %c376 = arith.constant 376 : index
    %1283 = memref.load %arg1[%c376] : memref<474xf32, #tpu.memory_space<smem>>
    %1284 = vector.broadcast %1283 : f32 to vector<8x128xf32>
    %1285 = arith.mulf %719, %1284 : vector<8x128xf32>
    %1286 = arith.addf %1282, %1285 : vector<8x128xf32>
    %c384 = arith.constant 384 : index
    %1287 = memref.load %arg1[%c384] : memref<474xf32, #tpu.memory_space<smem>>
    %1288 = vector.broadcast %1287 : f32 to vector<8x128xf32>
    %1289 = arith.mulf %786, %1288 : vector<8x128xf32>
    %1290 = arith.addf %1286, %1289 : vector<8x128xf32>
    %c392 = arith.constant 392 : index
    %1291 = memref.load %arg1[%c392] : memref<474xf32, #tpu.memory_space<smem>>
    %1292 = vector.broadcast %1291 : f32 to vector<8x128xf32>
    %1293 = arith.mulf %853, %1292 : vector<8x128xf32>
    %1294 = arith.addf %1290, %1293 : vector<8x128xf32>
    %c400 = arith.constant 400 : index
    %1295 = memref.load %arg1[%c400] : memref<474xf32, #tpu.memory_space<smem>>
    %1296 = vector.broadcast %1295 : f32 to vector<8x128xf32>
    %1297 = arith.mulf %920, %1296 : vector<8x128xf32>
    %1298 = arith.addf %1294, %1297 : vector<8x128xf32>
    %c408 = arith.constant 408 : index
    %1299 = memref.load %arg1[%c408] : memref<474xf32, #tpu.memory_space<smem>>
    %1300 = vector.broadcast %1299 : f32 to vector<8x128xf32>
    %1301 = arith.mulf %987, %1300 : vector<8x128xf32>
    %1302 = arith.addf %1298, %1301 : vector<8x128xf32>
    %c416 = arith.constant 416 : index
    %1303 = memref.load %arg1[%c416] : memref<474xf32, #tpu.memory_space<smem>>
    %1304 = vector.broadcast %1303 : f32 to vector<8x128xf32>
    %1305 = arith.mulf %1054, %1304 : vector<8x128xf32>
    %1306 = arith.addf %1302, %1305 : vector<8x128xf32>
    %c424 = arith.constant 424 : index
    %1307 = memref.load %arg1[%c424] : memref<474xf32, #tpu.memory_space<smem>>
    %1308 = vector.broadcast %1307 : f32 to vector<8x128xf32>
    %1309 = arith.mulf %1121, %1308 : vector<8x128xf32>
    %1310 = arith.addf %1306, %1309 : vector<8x128xf32>
    %c432 = arith.constant 432 : index
    %1311 = memref.load %arg1[%c432] : memref<474xf32, #tpu.memory_space<smem>>
    %1312 = vector.broadcast %1311 : f32 to vector<8x128xf32>
    %1313 = arith.mulf %1188, %1312 : vector<8x128xf32>
    %1314 = arith.addf %1310, %1313 : vector<8x128xf32>
    %c440 = arith.constant 440 : index
    %1315 = memref.load %arg1[%c440] : memref<474xf32, #tpu.memory_space<smem>>
    %1316 = vector.broadcast %1315 : f32 to vector<8x128xf32>
    %1317 = arith.mulf %1255, %1316 : vector<8x128xf32>
    %1318 = arith.addf %1314, %1317 : vector<8x128xf32>
    %c448 = arith.constant 448 : index
    %1319 = memref.load %arg1[%c448] : memref<474xf32, #tpu.memory_space<smem>>
    %1320 = vector.broadcast %1319 : f32 to vector<8x128xf32>
    %1321 = arith.addf %1318, %1320 : vector<8x128xf32>
    %1322 = math.tanh %1321 : vector<8x128xf32>
    %c321 = arith.constant 321 : index
    %1323 = memref.load %arg1[%c321] : memref<474xf32, #tpu.memory_space<smem>>
    %1324 = vector.broadcast %1323 : f32 to vector<8x128xf32>
    %1325 = arith.mulf %250, %1324 : vector<8x128xf32>
    %c329 = arith.constant 329 : index
    %1326 = memref.load %arg1[%c329] : memref<474xf32, #tpu.memory_space<smem>>
    %1327 = vector.broadcast %1326 : f32 to vector<8x128xf32>
    %1328 = arith.mulf %317, %1327 : vector<8x128xf32>
    %1329 = arith.addf %1325, %1328 : vector<8x128xf32>
    %c337 = arith.constant 337 : index
    %1330 = memref.load %arg1[%c337] : memref<474xf32, #tpu.memory_space<smem>>
    %1331 = vector.broadcast %1330 : f32 to vector<8x128xf32>
    %1332 = arith.mulf %384, %1331 : vector<8x128xf32>
    %1333 = arith.addf %1329, %1332 : vector<8x128xf32>
    %c345 = arith.constant 345 : index
    %1334 = memref.load %arg1[%c345] : memref<474xf32, #tpu.memory_space<smem>>
    %1335 = vector.broadcast %1334 : f32 to vector<8x128xf32>
    %1336 = arith.mulf %451, %1335 : vector<8x128xf32>
    %1337 = arith.addf %1333, %1336 : vector<8x128xf32>
    %c353 = arith.constant 353 : index
    %1338 = memref.load %arg1[%c353] : memref<474xf32, #tpu.memory_space<smem>>
    %1339 = vector.broadcast %1338 : f32 to vector<8x128xf32>
    %1340 = arith.mulf %518, %1339 : vector<8x128xf32>
    %1341 = arith.addf %1337, %1340 : vector<8x128xf32>
    %c361 = arith.constant 361 : index
    %1342 = memref.load %arg1[%c361] : memref<474xf32, #tpu.memory_space<smem>>
    %1343 = vector.broadcast %1342 : f32 to vector<8x128xf32>
    %1344 = arith.mulf %585, %1343 : vector<8x128xf32>
    %1345 = arith.addf %1341, %1344 : vector<8x128xf32>
    %c369 = arith.constant 369 : index
    %1346 = memref.load %arg1[%c369] : memref<474xf32, #tpu.memory_space<smem>>
    %1347 = vector.broadcast %1346 : f32 to vector<8x128xf32>
    %1348 = arith.mulf %652, %1347 : vector<8x128xf32>
    %1349 = arith.addf %1345, %1348 : vector<8x128xf32>
    %c377 = arith.constant 377 : index
    %1350 = memref.load %arg1[%c377] : memref<474xf32, #tpu.memory_space<smem>>
    %1351 = vector.broadcast %1350 : f32 to vector<8x128xf32>
    %1352 = arith.mulf %719, %1351 : vector<8x128xf32>
    %1353 = arith.addf %1349, %1352 : vector<8x128xf32>
    %c385 = arith.constant 385 : index
    %1354 = memref.load %arg1[%c385] : memref<474xf32, #tpu.memory_space<smem>>
    %1355 = vector.broadcast %1354 : f32 to vector<8x128xf32>
    %1356 = arith.mulf %786, %1355 : vector<8x128xf32>
    %1357 = arith.addf %1353, %1356 : vector<8x128xf32>
    %c393 = arith.constant 393 : index
    %1358 = memref.load %arg1[%c393] : memref<474xf32, #tpu.memory_space<smem>>
    %1359 = vector.broadcast %1358 : f32 to vector<8x128xf32>
    %1360 = arith.mulf %853, %1359 : vector<8x128xf32>
    %1361 = arith.addf %1357, %1360 : vector<8x128xf32>
    %c401 = arith.constant 401 : index
    %1362 = memref.load %arg1[%c401] : memref<474xf32, #tpu.memory_space<smem>>
    %1363 = vector.broadcast %1362 : f32 to vector<8x128xf32>
    %1364 = arith.mulf %920, %1363 : vector<8x128xf32>
    %1365 = arith.addf %1361, %1364 : vector<8x128xf32>
    %c409 = arith.constant 409 : index
    %1366 = memref.load %arg1[%c409] : memref<474xf32, #tpu.memory_space<smem>>
    %1367 = vector.broadcast %1366 : f32 to vector<8x128xf32>
    %1368 = arith.mulf %987, %1367 : vector<8x128xf32>
    %1369 = arith.addf %1365, %1368 : vector<8x128xf32>
    %c417 = arith.constant 417 : index
    %1370 = memref.load %arg1[%c417] : memref<474xf32, #tpu.memory_space<smem>>
    %1371 = vector.broadcast %1370 : f32 to vector<8x128xf32>
    %1372 = arith.mulf %1054, %1371 : vector<8x128xf32>
    %1373 = arith.addf %1369, %1372 : vector<8x128xf32>
    %c425 = arith.constant 425 : index
    %1374 = memref.load %arg1[%c425] : memref<474xf32, #tpu.memory_space<smem>>
    %1375 = vector.broadcast %1374 : f32 to vector<8x128xf32>
    %1376 = arith.mulf %1121, %1375 : vector<8x128xf32>
    %1377 = arith.addf %1373, %1376 : vector<8x128xf32>
    %c433 = arith.constant 433 : index
    %1378 = memref.load %arg1[%c433] : memref<474xf32, #tpu.memory_space<smem>>
    %1379 = vector.broadcast %1378 : f32 to vector<8x128xf32>
    %1380 = arith.mulf %1188, %1379 : vector<8x128xf32>
    %1381 = arith.addf %1377, %1380 : vector<8x128xf32>
    %c441 = arith.constant 441 : index
    %1382 = memref.load %arg1[%c441] : memref<474xf32, #tpu.memory_space<smem>>
    %1383 = vector.broadcast %1382 : f32 to vector<8x128xf32>
    %1384 = arith.mulf %1255, %1383 : vector<8x128xf32>
    %1385 = arith.addf %1381, %1384 : vector<8x128xf32>
    %c449 = arith.constant 449 : index
    %1386 = memref.load %arg1[%c449] : memref<474xf32, #tpu.memory_space<smem>>
    %1387 = vector.broadcast %1386 : f32 to vector<8x128xf32>
    %1388 = arith.addf %1385, %1387 : vector<8x128xf32>
    %1389 = math.tanh %1388 : vector<8x128xf32>
    %c322 = arith.constant 322 : index
    %1390 = memref.load %arg1[%c322] : memref<474xf32, #tpu.memory_space<smem>>
    %1391 = vector.broadcast %1390 : f32 to vector<8x128xf32>
    %1392 = arith.mulf %250, %1391 : vector<8x128xf32>
    %c330 = arith.constant 330 : index
    %1393 = memref.load %arg1[%c330] : memref<474xf32, #tpu.memory_space<smem>>
    %1394 = vector.broadcast %1393 : f32 to vector<8x128xf32>
    %1395 = arith.mulf %317, %1394 : vector<8x128xf32>
    %1396 = arith.addf %1392, %1395 : vector<8x128xf32>
    %c338 = arith.constant 338 : index
    %1397 = memref.load %arg1[%c338] : memref<474xf32, #tpu.memory_space<smem>>
    %1398 = vector.broadcast %1397 : f32 to vector<8x128xf32>
    %1399 = arith.mulf %384, %1398 : vector<8x128xf32>
    %1400 = arith.addf %1396, %1399 : vector<8x128xf32>
    %c346 = arith.constant 346 : index
    %1401 = memref.load %arg1[%c346] : memref<474xf32, #tpu.memory_space<smem>>
    %1402 = vector.broadcast %1401 : f32 to vector<8x128xf32>
    %1403 = arith.mulf %451, %1402 : vector<8x128xf32>
    %1404 = arith.addf %1400, %1403 : vector<8x128xf32>
    %c354 = arith.constant 354 : index
    %1405 = memref.load %arg1[%c354] : memref<474xf32, #tpu.memory_space<smem>>
    %1406 = vector.broadcast %1405 : f32 to vector<8x128xf32>
    %1407 = arith.mulf %518, %1406 : vector<8x128xf32>
    %1408 = arith.addf %1404, %1407 : vector<8x128xf32>
    %c362 = arith.constant 362 : index
    %1409 = memref.load %arg1[%c362] : memref<474xf32, #tpu.memory_space<smem>>
    %1410 = vector.broadcast %1409 : f32 to vector<8x128xf32>
    %1411 = arith.mulf %585, %1410 : vector<8x128xf32>
    %1412 = arith.addf %1408, %1411 : vector<8x128xf32>
    %c370 = arith.constant 370 : index
    %1413 = memref.load %arg1[%c370] : memref<474xf32, #tpu.memory_space<smem>>
    %1414 = vector.broadcast %1413 : f32 to vector<8x128xf32>
    %1415 = arith.mulf %652, %1414 : vector<8x128xf32>
    %1416 = arith.addf %1412, %1415 : vector<8x128xf32>
    %c378 = arith.constant 378 : index
    %1417 = memref.load %arg1[%c378] : memref<474xf32, #tpu.memory_space<smem>>
    %1418 = vector.broadcast %1417 : f32 to vector<8x128xf32>
    %1419 = arith.mulf %719, %1418 : vector<8x128xf32>
    %1420 = arith.addf %1416, %1419 : vector<8x128xf32>
    %c386 = arith.constant 386 : index
    %1421 = memref.load %arg1[%c386] : memref<474xf32, #tpu.memory_space<smem>>
    %1422 = vector.broadcast %1421 : f32 to vector<8x128xf32>
    %1423 = arith.mulf %786, %1422 : vector<8x128xf32>
    %1424 = arith.addf %1420, %1423 : vector<8x128xf32>
    %c394 = arith.constant 394 : index
    %1425 = memref.load %arg1[%c394] : memref<474xf32, #tpu.memory_space<smem>>
    %1426 = vector.broadcast %1425 : f32 to vector<8x128xf32>
    %1427 = arith.mulf %853, %1426 : vector<8x128xf32>
    %1428 = arith.addf %1424, %1427 : vector<8x128xf32>
    %c402 = arith.constant 402 : index
    %1429 = memref.load %arg1[%c402] : memref<474xf32, #tpu.memory_space<smem>>
    %1430 = vector.broadcast %1429 : f32 to vector<8x128xf32>
    %1431 = arith.mulf %920, %1430 : vector<8x128xf32>
    %1432 = arith.addf %1428, %1431 : vector<8x128xf32>
    %c410 = arith.constant 410 : index
    %1433 = memref.load %arg1[%c410] : memref<474xf32, #tpu.memory_space<smem>>
    %1434 = vector.broadcast %1433 : f32 to vector<8x128xf32>
    %1435 = arith.mulf %987, %1434 : vector<8x128xf32>
    %1436 = arith.addf %1432, %1435 : vector<8x128xf32>
    %c418 = arith.constant 418 : index
    %1437 = memref.load %arg1[%c418] : memref<474xf32, #tpu.memory_space<smem>>
    %1438 = vector.broadcast %1437 : f32 to vector<8x128xf32>
    %1439 = arith.mulf %1054, %1438 : vector<8x128xf32>
    %1440 = arith.addf %1436, %1439 : vector<8x128xf32>
    %c426 = arith.constant 426 : index
    %1441 = memref.load %arg1[%c426] : memref<474xf32, #tpu.memory_space<smem>>
    %1442 = vector.broadcast %1441 : f32 to vector<8x128xf32>
    %1443 = arith.mulf %1121, %1442 : vector<8x128xf32>
    %1444 = arith.addf %1440, %1443 : vector<8x128xf32>
    %c434 = arith.constant 434 : index
    %1445 = memref.load %arg1[%c434] : memref<474xf32, #tpu.memory_space<smem>>
    %1446 = vector.broadcast %1445 : f32 to vector<8x128xf32>
    %1447 = arith.mulf %1188, %1446 : vector<8x128xf32>
    %1448 = arith.addf %1444, %1447 : vector<8x128xf32>
    %c442 = arith.constant 442 : index
    %1449 = memref.load %arg1[%c442] : memref<474xf32, #tpu.memory_space<smem>>
    %1450 = vector.broadcast %1449 : f32 to vector<8x128xf32>
    %1451 = arith.mulf %1255, %1450 : vector<8x128xf32>
    %1452 = arith.addf %1448, %1451 : vector<8x128xf32>
    %c450 = arith.constant 450 : index
    %1453 = memref.load %arg1[%c450] : memref<474xf32, #tpu.memory_space<smem>>
    %1454 = vector.broadcast %1453 : f32 to vector<8x128xf32>
    %1455 = arith.addf %1452, %1454 : vector<8x128xf32>
    %1456 = math.tanh %1455 : vector<8x128xf32>
    %c323 = arith.constant 323 : index
    %1457 = memref.load %arg1[%c323] : memref<474xf32, #tpu.memory_space<smem>>
    %1458 = vector.broadcast %1457 : f32 to vector<8x128xf32>
    %1459 = arith.mulf %250, %1458 : vector<8x128xf32>
    %c331 = arith.constant 331 : index
    %1460 = memref.load %arg1[%c331] : memref<474xf32, #tpu.memory_space<smem>>
    %1461 = vector.broadcast %1460 : f32 to vector<8x128xf32>
    %1462 = arith.mulf %317, %1461 : vector<8x128xf32>
    %1463 = arith.addf %1459, %1462 : vector<8x128xf32>
    %c339 = arith.constant 339 : index
    %1464 = memref.load %arg1[%c339] : memref<474xf32, #tpu.memory_space<smem>>
    %1465 = vector.broadcast %1464 : f32 to vector<8x128xf32>
    %1466 = arith.mulf %384, %1465 : vector<8x128xf32>
    %1467 = arith.addf %1463, %1466 : vector<8x128xf32>
    %c347 = arith.constant 347 : index
    %1468 = memref.load %arg1[%c347] : memref<474xf32, #tpu.memory_space<smem>>
    %1469 = vector.broadcast %1468 : f32 to vector<8x128xf32>
    %1470 = arith.mulf %451, %1469 : vector<8x128xf32>
    %1471 = arith.addf %1467, %1470 : vector<8x128xf32>
    %c355 = arith.constant 355 : index
    %1472 = memref.load %arg1[%c355] : memref<474xf32, #tpu.memory_space<smem>>
    %1473 = vector.broadcast %1472 : f32 to vector<8x128xf32>
    %1474 = arith.mulf %518, %1473 : vector<8x128xf32>
    %1475 = arith.addf %1471, %1474 : vector<8x128xf32>
    %c363 = arith.constant 363 : index
    %1476 = memref.load %arg1[%c363] : memref<474xf32, #tpu.memory_space<smem>>
    %1477 = vector.broadcast %1476 : f32 to vector<8x128xf32>
    %1478 = arith.mulf %585, %1477 : vector<8x128xf32>
    %1479 = arith.addf %1475, %1478 : vector<8x128xf32>
    %c371 = arith.constant 371 : index
    %1480 = memref.load %arg1[%c371] : memref<474xf32, #tpu.memory_space<smem>>
    %1481 = vector.broadcast %1480 : f32 to vector<8x128xf32>
    %1482 = arith.mulf %652, %1481 : vector<8x128xf32>
    %1483 = arith.addf %1479, %1482 : vector<8x128xf32>
    %c379 = arith.constant 379 : index
    %1484 = memref.load %arg1[%c379] : memref<474xf32, #tpu.memory_space<smem>>
    %1485 = vector.broadcast %1484 : f32 to vector<8x128xf32>
    %1486 = arith.mulf %719, %1485 : vector<8x128xf32>
    %1487 = arith.addf %1483, %1486 : vector<8x128xf32>
    %c387 = arith.constant 387 : index
    %1488 = memref.load %arg1[%c387] : memref<474xf32, #tpu.memory_space<smem>>
    %1489 = vector.broadcast %1488 : f32 to vector<8x128xf32>
    %1490 = arith.mulf %786, %1489 : vector<8x128xf32>
    %1491 = arith.addf %1487, %1490 : vector<8x128xf32>
    %c395 = arith.constant 395 : index
    %1492 = memref.load %arg1[%c395] : memref<474xf32, #tpu.memory_space<smem>>
    %1493 = vector.broadcast %1492 : f32 to vector<8x128xf32>
    %1494 = arith.mulf %853, %1493 : vector<8x128xf32>
    %1495 = arith.addf %1491, %1494 : vector<8x128xf32>
    %c403 = arith.constant 403 : index
    %1496 = memref.load %arg1[%c403] : memref<474xf32, #tpu.memory_space<smem>>
    %1497 = vector.broadcast %1496 : f32 to vector<8x128xf32>
    %1498 = arith.mulf %920, %1497 : vector<8x128xf32>
    %1499 = arith.addf %1495, %1498 : vector<8x128xf32>
    %c411 = arith.constant 411 : index
    %1500 = memref.load %arg1[%c411] : memref<474xf32, #tpu.memory_space<smem>>
    %1501 = vector.broadcast %1500 : f32 to vector<8x128xf32>
    %1502 = arith.mulf %987, %1501 : vector<8x128xf32>
    %1503 = arith.addf %1499, %1502 : vector<8x128xf32>
    %c419 = arith.constant 419 : index
    %1504 = memref.load %arg1[%c419] : memref<474xf32, #tpu.memory_space<smem>>
    %1505 = vector.broadcast %1504 : f32 to vector<8x128xf32>
    %1506 = arith.mulf %1054, %1505 : vector<8x128xf32>
    %1507 = arith.addf %1503, %1506 : vector<8x128xf32>
    %c427 = arith.constant 427 : index
    %1508 = memref.load %arg1[%c427] : memref<474xf32, #tpu.memory_space<smem>>
    %1509 = vector.broadcast %1508 : f32 to vector<8x128xf32>
    %1510 = arith.mulf %1121, %1509 : vector<8x128xf32>
    %1511 = arith.addf %1507, %1510 : vector<8x128xf32>
    %c435 = arith.constant 435 : index
    %1512 = memref.load %arg1[%c435] : memref<474xf32, #tpu.memory_space<smem>>
    %1513 = vector.broadcast %1512 : f32 to vector<8x128xf32>
    %1514 = arith.mulf %1188, %1513 : vector<8x128xf32>
    %1515 = arith.addf %1511, %1514 : vector<8x128xf32>
    %c443 = arith.constant 443 : index
    %1516 = memref.load %arg1[%c443] : memref<474xf32, #tpu.memory_space<smem>>
    %1517 = vector.broadcast %1516 : f32 to vector<8x128xf32>
    %1518 = arith.mulf %1255, %1517 : vector<8x128xf32>
    %1519 = arith.addf %1515, %1518 : vector<8x128xf32>
    %c451 = arith.constant 451 : index
    %1520 = memref.load %arg1[%c451] : memref<474xf32, #tpu.memory_space<smem>>
    %1521 = vector.broadcast %1520 : f32 to vector<8x128xf32>
    %1522 = arith.addf %1519, %1521 : vector<8x128xf32>
    %1523 = math.tanh %1522 : vector<8x128xf32>
    %c324 = arith.constant 324 : index
    %1524 = memref.load %arg1[%c324] : memref<474xf32, #tpu.memory_space<smem>>
    %1525 = vector.broadcast %1524 : f32 to vector<8x128xf32>
    %1526 = arith.mulf %250, %1525 : vector<8x128xf32>
    %c332 = arith.constant 332 : index
    %1527 = memref.load %arg1[%c332] : memref<474xf32, #tpu.memory_space<smem>>
    %1528 = vector.broadcast %1527 : f32 to vector<8x128xf32>
    %1529 = arith.mulf %317, %1528 : vector<8x128xf32>
    %1530 = arith.addf %1526, %1529 : vector<8x128xf32>
    %c340 = arith.constant 340 : index
    %1531 = memref.load %arg1[%c340] : memref<474xf32, #tpu.memory_space<smem>>
    %1532 = vector.broadcast %1531 : f32 to vector<8x128xf32>
    %1533 = arith.mulf %384, %1532 : vector<8x128xf32>
    %1534 = arith.addf %1530, %1533 : vector<8x128xf32>
    %c348 = arith.constant 348 : index
    %1535 = memref.load %arg1[%c348] : memref<474xf32, #tpu.memory_space<smem>>
    %1536 = vector.broadcast %1535 : f32 to vector<8x128xf32>
    %1537 = arith.mulf %451, %1536 : vector<8x128xf32>
    %1538 = arith.addf %1534, %1537 : vector<8x128xf32>
    %c356 = arith.constant 356 : index
    %1539 = memref.load %arg1[%c356] : memref<474xf32, #tpu.memory_space<smem>>
    %1540 = vector.broadcast %1539 : f32 to vector<8x128xf32>
    %1541 = arith.mulf %518, %1540 : vector<8x128xf32>
    %1542 = arith.addf %1538, %1541 : vector<8x128xf32>
    %c364 = arith.constant 364 : index
    %1543 = memref.load %arg1[%c364] : memref<474xf32, #tpu.memory_space<smem>>
    %1544 = vector.broadcast %1543 : f32 to vector<8x128xf32>
    %1545 = arith.mulf %585, %1544 : vector<8x128xf32>
    %1546 = arith.addf %1542, %1545 : vector<8x128xf32>
    %c372 = arith.constant 372 : index
    %1547 = memref.load %arg1[%c372] : memref<474xf32, #tpu.memory_space<smem>>
    %1548 = vector.broadcast %1547 : f32 to vector<8x128xf32>
    %1549 = arith.mulf %652, %1548 : vector<8x128xf32>
    %1550 = arith.addf %1546, %1549 : vector<8x128xf32>
    %c380 = arith.constant 380 : index
    %1551 = memref.load %arg1[%c380] : memref<474xf32, #tpu.memory_space<smem>>
    %1552 = vector.broadcast %1551 : f32 to vector<8x128xf32>
    %1553 = arith.mulf %719, %1552 : vector<8x128xf32>
    %1554 = arith.addf %1550, %1553 : vector<8x128xf32>
    %c388 = arith.constant 388 : index
    %1555 = memref.load %arg1[%c388] : memref<474xf32, #tpu.memory_space<smem>>
    %1556 = vector.broadcast %1555 : f32 to vector<8x128xf32>
    %1557 = arith.mulf %786, %1556 : vector<8x128xf32>
    %1558 = arith.addf %1554, %1557 : vector<8x128xf32>
    %c396 = arith.constant 396 : index
    %1559 = memref.load %arg1[%c396] : memref<474xf32, #tpu.memory_space<smem>>
    %1560 = vector.broadcast %1559 : f32 to vector<8x128xf32>
    %1561 = arith.mulf %853, %1560 : vector<8x128xf32>
    %1562 = arith.addf %1558, %1561 : vector<8x128xf32>
    %c404 = arith.constant 404 : index
    %1563 = memref.load %arg1[%c404] : memref<474xf32, #tpu.memory_space<smem>>
    %1564 = vector.broadcast %1563 : f32 to vector<8x128xf32>
    %1565 = arith.mulf %920, %1564 : vector<8x128xf32>
    %1566 = arith.addf %1562, %1565 : vector<8x128xf32>
    %c412 = arith.constant 412 : index
    %1567 = memref.load %arg1[%c412] : memref<474xf32, #tpu.memory_space<smem>>
    %1568 = vector.broadcast %1567 : f32 to vector<8x128xf32>
    %1569 = arith.mulf %987, %1568 : vector<8x128xf32>
    %1570 = arith.addf %1566, %1569 : vector<8x128xf32>
    %c420 = arith.constant 420 : index
    %1571 = memref.load %arg1[%c420] : memref<474xf32, #tpu.memory_space<smem>>
    %1572 = vector.broadcast %1571 : f32 to vector<8x128xf32>
    %1573 = arith.mulf %1054, %1572 : vector<8x128xf32>
    %1574 = arith.addf %1570, %1573 : vector<8x128xf32>
    %c428 = arith.constant 428 : index
    %1575 = memref.load %arg1[%c428] : memref<474xf32, #tpu.memory_space<smem>>
    %1576 = vector.broadcast %1575 : f32 to vector<8x128xf32>
    %1577 = arith.mulf %1121, %1576 : vector<8x128xf32>
    %1578 = arith.addf %1574, %1577 : vector<8x128xf32>
    %c436 = arith.constant 436 : index
    %1579 = memref.load %arg1[%c436] : memref<474xf32, #tpu.memory_space<smem>>
    %1580 = vector.broadcast %1579 : f32 to vector<8x128xf32>
    %1581 = arith.mulf %1188, %1580 : vector<8x128xf32>
    %1582 = arith.addf %1578, %1581 : vector<8x128xf32>
    %c444 = arith.constant 444 : index
    %1583 = memref.load %arg1[%c444] : memref<474xf32, #tpu.memory_space<smem>>
    %1584 = vector.broadcast %1583 : f32 to vector<8x128xf32>
    %1585 = arith.mulf %1255, %1584 : vector<8x128xf32>
    %1586 = arith.addf %1582, %1585 : vector<8x128xf32>
    %c452 = arith.constant 452 : index
    %1587 = memref.load %arg1[%c452] : memref<474xf32, #tpu.memory_space<smem>>
    %1588 = vector.broadcast %1587 : f32 to vector<8x128xf32>
    %1589 = arith.addf %1586, %1588 : vector<8x128xf32>
    %1590 = math.tanh %1589 : vector<8x128xf32>
    %c325 = arith.constant 325 : index
    %1591 = memref.load %arg1[%c325] : memref<474xf32, #tpu.memory_space<smem>>
    %1592 = vector.broadcast %1591 : f32 to vector<8x128xf32>
    %1593 = arith.mulf %250, %1592 : vector<8x128xf32>
    %c333 = arith.constant 333 : index
    %1594 = memref.load %arg1[%c333] : memref<474xf32, #tpu.memory_space<smem>>
    %1595 = vector.broadcast %1594 : f32 to vector<8x128xf32>
    %1596 = arith.mulf %317, %1595 : vector<8x128xf32>
    %1597 = arith.addf %1593, %1596 : vector<8x128xf32>
    %c341 = arith.constant 341 : index
    %1598 = memref.load %arg1[%c341] : memref<474xf32, #tpu.memory_space<smem>>
    %1599 = vector.broadcast %1598 : f32 to vector<8x128xf32>
    %1600 = arith.mulf %384, %1599 : vector<8x128xf32>
    %1601 = arith.addf %1597, %1600 : vector<8x128xf32>
    %c349 = arith.constant 349 : index
    %1602 = memref.load %arg1[%c349] : memref<474xf32, #tpu.memory_space<smem>>
    %1603 = vector.broadcast %1602 : f32 to vector<8x128xf32>
    %1604 = arith.mulf %451, %1603 : vector<8x128xf32>
    %1605 = arith.addf %1601, %1604 : vector<8x128xf32>
    %c357 = arith.constant 357 : index
    %1606 = memref.load %arg1[%c357] : memref<474xf32, #tpu.memory_space<smem>>
    %1607 = vector.broadcast %1606 : f32 to vector<8x128xf32>
    %1608 = arith.mulf %518, %1607 : vector<8x128xf32>
    %1609 = arith.addf %1605, %1608 : vector<8x128xf32>
    %c365 = arith.constant 365 : index
    %1610 = memref.load %arg1[%c365] : memref<474xf32, #tpu.memory_space<smem>>
    %1611 = vector.broadcast %1610 : f32 to vector<8x128xf32>
    %1612 = arith.mulf %585, %1611 : vector<8x128xf32>
    %1613 = arith.addf %1609, %1612 : vector<8x128xf32>
    %c373 = arith.constant 373 : index
    %1614 = memref.load %arg1[%c373] : memref<474xf32, #tpu.memory_space<smem>>
    %1615 = vector.broadcast %1614 : f32 to vector<8x128xf32>
    %1616 = arith.mulf %652, %1615 : vector<8x128xf32>
    %1617 = arith.addf %1613, %1616 : vector<8x128xf32>
    %c381 = arith.constant 381 : index
    %1618 = memref.load %arg1[%c381] : memref<474xf32, #tpu.memory_space<smem>>
    %1619 = vector.broadcast %1618 : f32 to vector<8x128xf32>
    %1620 = arith.mulf %719, %1619 : vector<8x128xf32>
    %1621 = arith.addf %1617, %1620 : vector<8x128xf32>
    %c389 = arith.constant 389 : index
    %1622 = memref.load %arg1[%c389] : memref<474xf32, #tpu.memory_space<smem>>
    %1623 = vector.broadcast %1622 : f32 to vector<8x128xf32>
    %1624 = arith.mulf %786, %1623 : vector<8x128xf32>
    %1625 = arith.addf %1621, %1624 : vector<8x128xf32>
    %c397 = arith.constant 397 : index
    %1626 = memref.load %arg1[%c397] : memref<474xf32, #tpu.memory_space<smem>>
    %1627 = vector.broadcast %1626 : f32 to vector<8x128xf32>
    %1628 = arith.mulf %853, %1627 : vector<8x128xf32>
    %1629 = arith.addf %1625, %1628 : vector<8x128xf32>
    %c405 = arith.constant 405 : index
    %1630 = memref.load %arg1[%c405] : memref<474xf32, #tpu.memory_space<smem>>
    %1631 = vector.broadcast %1630 : f32 to vector<8x128xf32>
    %1632 = arith.mulf %920, %1631 : vector<8x128xf32>
    %1633 = arith.addf %1629, %1632 : vector<8x128xf32>
    %c413 = arith.constant 413 : index
    %1634 = memref.load %arg1[%c413] : memref<474xf32, #tpu.memory_space<smem>>
    %1635 = vector.broadcast %1634 : f32 to vector<8x128xf32>
    %1636 = arith.mulf %987, %1635 : vector<8x128xf32>
    %1637 = arith.addf %1633, %1636 : vector<8x128xf32>
    %c421 = arith.constant 421 : index
    %1638 = memref.load %arg1[%c421] : memref<474xf32, #tpu.memory_space<smem>>
    %1639 = vector.broadcast %1638 : f32 to vector<8x128xf32>
    %1640 = arith.mulf %1054, %1639 : vector<8x128xf32>
    %1641 = arith.addf %1637, %1640 : vector<8x128xf32>
    %c429 = arith.constant 429 : index
    %1642 = memref.load %arg1[%c429] : memref<474xf32, #tpu.memory_space<smem>>
    %1643 = vector.broadcast %1642 : f32 to vector<8x128xf32>
    %1644 = arith.mulf %1121, %1643 : vector<8x128xf32>
    %1645 = arith.addf %1641, %1644 : vector<8x128xf32>
    %c437 = arith.constant 437 : index
    %1646 = memref.load %arg1[%c437] : memref<474xf32, #tpu.memory_space<smem>>
    %1647 = vector.broadcast %1646 : f32 to vector<8x128xf32>
    %1648 = arith.mulf %1188, %1647 : vector<8x128xf32>
    %1649 = arith.addf %1645, %1648 : vector<8x128xf32>
    %c445 = arith.constant 445 : index
    %1650 = memref.load %arg1[%c445] : memref<474xf32, #tpu.memory_space<smem>>
    %1651 = vector.broadcast %1650 : f32 to vector<8x128xf32>
    %1652 = arith.mulf %1255, %1651 : vector<8x128xf32>
    %1653 = arith.addf %1649, %1652 : vector<8x128xf32>
    %c453 = arith.constant 453 : index
    %1654 = memref.load %arg1[%c453] : memref<474xf32, #tpu.memory_space<smem>>
    %1655 = vector.broadcast %1654 : f32 to vector<8x128xf32>
    %1656 = arith.addf %1653, %1655 : vector<8x128xf32>
    %1657 = math.tanh %1656 : vector<8x128xf32>
    %c326 = arith.constant 326 : index
    %1658 = memref.load %arg1[%c326] : memref<474xf32, #tpu.memory_space<smem>>
    %1659 = vector.broadcast %1658 : f32 to vector<8x128xf32>
    %1660 = arith.mulf %250, %1659 : vector<8x128xf32>
    %c334 = arith.constant 334 : index
    %1661 = memref.load %arg1[%c334] : memref<474xf32, #tpu.memory_space<smem>>
    %1662 = vector.broadcast %1661 : f32 to vector<8x128xf32>
    %1663 = arith.mulf %317, %1662 : vector<8x128xf32>
    %1664 = arith.addf %1660, %1663 : vector<8x128xf32>
    %c342 = arith.constant 342 : index
    %1665 = memref.load %arg1[%c342] : memref<474xf32, #tpu.memory_space<smem>>
    %1666 = vector.broadcast %1665 : f32 to vector<8x128xf32>
    %1667 = arith.mulf %384, %1666 : vector<8x128xf32>
    %1668 = arith.addf %1664, %1667 : vector<8x128xf32>
    %c350 = arith.constant 350 : index
    %1669 = memref.load %arg1[%c350] : memref<474xf32, #tpu.memory_space<smem>>
    %1670 = vector.broadcast %1669 : f32 to vector<8x128xf32>
    %1671 = arith.mulf %451, %1670 : vector<8x128xf32>
    %1672 = arith.addf %1668, %1671 : vector<8x128xf32>
    %c358 = arith.constant 358 : index
    %1673 = memref.load %arg1[%c358] : memref<474xf32, #tpu.memory_space<smem>>
    %1674 = vector.broadcast %1673 : f32 to vector<8x128xf32>
    %1675 = arith.mulf %518, %1674 : vector<8x128xf32>
    %1676 = arith.addf %1672, %1675 : vector<8x128xf32>
    %c366 = arith.constant 366 : index
    %1677 = memref.load %arg1[%c366] : memref<474xf32, #tpu.memory_space<smem>>
    %1678 = vector.broadcast %1677 : f32 to vector<8x128xf32>
    %1679 = arith.mulf %585, %1678 : vector<8x128xf32>
    %1680 = arith.addf %1676, %1679 : vector<8x128xf32>
    %c374 = arith.constant 374 : index
    %1681 = memref.load %arg1[%c374] : memref<474xf32, #tpu.memory_space<smem>>
    %1682 = vector.broadcast %1681 : f32 to vector<8x128xf32>
    %1683 = arith.mulf %652, %1682 : vector<8x128xf32>
    %1684 = arith.addf %1680, %1683 : vector<8x128xf32>
    %c382 = arith.constant 382 : index
    %1685 = memref.load %arg1[%c382] : memref<474xf32, #tpu.memory_space<smem>>
    %1686 = vector.broadcast %1685 : f32 to vector<8x128xf32>
    %1687 = arith.mulf %719, %1686 : vector<8x128xf32>
    %1688 = arith.addf %1684, %1687 : vector<8x128xf32>
    %c390 = arith.constant 390 : index
    %1689 = memref.load %arg1[%c390] : memref<474xf32, #tpu.memory_space<smem>>
    %1690 = vector.broadcast %1689 : f32 to vector<8x128xf32>
    %1691 = arith.mulf %786, %1690 : vector<8x128xf32>
    %1692 = arith.addf %1688, %1691 : vector<8x128xf32>
    %c398 = arith.constant 398 : index
    %1693 = memref.load %arg1[%c398] : memref<474xf32, #tpu.memory_space<smem>>
    %1694 = vector.broadcast %1693 : f32 to vector<8x128xf32>
    %1695 = arith.mulf %853, %1694 : vector<8x128xf32>
    %1696 = arith.addf %1692, %1695 : vector<8x128xf32>
    %c406 = arith.constant 406 : index
    %1697 = memref.load %arg1[%c406] : memref<474xf32, #tpu.memory_space<smem>>
    %1698 = vector.broadcast %1697 : f32 to vector<8x128xf32>
    %1699 = arith.mulf %920, %1698 : vector<8x128xf32>
    %1700 = arith.addf %1696, %1699 : vector<8x128xf32>
    %c414 = arith.constant 414 : index
    %1701 = memref.load %arg1[%c414] : memref<474xf32, #tpu.memory_space<smem>>
    %1702 = vector.broadcast %1701 : f32 to vector<8x128xf32>
    %1703 = arith.mulf %987, %1702 : vector<8x128xf32>
    %1704 = arith.addf %1700, %1703 : vector<8x128xf32>
    %c422 = arith.constant 422 : index
    %1705 = memref.load %arg1[%c422] : memref<474xf32, #tpu.memory_space<smem>>
    %1706 = vector.broadcast %1705 : f32 to vector<8x128xf32>
    %1707 = arith.mulf %1054, %1706 : vector<8x128xf32>
    %1708 = arith.addf %1704, %1707 : vector<8x128xf32>
    %c430 = arith.constant 430 : index
    %1709 = memref.load %arg1[%c430] : memref<474xf32, #tpu.memory_space<smem>>
    %1710 = vector.broadcast %1709 : f32 to vector<8x128xf32>
    %1711 = arith.mulf %1121, %1710 : vector<8x128xf32>
    %1712 = arith.addf %1708, %1711 : vector<8x128xf32>
    %c438 = arith.constant 438 : index
    %1713 = memref.load %arg1[%c438] : memref<474xf32, #tpu.memory_space<smem>>
    %1714 = vector.broadcast %1713 : f32 to vector<8x128xf32>
    %1715 = arith.mulf %1188, %1714 : vector<8x128xf32>
    %1716 = arith.addf %1712, %1715 : vector<8x128xf32>
    %c446 = arith.constant 446 : index
    %1717 = memref.load %arg1[%c446] : memref<474xf32, #tpu.memory_space<smem>>
    %1718 = vector.broadcast %1717 : f32 to vector<8x128xf32>
    %1719 = arith.mulf %1255, %1718 : vector<8x128xf32>
    %1720 = arith.addf %1716, %1719 : vector<8x128xf32>
    %c454 = arith.constant 454 : index
    %1721 = memref.load %arg1[%c454] : memref<474xf32, #tpu.memory_space<smem>>
    %1722 = vector.broadcast %1721 : f32 to vector<8x128xf32>
    %1723 = arith.addf %1720, %1722 : vector<8x128xf32>
    %1724 = math.tanh %1723 : vector<8x128xf32>
    %c327 = arith.constant 327 : index
    %1725 = memref.load %arg1[%c327] : memref<474xf32, #tpu.memory_space<smem>>
    %1726 = vector.broadcast %1725 : f32 to vector<8x128xf32>
    %1727 = arith.mulf %250, %1726 : vector<8x128xf32>
    %c335 = arith.constant 335 : index
    %1728 = memref.load %arg1[%c335] : memref<474xf32, #tpu.memory_space<smem>>
    %1729 = vector.broadcast %1728 : f32 to vector<8x128xf32>
    %1730 = arith.mulf %317, %1729 : vector<8x128xf32>
    %1731 = arith.addf %1727, %1730 : vector<8x128xf32>
    %c343 = arith.constant 343 : index
    %1732 = memref.load %arg1[%c343] : memref<474xf32, #tpu.memory_space<smem>>
    %1733 = vector.broadcast %1732 : f32 to vector<8x128xf32>
    %1734 = arith.mulf %384, %1733 : vector<8x128xf32>
    %1735 = arith.addf %1731, %1734 : vector<8x128xf32>
    %c351 = arith.constant 351 : index
    %1736 = memref.load %arg1[%c351] : memref<474xf32, #tpu.memory_space<smem>>
    %1737 = vector.broadcast %1736 : f32 to vector<8x128xf32>
    %1738 = arith.mulf %451, %1737 : vector<8x128xf32>
    %1739 = arith.addf %1735, %1738 : vector<8x128xf32>
    %c359 = arith.constant 359 : index
    %1740 = memref.load %arg1[%c359] : memref<474xf32, #tpu.memory_space<smem>>
    %1741 = vector.broadcast %1740 : f32 to vector<8x128xf32>
    %1742 = arith.mulf %518, %1741 : vector<8x128xf32>
    %1743 = arith.addf %1739, %1742 : vector<8x128xf32>
    %c367 = arith.constant 367 : index
    %1744 = memref.load %arg1[%c367] : memref<474xf32, #tpu.memory_space<smem>>
    %1745 = vector.broadcast %1744 : f32 to vector<8x128xf32>
    %1746 = arith.mulf %585, %1745 : vector<8x128xf32>
    %1747 = arith.addf %1743, %1746 : vector<8x128xf32>
    %c375 = arith.constant 375 : index
    %1748 = memref.load %arg1[%c375] : memref<474xf32, #tpu.memory_space<smem>>
    %1749 = vector.broadcast %1748 : f32 to vector<8x128xf32>
    %1750 = arith.mulf %652, %1749 : vector<8x128xf32>
    %1751 = arith.addf %1747, %1750 : vector<8x128xf32>
    %c383 = arith.constant 383 : index
    %1752 = memref.load %arg1[%c383] : memref<474xf32, #tpu.memory_space<smem>>
    %1753 = vector.broadcast %1752 : f32 to vector<8x128xf32>
    %1754 = arith.mulf %719, %1753 : vector<8x128xf32>
    %1755 = arith.addf %1751, %1754 : vector<8x128xf32>
    %c391 = arith.constant 391 : index
    %1756 = memref.load %arg1[%c391] : memref<474xf32, #tpu.memory_space<smem>>
    %1757 = vector.broadcast %1756 : f32 to vector<8x128xf32>
    %1758 = arith.mulf %786, %1757 : vector<8x128xf32>
    %1759 = arith.addf %1755, %1758 : vector<8x128xf32>
    %c399 = arith.constant 399 : index
    %1760 = memref.load %arg1[%c399] : memref<474xf32, #tpu.memory_space<smem>>
    %1761 = vector.broadcast %1760 : f32 to vector<8x128xf32>
    %1762 = arith.mulf %853, %1761 : vector<8x128xf32>
    %1763 = arith.addf %1759, %1762 : vector<8x128xf32>
    %c407 = arith.constant 407 : index
    %1764 = memref.load %arg1[%c407] : memref<474xf32, #tpu.memory_space<smem>>
    %1765 = vector.broadcast %1764 : f32 to vector<8x128xf32>
    %1766 = arith.mulf %920, %1765 : vector<8x128xf32>
    %1767 = arith.addf %1763, %1766 : vector<8x128xf32>
    %c415 = arith.constant 415 : index
    %1768 = memref.load %arg1[%c415] : memref<474xf32, #tpu.memory_space<smem>>
    %1769 = vector.broadcast %1768 : f32 to vector<8x128xf32>
    %1770 = arith.mulf %987, %1769 : vector<8x128xf32>
    %1771 = arith.addf %1767, %1770 : vector<8x128xf32>
    %c423 = arith.constant 423 : index
    %1772 = memref.load %arg1[%c423] : memref<474xf32, #tpu.memory_space<smem>>
    %1773 = vector.broadcast %1772 : f32 to vector<8x128xf32>
    %1774 = arith.mulf %1054, %1773 : vector<8x128xf32>
    %1775 = arith.addf %1771, %1774 : vector<8x128xf32>
    %c431 = arith.constant 431 : index
    %1776 = memref.load %arg1[%c431] : memref<474xf32, #tpu.memory_space<smem>>
    %1777 = vector.broadcast %1776 : f32 to vector<8x128xf32>
    %1778 = arith.mulf %1121, %1777 : vector<8x128xf32>
    %1779 = arith.addf %1775, %1778 : vector<8x128xf32>
    %c439 = arith.constant 439 : index
    %1780 = memref.load %arg1[%c439] : memref<474xf32, #tpu.memory_space<smem>>
    %1781 = vector.broadcast %1780 : f32 to vector<8x128xf32>
    %1782 = arith.mulf %1188, %1781 : vector<8x128xf32>
    %1783 = arith.addf %1779, %1782 : vector<8x128xf32>
    %c447 = arith.constant 447 : index
    %1784 = memref.load %arg1[%c447] : memref<474xf32, #tpu.memory_space<smem>>
    %1785 = vector.broadcast %1784 : f32 to vector<8x128xf32>
    %1786 = arith.mulf %1255, %1785 : vector<8x128xf32>
    %1787 = arith.addf %1783, %1786 : vector<8x128xf32>
    %c455 = arith.constant 455 : index
    %1788 = memref.load %arg1[%c455] : memref<474xf32, #tpu.memory_space<smem>>
    %1789 = vector.broadcast %1788 : f32 to vector<8x128xf32>
    %1790 = arith.addf %1787, %1789 : vector<8x128xf32>
    %1791 = math.tanh %1790 : vector<8x128xf32>
    %c456 = arith.constant 456 : index
    %1792 = memref.load %arg1[%c456] : memref<474xf32, #tpu.memory_space<smem>>
    %1793 = vector.broadcast %1792 : f32 to vector<8x128xf32>
    %1794 = arith.mulf %1322, %1793 : vector<8x128xf32>
    %c465 = arith.constant 465 : index
    %1795 = memref.load %arg1[%c465] : memref<474xf32, #tpu.memory_space<smem>>
    %1796 = vector.broadcast %1795 : f32 to vector<8x128xf32>
    %1797 = arith.mulf %1322, %1796 : vector<8x128xf32>
    %c457 = arith.constant 457 : index
    %1798 = memref.load %arg1[%c457] : memref<474xf32, #tpu.memory_space<smem>>
    %1799 = vector.broadcast %1798 : f32 to vector<8x128xf32>
    %1800 = arith.mulf %1389, %1799 : vector<8x128xf32>
    %1801 = arith.addf %1794, %1800 : vector<8x128xf32>
    %c466 = arith.constant 466 : index
    %1802 = memref.load %arg1[%c466] : memref<474xf32, #tpu.memory_space<smem>>
    %1803 = vector.broadcast %1802 : f32 to vector<8x128xf32>
    %1804 = arith.mulf %1389, %1803 : vector<8x128xf32>
    %1805 = arith.addf %1797, %1804 : vector<8x128xf32>
    %c458 = arith.constant 458 : index
    %1806 = memref.load %arg1[%c458] : memref<474xf32, #tpu.memory_space<smem>>
    %1807 = vector.broadcast %1806 : f32 to vector<8x128xf32>
    %1808 = arith.mulf %1456, %1807 : vector<8x128xf32>
    %1809 = arith.addf %1801, %1808 : vector<8x128xf32>
    %c467 = arith.constant 467 : index
    %1810 = memref.load %arg1[%c467] : memref<474xf32, #tpu.memory_space<smem>>
    %1811 = vector.broadcast %1810 : f32 to vector<8x128xf32>
    %1812 = arith.mulf %1456, %1811 : vector<8x128xf32>
    %1813 = arith.addf %1805, %1812 : vector<8x128xf32>
    %c459 = arith.constant 459 : index
    %1814 = memref.load %arg1[%c459] : memref<474xf32, #tpu.memory_space<smem>>
    %1815 = vector.broadcast %1814 : f32 to vector<8x128xf32>
    %1816 = arith.mulf %1523, %1815 : vector<8x128xf32>
    %1817 = arith.addf %1809, %1816 : vector<8x128xf32>
    %c468 = arith.constant 468 : index
    %1818 = memref.load %arg1[%c468] : memref<474xf32, #tpu.memory_space<smem>>
    %1819 = vector.broadcast %1818 : f32 to vector<8x128xf32>
    %1820 = arith.mulf %1523, %1819 : vector<8x128xf32>
    %1821 = arith.addf %1813, %1820 : vector<8x128xf32>
    %c460 = arith.constant 460 : index
    %1822 = memref.load %arg1[%c460] : memref<474xf32, #tpu.memory_space<smem>>
    %1823 = vector.broadcast %1822 : f32 to vector<8x128xf32>
    %1824 = arith.mulf %1590, %1823 : vector<8x128xf32>
    %1825 = arith.addf %1817, %1824 : vector<8x128xf32>
    %c469 = arith.constant 469 : index
    %1826 = memref.load %arg1[%c469] : memref<474xf32, #tpu.memory_space<smem>>
    %1827 = vector.broadcast %1826 : f32 to vector<8x128xf32>
    %1828 = arith.mulf %1590, %1827 : vector<8x128xf32>
    %1829 = arith.addf %1821, %1828 : vector<8x128xf32>
    %c461 = arith.constant 461 : index
    %1830 = memref.load %arg1[%c461] : memref<474xf32, #tpu.memory_space<smem>>
    %1831 = vector.broadcast %1830 : f32 to vector<8x128xf32>
    %1832 = arith.mulf %1657, %1831 : vector<8x128xf32>
    %1833 = arith.addf %1825, %1832 : vector<8x128xf32>
    %c470 = arith.constant 470 : index
    %1834 = memref.load %arg1[%c470] : memref<474xf32, #tpu.memory_space<smem>>
    %1835 = vector.broadcast %1834 : f32 to vector<8x128xf32>
    %1836 = arith.mulf %1657, %1835 : vector<8x128xf32>
    %1837 = arith.addf %1829, %1836 : vector<8x128xf32>
    %c462 = arith.constant 462 : index
    %1838 = memref.load %arg1[%c462] : memref<474xf32, #tpu.memory_space<smem>>
    %1839 = vector.broadcast %1838 : f32 to vector<8x128xf32>
    %1840 = arith.mulf %1724, %1839 : vector<8x128xf32>
    %1841 = arith.addf %1833, %1840 : vector<8x128xf32>
    %c471 = arith.constant 471 : index
    %1842 = memref.load %arg1[%c471] : memref<474xf32, #tpu.memory_space<smem>>
    %1843 = vector.broadcast %1842 : f32 to vector<8x128xf32>
    %1844 = arith.mulf %1724, %1843 : vector<8x128xf32>
    %1845 = arith.addf %1837, %1844 : vector<8x128xf32>
    %c463 = arith.constant 463 : index
    %1846 = memref.load %arg1[%c463] : memref<474xf32, #tpu.memory_space<smem>>
    %1847 = vector.broadcast %1846 : f32 to vector<8x128xf32>
    %1848 = arith.mulf %1791, %1847 : vector<8x128xf32>
    %1849 = arith.addf %1841, %1848 : vector<8x128xf32>
    %c472 = arith.constant 472 : index
    %1850 = memref.load %arg1[%c472] : memref<474xf32, #tpu.memory_space<smem>>
    %1851 = vector.broadcast %1850 : f32 to vector<8x128xf32>
    %1852 = arith.mulf %1791, %1851 : vector<8x128xf32>
    %1853 = arith.addf %1845, %1852 : vector<8x128xf32>
    %c464 = arith.constant 464 : index
    %1854 = memref.load %arg1[%c464] : memref<474xf32, #tpu.memory_space<smem>>
    %1855 = vector.broadcast %1854 : f32 to vector<8x128xf32>
    %1856 = arith.addf %1849, %1855 : vector<8x128xf32>
    %c473 = arith.constant 473 : index
    %1857 = memref.load %arg1[%c473] : memref<474xf32, #tpu.memory_space<smem>>
    %1858 = vector.broadcast %1857 : f32 to vector<8x128xf32>
    %1859 = arith.addf %1853, %1858 : vector<8x128xf32>
    %1860 = arith.mulf %1856, %1859 : vector<8x128xf32>
    %c0_4 = arith.constant 0 : index
    %1861 = arith.index_cast %1 : i32 to index
    %c0_5 = arith.constant 0 : index
    %1862 = vector.load %arg3[%c0_4, %1861, %c0_5] : memref<1x16x128xf32, #tpu.memory_space<vmem>>, vector<1x8x128xf32>
    %1863 = vector.shape_cast %1862 : vector<1x8x128xf32> to vector<8x128xf32>
    %1864 = vector.shape_cast %1860 : vector<8x128xf32> to vector<1x8x128xf32>
    tpu.vector_store %arg3[%c0_4, %1861, %c0_5], %1864 {strides = array<i32>} : memref<1x16x128xf32, #tpu.memory_space<vmem>>, vector<1x8x128xf32>,
    %c1_i32 = arith.constant 1 : i32
    %c8_i32_6 = arith.constant 8 : i32
    %1865 = arith.muli %c1_i32, %c8_i32_6 : i32
    %1866 = tpu.assume_multiple %1865, 8 : i32
    %c0_7 = arith.constant 0 : index
    %1867 = arith.index_cast %1866 : i32 to index
    %c0_8 = arith.constant 0 : index
    %1868 = vector.load %arg2[%c0_7, %1867, %c0_8] : memref<2x16x128xf32, #tpu.memory_space<vmem>>, vector<1x8x128xf32>
    %1869 = vector.shape_cast %1868 : vector<1x8x128xf32> to vector<8x128xf32>
    %c1_9 = arith.constant 1 : index
    %1870 = arith.index_cast %1866 : i32 to index
    %c0_10 = arith.constant 0 : index
    %1871 = vector.load %arg2[%c1_9, %1870, %c0_10] : memref<2x16x128xf32, #tpu.memory_space<vmem>>, vector<1x8x128xf32>
    %1872 = vector.shape_cast %1871 : vector<1x8x128xf32> to vector<8x128xf32>
    %c0_11 = arith.constant 0 : index
    %1873 = memref.load %arg1[%c0_11] : memref<474xf32, #tpu.memory_space<smem>>
    %1874 = vector.broadcast %1873 : f32 to vector<8x128xf32>
    %1875 = arith.mulf %1869, %1874 : vector<8x128xf32>
    %c16_12 = arith.constant 16 : index
    %1876 = memref.load %arg1[%c16_12] : memref<474xf32, #tpu.memory_space<smem>>
    %1877 = vector.broadcast %1876 : f32 to vector<8x128xf32>
    %1878 = arith.mulf %1872, %1877 : vector<8x128xf32>
    %1879 = arith.addf %1875, %1878 : vector<8x128xf32>
    %c32_13 = arith.constant 32 : index
    %1880 = memref.load %arg1[%c32_13] : memref<474xf32, #tpu.memory_space<smem>>
    %1881 = vector.broadcast %1880 : f32 to vector<8x128xf32>
    %1882 = arith.addf %1879, %1881 : vector<8x128xf32>
    %1883 = math.tanh %1882 : vector<8x128xf32>
    %c1_14 = arith.constant 1 : index
    %1884 = memref.load %arg1[%c1_14] : memref<474xf32, #tpu.memory_space<smem>>
    %1885 = vector.broadcast %1884 : f32 to vector<8x128xf32>
    %1886 = arith.mulf %1869, %1885 : vector<8x128xf32>
    %c17_15 = arith.constant 17 : index
    %1887 = memref.load %arg1[%c17_15] : memref<474xf32, #tpu.memory_space<smem>>
    %1888 = vector.broadcast %1887 : f32 to vector<8x128xf32>
    %1889 = arith.mulf %1872, %1888 : vector<8x128xf32>
    %1890 = arith.addf %1886, %1889 : vector<8x128xf32>
    %c33_16 = arith.constant 33 : index
    %1891 = memref.load %arg1[%c33_16] : memref<474xf32, #tpu.memory_space<smem>>
    %1892 = vector.broadcast %1891 : f32 to vector<8x128xf32>
    %1893 = arith.addf %1890, %1892 : vector<8x128xf32>
    %1894 = math.tanh %1893 : vector<8x128xf32>
    %c2_17 = arith.constant 2 : index
    %1895 = memref.load %arg1[%c2_17] : memref<474xf32, #tpu.memory_space<smem>>
    %1896 = vector.broadcast %1895 : f32 to vector<8x128xf32>
    %1897 = arith.mulf %1869, %1896 : vector<8x128xf32>
    %c18_18 = arith.constant 18 : index
    %1898 = memref.load %arg1[%c18_18] : memref<474xf32, #tpu.memory_space<smem>>
    %1899 = vector.broadcast %1898 : f32 to vector<8x128xf32>
    %1900 = arith.mulf %1872, %1899 : vector<8x128xf32>
    %1901 = arith.addf %1897, %1900 : vector<8x128xf32>
    %c34_19 = arith.constant 34 : index
    %1902 = memref.load %arg1[%c34_19] : memref<474xf32, #tpu.memory_space<smem>>
    %1903 = vector.broadcast %1902 : f32 to vector<8x128xf32>
    %1904 = arith.addf %1901, %1903 : vector<8x128xf32>
    %1905 = math.tanh %1904 : vector<8x128xf32>
    %c3_20 = arith.constant 3 : index
    %1906 = memref.load %arg1[%c3_20] : memref<474xf32, #tpu.memory_space<smem>>
    %1907 = vector.broadcast %1906 : f32 to vector<8x128xf32>
    %1908 = arith.mulf %1869, %1907 : vector<8x128xf32>
    %c19_21 = arith.constant 19 : index
    %1909 = memref.load %arg1[%c19_21] : memref<474xf32, #tpu.memory_space<smem>>
    %1910 = vector.broadcast %1909 : f32 to vector<8x128xf32>
    %1911 = arith.mulf %1872, %1910 : vector<8x128xf32>
    %1912 = arith.addf %1908, %1911 : vector<8x128xf32>
    %c35_22 = arith.constant 35 : index
    %1913 = memref.load %arg1[%c35_22] : memref<474xf32, #tpu.memory_space<smem>>
    %1914 = vector.broadcast %1913 : f32 to vector<8x128xf32>
    %1915 = arith.addf %1912, %1914 : vector<8x128xf32>
    %1916 = math.tanh %1915 : vector<8x128xf32>
    %c4_23 = arith.constant 4 : index
    %1917 = memref.load %arg1[%c4_23] : memref<474xf32, #tpu.memory_space<smem>>
    %1918 = vector.broadcast %1917 : f32 to vector<8x128xf32>
    %1919 = arith.mulf %1869, %1918 : vector<8x128xf32>
    %c20_24 = arith.constant 20 : index
    %1920 = memref.load %arg1[%c20_24] : memref<474xf32, #tpu.memory_space<smem>>
    %1921 = vector.broadcast %1920 : f32 to vector<8x128xf32>
    %1922 = arith.mulf %1872, %1921 : vector<8x128xf32>
    %1923 = arith.addf %1919, %1922 : vector<8x128xf32>
    %c36_25 = arith.constant 36 : index
    %1924 = memref.load %arg1[%c36_25] : memref<474xf32, #tpu.memory_space<smem>>
    %1925 = vector.broadcast %1924 : f32 to vector<8x128xf32>
    %1926 = arith.addf %1923, %1925 : vector<8x128xf32>
    %1927 = math.tanh %1926 : vector<8x128xf32>
    %c5_26 = arith.constant 5 : index
    %1928 = memref.load %arg1[%c5_26] : memref<474xf32, #tpu.memory_space<smem>>
    %1929 = vector.broadcast %1928 : f32 to vector<8x128xf32>
    %1930 = arith.mulf %1869, %1929 : vector<8x128xf32>
    %c21_27 = arith.constant 21 : index
    %1931 = memref.load %arg1[%c21_27] : memref<474xf32, #tpu.memory_space<smem>>
    %1932 = vector.broadcast %1931 : f32 to vector<8x128xf32>
    %1933 = arith.mulf %1872, %1932 : vector<8x128xf32>
    %1934 = arith.addf %1930, %1933 : vector<8x128xf32>
    %c37_28 = arith.constant 37 : index
    %1935 = memref.load %arg1[%c37_28] : memref<474xf32, #tpu.memory_space<smem>>
    %1936 = vector.broadcast %1935 : f32 to vector<8x128xf32>
    %1937 = arith.addf %1934, %1936 : vector<8x128xf32>
    %1938 = math.tanh %1937 : vector<8x128xf32>
    %c6_29 = arith.constant 6 : index
    %1939 = memref.load %arg1[%c6_29] : memref<474xf32, #tpu.memory_space<smem>>
    %1940 = vector.broadcast %1939 : f32 to vector<8x128xf32>
    %1941 = arith.mulf %1869, %1940 : vector<8x128xf32>
    %c22_30 = arith.constant 22 : index
    %1942 = memref.load %arg1[%c22_30] : memref<474xf32, #tpu.memory_space<smem>>
    %1943 = vector.broadcast %1942 : f32 to vector<8x128xf32>
    %1944 = arith.mulf %1872, %1943 : vector<8x128xf32>
    %1945 = arith.addf %1941, %1944 : vector<8x128xf32>
    %c38_31 = arith.constant 38 : index
    %1946 = memref.load %arg1[%c38_31] : memref<474xf32, #tpu.memory_space<smem>>
    %1947 = vector.broadcast %1946 : f32 to vector<8x128xf32>
    %1948 = arith.addf %1945, %1947 : vector<8x128xf32>
    %1949 = math.tanh %1948 : vector<8x128xf32>
    %c7_32 = arith.constant 7 : index
    %1950 = memref.load %arg1[%c7_32] : memref<474xf32, #tpu.memory_space<smem>>
    %1951 = vector.broadcast %1950 : f32 to vector<8x128xf32>
    %1952 = arith.mulf %1869, %1951 : vector<8x128xf32>
    %c23_33 = arith.constant 23 : index
    %1953 = memref.load %arg1[%c23_33] : memref<474xf32, #tpu.memory_space<smem>>
    %1954 = vector.broadcast %1953 : f32 to vector<8x128xf32>
    %1955 = arith.mulf %1872, %1954 : vector<8x128xf32>
    %1956 = arith.addf %1952, %1955 : vector<8x128xf32>
    %c39_34 = arith.constant 39 : index
    %1957 = memref.load %arg1[%c39_34] : memref<474xf32, #tpu.memory_space<smem>>
    %1958 = vector.broadcast %1957 : f32 to vector<8x128xf32>
    %1959 = arith.addf %1956, %1958 : vector<8x128xf32>
    %1960 = math.tanh %1959 : vector<8x128xf32>
    %c8_35 = arith.constant 8 : index
    %1961 = memref.load %arg1[%c8_35] : memref<474xf32, #tpu.memory_space<smem>>
    %1962 = vector.broadcast %1961 : f32 to vector<8x128xf32>
    %1963 = arith.mulf %1869, %1962 : vector<8x128xf32>
    %c24_36 = arith.constant 24 : index
    %1964 = memref.load %arg1[%c24_36] : memref<474xf32, #tpu.memory_space<smem>>
    %1965 = vector.broadcast %1964 : f32 to vector<8x128xf32>
    %1966 = arith.mulf %1872, %1965 : vector<8x128xf32>
    %1967 = arith.addf %1963, %1966 : vector<8x128xf32>
    %c40_37 = arith.constant 40 : index
    %1968 = memref.load %arg1[%c40_37] : memref<474xf32, #tpu.memory_space<smem>>
    %1969 = vector.broadcast %1968 : f32 to vector<8x128xf32>
    %1970 = arith.addf %1967, %1969 : vector<8x128xf32>
    %1971 = math.tanh %1970 : vector<8x128xf32>
    %c9_38 = arith.constant 9 : index
    %1972 = memref.load %arg1[%c9_38] : memref<474xf32, #tpu.memory_space<smem>>
    %1973 = vector.broadcast %1972 : f32 to vector<8x128xf32>
    %1974 = arith.mulf %1869, %1973 : vector<8x128xf32>
    %c25_39 = arith.constant 25 : index
    %1975 = memref.load %arg1[%c25_39] : memref<474xf32, #tpu.memory_space<smem>>
    %1976 = vector.broadcast %1975 : f32 to vector<8x128xf32>
    %1977 = arith.mulf %1872, %1976 : vector<8x128xf32>
    %1978 = arith.addf %1974, %1977 : vector<8x128xf32>
    %c41_40 = arith.constant 41 : index
    %1979 = memref.load %arg1[%c41_40] : memref<474xf32, #tpu.memory_space<smem>>
    %1980 = vector.broadcast %1979 : f32 to vector<8x128xf32>
    %1981 = arith.addf %1978, %1980 : vector<8x128xf32>
    %1982 = math.tanh %1981 : vector<8x128xf32>
    %c10_41 = arith.constant 10 : index
    %1983 = memref.load %arg1[%c10_41] : memref<474xf32, #tpu.memory_space<smem>>
    %1984 = vector.broadcast %1983 : f32 to vector<8x128xf32>
    %1985 = arith.mulf %1869, %1984 : vector<8x128xf32>
    %c26_42 = arith.constant 26 : index
    %1986 = memref.load %arg1[%c26_42] : memref<474xf32, #tpu.memory_space<smem>>
    %1987 = vector.broadcast %1986 : f32 to vector<8x128xf32>
    %1988 = arith.mulf %1872, %1987 : vector<8x128xf32>
    %1989 = arith.addf %1985, %1988 : vector<8x128xf32>
    %c42_43 = arith.constant 42 : index
    %1990 = memref.load %arg1[%c42_43] : memref<474xf32, #tpu.memory_space<smem>>
    %1991 = vector.broadcast %1990 : f32 to vector<8x128xf32>
    %1992 = arith.addf %1989, %1991 : vector<8x128xf32>
    %1993 = math.tanh %1992 : vector<8x128xf32>
    %c11_44 = arith.constant 11 : index
    %1994 = memref.load %arg1[%c11_44] : memref<474xf32, #tpu.memory_space<smem>>
    %1995 = vector.broadcast %1994 : f32 to vector<8x128xf32>
    %1996 = arith.mulf %1869, %1995 : vector<8x128xf32>
    %c27_45 = arith.constant 27 : index
    %1997 = memref.load %arg1[%c27_45] : memref<474xf32, #tpu.memory_space<smem>>
    %1998 = vector.broadcast %1997 : f32 to vector<8x128xf32>
    %1999 = arith.mulf %1872, %1998 : vector<8x128xf32>
    %2000 = arith.addf %1996, %1999 : vector<8x128xf32>
    %c43_46 = arith.constant 43 : index
    %2001 = memref.load %arg1[%c43_46] : memref<474xf32, #tpu.memory_space<smem>>
    %2002 = vector.broadcast %2001 : f32 to vector<8x128xf32>
    %2003 = arith.addf %2000, %2002 : vector<8x128xf32>
    %2004 = math.tanh %2003 : vector<8x128xf32>
    %c12_47 = arith.constant 12 : index
    %2005 = memref.load %arg1[%c12_47] : memref<474xf32, #tpu.memory_space<smem>>
    %2006 = vector.broadcast %2005 : f32 to vector<8x128xf32>
    %2007 = arith.mulf %1869, %2006 : vector<8x128xf32>
    %c28_48 = arith.constant 28 : index
    %2008 = memref.load %arg1[%c28_48] : memref<474xf32, #tpu.memory_space<smem>>
    %2009 = vector.broadcast %2008 : f32 to vector<8x128xf32>
    %2010 = arith.mulf %1872, %2009 : vector<8x128xf32>
    %2011 = arith.addf %2007, %2010 : vector<8x128xf32>
    %c44_49 = arith.constant 44 : index
    %2012 = memref.load %arg1[%c44_49] : memref<474xf32, #tpu.memory_space<smem>>
    %2013 = vector.broadcast %2012 : f32 to vector<8x128xf32>
    %2014 = arith.addf %2011, %2013 : vector<8x128xf32>
    %2015 = math.tanh %2014 : vector<8x128xf32>
    %c13_50 = arith.constant 13 : index
    %2016 = memref.load %arg1[%c13_50] : memref<474xf32, #tpu.memory_space<smem>>
    %2017 = vector.broadcast %2016 : f32 to vector<8x128xf32>
    %2018 = arith.mulf %1869, %2017 : vector<8x128xf32>
    %c29_51 = arith.constant 29 : index
    %2019 = memref.load %arg1[%c29_51] : memref<474xf32, #tpu.memory_space<smem>>
    %2020 = vector.broadcast %2019 : f32 to vector<8x128xf32>
    %2021 = arith.mulf %1872, %2020 : vector<8x128xf32>
    %2022 = arith.addf %2018, %2021 : vector<8x128xf32>
    %c45_52 = arith.constant 45 : index
    %2023 = memref.load %arg1[%c45_52] : memref<474xf32, #tpu.memory_space<smem>>
    %2024 = vector.broadcast %2023 : f32 to vector<8x128xf32>
    %2025 = arith.addf %2022, %2024 : vector<8x128xf32>
    %2026 = math.tanh %2025 : vector<8x128xf32>
    %c14_53 = arith.constant 14 : index
    %2027 = memref.load %arg1[%c14_53] : memref<474xf32, #tpu.memory_space<smem>>
    %2028 = vector.broadcast %2027 : f32 to vector<8x128xf32>
    %2029 = arith.mulf %1869, %2028 : vector<8x128xf32>
    %c30_54 = arith.constant 30 : index
    %2030 = memref.load %arg1[%c30_54] : memref<474xf32, #tpu.memory_space<smem>>
    %2031 = vector.broadcast %2030 : f32 to vector<8x128xf32>
    %2032 = arith.mulf %1872, %2031 : vector<8x128xf32>
    %2033 = arith.addf %2029, %2032 : vector<8x128xf32>
    %c46_55 = arith.constant 46 : index
    %2034 = memref.load %arg1[%c46_55] : memref<474xf32, #tpu.memory_space<smem>>
    %2035 = vector.broadcast %2034 : f32 to vector<8x128xf32>
    %2036 = arith.addf %2033, %2035 : vector<8x128xf32>
    %2037 = math.tanh %2036 : vector<8x128xf32>
    %c15_56 = arith.constant 15 : index
    %2038 = memref.load %arg1[%c15_56] : memref<474xf32, #tpu.memory_space<smem>>
    %2039 = vector.broadcast %2038 : f32 to vector<8x128xf32>
    %2040 = arith.mulf %1869, %2039 : vector<8x128xf32>
    %c31_57 = arith.constant 31 : index
    %2041 = memref.load %arg1[%c31_57] : memref<474xf32, #tpu.memory_space<smem>>
    %2042 = vector.broadcast %2041 : f32 to vector<8x128xf32>
    %2043 = arith.mulf %1872, %2042 : vector<8x128xf32>
    %2044 = arith.addf %2040, %2043 : vector<8x128xf32>
    %c47_58 = arith.constant 47 : index
    %2045 = memref.load %arg1[%c47_58] : memref<474xf32, #tpu.memory_space<smem>>
    %2046 = vector.broadcast %2045 : f32 to vector<8x128xf32>
    %2047 = arith.addf %2044, %2046 : vector<8x128xf32>
    %2048 = math.tanh %2047 : vector<8x128xf32>
    %c48_59 = arith.constant 48 : index
    %2049 = memref.load %arg1[%c48_59] : memref<474xf32, #tpu.memory_space<smem>>
    %2050 = vector.broadcast %2049 : f32 to vector<8x128xf32>
    %2051 = arith.mulf %1883, %2050 : vector<8x128xf32>
    %c64_60 = arith.constant 64 : index
    %2052 = memref.load %arg1[%c64_60] : memref<474xf32, #tpu.memory_space<smem>>
    %2053 = vector.broadcast %2052 : f32 to vector<8x128xf32>
    %2054 = arith.mulf %1894, %2053 : vector<8x128xf32>
    %2055 = arith.addf %2051, %2054 : vector<8x128xf32>
    %c80_61 = arith.constant 80 : index
    %2056 = memref.load %arg1[%c80_61] : memref<474xf32, #tpu.memory_space<smem>>
    %2057 = vector.broadcast %2056 : f32 to vector<8x128xf32>
    %2058 = arith.mulf %1905, %2057 : vector<8x128xf32>
    %2059 = arith.addf %2055, %2058 : vector<8x128xf32>
    %c96_62 = arith.constant 96 : index
    %2060 = memref.load %arg1[%c96_62] : memref<474xf32, #tpu.memory_space<smem>>
    %2061 = vector.broadcast %2060 : f32 to vector<8x128xf32>
    %2062 = arith.mulf %1916, %2061 : vector<8x128xf32>
    %2063 = arith.addf %2059, %2062 : vector<8x128xf32>
    %c112_63 = arith.constant 112 : index
    %2064 = memref.load %arg1[%c112_63] : memref<474xf32, #tpu.memory_space<smem>>
    %2065 = vector.broadcast %2064 : f32 to vector<8x128xf32>
    %2066 = arith.mulf %1927, %2065 : vector<8x128xf32>
    %2067 = arith.addf %2063, %2066 : vector<8x128xf32>
    %c128_64 = arith.constant 128 : index
    %2068 = memref.load %arg1[%c128_64] : memref<474xf32, #tpu.memory_space<smem>>
    %2069 = vector.broadcast %2068 : f32 to vector<8x128xf32>
    %2070 = arith.mulf %1938, %2069 : vector<8x128xf32>
    %2071 = arith.addf %2067, %2070 : vector<8x128xf32>
    %c144_65 = arith.constant 144 : index
    %2072 = memref.load %arg1[%c144_65] : memref<474xf32, #tpu.memory_space<smem>>
    %2073 = vector.broadcast %2072 : f32 to vector<8x128xf32>
    %2074 = arith.mulf %1949, %2073 : vector<8x128xf32>
    %2075 = arith.addf %2071, %2074 : vector<8x128xf32>
    %c160_66 = arith.constant 160 : index
    %2076 = memref.load %arg1[%c160_66] : memref<474xf32, #tpu.memory_space<smem>>
    %2077 = vector.broadcast %2076 : f32 to vector<8x128xf32>
    %2078 = arith.mulf %1960, %2077 : vector<8x128xf32>
    %2079 = arith.addf %2075, %2078 : vector<8x128xf32>
    %c176_67 = arith.constant 176 : index
    %2080 = memref.load %arg1[%c176_67] : memref<474xf32, #tpu.memory_space<smem>>
    %2081 = vector.broadcast %2080 : f32 to vector<8x128xf32>
    %2082 = arith.mulf %1971, %2081 : vector<8x128xf32>
    %2083 = arith.addf %2079, %2082 : vector<8x128xf32>
    %c192_68 = arith.constant 192 : index
    %2084 = memref.load %arg1[%c192_68] : memref<474xf32, #tpu.memory_space<smem>>
    %2085 = vector.broadcast %2084 : f32 to vector<8x128xf32>
    %2086 = arith.mulf %1982, %2085 : vector<8x128xf32>
    %2087 = arith.addf %2083, %2086 : vector<8x128xf32>
    %c208_69 = arith.constant 208 : index
    %2088 = memref.load %arg1[%c208_69] : memref<474xf32, #tpu.memory_space<smem>>
    %2089 = vector.broadcast %2088 : f32 to vector<8x128xf32>
    %2090 = arith.mulf %1993, %2089 : vector<8x128xf32>
    %2091 = arith.addf %2087, %2090 : vector<8x128xf32>
    %c224_70 = arith.constant 224 : index
    %2092 = memref.load %arg1[%c224_70] : memref<474xf32, #tpu.memory_space<smem>>
    %2093 = vector.broadcast %2092 : f32 to vector<8x128xf32>
    %2094 = arith.mulf %2004, %2093 : vector<8x128xf32>
    %2095 = arith.addf %2091, %2094 : vector<8x128xf32>
    %c240_71 = arith.constant 240 : index
    %2096 = memref.load %arg1[%c240_71] : memref<474xf32, #tpu.memory_space<smem>>
    %2097 = vector.broadcast %2096 : f32 to vector<8x128xf32>
    %2098 = arith.mulf %2015, %2097 : vector<8x128xf32>
    %2099 = arith.addf %2095, %2098 : vector<8x128xf32>
    %c256_72 = arith.constant 256 : index
    %2100 = memref.load %arg1[%c256_72] : memref<474xf32, #tpu.memory_space<smem>>
    %2101 = vector.broadcast %2100 : f32 to vector<8x128xf32>
    %2102 = arith.mulf %2026, %2101 : vector<8x128xf32>
    %2103 = arith.addf %2099, %2102 : vector<8x128xf32>
    %c272_73 = arith.constant 272 : index
    %2104 = memref.load %arg1[%c272_73] : memref<474xf32, #tpu.memory_space<smem>>
    %2105 = vector.broadcast %2104 : f32 to vector<8x128xf32>
    %2106 = arith.mulf %2037, %2105 : vector<8x128xf32>
    %2107 = arith.addf %2103, %2106 : vector<8x128xf32>
    %c288_74 = arith.constant 288 : index
    %2108 = memref.load %arg1[%c288_74] : memref<474xf32, #tpu.memory_space<smem>>
    %2109 = vector.broadcast %2108 : f32 to vector<8x128xf32>
    %2110 = arith.mulf %2048, %2109 : vector<8x128xf32>
    %2111 = arith.addf %2107, %2110 : vector<8x128xf32>
    %c304_75 = arith.constant 304 : index
    %2112 = memref.load %arg1[%c304_75] : memref<474xf32, #tpu.memory_space<smem>>
    %2113 = vector.broadcast %2112 : f32 to vector<8x128xf32>
    %2114 = arith.addf %2111, %2113 : vector<8x128xf32>
    %2115 = math.tanh %2114 : vector<8x128xf32>
    %c49_76 = arith.constant 49 : index
    %2116 = memref.load %arg1[%c49_76] : memref<474xf32, #tpu.memory_space<smem>>
    %2117 = vector.broadcast %2116 : f32 to vector<8x128xf32>
    %2118 = arith.mulf %1883, %2117 : vector<8x128xf32>
    %c65_77 = arith.constant 65 : index
    %2119 = memref.load %arg1[%c65_77] : memref<474xf32, #tpu.memory_space<smem>>
    %2120 = vector.broadcast %2119 : f32 to vector<8x128xf32>
    %2121 = arith.mulf %1894, %2120 : vector<8x128xf32>
    %2122 = arith.addf %2118, %2121 : vector<8x128xf32>
    %c81_78 = arith.constant 81 : index
    %2123 = memref.load %arg1[%c81_78] : memref<474xf32, #tpu.memory_space<smem>>
    %2124 = vector.broadcast %2123 : f32 to vector<8x128xf32>
    %2125 = arith.mulf %1905, %2124 : vector<8x128xf32>
    %2126 = arith.addf %2122, %2125 : vector<8x128xf32>
    %c97_79 = arith.constant 97 : index
    %2127 = memref.load %arg1[%c97_79] : memref<474xf32, #tpu.memory_space<smem>>
    %2128 = vector.broadcast %2127 : f32 to vector<8x128xf32>
    %2129 = arith.mulf %1916, %2128 : vector<8x128xf32>
    %2130 = arith.addf %2126, %2129 : vector<8x128xf32>
    %c113_80 = arith.constant 113 : index
    %2131 = memref.load %arg1[%c113_80] : memref<474xf32, #tpu.memory_space<smem>>
    %2132 = vector.broadcast %2131 : f32 to vector<8x128xf32>
    %2133 = arith.mulf %1927, %2132 : vector<8x128xf32>
    %2134 = arith.addf %2130, %2133 : vector<8x128xf32>
    %c129_81 = arith.constant 129 : index
    %2135 = memref.load %arg1[%c129_81] : memref<474xf32, #tpu.memory_space<smem>>
    %2136 = vector.broadcast %2135 : f32 to vector<8x128xf32>
    %2137 = arith.mulf %1938, %2136 : vector<8x128xf32>
    %2138 = arith.addf %2134, %2137 : vector<8x128xf32>
    %c145_82 = arith.constant 145 : index
    %2139 = memref.load %arg1[%c145_82] : memref<474xf32, #tpu.memory_space<smem>>
    %2140 = vector.broadcast %2139 : f32 to vector<8x128xf32>
    %2141 = arith.mulf %1949, %2140 : vector<8x128xf32>
    %2142 = arith.addf %2138, %2141 : vector<8x128xf32>
    %c161_83 = arith.constant 161 : index
    %2143 = memref.load %arg1[%c161_83] : memref<474xf32, #tpu.memory_space<smem>>
    %2144 = vector.broadcast %2143 : f32 to vector<8x128xf32>
    %2145 = arith.mulf %1960, %2144 : vector<8x128xf32>
    %2146 = arith.addf %2142, %2145 : vector<8x128xf32>
    %c177_84 = arith.constant 177 : index
    %2147 = memref.load %arg1[%c177_84] : memref<474xf32, #tpu.memory_space<smem>>
    %2148 = vector.broadcast %2147 : f32 to vector<8x128xf32>
    %2149 = arith.mulf %1971, %2148 : vector<8x128xf32>
    %2150 = arith.addf %2146, %2149 : vector<8x128xf32>
    %c193_85 = arith.constant 193 : index
    %2151 = memref.load %arg1[%c193_85] : memref<474xf32, #tpu.memory_space<smem>>
    %2152 = vector.broadcast %2151 : f32 to vector<8x128xf32>
    %2153 = arith.mulf %1982, %2152 : vector<8x128xf32>
    %2154 = arith.addf %2150, %2153 : vector<8x128xf32>
    %c209_86 = arith.constant 209 : index
    %2155 = memref.load %arg1[%c209_86] : memref<474xf32, #tpu.memory_space<smem>>
    %2156 = vector.broadcast %2155 : f32 to vector<8x128xf32>
    %2157 = arith.mulf %1993, %2156 : vector<8x128xf32>
    %2158 = arith.addf %2154, %2157 : vector<8x128xf32>
    %c225_87 = arith.constant 225 : index
    %2159 = memref.load %arg1[%c225_87] : memref<474xf32, #tpu.memory_space<smem>>
    %2160 = vector.broadcast %2159 : f32 to vector<8x128xf32>
    %2161 = arith.mulf %2004, %2160 : vector<8x128xf32>
    %2162 = arith.addf %2158, %2161 : vector<8x128xf32>
    %c241_88 = arith.constant 241 : index
    %2163 = memref.load %arg1[%c241_88] : memref<474xf32, #tpu.memory_space<smem>>
    %2164 = vector.broadcast %2163 : f32 to vector<8x128xf32>
    %2165 = arith.mulf %2015, %2164 : vector<8x128xf32>
    %2166 = arith.addf %2162, %2165 : vector<8x128xf32>
    %c257_89 = arith.constant 257 : index
    %2167 = memref.load %arg1[%c257_89] : memref<474xf32, #tpu.memory_space<smem>>
    %2168 = vector.broadcast %2167 : f32 to vector<8x128xf32>
    %2169 = arith.mulf %2026, %2168 : vector<8x128xf32>
    %2170 = arith.addf %2166, %2169 : vector<8x128xf32>
    %c273_90 = arith.constant 273 : index
    %2171 = memref.load %arg1[%c273_90] : memref<474xf32, #tpu.memory_space<smem>>
    %2172 = vector.broadcast %2171 : f32 to vector<8x128xf32>
    %2173 = arith.mulf %2037, %2172 : vector<8x128xf32>
    %2174 = arith.addf %2170, %2173 : vector<8x128xf32>
    %c289_91 = arith.constant 289 : index
    %2175 = memref.load %arg1[%c289_91] : memref<474xf32, #tpu.memory_space<smem>>
    %2176 = vector.broadcast %2175 : f32 to vector<8x128xf32>
    %2177 = arith.mulf %2048, %2176 : vector<8x128xf32>
    %2178 = arith.addf %2174, %2177 : vector<8x128xf32>
    %c305_92 = arith.constant 305 : index
    %2179 = memref.load %arg1[%c305_92] : memref<474xf32, #tpu.memory_space<smem>>
    %2180 = vector.broadcast %2179 : f32 to vector<8x128xf32>
    %2181 = arith.addf %2178, %2180 : vector<8x128xf32>
    %2182 = math.tanh %2181 : vector<8x128xf32>
    %c50_93 = arith.constant 50 : index
    %2183 = memref.load %arg1[%c50_93] : memref<474xf32, #tpu.memory_space<smem>>
    %2184 = vector.broadcast %2183 : f32 to vector<8x128xf32>
    %2185 = arith.mulf %1883, %2184 : vector<8x128xf32>
    %c66_94 = arith.constant 66 : index
    %2186 = memref.load %arg1[%c66_94] : memref<474xf32, #tpu.memory_space<smem>>
    %2187 = vector.broadcast %2186 : f32 to vector<8x128xf32>
    %2188 = arith.mulf %1894, %2187 : vector<8x128xf32>
    %2189 = arith.addf %2185, %2188 : vector<8x128xf32>
    %c82_95 = arith.constant 82 : index
    %2190 = memref.load %arg1[%c82_95] : memref<474xf32, #tpu.memory_space<smem>>
    %2191 = vector.broadcast %2190 : f32 to vector<8x128xf32>
    %2192 = arith.mulf %1905, %2191 : vector<8x128xf32>
    %2193 = arith.addf %2189, %2192 : vector<8x128xf32>
    %c98_96 = arith.constant 98 : index
    %2194 = memref.load %arg1[%c98_96] : memref<474xf32, #tpu.memory_space<smem>>
    %2195 = vector.broadcast %2194 : f32 to vector<8x128xf32>
    %2196 = arith.mulf %1916, %2195 : vector<8x128xf32>
    %2197 = arith.addf %2193, %2196 : vector<8x128xf32>
    %c114_97 = arith.constant 114 : index
    %2198 = memref.load %arg1[%c114_97] : memref<474xf32, #tpu.memory_space<smem>>
    %2199 = vector.broadcast %2198 : f32 to vector<8x128xf32>
    %2200 = arith.mulf %1927, %2199 : vector<8x128xf32>
    %2201 = arith.addf %2197, %2200 : vector<8x128xf32>
    %c130_98 = arith.constant 130 : index
    %2202 = memref.load %arg1[%c130_98] : memref<474xf32, #tpu.memory_space<smem>>
    %2203 = vector.broadcast %2202 : f32 to vector<8x128xf32>
    %2204 = arith.mulf %1938, %2203 : vector<8x128xf32>
    %2205 = arith.addf %2201, %2204 : vector<8x128xf32>
    %c146_99 = arith.constant 146 : index
    %2206 = memref.load %arg1[%c146_99] : memref<474xf32, #tpu.memory_space<smem>>
    %2207 = vector.broadcast %2206 : f32 to vector<8x128xf32>
    %2208 = arith.mulf %1949, %2207 : vector<8x128xf32>
    %2209 = arith.addf %2205, %2208 : vector<8x128xf32>
    %c162_100 = arith.constant 162 : index
    %2210 = memref.load %arg1[%c162_100] : memref<474xf32, #tpu.memory_space<smem>>
    %2211 = vector.broadcast %2210 : f32 to vector<8x128xf32>
    %2212 = arith.mulf %1960, %2211 : vector<8x128xf32>
    %2213 = arith.addf %2209, %2212 : vector<8x128xf32>
    %c178_101 = arith.constant 178 : index
    %2214 = memref.load %arg1[%c178_101] : memref<474xf32, #tpu.memory_space<smem>>
    %2215 = vector.broadcast %2214 : f32 to vector<8x128xf32>
    %2216 = arith.mulf %1971, %2215 : vector<8x128xf32>
    %2217 = arith.addf %2213, %2216 : vector<8x128xf32>
    %c194_102 = arith.constant 194 : index
    %2218 = memref.load %arg1[%c194_102] : memref<474xf32, #tpu.memory_space<smem>>
    %2219 = vector.broadcast %2218 : f32 to vector<8x128xf32>
    %2220 = arith.mulf %1982, %2219 : vector<8x128xf32>
    %2221 = arith.addf %2217, %2220 : vector<8x128xf32>
    %c210_103 = arith.constant 210 : index
    %2222 = memref.load %arg1[%c210_103] : memref<474xf32, #tpu.memory_space<smem>>
    %2223 = vector.broadcast %2222 : f32 to vector<8x128xf32>
    %2224 = arith.mulf %1993, %2223 : vector<8x128xf32>
    %2225 = arith.addf %2221, %2224 : vector<8x128xf32>
    %c226_104 = arith.constant 226 : index
    %2226 = memref.load %arg1[%c226_104] : memref<474xf32, #tpu.memory_space<smem>>
    %2227 = vector.broadcast %2226 : f32 to vector<8x128xf32>
    %2228 = arith.mulf %2004, %2227 : vector<8x128xf32>
    %2229 = arith.addf %2225, %2228 : vector<8x128xf32>
    %c242_105 = arith.constant 242 : index
    %2230 = memref.load %arg1[%c242_105] : memref<474xf32, #tpu.memory_space<smem>>
    %2231 = vector.broadcast %2230 : f32 to vector<8x128xf32>
    %2232 = arith.mulf %2015, %2231 : vector<8x128xf32>
    %2233 = arith.addf %2229, %2232 : vector<8x128xf32>
    %c258_106 = arith.constant 258 : index
    %2234 = memref.load %arg1[%c258_106] : memref<474xf32, #tpu.memory_space<smem>>
    %2235 = vector.broadcast %2234 : f32 to vector<8x128xf32>
    %2236 = arith.mulf %2026, %2235 : vector<8x128xf32>
    %2237 = arith.addf %2233, %2236 : vector<8x128xf32>
    %c274_107 = arith.constant 274 : index
    %2238 = memref.load %arg1[%c274_107] : memref<474xf32, #tpu.memory_space<smem>>
    %2239 = vector.broadcast %2238 : f32 to vector<8x128xf32>
    %2240 = arith.mulf %2037, %2239 : vector<8x128xf32>
    %2241 = arith.addf %2237, %2240 : vector<8x128xf32>
    %c290_108 = arith.constant 290 : index
    %2242 = memref.load %arg1[%c290_108] : memref<474xf32, #tpu.memory_space<smem>>
    %2243 = vector.broadcast %2242 : f32 to vector<8x128xf32>
    %2244 = arith.mulf %2048, %2243 : vector<8x128xf32>
    %2245 = arith.addf %2241, %2244 : vector<8x128xf32>
    %c306_109 = arith.constant 306 : index
    %2246 = memref.load %arg1[%c306_109] : memref<474xf32, #tpu.memory_space<smem>>
    %2247 = vector.broadcast %2246 : f32 to vector<8x128xf32>
    %2248 = arith.addf %2245, %2247 : vector<8x128xf32>
    %2249 = math.tanh %2248 : vector<8x128xf32>
    %c51_110 = arith.constant 51 : index
    %2250 = memref.load %arg1[%c51_110] : memref<474xf32, #tpu.memory_space<smem>>
    %2251 = vector.broadcast %2250 : f32 to vector<8x128xf32>
    %2252 = arith.mulf %1883, %2251 : vector<8x128xf32>
    %c67_111 = arith.constant 67 : index
    %2253 = memref.load %arg1[%c67_111] : memref<474xf32, #tpu.memory_space<smem>>
    %2254 = vector.broadcast %2253 : f32 to vector<8x128xf32>
    %2255 = arith.mulf %1894, %2254 : vector<8x128xf32>
    %2256 = arith.addf %2252, %2255 : vector<8x128xf32>
    %c83_112 = arith.constant 83 : index
    %2257 = memref.load %arg1[%c83_112] : memref<474xf32, #tpu.memory_space<smem>>
    %2258 = vector.broadcast %2257 : f32 to vector<8x128xf32>
    %2259 = arith.mulf %1905, %2258 : vector<8x128xf32>
    %2260 = arith.addf %2256, %2259 : vector<8x128xf32>
    %c99_113 = arith.constant 99 : index
    %2261 = memref.load %arg1[%c99_113] : memref<474xf32, #tpu.memory_space<smem>>
    %2262 = vector.broadcast %2261 : f32 to vector<8x128xf32>
    %2263 = arith.mulf %1916, %2262 : vector<8x128xf32>
    %2264 = arith.addf %2260, %2263 : vector<8x128xf32>
    %c115_114 = arith.constant 115 : index
    %2265 = memref.load %arg1[%c115_114] : memref<474xf32, #tpu.memory_space<smem>>
    %2266 = vector.broadcast %2265 : f32 to vector<8x128xf32>
    %2267 = arith.mulf %1927, %2266 : vector<8x128xf32>
    %2268 = arith.addf %2264, %2267 : vector<8x128xf32>
    %c131_115 = arith.constant 131 : index
    %2269 = memref.load %arg1[%c131_115] : memref<474xf32, #tpu.memory_space<smem>>
    %2270 = vector.broadcast %2269 : f32 to vector<8x128xf32>
    %2271 = arith.mulf %1938, %2270 : vector<8x128xf32>
    %2272 = arith.addf %2268, %2271 : vector<8x128xf32>
    %c147_116 = arith.constant 147 : index
    %2273 = memref.load %arg1[%c147_116] : memref<474xf32, #tpu.memory_space<smem>>
    %2274 = vector.broadcast %2273 : f32 to vector<8x128xf32>
    %2275 = arith.mulf %1949, %2274 : vector<8x128xf32>
    %2276 = arith.addf %2272, %2275 : vector<8x128xf32>
    %c163_117 = arith.constant 163 : index
    %2277 = memref.load %arg1[%c163_117] : memref<474xf32, #tpu.memory_space<smem>>
    %2278 = vector.broadcast %2277 : f32 to vector<8x128xf32>
    %2279 = arith.mulf %1960, %2278 : vector<8x128xf32>
    %2280 = arith.addf %2276, %2279 : vector<8x128xf32>
    %c179_118 = arith.constant 179 : index
    %2281 = memref.load %arg1[%c179_118] : memref<474xf32, #tpu.memory_space<smem>>
    %2282 = vector.broadcast %2281 : f32 to vector<8x128xf32>
    %2283 = arith.mulf %1971, %2282 : vector<8x128xf32>
    %2284 = arith.addf %2280, %2283 : vector<8x128xf32>
    %c195_119 = arith.constant 195 : index
    %2285 = memref.load %arg1[%c195_119] : memref<474xf32, #tpu.memory_space<smem>>
    %2286 = vector.broadcast %2285 : f32 to vector<8x128xf32>
    %2287 = arith.mulf %1982, %2286 : vector<8x128xf32>
    %2288 = arith.addf %2284, %2287 : vector<8x128xf32>
    %c211_120 = arith.constant 211 : index
    %2289 = memref.load %arg1[%c211_120] : memref<474xf32, #tpu.memory_space<smem>>
    %2290 = vector.broadcast %2289 : f32 to vector<8x128xf32>
    %2291 = arith.mulf %1993, %2290 : vector<8x128xf32>
    %2292 = arith.addf %2288, %2291 : vector<8x128xf32>
    %c227_121 = arith.constant 227 : index
    %2293 = memref.load %arg1[%c227_121] : memref<474xf32, #tpu.memory_space<smem>>
    %2294 = vector.broadcast %2293 : f32 to vector<8x128xf32>
    %2295 = arith.mulf %2004, %2294 : vector<8x128xf32>
    %2296 = arith.addf %2292, %2295 : vector<8x128xf32>
    %c243_122 = arith.constant 243 : index
    %2297 = memref.load %arg1[%c243_122] : memref<474xf32, #tpu.memory_space<smem>>
    %2298 = vector.broadcast %2297 : f32 to vector<8x128xf32>
    %2299 = arith.mulf %2015, %2298 : vector<8x128xf32>
    %2300 = arith.addf %2296, %2299 : vector<8x128xf32>
    %c259_123 = arith.constant 259 : index
    %2301 = memref.load %arg1[%c259_123] : memref<474xf32, #tpu.memory_space<smem>>
    %2302 = vector.broadcast %2301 : f32 to vector<8x128xf32>
    %2303 = arith.mulf %2026, %2302 : vector<8x128xf32>
    %2304 = arith.addf %2300, %2303 : vector<8x128xf32>
    %c275_124 = arith.constant 275 : index
    %2305 = memref.load %arg1[%c275_124] : memref<474xf32, #tpu.memory_space<smem>>
    %2306 = vector.broadcast %2305 : f32 to vector<8x128xf32>
    %2307 = arith.mulf %2037, %2306 : vector<8x128xf32>
    %2308 = arith.addf %2304, %2307 : vector<8x128xf32>
    %c291_125 = arith.constant 291 : index
    %2309 = memref.load %arg1[%c291_125] : memref<474xf32, #tpu.memory_space<smem>>
    %2310 = vector.broadcast %2309 : f32 to vector<8x128xf32>
    %2311 = arith.mulf %2048, %2310 : vector<8x128xf32>
    %2312 = arith.addf %2308, %2311 : vector<8x128xf32>
    %c307_126 = arith.constant 307 : index
    %2313 = memref.load %arg1[%c307_126] : memref<474xf32, #tpu.memory_space<smem>>
    %2314 = vector.broadcast %2313 : f32 to vector<8x128xf32>
    %2315 = arith.addf %2312, %2314 : vector<8x128xf32>
    %2316 = math.tanh %2315 : vector<8x128xf32>
    %c52_127 = arith.constant 52 : index
    %2317 = memref.load %arg1[%c52_127] : memref<474xf32, #tpu.memory_space<smem>>
    %2318 = vector.broadcast %2317 : f32 to vector<8x128xf32>
    %2319 = arith.mulf %1883, %2318 : vector<8x128xf32>
    %c68_128 = arith.constant 68 : index
    %2320 = memref.load %arg1[%c68_128] : memref<474xf32, #tpu.memory_space<smem>>
    %2321 = vector.broadcast %2320 : f32 to vector<8x128xf32>
    %2322 = arith.mulf %1894, %2321 : vector<8x128xf32>
    %2323 = arith.addf %2319, %2322 : vector<8x128xf32>
    %c84_129 = arith.constant 84 : index
    %2324 = memref.load %arg1[%c84_129] : memref<474xf32, #tpu.memory_space<smem>>
    %2325 = vector.broadcast %2324 : f32 to vector<8x128xf32>
    %2326 = arith.mulf %1905, %2325 : vector<8x128xf32>
    %2327 = arith.addf %2323, %2326 : vector<8x128xf32>
    %c100_130 = arith.constant 100 : index
    %2328 = memref.load %arg1[%c100_130] : memref<474xf32, #tpu.memory_space<smem>>
    %2329 = vector.broadcast %2328 : f32 to vector<8x128xf32>
    %2330 = arith.mulf %1916, %2329 : vector<8x128xf32>
    %2331 = arith.addf %2327, %2330 : vector<8x128xf32>
    %c116_131 = arith.constant 116 : index
    %2332 = memref.load %arg1[%c116_131] : memref<474xf32, #tpu.memory_space<smem>>
    %2333 = vector.broadcast %2332 : f32 to vector<8x128xf32>
    %2334 = arith.mulf %1927, %2333 : vector<8x128xf32>
    %2335 = arith.addf %2331, %2334 : vector<8x128xf32>
    %c132_132 = arith.constant 132 : index
    %2336 = memref.load %arg1[%c132_132] : memref<474xf32, #tpu.memory_space<smem>>
    %2337 = vector.broadcast %2336 : f32 to vector<8x128xf32>
    %2338 = arith.mulf %1938, %2337 : vector<8x128xf32>
    %2339 = arith.addf %2335, %2338 : vector<8x128xf32>
    %c148_133 = arith.constant 148 : index
    %2340 = memref.load %arg1[%c148_133] : memref<474xf32, #tpu.memory_space<smem>>
    %2341 = vector.broadcast %2340 : f32 to vector<8x128xf32>
    %2342 = arith.mulf %1949, %2341 : vector<8x128xf32>
    %2343 = arith.addf %2339, %2342 : vector<8x128xf32>
    %c164_134 = arith.constant 164 : index
    %2344 = memref.load %arg1[%c164_134] : memref<474xf32, #tpu.memory_space<smem>>
    %2345 = vector.broadcast %2344 : f32 to vector<8x128xf32>
    %2346 = arith.mulf %1960, %2345 : vector<8x128xf32>
    %2347 = arith.addf %2343, %2346 : vector<8x128xf32>
    %c180_135 = arith.constant 180 : index
    %2348 = memref.load %arg1[%c180_135] : memref<474xf32, #tpu.memory_space<smem>>
    %2349 = vector.broadcast %2348 : f32 to vector<8x128xf32>
    %2350 = arith.mulf %1971, %2349 : vector<8x128xf32>
    %2351 = arith.addf %2347, %2350 : vector<8x128xf32>
    %c196_136 = arith.constant 196 : index
    %2352 = memref.load %arg1[%c196_136] : memref<474xf32, #tpu.memory_space<smem>>
    %2353 = vector.broadcast %2352 : f32 to vector<8x128xf32>
    %2354 = arith.mulf %1982, %2353 : vector<8x128xf32>
    %2355 = arith.addf %2351, %2354 : vector<8x128xf32>
    %c212_137 = arith.constant 212 : index
    %2356 = memref.load %arg1[%c212_137] : memref<474xf32, #tpu.memory_space<smem>>
    %2357 = vector.broadcast %2356 : f32 to vector<8x128xf32>
    %2358 = arith.mulf %1993, %2357 : vector<8x128xf32>
    %2359 = arith.addf %2355, %2358 : vector<8x128xf32>
    %c228_138 = arith.constant 228 : index
    %2360 = memref.load %arg1[%c228_138] : memref<474xf32, #tpu.memory_space<smem>>
    %2361 = vector.broadcast %2360 : f32 to vector<8x128xf32>
    %2362 = arith.mulf %2004, %2361 : vector<8x128xf32>
    %2363 = arith.addf %2359, %2362 : vector<8x128xf32>
    %c244_139 = arith.constant 244 : index
    %2364 = memref.load %arg1[%c244_139] : memref<474xf32, #tpu.memory_space<smem>>
    %2365 = vector.broadcast %2364 : f32 to vector<8x128xf32>
    %2366 = arith.mulf %2015, %2365 : vector<8x128xf32>
    %2367 = arith.addf %2363, %2366 : vector<8x128xf32>
    %c260_140 = arith.constant 260 : index
    %2368 = memref.load %arg1[%c260_140] : memref<474xf32, #tpu.memory_space<smem>>
    %2369 = vector.broadcast %2368 : f32 to vector<8x128xf32>
    %2370 = arith.mulf %2026, %2369 : vector<8x128xf32>
    %2371 = arith.addf %2367, %2370 : vector<8x128xf32>
    %c276_141 = arith.constant 276 : index
    %2372 = memref.load %arg1[%c276_141] : memref<474xf32, #tpu.memory_space<smem>>
    %2373 = vector.broadcast %2372 : f32 to vector<8x128xf32>
    %2374 = arith.mulf %2037, %2373 : vector<8x128xf32>
    %2375 = arith.addf %2371, %2374 : vector<8x128xf32>
    %c292_142 = arith.constant 292 : index
    %2376 = memref.load %arg1[%c292_142] : memref<474xf32, #tpu.memory_space<smem>>
    %2377 = vector.broadcast %2376 : f32 to vector<8x128xf32>
    %2378 = arith.mulf %2048, %2377 : vector<8x128xf32>
    %2379 = arith.addf %2375, %2378 : vector<8x128xf32>
    %c308_143 = arith.constant 308 : index
    %2380 = memref.load %arg1[%c308_143] : memref<474xf32, #tpu.memory_space<smem>>
    %2381 = vector.broadcast %2380 : f32 to vector<8x128xf32>
    %2382 = arith.addf %2379, %2381 : vector<8x128xf32>
    %2383 = math.tanh %2382 : vector<8x128xf32>
    %c53_144 = arith.constant 53 : index
    %2384 = memref.load %arg1[%c53_144] : memref<474xf32, #tpu.memory_space<smem>>
    %2385 = vector.broadcast %2384 : f32 to vector<8x128xf32>
    %2386 = arith.mulf %1883, %2385 : vector<8x128xf32>
    %c69_145 = arith.constant 69 : index
    %2387 = memref.load %arg1[%c69_145] : memref<474xf32, #tpu.memory_space<smem>>
    %2388 = vector.broadcast %2387 : f32 to vector<8x128xf32>
    %2389 = arith.mulf %1894, %2388 : vector<8x128xf32>
    %2390 = arith.addf %2386, %2389 : vector<8x128xf32>
    %c85_146 = arith.constant 85 : index
    %2391 = memref.load %arg1[%c85_146] : memref<474xf32, #tpu.memory_space<smem>>
    %2392 = vector.broadcast %2391 : f32 to vector<8x128xf32>
    %2393 = arith.mulf %1905, %2392 : vector<8x128xf32>
    %2394 = arith.addf %2390, %2393 : vector<8x128xf32>
    %c101_147 = arith.constant 101 : index
    %2395 = memref.load %arg1[%c101_147] : memref<474xf32, #tpu.memory_space<smem>>
    %2396 = vector.broadcast %2395 : f32 to vector<8x128xf32>
    %2397 = arith.mulf %1916, %2396 : vector<8x128xf32>
    %2398 = arith.addf %2394, %2397 : vector<8x128xf32>
    %c117_148 = arith.constant 117 : index
    %2399 = memref.load %arg1[%c117_148] : memref<474xf32, #tpu.memory_space<smem>>
    %2400 = vector.broadcast %2399 : f32 to vector<8x128xf32>
    %2401 = arith.mulf %1927, %2400 : vector<8x128xf32>
    %2402 = arith.addf %2398, %2401 : vector<8x128xf32>
    %c133_149 = arith.constant 133 : index
    %2403 = memref.load %arg1[%c133_149] : memref<474xf32, #tpu.memory_space<smem>>
    %2404 = vector.broadcast %2403 : f32 to vector<8x128xf32>
    %2405 = arith.mulf %1938, %2404 : vector<8x128xf32>
    %2406 = arith.addf %2402, %2405 : vector<8x128xf32>
    %c149_150 = arith.constant 149 : index
    %2407 = memref.load %arg1[%c149_150] : memref<474xf32, #tpu.memory_space<smem>>
    %2408 = vector.broadcast %2407 : f32 to vector<8x128xf32>
    %2409 = arith.mulf %1949, %2408 : vector<8x128xf32>
    %2410 = arith.addf %2406, %2409 : vector<8x128xf32>
    %c165_151 = arith.constant 165 : index
    %2411 = memref.load %arg1[%c165_151] : memref<474xf32, #tpu.memory_space<smem>>
    %2412 = vector.broadcast %2411 : f32 to vector<8x128xf32>
    %2413 = arith.mulf %1960, %2412 : vector<8x128xf32>
    %2414 = arith.addf %2410, %2413 : vector<8x128xf32>
    %c181_152 = arith.constant 181 : index
    %2415 = memref.load %arg1[%c181_152] : memref<474xf32, #tpu.memory_space<smem>>
    %2416 = vector.broadcast %2415 : f32 to vector<8x128xf32>
    %2417 = arith.mulf %1971, %2416 : vector<8x128xf32>
    %2418 = arith.addf %2414, %2417 : vector<8x128xf32>
    %c197_153 = arith.constant 197 : index
    %2419 = memref.load %arg1[%c197_153] : memref<474xf32, #tpu.memory_space<smem>>
    %2420 = vector.broadcast %2419 : f32 to vector<8x128xf32>
    %2421 = arith.mulf %1982, %2420 : vector<8x128xf32>
    %2422 = arith.addf %2418, %2421 : vector<8x128xf32>
    %c213_154 = arith.constant 213 : index
    %2423 = memref.load %arg1[%c213_154] : memref<474xf32, #tpu.memory_space<smem>>
    %2424 = vector.broadcast %2423 : f32 to vector<8x128xf32>
    %2425 = arith.mulf %1993, %2424 : vector<8x128xf32>
    %2426 = arith.addf %2422, %2425 : vector<8x128xf32>
    %c229_155 = arith.constant 229 : index
    %2427 = memref.load %arg1[%c229_155] : memref<474xf32, #tpu.memory_space<smem>>
    %2428 = vector.broadcast %2427 : f32 to vector<8x128xf32>
    %2429 = arith.mulf %2004, %2428 : vector<8x128xf32>
    %2430 = arith.addf %2426, %2429 : vector<8x128xf32>
    %c245_156 = arith.constant 245 : index
    %2431 = memref.load %arg1[%c245_156] : memref<474xf32, #tpu.memory_space<smem>>
    %2432 = vector.broadcast %2431 : f32 to vector<8x128xf32>
    %2433 = arith.mulf %2015, %2432 : vector<8x128xf32>
    %2434 = arith.addf %2430, %2433 : vector<8x128xf32>
    %c261_157 = arith.constant 261 : index
    %2435 = memref.load %arg1[%c261_157] : memref<474xf32, #tpu.memory_space<smem>>
    %2436 = vector.broadcast %2435 : f32 to vector<8x128xf32>
    %2437 = arith.mulf %2026, %2436 : vector<8x128xf32>
    %2438 = arith.addf %2434, %2437 : vector<8x128xf32>
    %c277_158 = arith.constant 277 : index
    %2439 = memref.load %arg1[%c277_158] : memref<474xf32, #tpu.memory_space<smem>>
    %2440 = vector.broadcast %2439 : f32 to vector<8x128xf32>
    %2441 = arith.mulf %2037, %2440 : vector<8x128xf32>
    %2442 = arith.addf %2438, %2441 : vector<8x128xf32>
    %c293_159 = arith.constant 293 : index
    %2443 = memref.load %arg1[%c293_159] : memref<474xf32, #tpu.memory_space<smem>>
    %2444 = vector.broadcast %2443 : f32 to vector<8x128xf32>
    %2445 = arith.mulf %2048, %2444 : vector<8x128xf32>
    %2446 = arith.addf %2442, %2445 : vector<8x128xf32>
    %c309_160 = arith.constant 309 : index
    %2447 = memref.load %arg1[%c309_160] : memref<474xf32, #tpu.memory_space<smem>>
    %2448 = vector.broadcast %2447 : f32 to vector<8x128xf32>
    %2449 = arith.addf %2446, %2448 : vector<8x128xf32>
    %2450 = math.tanh %2449 : vector<8x128xf32>
    %c54_161 = arith.constant 54 : index
    %2451 = memref.load %arg1[%c54_161] : memref<474xf32, #tpu.memory_space<smem>>
    %2452 = vector.broadcast %2451 : f32 to vector<8x128xf32>
    %2453 = arith.mulf %1883, %2452 : vector<8x128xf32>
    %c70_162 = arith.constant 70 : index
    %2454 = memref.load %arg1[%c70_162] : memref<474xf32, #tpu.memory_space<smem>>
    %2455 = vector.broadcast %2454 : f32 to vector<8x128xf32>
    %2456 = arith.mulf %1894, %2455 : vector<8x128xf32>
    %2457 = arith.addf %2453, %2456 : vector<8x128xf32>
    %c86_163 = arith.constant 86 : index
    %2458 = memref.load %arg1[%c86_163] : memref<474xf32, #tpu.memory_space<smem>>
    %2459 = vector.broadcast %2458 : f32 to vector<8x128xf32>
    %2460 = arith.mulf %1905, %2459 : vector<8x128xf32>
    %2461 = arith.addf %2457, %2460 : vector<8x128xf32>
    %c102_164 = arith.constant 102 : index
    %2462 = memref.load %arg1[%c102_164] : memref<474xf32, #tpu.memory_space<smem>>
    %2463 = vector.broadcast %2462 : f32 to vector<8x128xf32>
    %2464 = arith.mulf %1916, %2463 : vector<8x128xf32>
    %2465 = arith.addf %2461, %2464 : vector<8x128xf32>
    %c118_165 = arith.constant 118 : index
    %2466 = memref.load %arg1[%c118_165] : memref<474xf32, #tpu.memory_space<smem>>
    %2467 = vector.broadcast %2466 : f32 to vector<8x128xf32>
    %2468 = arith.mulf %1927, %2467 : vector<8x128xf32>
    %2469 = arith.addf %2465, %2468 : vector<8x128xf32>
    %c134_166 = arith.constant 134 : index
    %2470 = memref.load %arg1[%c134_166] : memref<474xf32, #tpu.memory_space<smem>>
    %2471 = vector.broadcast %2470 : f32 to vector<8x128xf32>
    %2472 = arith.mulf %1938, %2471 : vector<8x128xf32>
    %2473 = arith.addf %2469, %2472 : vector<8x128xf32>
    %c150_167 = arith.constant 150 : index
    %2474 = memref.load %arg1[%c150_167] : memref<474xf32, #tpu.memory_space<smem>>
    %2475 = vector.broadcast %2474 : f32 to vector<8x128xf32>
    %2476 = arith.mulf %1949, %2475 : vector<8x128xf32>
    %2477 = arith.addf %2473, %2476 : vector<8x128xf32>
    %c166_168 = arith.constant 166 : index
    %2478 = memref.load %arg1[%c166_168] : memref<474xf32, #tpu.memory_space<smem>>
    %2479 = vector.broadcast %2478 : f32 to vector<8x128xf32>
    %2480 = arith.mulf %1960, %2479 : vector<8x128xf32>
    %2481 = arith.addf %2477, %2480 : vector<8x128xf32>
    %c182_169 = arith.constant 182 : index
    %2482 = memref.load %arg1[%c182_169] : memref<474xf32, #tpu.memory_space<smem>>
    %2483 = vector.broadcast %2482 : f32 to vector<8x128xf32>
    %2484 = arith.mulf %1971, %2483 : vector<8x128xf32>
    %2485 = arith.addf %2481, %2484 : vector<8x128xf32>
    %c198_170 = arith.constant 198 : index
    %2486 = memref.load %arg1[%c198_170] : memref<474xf32, #tpu.memory_space<smem>>
    %2487 = vector.broadcast %2486 : f32 to vector<8x128xf32>
    %2488 = arith.mulf %1982, %2487 : vector<8x128xf32>
    %2489 = arith.addf %2485, %2488 : vector<8x128xf32>
    %c214_171 = arith.constant 214 : index
    %2490 = memref.load %arg1[%c214_171] : memref<474xf32, #tpu.memory_space<smem>>
    %2491 = vector.broadcast %2490 : f32 to vector<8x128xf32>
    %2492 = arith.mulf %1993, %2491 : vector<8x128xf32>
    %2493 = arith.addf %2489, %2492 : vector<8x128xf32>
    %c230_172 = arith.constant 230 : index
    %2494 = memref.load %arg1[%c230_172] : memref<474xf32, #tpu.memory_space<smem>>
    %2495 = vector.broadcast %2494 : f32 to vector<8x128xf32>
    %2496 = arith.mulf %2004, %2495 : vector<8x128xf32>
    %2497 = arith.addf %2493, %2496 : vector<8x128xf32>
    %c246_173 = arith.constant 246 : index
    %2498 = memref.load %arg1[%c246_173] : memref<474xf32, #tpu.memory_space<smem>>
    %2499 = vector.broadcast %2498 : f32 to vector<8x128xf32>
    %2500 = arith.mulf %2015, %2499 : vector<8x128xf32>
    %2501 = arith.addf %2497, %2500 : vector<8x128xf32>
    %c262_174 = arith.constant 262 : index
    %2502 = memref.load %arg1[%c262_174] : memref<474xf32, #tpu.memory_space<smem>>
    %2503 = vector.broadcast %2502 : f32 to vector<8x128xf32>
    %2504 = arith.mulf %2026, %2503 : vector<8x128xf32>
    %2505 = arith.addf %2501, %2504 : vector<8x128xf32>
    %c278_175 = arith.constant 278 : index
    %2506 = memref.load %arg1[%c278_175] : memref<474xf32, #tpu.memory_space<smem>>
    %2507 = vector.broadcast %2506 : f32 to vector<8x128xf32>
    %2508 = arith.mulf %2037, %2507 : vector<8x128xf32>
    %2509 = arith.addf %2505, %2508 : vector<8x128xf32>
    %c294_176 = arith.constant 294 : index
    %2510 = memref.load %arg1[%c294_176] : memref<474xf32, #tpu.memory_space<smem>>
    %2511 = vector.broadcast %2510 : f32 to vector<8x128xf32>
    %2512 = arith.mulf %2048, %2511 : vector<8x128xf32>
    %2513 = arith.addf %2509, %2512 : vector<8x128xf32>
    %c310_177 = arith.constant 310 : index
    %2514 = memref.load %arg1[%c310_177] : memref<474xf32, #tpu.memory_space<smem>>
    %2515 = vector.broadcast %2514 : f32 to vector<8x128xf32>
    %2516 = arith.addf %2513, %2515 : vector<8x128xf32>
    %2517 = math.tanh %2516 : vector<8x128xf32>
    %c55_178 = arith.constant 55 : index
    %2518 = memref.load %arg1[%c55_178] : memref<474xf32, #tpu.memory_space<smem>>
    %2519 = vector.broadcast %2518 : f32 to vector<8x128xf32>
    %2520 = arith.mulf %1883, %2519 : vector<8x128xf32>
    %c71_179 = arith.constant 71 : index
    %2521 = memref.load %arg1[%c71_179] : memref<474xf32, #tpu.memory_space<smem>>
    %2522 = vector.broadcast %2521 : f32 to vector<8x128xf32>
    %2523 = arith.mulf %1894, %2522 : vector<8x128xf32>
    %2524 = arith.addf %2520, %2523 : vector<8x128xf32>
    %c87_180 = arith.constant 87 : index
    %2525 = memref.load %arg1[%c87_180] : memref<474xf32, #tpu.memory_space<smem>>
    %2526 = vector.broadcast %2525 : f32 to vector<8x128xf32>
    %2527 = arith.mulf %1905, %2526 : vector<8x128xf32>
    %2528 = arith.addf %2524, %2527 : vector<8x128xf32>
    %c103_181 = arith.constant 103 : index
    %2529 = memref.load %arg1[%c103_181] : memref<474xf32, #tpu.memory_space<smem>>
    %2530 = vector.broadcast %2529 : f32 to vector<8x128xf32>
    %2531 = arith.mulf %1916, %2530 : vector<8x128xf32>
    %2532 = arith.addf %2528, %2531 : vector<8x128xf32>
    %c119_182 = arith.constant 119 : index
    %2533 = memref.load %arg1[%c119_182] : memref<474xf32, #tpu.memory_space<smem>>
    %2534 = vector.broadcast %2533 : f32 to vector<8x128xf32>
    %2535 = arith.mulf %1927, %2534 : vector<8x128xf32>
    %2536 = arith.addf %2532, %2535 : vector<8x128xf32>
    %c135_183 = arith.constant 135 : index
    %2537 = memref.load %arg1[%c135_183] : memref<474xf32, #tpu.memory_space<smem>>
    %2538 = vector.broadcast %2537 : f32 to vector<8x128xf32>
    %2539 = arith.mulf %1938, %2538 : vector<8x128xf32>
    %2540 = arith.addf %2536, %2539 : vector<8x128xf32>
    %c151_184 = arith.constant 151 : index
    %2541 = memref.load %arg1[%c151_184] : memref<474xf32, #tpu.memory_space<smem>>
    %2542 = vector.broadcast %2541 : f32 to vector<8x128xf32>
    %2543 = arith.mulf %1949, %2542 : vector<8x128xf32>
    %2544 = arith.addf %2540, %2543 : vector<8x128xf32>
    %c167_185 = arith.constant 167 : index
    %2545 = memref.load %arg1[%c167_185] : memref<474xf32, #tpu.memory_space<smem>>
    %2546 = vector.broadcast %2545 : f32 to vector<8x128xf32>
    %2547 = arith.mulf %1960, %2546 : vector<8x128xf32>
    %2548 = arith.addf %2544, %2547 : vector<8x128xf32>
    %c183_186 = arith.constant 183 : index
    %2549 = memref.load %arg1[%c183_186] : memref<474xf32, #tpu.memory_space<smem>>
    %2550 = vector.broadcast %2549 : f32 to vector<8x128xf32>
    %2551 = arith.mulf %1971, %2550 : vector<8x128xf32>
    %2552 = arith.addf %2548, %2551 : vector<8x128xf32>
    %c199_187 = arith.constant 199 : index
    %2553 = memref.load %arg1[%c199_187] : memref<474xf32, #tpu.memory_space<smem>>
    %2554 = vector.broadcast %2553 : f32 to vector<8x128xf32>
    %2555 = arith.mulf %1982, %2554 : vector<8x128xf32>
    %2556 = arith.addf %2552, %2555 : vector<8x128xf32>
    %c215_188 = arith.constant 215 : index
    %2557 = memref.load %arg1[%c215_188] : memref<474xf32, #tpu.memory_space<smem>>
    %2558 = vector.broadcast %2557 : f32 to vector<8x128xf32>
    %2559 = arith.mulf %1993, %2558 : vector<8x128xf32>
    %2560 = arith.addf %2556, %2559 : vector<8x128xf32>
    %c231_189 = arith.constant 231 : index
    %2561 = memref.load %arg1[%c231_189] : memref<474xf32, #tpu.memory_space<smem>>
    %2562 = vector.broadcast %2561 : f32 to vector<8x128xf32>
    %2563 = arith.mulf %2004, %2562 : vector<8x128xf32>
    %2564 = arith.addf %2560, %2563 : vector<8x128xf32>
    %c247_190 = arith.constant 247 : index
    %2565 = memref.load %arg1[%c247_190] : memref<474xf32, #tpu.memory_space<smem>>
    %2566 = vector.broadcast %2565 : f32 to vector<8x128xf32>
    %2567 = arith.mulf %2015, %2566 : vector<8x128xf32>
    %2568 = arith.addf %2564, %2567 : vector<8x128xf32>
    %c263_191 = arith.constant 263 : index
    %2569 = memref.load %arg1[%c263_191] : memref<474xf32, #tpu.memory_space<smem>>
    %2570 = vector.broadcast %2569 : f32 to vector<8x128xf32>
    %2571 = arith.mulf %2026, %2570 : vector<8x128xf32>
    %2572 = arith.addf %2568, %2571 : vector<8x128xf32>
    %c279_192 = arith.constant 279 : index
    %2573 = memref.load %arg1[%c279_192] : memref<474xf32, #tpu.memory_space<smem>>
    %2574 = vector.broadcast %2573 : f32 to vector<8x128xf32>
    %2575 = arith.mulf %2037, %2574 : vector<8x128xf32>
    %2576 = arith.addf %2572, %2575 : vector<8x128xf32>
    %c295_193 = arith.constant 295 : index
    %2577 = memref.load %arg1[%c295_193] : memref<474xf32, #tpu.memory_space<smem>>
    %2578 = vector.broadcast %2577 : f32 to vector<8x128xf32>
    %2579 = arith.mulf %2048, %2578 : vector<8x128xf32>
    %2580 = arith.addf %2576, %2579 : vector<8x128xf32>
    %c311_194 = arith.constant 311 : index
    %2581 = memref.load %arg1[%c311_194] : memref<474xf32, #tpu.memory_space<smem>>
    %2582 = vector.broadcast %2581 : f32 to vector<8x128xf32>
    %2583 = arith.addf %2580, %2582 : vector<8x128xf32>
    %2584 = math.tanh %2583 : vector<8x128xf32>
    %c56_195 = arith.constant 56 : index
    %2585 = memref.load %arg1[%c56_195] : memref<474xf32, #tpu.memory_space<smem>>
    %2586 = vector.broadcast %2585 : f32 to vector<8x128xf32>
    %2587 = arith.mulf %1883, %2586 : vector<8x128xf32>
    %c72_196 = arith.constant 72 : index
    %2588 = memref.load %arg1[%c72_196] : memref<474xf32, #tpu.memory_space<smem>>
    %2589 = vector.broadcast %2588 : f32 to vector<8x128xf32>
    %2590 = arith.mulf %1894, %2589 : vector<8x128xf32>
    %2591 = arith.addf %2587, %2590 : vector<8x128xf32>
    %c88_197 = arith.constant 88 : index
    %2592 = memref.load %arg1[%c88_197] : memref<474xf32, #tpu.memory_space<smem>>
    %2593 = vector.broadcast %2592 : f32 to vector<8x128xf32>
    %2594 = arith.mulf %1905, %2593 : vector<8x128xf32>
    %2595 = arith.addf %2591, %2594 : vector<8x128xf32>
    %c104_198 = arith.constant 104 : index
    %2596 = memref.load %arg1[%c104_198] : memref<474xf32, #tpu.memory_space<smem>>
    %2597 = vector.broadcast %2596 : f32 to vector<8x128xf32>
    %2598 = arith.mulf %1916, %2597 : vector<8x128xf32>
    %2599 = arith.addf %2595, %2598 : vector<8x128xf32>
    %c120_199 = arith.constant 120 : index
    %2600 = memref.load %arg1[%c120_199] : memref<474xf32, #tpu.memory_space<smem>>
    %2601 = vector.broadcast %2600 : f32 to vector<8x128xf32>
    %2602 = arith.mulf %1927, %2601 : vector<8x128xf32>
    %2603 = arith.addf %2599, %2602 : vector<8x128xf32>
    %c136_200 = arith.constant 136 : index
    %2604 = memref.load %arg1[%c136_200] : memref<474xf32, #tpu.memory_space<smem>>
    %2605 = vector.broadcast %2604 : f32 to vector<8x128xf32>
    %2606 = arith.mulf %1938, %2605 : vector<8x128xf32>
    %2607 = arith.addf %2603, %2606 : vector<8x128xf32>
    %c152_201 = arith.constant 152 : index
    %2608 = memref.load %arg1[%c152_201] : memref<474xf32, #tpu.memory_space<smem>>
    %2609 = vector.broadcast %2608 : f32 to vector<8x128xf32>
    %2610 = arith.mulf %1949, %2609 : vector<8x128xf32>
    %2611 = arith.addf %2607, %2610 : vector<8x128xf32>
    %c168_202 = arith.constant 168 : index
    %2612 = memref.load %arg1[%c168_202] : memref<474xf32, #tpu.memory_space<smem>>
    %2613 = vector.broadcast %2612 : f32 to vector<8x128xf32>
    %2614 = arith.mulf %1960, %2613 : vector<8x128xf32>
    %2615 = arith.addf %2611, %2614 : vector<8x128xf32>
    %c184_203 = arith.constant 184 : index
    %2616 = memref.load %arg1[%c184_203] : memref<474xf32, #tpu.memory_space<smem>>
    %2617 = vector.broadcast %2616 : f32 to vector<8x128xf32>
    %2618 = arith.mulf %1971, %2617 : vector<8x128xf32>
    %2619 = arith.addf %2615, %2618 : vector<8x128xf32>
    %c200_204 = arith.constant 200 : index
    %2620 = memref.load %arg1[%c200_204] : memref<474xf32, #tpu.memory_space<smem>>
    %2621 = vector.broadcast %2620 : f32 to vector<8x128xf32>
    %2622 = arith.mulf %1982, %2621 : vector<8x128xf32>
    %2623 = arith.addf %2619, %2622 : vector<8x128xf32>
    %c216_205 = arith.constant 216 : index
    %2624 = memref.load %arg1[%c216_205] : memref<474xf32, #tpu.memory_space<smem>>
    %2625 = vector.broadcast %2624 : f32 to vector<8x128xf32>
    %2626 = arith.mulf %1993, %2625 : vector<8x128xf32>
    %2627 = arith.addf %2623, %2626 : vector<8x128xf32>
    %c232_206 = arith.constant 232 : index
    %2628 = memref.load %arg1[%c232_206] : memref<474xf32, #tpu.memory_space<smem>>
    %2629 = vector.broadcast %2628 : f32 to vector<8x128xf32>
    %2630 = arith.mulf %2004, %2629 : vector<8x128xf32>
    %2631 = arith.addf %2627, %2630 : vector<8x128xf32>
    %c248_207 = arith.constant 248 : index
    %2632 = memref.load %arg1[%c248_207] : memref<474xf32, #tpu.memory_space<smem>>
    %2633 = vector.broadcast %2632 : f32 to vector<8x128xf32>
    %2634 = arith.mulf %2015, %2633 : vector<8x128xf32>
    %2635 = arith.addf %2631, %2634 : vector<8x128xf32>
    %c264_208 = arith.constant 264 : index
    %2636 = memref.load %arg1[%c264_208] : memref<474xf32, #tpu.memory_space<smem>>
    %2637 = vector.broadcast %2636 : f32 to vector<8x128xf32>
    %2638 = arith.mulf %2026, %2637 : vector<8x128xf32>
    %2639 = arith.addf %2635, %2638 : vector<8x128xf32>
    %c280_209 = arith.constant 280 : index
    %2640 = memref.load %arg1[%c280_209] : memref<474xf32, #tpu.memory_space<smem>>
    %2641 = vector.broadcast %2640 : f32 to vector<8x128xf32>
    %2642 = arith.mulf %2037, %2641 : vector<8x128xf32>
    %2643 = arith.addf %2639, %2642 : vector<8x128xf32>
    %c296_210 = arith.constant 296 : index
    %2644 = memref.load %arg1[%c296_210] : memref<474xf32, #tpu.memory_space<smem>>
    %2645 = vector.broadcast %2644 : f32 to vector<8x128xf32>
    %2646 = arith.mulf %2048, %2645 : vector<8x128xf32>
    %2647 = arith.addf %2643, %2646 : vector<8x128xf32>
    %c312_211 = arith.constant 312 : index
    %2648 = memref.load %arg1[%c312_211] : memref<474xf32, #tpu.memory_space<smem>>
    %2649 = vector.broadcast %2648 : f32 to vector<8x128xf32>
    %2650 = arith.addf %2647, %2649 : vector<8x128xf32>
    %2651 = math.tanh %2650 : vector<8x128xf32>
    %c57_212 = arith.constant 57 : index
    %2652 = memref.load %arg1[%c57_212] : memref<474xf32, #tpu.memory_space<smem>>
    %2653 = vector.broadcast %2652 : f32 to vector<8x128xf32>
    %2654 = arith.mulf %1883, %2653 : vector<8x128xf32>
    %c73_213 = arith.constant 73 : index
    %2655 = memref.load %arg1[%c73_213] : memref<474xf32, #tpu.memory_space<smem>>
    %2656 = vector.broadcast %2655 : f32 to vector<8x128xf32>
    %2657 = arith.mulf %1894, %2656 : vector<8x128xf32>
    %2658 = arith.addf %2654, %2657 : vector<8x128xf32>
    %c89_214 = arith.constant 89 : index
    %2659 = memref.load %arg1[%c89_214] : memref<474xf32, #tpu.memory_space<smem>>
    %2660 = vector.broadcast %2659 : f32 to vector<8x128xf32>
    %2661 = arith.mulf %1905, %2660 : vector<8x128xf32>
    %2662 = arith.addf %2658, %2661 : vector<8x128xf32>
    %c105_215 = arith.constant 105 : index
    %2663 = memref.load %arg1[%c105_215] : memref<474xf32, #tpu.memory_space<smem>>
    %2664 = vector.broadcast %2663 : f32 to vector<8x128xf32>
    %2665 = arith.mulf %1916, %2664 : vector<8x128xf32>
    %2666 = arith.addf %2662, %2665 : vector<8x128xf32>
    %c121_216 = arith.constant 121 : index
    %2667 = memref.load %arg1[%c121_216] : memref<474xf32, #tpu.memory_space<smem>>
    %2668 = vector.broadcast %2667 : f32 to vector<8x128xf32>
    %2669 = arith.mulf %1927, %2668 : vector<8x128xf32>
    %2670 = arith.addf %2666, %2669 : vector<8x128xf32>
    %c137_217 = arith.constant 137 : index
    %2671 = memref.load %arg1[%c137_217] : memref<474xf32, #tpu.memory_space<smem>>
    %2672 = vector.broadcast %2671 : f32 to vector<8x128xf32>
    %2673 = arith.mulf %1938, %2672 : vector<8x128xf32>
    %2674 = arith.addf %2670, %2673 : vector<8x128xf32>
    %c153_218 = arith.constant 153 : index
    %2675 = memref.load %arg1[%c153_218] : memref<474xf32, #tpu.memory_space<smem>>
    %2676 = vector.broadcast %2675 : f32 to vector<8x128xf32>
    %2677 = arith.mulf %1949, %2676 : vector<8x128xf32>
    %2678 = arith.addf %2674, %2677 : vector<8x128xf32>
    %c169_219 = arith.constant 169 : index
    %2679 = memref.load %arg1[%c169_219] : memref<474xf32, #tpu.memory_space<smem>>
    %2680 = vector.broadcast %2679 : f32 to vector<8x128xf32>
    %2681 = arith.mulf %1960, %2680 : vector<8x128xf32>
    %2682 = arith.addf %2678, %2681 : vector<8x128xf32>
    %c185_220 = arith.constant 185 : index
    %2683 = memref.load %arg1[%c185_220] : memref<474xf32, #tpu.memory_space<smem>>
    %2684 = vector.broadcast %2683 : f32 to vector<8x128xf32>
    %2685 = arith.mulf %1971, %2684 : vector<8x128xf32>
    %2686 = arith.addf %2682, %2685 : vector<8x128xf32>
    %c201_221 = arith.constant 201 : index
    %2687 = memref.load %arg1[%c201_221] : memref<474xf32, #tpu.memory_space<smem>>
    %2688 = vector.broadcast %2687 : f32 to vector<8x128xf32>
    %2689 = arith.mulf %1982, %2688 : vector<8x128xf32>
    %2690 = arith.addf %2686, %2689 : vector<8x128xf32>
    %c217_222 = arith.constant 217 : index
    %2691 = memref.load %arg1[%c217_222] : memref<474xf32, #tpu.memory_space<smem>>
    %2692 = vector.broadcast %2691 : f32 to vector<8x128xf32>
    %2693 = arith.mulf %1993, %2692 : vector<8x128xf32>
    %2694 = arith.addf %2690, %2693 : vector<8x128xf32>
    %c233_223 = arith.constant 233 : index
    %2695 = memref.load %arg1[%c233_223] : memref<474xf32, #tpu.memory_space<smem>>
    %2696 = vector.broadcast %2695 : f32 to vector<8x128xf32>
    %2697 = arith.mulf %2004, %2696 : vector<8x128xf32>
    %2698 = arith.addf %2694, %2697 : vector<8x128xf32>
    %c249_224 = arith.constant 249 : index
    %2699 = memref.load %arg1[%c249_224] : memref<474xf32, #tpu.memory_space<smem>>
    %2700 = vector.broadcast %2699 : f32 to vector<8x128xf32>
    %2701 = arith.mulf %2015, %2700 : vector<8x128xf32>
    %2702 = arith.addf %2698, %2701 : vector<8x128xf32>
    %c265_225 = arith.constant 265 : index
    %2703 = memref.load %arg1[%c265_225] : memref<474xf32, #tpu.memory_space<smem>>
    %2704 = vector.broadcast %2703 : f32 to vector<8x128xf32>
    %2705 = arith.mulf %2026, %2704 : vector<8x128xf32>
    %2706 = arith.addf %2702, %2705 : vector<8x128xf32>
    %c281_226 = arith.constant 281 : index
    %2707 = memref.load %arg1[%c281_226] : memref<474xf32, #tpu.memory_space<smem>>
    %2708 = vector.broadcast %2707 : f32 to vector<8x128xf32>
    %2709 = arith.mulf %2037, %2708 : vector<8x128xf32>
    %2710 = arith.addf %2706, %2709 : vector<8x128xf32>
    %c297_227 = arith.constant 297 : index
    %2711 = memref.load %arg1[%c297_227] : memref<474xf32, #tpu.memory_space<smem>>
    %2712 = vector.broadcast %2711 : f32 to vector<8x128xf32>
    %2713 = arith.mulf %2048, %2712 : vector<8x128xf32>
    %2714 = arith.addf %2710, %2713 : vector<8x128xf32>
    %c313_228 = arith.constant 313 : index
    %2715 = memref.load %arg1[%c313_228] : memref<474xf32, #tpu.memory_space<smem>>
    %2716 = vector.broadcast %2715 : f32 to vector<8x128xf32>
    %2717 = arith.addf %2714, %2716 : vector<8x128xf32>
    %2718 = math.tanh %2717 : vector<8x128xf32>
    %c58_229 = arith.constant 58 : index
    %2719 = memref.load %arg1[%c58_229] : memref<474xf32, #tpu.memory_space<smem>>
    %2720 = vector.broadcast %2719 : f32 to vector<8x128xf32>
    %2721 = arith.mulf %1883, %2720 : vector<8x128xf32>
    %c74_230 = arith.constant 74 : index
    %2722 = memref.load %arg1[%c74_230] : memref<474xf32, #tpu.memory_space<smem>>
    %2723 = vector.broadcast %2722 : f32 to vector<8x128xf32>
    %2724 = arith.mulf %1894, %2723 : vector<8x128xf32>
    %2725 = arith.addf %2721, %2724 : vector<8x128xf32>
    %c90_231 = arith.constant 90 : index
    %2726 = memref.load %arg1[%c90_231] : memref<474xf32, #tpu.memory_space<smem>>
    %2727 = vector.broadcast %2726 : f32 to vector<8x128xf32>
    %2728 = arith.mulf %1905, %2727 : vector<8x128xf32>
    %2729 = arith.addf %2725, %2728 : vector<8x128xf32>
    %c106_232 = arith.constant 106 : index
    %2730 = memref.load %arg1[%c106_232] : memref<474xf32, #tpu.memory_space<smem>>
    %2731 = vector.broadcast %2730 : f32 to vector<8x128xf32>
    %2732 = arith.mulf %1916, %2731 : vector<8x128xf32>
    %2733 = arith.addf %2729, %2732 : vector<8x128xf32>
    %c122_233 = arith.constant 122 : index
    %2734 = memref.load %arg1[%c122_233] : memref<474xf32, #tpu.memory_space<smem>>
    %2735 = vector.broadcast %2734 : f32 to vector<8x128xf32>
    %2736 = arith.mulf %1927, %2735 : vector<8x128xf32>
    %2737 = arith.addf %2733, %2736 : vector<8x128xf32>
    %c138_234 = arith.constant 138 : index
    %2738 = memref.load %arg1[%c138_234] : memref<474xf32, #tpu.memory_space<smem>>
    %2739 = vector.broadcast %2738 : f32 to vector<8x128xf32>
    %2740 = arith.mulf %1938, %2739 : vector<8x128xf32>
    %2741 = arith.addf %2737, %2740 : vector<8x128xf32>
    %c154_235 = arith.constant 154 : index
    %2742 = memref.load %arg1[%c154_235] : memref<474xf32, #tpu.memory_space<smem>>
    %2743 = vector.broadcast %2742 : f32 to vector<8x128xf32>
    %2744 = arith.mulf %1949, %2743 : vector<8x128xf32>
    %2745 = arith.addf %2741, %2744 : vector<8x128xf32>
    %c170_236 = arith.constant 170 : index
    %2746 = memref.load %arg1[%c170_236] : memref<474xf32, #tpu.memory_space<smem>>
    %2747 = vector.broadcast %2746 : f32 to vector<8x128xf32>
    %2748 = arith.mulf %1960, %2747 : vector<8x128xf32>
    %2749 = arith.addf %2745, %2748 : vector<8x128xf32>
    %c186_237 = arith.constant 186 : index
    %2750 = memref.load %arg1[%c186_237] : memref<474xf32, #tpu.memory_space<smem>>
    %2751 = vector.broadcast %2750 : f32 to vector<8x128xf32>
    %2752 = arith.mulf %1971, %2751 : vector<8x128xf32>
    %2753 = arith.addf %2749, %2752 : vector<8x128xf32>
    %c202_238 = arith.constant 202 : index
    %2754 = memref.load %arg1[%c202_238] : memref<474xf32, #tpu.memory_space<smem>>
    %2755 = vector.broadcast %2754 : f32 to vector<8x128xf32>
    %2756 = arith.mulf %1982, %2755 : vector<8x128xf32>
    %2757 = arith.addf %2753, %2756 : vector<8x128xf32>
    %c218_239 = arith.constant 218 : index
    %2758 = memref.load %arg1[%c218_239] : memref<474xf32, #tpu.memory_space<smem>>
    %2759 = vector.broadcast %2758 : f32 to vector<8x128xf32>
    %2760 = arith.mulf %1993, %2759 : vector<8x128xf32>
    %2761 = arith.addf %2757, %2760 : vector<8x128xf32>
    %c234_240 = arith.constant 234 : index
    %2762 = memref.load %arg1[%c234_240] : memref<474xf32, #tpu.memory_space<smem>>
    %2763 = vector.broadcast %2762 : f32 to vector<8x128xf32>
    %2764 = arith.mulf %2004, %2763 : vector<8x128xf32>
    %2765 = arith.addf %2761, %2764 : vector<8x128xf32>
    %c250_241 = arith.constant 250 : index
    %2766 = memref.load %arg1[%c250_241] : memref<474xf32, #tpu.memory_space<smem>>
    %2767 = vector.broadcast %2766 : f32 to vector<8x128xf32>
    %2768 = arith.mulf %2015, %2767 : vector<8x128xf32>
    %2769 = arith.addf %2765, %2768 : vector<8x128xf32>
    %c266_242 = arith.constant 266 : index
    %2770 = memref.load %arg1[%c266_242] : memref<474xf32, #tpu.memory_space<smem>>
    %2771 = vector.broadcast %2770 : f32 to vector<8x128xf32>
    %2772 = arith.mulf %2026, %2771 : vector<8x128xf32>
    %2773 = arith.addf %2769, %2772 : vector<8x128xf32>
    %c282_243 = arith.constant 282 : index
    %2774 = memref.load %arg1[%c282_243] : memref<474xf32, #tpu.memory_space<smem>>
    %2775 = vector.broadcast %2774 : f32 to vector<8x128xf32>
    %2776 = arith.mulf %2037, %2775 : vector<8x128xf32>
    %2777 = arith.addf %2773, %2776 : vector<8x128xf32>
    %c298_244 = arith.constant 298 : index
    %2778 = memref.load %arg1[%c298_244] : memref<474xf32, #tpu.memory_space<smem>>
    %2779 = vector.broadcast %2778 : f32 to vector<8x128xf32>
    %2780 = arith.mulf %2048, %2779 : vector<8x128xf32>
    %2781 = arith.addf %2777, %2780 : vector<8x128xf32>
    %c314_245 = arith.constant 314 : index
    %2782 = memref.load %arg1[%c314_245] : memref<474xf32, #tpu.memory_space<smem>>
    %2783 = vector.broadcast %2782 : f32 to vector<8x128xf32>
    %2784 = arith.addf %2781, %2783 : vector<8x128xf32>
    %2785 = math.tanh %2784 : vector<8x128xf32>
    %c59_246 = arith.constant 59 : index
    %2786 = memref.load %arg1[%c59_246] : memref<474xf32, #tpu.memory_space<smem>>
    %2787 = vector.broadcast %2786 : f32 to vector<8x128xf32>
    %2788 = arith.mulf %1883, %2787 : vector<8x128xf32>
    %c75_247 = arith.constant 75 : index
    %2789 = memref.load %arg1[%c75_247] : memref<474xf32, #tpu.memory_space<smem>>
    %2790 = vector.broadcast %2789 : f32 to vector<8x128xf32>
    %2791 = arith.mulf %1894, %2790 : vector<8x128xf32>
    %2792 = arith.addf %2788, %2791 : vector<8x128xf32>
    %c91_248 = arith.constant 91 : index
    %2793 = memref.load %arg1[%c91_248] : memref<474xf32, #tpu.memory_space<smem>>
    %2794 = vector.broadcast %2793 : f32 to vector<8x128xf32>
    %2795 = arith.mulf %1905, %2794 : vector<8x128xf32>
    %2796 = arith.addf %2792, %2795 : vector<8x128xf32>
    %c107_249 = arith.constant 107 : index
    %2797 = memref.load %arg1[%c107_249] : memref<474xf32, #tpu.memory_space<smem>>
    %2798 = vector.broadcast %2797 : f32 to vector<8x128xf32>
    %2799 = arith.mulf %1916, %2798 : vector<8x128xf32>
    %2800 = arith.addf %2796, %2799 : vector<8x128xf32>
    %c123_250 = arith.constant 123 : index
    %2801 = memref.load %arg1[%c123_250] : memref<474xf32, #tpu.memory_space<smem>>
    %2802 = vector.broadcast %2801 : f32 to vector<8x128xf32>
    %2803 = arith.mulf %1927, %2802 : vector<8x128xf32>
    %2804 = arith.addf %2800, %2803 : vector<8x128xf32>
    %c139_251 = arith.constant 139 : index
    %2805 = memref.load %arg1[%c139_251] : memref<474xf32, #tpu.memory_space<smem>>
    %2806 = vector.broadcast %2805 : f32 to vector<8x128xf32>
    %2807 = arith.mulf %1938, %2806 : vector<8x128xf32>
    %2808 = arith.addf %2804, %2807 : vector<8x128xf32>
    %c155_252 = arith.constant 155 : index
    %2809 = memref.load %arg1[%c155_252] : memref<474xf32, #tpu.memory_space<smem>>
    %2810 = vector.broadcast %2809 : f32 to vector<8x128xf32>
    %2811 = arith.mulf %1949, %2810 : vector<8x128xf32>
    %2812 = arith.addf %2808, %2811 : vector<8x128xf32>
    %c171_253 = arith.constant 171 : index
    %2813 = memref.load %arg1[%c171_253] : memref<474xf32, #tpu.memory_space<smem>>
    %2814 = vector.broadcast %2813 : f32 to vector<8x128xf32>
    %2815 = arith.mulf %1960, %2814 : vector<8x128xf32>
    %2816 = arith.addf %2812, %2815 : vector<8x128xf32>
    %c187_254 = arith.constant 187 : index
    %2817 = memref.load %arg1[%c187_254] : memref<474xf32, #tpu.memory_space<smem>>
    %2818 = vector.broadcast %2817 : f32 to vector<8x128xf32>
    %2819 = arith.mulf %1971, %2818 : vector<8x128xf32>
    %2820 = arith.addf %2816, %2819 : vector<8x128xf32>
    %c203_255 = arith.constant 203 : index
    %2821 = memref.load %arg1[%c203_255] : memref<474xf32, #tpu.memory_space<smem>>
    %2822 = vector.broadcast %2821 : f32 to vector<8x128xf32>
    %2823 = arith.mulf %1982, %2822 : vector<8x128xf32>
    %2824 = arith.addf %2820, %2823 : vector<8x128xf32>
    %c219_256 = arith.constant 219 : index
    %2825 = memref.load %arg1[%c219_256] : memref<474xf32, #tpu.memory_space<smem>>
    %2826 = vector.broadcast %2825 : f32 to vector<8x128xf32>
    %2827 = arith.mulf %1993, %2826 : vector<8x128xf32>
    %2828 = arith.addf %2824, %2827 : vector<8x128xf32>
    %c235_257 = arith.constant 235 : index
    %2829 = memref.load %arg1[%c235_257] : memref<474xf32, #tpu.memory_space<smem>>
    %2830 = vector.broadcast %2829 : f32 to vector<8x128xf32>
    %2831 = arith.mulf %2004, %2830 : vector<8x128xf32>
    %2832 = arith.addf %2828, %2831 : vector<8x128xf32>
    %c251_258 = arith.constant 251 : index
    %2833 = memref.load %arg1[%c251_258] : memref<474xf32, #tpu.memory_space<smem>>
    %2834 = vector.broadcast %2833 : f32 to vector<8x128xf32>
    %2835 = arith.mulf %2015, %2834 : vector<8x128xf32>
    %2836 = arith.addf %2832, %2835 : vector<8x128xf32>
    %c267_259 = arith.constant 267 : index
    %2837 = memref.load %arg1[%c267_259] : memref<474xf32, #tpu.memory_space<smem>>
    %2838 = vector.broadcast %2837 : f32 to vector<8x128xf32>
    %2839 = arith.mulf %2026, %2838 : vector<8x128xf32>
    %2840 = arith.addf %2836, %2839 : vector<8x128xf32>
    %c283_260 = arith.constant 283 : index
    %2841 = memref.load %arg1[%c283_260] : memref<474xf32, #tpu.memory_space<smem>>
    %2842 = vector.broadcast %2841 : f32 to vector<8x128xf32>
    %2843 = arith.mulf %2037, %2842 : vector<8x128xf32>
    %2844 = arith.addf %2840, %2843 : vector<8x128xf32>
    %c299_261 = arith.constant 299 : index
    %2845 = memref.load %arg1[%c299_261] : memref<474xf32, #tpu.memory_space<smem>>
    %2846 = vector.broadcast %2845 : f32 to vector<8x128xf32>
    %2847 = arith.mulf %2048, %2846 : vector<8x128xf32>
    %2848 = arith.addf %2844, %2847 : vector<8x128xf32>
    %c315_262 = arith.constant 315 : index
    %2849 = memref.load %arg1[%c315_262] : memref<474xf32, #tpu.memory_space<smem>>
    %2850 = vector.broadcast %2849 : f32 to vector<8x128xf32>
    %2851 = arith.addf %2848, %2850 : vector<8x128xf32>
    %2852 = math.tanh %2851 : vector<8x128xf32>
    %c60_263 = arith.constant 60 : index
    %2853 = memref.load %arg1[%c60_263] : memref<474xf32, #tpu.memory_space<smem>>
    %2854 = vector.broadcast %2853 : f32 to vector<8x128xf32>
    %2855 = arith.mulf %1883, %2854 : vector<8x128xf32>
    %c76_264 = arith.constant 76 : index
    %2856 = memref.load %arg1[%c76_264] : memref<474xf32, #tpu.memory_space<smem>>
    %2857 = vector.broadcast %2856 : f32 to vector<8x128xf32>
    %2858 = arith.mulf %1894, %2857 : vector<8x128xf32>
    %2859 = arith.addf %2855, %2858 : vector<8x128xf32>
    %c92_265 = arith.constant 92 : index
    %2860 = memref.load %arg1[%c92_265] : memref<474xf32, #tpu.memory_space<smem>>
    %2861 = vector.broadcast %2860 : f32 to vector<8x128xf32>
    %2862 = arith.mulf %1905, %2861 : vector<8x128xf32>
    %2863 = arith.addf %2859, %2862 : vector<8x128xf32>
    %c108_266 = arith.constant 108 : index
    %2864 = memref.load %arg1[%c108_266] : memref<474xf32, #tpu.memory_space<smem>>
    %2865 = vector.broadcast %2864 : f32 to vector<8x128xf32>
    %2866 = arith.mulf %1916, %2865 : vector<8x128xf32>
    %2867 = arith.addf %2863, %2866 : vector<8x128xf32>
    %c124_267 = arith.constant 124 : index
    %2868 = memref.load %arg1[%c124_267] : memref<474xf32, #tpu.memory_space<smem>>
    %2869 = vector.broadcast %2868 : f32 to vector<8x128xf32>
    %2870 = arith.mulf %1927, %2869 : vector<8x128xf32>
    %2871 = arith.addf %2867, %2870 : vector<8x128xf32>
    %c140_268 = arith.constant 140 : index
    %2872 = memref.load %arg1[%c140_268] : memref<474xf32, #tpu.memory_space<smem>>
    %2873 = vector.broadcast %2872 : f32 to vector<8x128xf32>
    %2874 = arith.mulf %1938, %2873 : vector<8x128xf32>
    %2875 = arith.addf %2871, %2874 : vector<8x128xf32>
    %c156_269 = arith.constant 156 : index
    %2876 = memref.load %arg1[%c156_269] : memref<474xf32, #tpu.memory_space<smem>>
    %2877 = vector.broadcast %2876 : f32 to vector<8x128xf32>
    %2878 = arith.mulf %1949, %2877 : vector<8x128xf32>
    %2879 = arith.addf %2875, %2878 : vector<8x128xf32>
    %c172_270 = arith.constant 172 : index
    %2880 = memref.load %arg1[%c172_270] : memref<474xf32, #tpu.memory_space<smem>>
    %2881 = vector.broadcast %2880 : f32 to vector<8x128xf32>
    %2882 = arith.mulf %1960, %2881 : vector<8x128xf32>
    %2883 = arith.addf %2879, %2882 : vector<8x128xf32>
    %c188_271 = arith.constant 188 : index
    %2884 = memref.load %arg1[%c188_271] : memref<474xf32, #tpu.memory_space<smem>>
    %2885 = vector.broadcast %2884 : f32 to vector<8x128xf32>
    %2886 = arith.mulf %1971, %2885 : vector<8x128xf32>
    %2887 = arith.addf %2883, %2886 : vector<8x128xf32>
    %c204_272 = arith.constant 204 : index
    %2888 = memref.load %arg1[%c204_272] : memref<474xf32, #tpu.memory_space<smem>>
    %2889 = vector.broadcast %2888 : f32 to vector<8x128xf32>
    %2890 = arith.mulf %1982, %2889 : vector<8x128xf32>
    %2891 = arith.addf %2887, %2890 : vector<8x128xf32>
    %c220_273 = arith.constant 220 : index
    %2892 = memref.load %arg1[%c220_273] : memref<474xf32, #tpu.memory_space<smem>>
    %2893 = vector.broadcast %2892 : f32 to vector<8x128xf32>
    %2894 = arith.mulf %1993, %2893 : vector<8x128xf32>
    %2895 = arith.addf %2891, %2894 : vector<8x128xf32>
    %c236_274 = arith.constant 236 : index
    %2896 = memref.load %arg1[%c236_274] : memref<474xf32, #tpu.memory_space<smem>>
    %2897 = vector.broadcast %2896 : f32 to vector<8x128xf32>
    %2898 = arith.mulf %2004, %2897 : vector<8x128xf32>
    %2899 = arith.addf %2895, %2898 : vector<8x128xf32>
    %c252_275 = arith.constant 252 : index
    %2900 = memref.load %arg1[%c252_275] : memref<474xf32, #tpu.memory_space<smem>>
    %2901 = vector.broadcast %2900 : f32 to vector<8x128xf32>
    %2902 = arith.mulf %2015, %2901 : vector<8x128xf32>
    %2903 = arith.addf %2899, %2902 : vector<8x128xf32>
    %c268_276 = arith.constant 268 : index
    %2904 = memref.load %arg1[%c268_276] : memref<474xf32, #tpu.memory_space<smem>>
    %2905 = vector.broadcast %2904 : f32 to vector<8x128xf32>
    %2906 = arith.mulf %2026, %2905 : vector<8x128xf32>
    %2907 = arith.addf %2903, %2906 : vector<8x128xf32>
    %c284_277 = arith.constant 284 : index
    %2908 = memref.load %arg1[%c284_277] : memref<474xf32, #tpu.memory_space<smem>>
    %2909 = vector.broadcast %2908 : f32 to vector<8x128xf32>
    %2910 = arith.mulf %2037, %2909 : vector<8x128xf32>
    %2911 = arith.addf %2907, %2910 : vector<8x128xf32>
    %c300_278 = arith.constant 300 : index
    %2912 = memref.load %arg1[%c300_278] : memref<474xf32, #tpu.memory_space<smem>>
    %2913 = vector.broadcast %2912 : f32 to vector<8x128xf32>
    %2914 = arith.mulf %2048, %2913 : vector<8x128xf32>
    %2915 = arith.addf %2911, %2914 : vector<8x128xf32>
    %c316_279 = arith.constant 316 : index
    %2916 = memref.load %arg1[%c316_279] : memref<474xf32, #tpu.memory_space<smem>>
    %2917 = vector.broadcast %2916 : f32 to vector<8x128xf32>
    %2918 = arith.addf %2915, %2917 : vector<8x128xf32>
    %2919 = math.tanh %2918 : vector<8x128xf32>
    %c61_280 = arith.constant 61 : index
    %2920 = memref.load %arg1[%c61_280] : memref<474xf32, #tpu.memory_space<smem>>
    %2921 = vector.broadcast %2920 : f32 to vector<8x128xf32>
    %2922 = arith.mulf %1883, %2921 : vector<8x128xf32>
    %c77_281 = arith.constant 77 : index
    %2923 = memref.load %arg1[%c77_281] : memref<474xf32, #tpu.memory_space<smem>>
    %2924 = vector.broadcast %2923 : f32 to vector<8x128xf32>
    %2925 = arith.mulf %1894, %2924 : vector<8x128xf32>
    %2926 = arith.addf %2922, %2925 : vector<8x128xf32>
    %c93_282 = arith.constant 93 : index
    %2927 = memref.load %arg1[%c93_282] : memref<474xf32, #tpu.memory_space<smem>>
    %2928 = vector.broadcast %2927 : f32 to vector<8x128xf32>
    %2929 = arith.mulf %1905, %2928 : vector<8x128xf32>
    %2930 = arith.addf %2926, %2929 : vector<8x128xf32>
    %c109_283 = arith.constant 109 : index
    %2931 = memref.load %arg1[%c109_283] : memref<474xf32, #tpu.memory_space<smem>>
    %2932 = vector.broadcast %2931 : f32 to vector<8x128xf32>
    %2933 = arith.mulf %1916, %2932 : vector<8x128xf32>
    %2934 = arith.addf %2930, %2933 : vector<8x128xf32>
    %c125_284 = arith.constant 125 : index
    %2935 = memref.load %arg1[%c125_284] : memref<474xf32, #tpu.memory_space<smem>>
    %2936 = vector.broadcast %2935 : f32 to vector<8x128xf32>
    %2937 = arith.mulf %1927, %2936 : vector<8x128xf32>
    %2938 = arith.addf %2934, %2937 : vector<8x128xf32>
    %c141_285 = arith.constant 141 : index
    %2939 = memref.load %arg1[%c141_285] : memref<474xf32, #tpu.memory_space<smem>>
    %2940 = vector.broadcast %2939 : f32 to vector<8x128xf32>
    %2941 = arith.mulf %1938, %2940 : vector<8x128xf32>
    %2942 = arith.addf %2938, %2941 : vector<8x128xf32>
    %c157_286 = arith.constant 157 : index
    %2943 = memref.load %arg1[%c157_286] : memref<474xf32, #tpu.memory_space<smem>>
    %2944 = vector.broadcast %2943 : f32 to vector<8x128xf32>
    %2945 = arith.mulf %1949, %2944 : vector<8x128xf32>
    %2946 = arith.addf %2942, %2945 : vector<8x128xf32>
    %c173_287 = arith.constant 173 : index
    %2947 = memref.load %arg1[%c173_287] : memref<474xf32, #tpu.memory_space<smem>>
    %2948 = vector.broadcast %2947 : f32 to vector<8x128xf32>
    %2949 = arith.mulf %1960, %2948 : vector<8x128xf32>
    %2950 = arith.addf %2946, %2949 : vector<8x128xf32>
    %c189_288 = arith.constant 189 : index
    %2951 = memref.load %arg1[%c189_288] : memref<474xf32, #tpu.memory_space<smem>>
    %2952 = vector.broadcast %2951 : f32 to vector<8x128xf32>
    %2953 = arith.mulf %1971, %2952 : vector<8x128xf32>
    %2954 = arith.addf %2950, %2953 : vector<8x128xf32>
    %c205_289 = arith.constant 205 : index
    %2955 = memref.load %arg1[%c205_289] : memref<474xf32, #tpu.memory_space<smem>>
    %2956 = vector.broadcast %2955 : f32 to vector<8x128xf32>
    %2957 = arith.mulf %1982, %2956 : vector<8x128xf32>
    %2958 = arith.addf %2954, %2957 : vector<8x128xf32>
    %c221_290 = arith.constant 221 : index
    %2959 = memref.load %arg1[%c221_290] : memref<474xf32, #tpu.memory_space<smem>>
    %2960 = vector.broadcast %2959 : f32 to vector<8x128xf32>
    %2961 = arith.mulf %1993, %2960 : vector<8x128xf32>
    %2962 = arith.addf %2958, %2961 : vector<8x128xf32>
    %c237_291 = arith.constant 237 : index
    %2963 = memref.load %arg1[%c237_291] : memref<474xf32, #tpu.memory_space<smem>>
    %2964 = vector.broadcast %2963 : f32 to vector<8x128xf32>
    %2965 = arith.mulf %2004, %2964 : vector<8x128xf32>
    %2966 = arith.addf %2962, %2965 : vector<8x128xf32>
    %c253_292 = arith.constant 253 : index
    %2967 = memref.load %arg1[%c253_292] : memref<474xf32, #tpu.memory_space<smem>>
    %2968 = vector.broadcast %2967 : f32 to vector<8x128xf32>
    %2969 = arith.mulf %2015, %2968 : vector<8x128xf32>
    %2970 = arith.addf %2966, %2969 : vector<8x128xf32>
    %c269_293 = arith.constant 269 : index
    %2971 = memref.load %arg1[%c269_293] : memref<474xf32, #tpu.memory_space<smem>>
    %2972 = vector.broadcast %2971 : f32 to vector<8x128xf32>
    %2973 = arith.mulf %2026, %2972 : vector<8x128xf32>
    %2974 = arith.addf %2970, %2973 : vector<8x128xf32>
    %c285_294 = arith.constant 285 : index
    %2975 = memref.load %arg1[%c285_294] : memref<474xf32, #tpu.memory_space<smem>>
    %2976 = vector.broadcast %2975 : f32 to vector<8x128xf32>
    %2977 = arith.mulf %2037, %2976 : vector<8x128xf32>
    %2978 = arith.addf %2974, %2977 : vector<8x128xf32>
    %c301_295 = arith.constant 301 : index
    %2979 = memref.load %arg1[%c301_295] : memref<474xf32, #tpu.memory_space<smem>>
    %2980 = vector.broadcast %2979 : f32 to vector<8x128xf32>
    %2981 = arith.mulf %2048, %2980 : vector<8x128xf32>
    %2982 = arith.addf %2978, %2981 : vector<8x128xf32>
    %c317_296 = arith.constant 317 : index
    %2983 = memref.load %arg1[%c317_296] : memref<474xf32, #tpu.memory_space<smem>>
    %2984 = vector.broadcast %2983 : f32 to vector<8x128xf32>
    %2985 = arith.addf %2982, %2984 : vector<8x128xf32>
    %2986 = math.tanh %2985 : vector<8x128xf32>
    %c62_297 = arith.constant 62 : index
    %2987 = memref.load %arg1[%c62_297] : memref<474xf32, #tpu.memory_space<smem>>
    %2988 = vector.broadcast %2987 : f32 to vector<8x128xf32>
    %2989 = arith.mulf %1883, %2988 : vector<8x128xf32>
    %c78_298 = arith.constant 78 : index
    %2990 = memref.load %arg1[%c78_298] : memref<474xf32, #tpu.memory_space<smem>>
    %2991 = vector.broadcast %2990 : f32 to vector<8x128xf32>
    %2992 = arith.mulf %1894, %2991 : vector<8x128xf32>
    %2993 = arith.addf %2989, %2992 : vector<8x128xf32>
    %c94_299 = arith.constant 94 : index
    %2994 = memref.load %arg1[%c94_299] : memref<474xf32, #tpu.memory_space<smem>>
    %2995 = vector.broadcast %2994 : f32 to vector<8x128xf32>
    %2996 = arith.mulf %1905, %2995 : vector<8x128xf32>
    %2997 = arith.addf %2993, %2996 : vector<8x128xf32>
    %c110_300 = arith.constant 110 : index
    %2998 = memref.load %arg1[%c110_300] : memref<474xf32, #tpu.memory_space<smem>>
    %2999 = vector.broadcast %2998 : f32 to vector<8x128xf32>
    %3000 = arith.mulf %1916, %2999 : vector<8x128xf32>
    %3001 = arith.addf %2997, %3000 : vector<8x128xf32>
    %c126_301 = arith.constant 126 : index
    %3002 = memref.load %arg1[%c126_301] : memref<474xf32, #tpu.memory_space<smem>>
    %3003 = vector.broadcast %3002 : f32 to vector<8x128xf32>
    %3004 = arith.mulf %1927, %3003 : vector<8x128xf32>
    %3005 = arith.addf %3001, %3004 : vector<8x128xf32>
    %c142_302 = arith.constant 142 : index
    %3006 = memref.load %arg1[%c142_302] : memref<474xf32, #tpu.memory_space<smem>>
    %3007 = vector.broadcast %3006 : f32 to vector<8x128xf32>
    %3008 = arith.mulf %1938, %3007 : vector<8x128xf32>
    %3009 = arith.addf %3005, %3008 : vector<8x128xf32>
    %c158_303 = arith.constant 158 : index
    %3010 = memref.load %arg1[%c158_303] : memref<474xf32, #tpu.memory_space<smem>>
    %3011 = vector.broadcast %3010 : f32 to vector<8x128xf32>
    %3012 = arith.mulf %1949, %3011 : vector<8x128xf32>
    %3013 = arith.addf %3009, %3012 : vector<8x128xf32>
    %c174_304 = arith.constant 174 : index
    %3014 = memref.load %arg1[%c174_304] : memref<474xf32, #tpu.memory_space<smem>>
    %3015 = vector.broadcast %3014 : f32 to vector<8x128xf32>
    %3016 = arith.mulf %1960, %3015 : vector<8x128xf32>
    %3017 = arith.addf %3013, %3016 : vector<8x128xf32>
    %c190_305 = arith.constant 190 : index
    %3018 = memref.load %arg1[%c190_305] : memref<474xf32, #tpu.memory_space<smem>>
    %3019 = vector.broadcast %3018 : f32 to vector<8x128xf32>
    %3020 = arith.mulf %1971, %3019 : vector<8x128xf32>
    %3021 = arith.addf %3017, %3020 : vector<8x128xf32>
    %c206_306 = arith.constant 206 : index
    %3022 = memref.load %arg1[%c206_306] : memref<474xf32, #tpu.memory_space<smem>>
    %3023 = vector.broadcast %3022 : f32 to vector<8x128xf32>
    %3024 = arith.mulf %1982, %3023 : vector<8x128xf32>
    %3025 = arith.addf %3021, %3024 : vector<8x128xf32>
    %c222_307 = arith.constant 222 : index
    %3026 = memref.load %arg1[%c222_307] : memref<474xf32, #tpu.memory_space<smem>>
    %3027 = vector.broadcast %3026 : f32 to vector<8x128xf32>
    %3028 = arith.mulf %1993, %3027 : vector<8x128xf32>
    %3029 = arith.addf %3025, %3028 : vector<8x128xf32>
    %c238_308 = arith.constant 238 : index
    %3030 = memref.load %arg1[%c238_308] : memref<474xf32, #tpu.memory_space<smem>>
    %3031 = vector.broadcast %3030 : f32 to vector<8x128xf32>
    %3032 = arith.mulf %2004, %3031 : vector<8x128xf32>
    %3033 = arith.addf %3029, %3032 : vector<8x128xf32>
    %c254_309 = arith.constant 254 : index
    %3034 = memref.load %arg1[%c254_309] : memref<474xf32, #tpu.memory_space<smem>>
    %3035 = vector.broadcast %3034 : f32 to vector<8x128xf32>
    %3036 = arith.mulf %2015, %3035 : vector<8x128xf32>
    %3037 = arith.addf %3033, %3036 : vector<8x128xf32>
    %c270_310 = arith.constant 270 : index
    %3038 = memref.load %arg1[%c270_310] : memref<474xf32, #tpu.memory_space<smem>>
    %3039 = vector.broadcast %3038 : f32 to vector<8x128xf32>
    %3040 = arith.mulf %2026, %3039 : vector<8x128xf32>
    %3041 = arith.addf %3037, %3040 : vector<8x128xf32>
    %c286_311 = arith.constant 286 : index
    %3042 = memref.load %arg1[%c286_311] : memref<474xf32, #tpu.memory_space<smem>>
    %3043 = vector.broadcast %3042 : f32 to vector<8x128xf32>
    %3044 = arith.mulf %2037, %3043 : vector<8x128xf32>
    %3045 = arith.addf %3041, %3044 : vector<8x128xf32>
    %c302_312 = arith.constant 302 : index
    %3046 = memref.load %arg1[%c302_312] : memref<474xf32, #tpu.memory_space<smem>>
    %3047 = vector.broadcast %3046 : f32 to vector<8x128xf32>
    %3048 = arith.mulf %2048, %3047 : vector<8x128xf32>
    %3049 = arith.addf %3045, %3048 : vector<8x128xf32>
    %c318_313 = arith.constant 318 : index
    %3050 = memref.load %arg1[%c318_313] : memref<474xf32, #tpu.memory_space<smem>>
    %3051 = vector.broadcast %3050 : f32 to vector<8x128xf32>
    %3052 = arith.addf %3049, %3051 : vector<8x128xf32>
    %3053 = math.tanh %3052 : vector<8x128xf32>
    %c63_314 = arith.constant 63 : index
    %3054 = memref.load %arg1[%c63_314] : memref<474xf32, #tpu.memory_space<smem>>
    %3055 = vector.broadcast %3054 : f32 to vector<8x128xf32>
    %3056 = arith.mulf %1883, %3055 : vector<8x128xf32>
    %c79_315 = arith.constant 79 : index
    %3057 = memref.load %arg1[%c79_315] : memref<474xf32, #tpu.memory_space<smem>>
    %3058 = vector.broadcast %3057 : f32 to vector<8x128xf32>
    %3059 = arith.mulf %1894, %3058 : vector<8x128xf32>
    %3060 = arith.addf %3056, %3059 : vector<8x128xf32>
    %c95_316 = arith.constant 95 : index
    %3061 = memref.load %arg1[%c95_316] : memref<474xf32, #tpu.memory_space<smem>>
    %3062 = vector.broadcast %3061 : f32 to vector<8x128xf32>
    %3063 = arith.mulf %1905, %3062 : vector<8x128xf32>
    %3064 = arith.addf %3060, %3063 : vector<8x128xf32>
    %c111_317 = arith.constant 111 : index
    %3065 = memref.load %arg1[%c111_317] : memref<474xf32, #tpu.memory_space<smem>>
    %3066 = vector.broadcast %3065 : f32 to vector<8x128xf32>
    %3067 = arith.mulf %1916, %3066 : vector<8x128xf32>
    %3068 = arith.addf %3064, %3067 : vector<8x128xf32>
    %c127_318 = arith.constant 127 : index
    %3069 = memref.load %arg1[%c127_318] : memref<474xf32, #tpu.memory_space<smem>>
    %3070 = vector.broadcast %3069 : f32 to vector<8x128xf32>
    %3071 = arith.mulf %1927, %3070 : vector<8x128xf32>
    %3072 = arith.addf %3068, %3071 : vector<8x128xf32>
    %c143_319 = arith.constant 143 : index
    %3073 = memref.load %arg1[%c143_319] : memref<474xf32, #tpu.memory_space<smem>>
    %3074 = vector.broadcast %3073 : f32 to vector<8x128xf32>
    %3075 = arith.mulf %1938, %3074 : vector<8x128xf32>
    %3076 = arith.addf %3072, %3075 : vector<8x128xf32>
    %c159_320 = arith.constant 159 : index
    %3077 = memref.load %arg1[%c159_320] : memref<474xf32, #tpu.memory_space<smem>>
    %3078 = vector.broadcast %3077 : f32 to vector<8x128xf32>
    %3079 = arith.mulf %1949, %3078 : vector<8x128xf32>
    %3080 = arith.addf %3076, %3079 : vector<8x128xf32>
    %c175_321 = arith.constant 175 : index
    %3081 = memref.load %arg1[%c175_321] : memref<474xf32, #tpu.memory_space<smem>>
    %3082 = vector.broadcast %3081 : f32 to vector<8x128xf32>
    %3083 = arith.mulf %1960, %3082 : vector<8x128xf32>
    %3084 = arith.addf %3080, %3083 : vector<8x128xf32>
    %c191_322 = arith.constant 191 : index
    %3085 = memref.load %arg1[%c191_322] : memref<474xf32, #tpu.memory_space<smem>>
    %3086 = vector.broadcast %3085 : f32 to vector<8x128xf32>
    %3087 = arith.mulf %1971, %3086 : vector<8x128xf32>
    %3088 = arith.addf %3084, %3087 : vector<8x128xf32>
    %c207_323 = arith.constant 207 : index
    %3089 = memref.load %arg1[%c207_323] : memref<474xf32, #tpu.memory_space<smem>>
    %3090 = vector.broadcast %3089 : f32 to vector<8x128xf32>
    %3091 = arith.mulf %1982, %3090 : vector<8x128xf32>
    %3092 = arith.addf %3088, %3091 : vector<8x128xf32>
    %c223_324 = arith.constant 223 : index
    %3093 = memref.load %arg1[%c223_324] : memref<474xf32, #tpu.memory_space<smem>>
    %3094 = vector.broadcast %3093 : f32 to vector<8x128xf32>
    %3095 = arith.mulf %1993, %3094 : vector<8x128xf32>
    %3096 = arith.addf %3092, %3095 : vector<8x128xf32>
    %c239_325 = arith.constant 239 : index
    %3097 = memref.load %arg1[%c239_325] : memref<474xf32, #tpu.memory_space<smem>>
    %3098 = vector.broadcast %3097 : f32 to vector<8x128xf32>
    %3099 = arith.mulf %2004, %3098 : vector<8x128xf32>
    %3100 = arith.addf %3096, %3099 : vector<8x128xf32>
    %c255_326 = arith.constant 255 : index
    %3101 = memref.load %arg1[%c255_326] : memref<474xf32, #tpu.memory_space<smem>>
    %3102 = vector.broadcast %3101 : f32 to vector<8x128xf32>
    %3103 = arith.mulf %2015, %3102 : vector<8x128xf32>
    %3104 = arith.addf %3100, %3103 : vector<8x128xf32>
    %c271_327 = arith.constant 271 : index
    %3105 = memref.load %arg1[%c271_327] : memref<474xf32, #tpu.memory_space<smem>>
    %3106 = vector.broadcast %3105 : f32 to vector<8x128xf32>
    %3107 = arith.mulf %2026, %3106 : vector<8x128xf32>
    %3108 = arith.addf %3104, %3107 : vector<8x128xf32>
    %c287_328 = arith.constant 287 : index
    %3109 = memref.load %arg1[%c287_328] : memref<474xf32, #tpu.memory_space<smem>>
    %3110 = vector.broadcast %3109 : f32 to vector<8x128xf32>
    %3111 = arith.mulf %2037, %3110 : vector<8x128xf32>
    %3112 = arith.addf %3108, %3111 : vector<8x128xf32>
    %c303_329 = arith.constant 303 : index
    %3113 = memref.load %arg1[%c303_329] : memref<474xf32, #tpu.memory_space<smem>>
    %3114 = vector.broadcast %3113 : f32 to vector<8x128xf32>
    %3115 = arith.mulf %2048, %3114 : vector<8x128xf32>
    %3116 = arith.addf %3112, %3115 : vector<8x128xf32>
    %c319_330 = arith.constant 319 : index
    %3117 = memref.load %arg1[%c319_330] : memref<474xf32, #tpu.memory_space<smem>>
    %3118 = vector.broadcast %3117 : f32 to vector<8x128xf32>
    %3119 = arith.addf %3116, %3118 : vector<8x128xf32>
    %3120 = math.tanh %3119 : vector<8x128xf32>
    %c320_331 = arith.constant 320 : index
    %3121 = memref.load %arg1[%c320_331] : memref<474xf32, #tpu.memory_space<smem>>
    %3122 = vector.broadcast %3121 : f32 to vector<8x128xf32>
    %3123 = arith.mulf %2115, %3122 : vector<8x128xf32>
    %c328_332 = arith.constant 328 : index
    %3124 = memref.load %arg1[%c328_332] : memref<474xf32, #tpu.memory_space<smem>>
    %3125 = vector.broadcast %3124 : f32 to vector<8x128xf32>
    %3126 = arith.mulf %2182, %3125 : vector<8x128xf32>
    %3127 = arith.addf %3123, %3126 : vector<8x128xf32>
    %c336_333 = arith.constant 336 : index
    %3128 = memref.load %arg1[%c336_333] : memref<474xf32, #tpu.memory_space<smem>>
    %3129 = vector.broadcast %3128 : f32 to vector<8x128xf32>
    %3130 = arith.mulf %2249, %3129 : vector<8x128xf32>
    %3131 = arith.addf %3127, %3130 : vector<8x128xf32>
    %c344_334 = arith.constant 344 : index
    %3132 = memref.load %arg1[%c344_334] : memref<474xf32, #tpu.memory_space<smem>>
    %3133 = vector.broadcast %3132 : f32 to vector<8x128xf32>
    %3134 = arith.mulf %2316, %3133 : vector<8x128xf32>
    %3135 = arith.addf %3131, %3134 : vector<8x128xf32>
    %c352_335 = arith.constant 352 : index
    %3136 = memref.load %arg1[%c352_335] : memref<474xf32, #tpu.memory_space<smem>>
    %3137 = vector.broadcast %3136 : f32 to vector<8x128xf32>
    %3138 = arith.mulf %2383, %3137 : vector<8x128xf32>
    %3139 = arith.addf %3135, %3138 : vector<8x128xf32>
    %c360_336 = arith.constant 360 : index
    %3140 = memref.load %arg1[%c360_336] : memref<474xf32, #tpu.memory_space<smem>>
    %3141 = vector.broadcast %3140 : f32 to vector<8x128xf32>
    %3142 = arith.mulf %2450, %3141 : vector<8x128xf32>
    %3143 = arith.addf %3139, %3142 : vector<8x128xf32>
    %c368_337 = arith.constant 368 : index
    %3144 = memref.load %arg1[%c368_337] : memref<474xf32, #tpu.memory_space<smem>>
    %3145 = vector.broadcast %3144 : f32 to vector<8x128xf32>
    %3146 = arith.mulf %2517, %3145 : vector<8x128xf32>
    %3147 = arith.addf %3143, %3146 : vector<8x128xf32>
    %c376_338 = arith.constant 376 : index
    %3148 = memref.load %arg1[%c376_338] : memref<474xf32, #tpu.memory_space<smem>>
    %3149 = vector.broadcast %3148 : f32 to vector<8x128xf32>
    %3150 = arith.mulf %2584, %3149 : vector<8x128xf32>
    %3151 = arith.addf %3147, %3150 : vector<8x128xf32>
    %c384_339 = arith.constant 384 : index
    %3152 = memref.load %arg1[%c384_339] : memref<474xf32, #tpu.memory_space<smem>>
    %3153 = vector.broadcast %3152 : f32 to vector<8x128xf32>
    %3154 = arith.mulf %2651, %3153 : vector<8x128xf32>
    %3155 = arith.addf %3151, %3154 : vector<8x128xf32>
    %c392_340 = arith.constant 392 : index
    %3156 = memref.load %arg1[%c392_340] : memref<474xf32, #tpu.memory_space<smem>>
    %3157 = vector.broadcast %3156 : f32 to vector<8x128xf32>
    %3158 = arith.mulf %2718, %3157 : vector<8x128xf32>
    %3159 = arith.addf %3155, %3158 : vector<8x128xf32>
    %c400_341 = arith.constant 400 : index
    %3160 = memref.load %arg1[%c400_341] : memref<474xf32, #tpu.memory_space<smem>>
    %3161 = vector.broadcast %3160 : f32 to vector<8x128xf32>
    %3162 = arith.mulf %2785, %3161 : vector<8x128xf32>
    %3163 = arith.addf %3159, %3162 : vector<8x128xf32>
    %c408_342 = arith.constant 408 : index
    %3164 = memref.load %arg1[%c408_342] : memref<474xf32, #tpu.memory_space<smem>>
    %3165 = vector.broadcast %3164 : f32 to vector<8x128xf32>
    %3166 = arith.mulf %2852, %3165 : vector<8x128xf32>
    %3167 = arith.addf %3163, %3166 : vector<8x128xf32>
    %c416_343 = arith.constant 416 : index
    %3168 = memref.load %arg1[%c416_343] : memref<474xf32, #tpu.memory_space<smem>>
    %3169 = vector.broadcast %3168 : f32 to vector<8x128xf32>
    %3170 = arith.mulf %2919, %3169 : vector<8x128xf32>
    %3171 = arith.addf %3167, %3170 : vector<8x128xf32>
    %c424_344 = arith.constant 424 : index
    %3172 = memref.load %arg1[%c424_344] : memref<474xf32, #tpu.memory_space<smem>>
    %3173 = vector.broadcast %3172 : f32 to vector<8x128xf32>
    %3174 = arith.mulf %2986, %3173 : vector<8x128xf32>
    %3175 = arith.addf %3171, %3174 : vector<8x128xf32>
    %c432_345 = arith.constant 432 : index
    %3176 = memref.load %arg1[%c432_345] : memref<474xf32, #tpu.memory_space<smem>>
    %3177 = vector.broadcast %3176 : f32 to vector<8x128xf32>
    %3178 = arith.mulf %3053, %3177 : vector<8x128xf32>
    %3179 = arith.addf %3175, %3178 : vector<8x128xf32>
    %c440_346 = arith.constant 440 : index
    %3180 = memref.load %arg1[%c440_346] : memref<474xf32, #tpu.memory_space<smem>>
    %3181 = vector.broadcast %3180 : f32 to vector<8x128xf32>
    %3182 = arith.mulf %3120, %3181 : vector<8x128xf32>
    %3183 = arith.addf %3179, %3182 : vector<8x128xf32>
    %c448_347 = arith.constant 448 : index
    %3184 = memref.load %arg1[%c448_347] : memref<474xf32, #tpu.memory_space<smem>>
    %3185 = vector.broadcast %3184 : f32 to vector<8x128xf32>
    %3186 = arith.addf %3183, %3185 : vector<8x128xf32>
    %3187 = math.tanh %3186 : vector<8x128xf32>
    %c321_348 = arith.constant 321 : index
    %3188 = memref.load %arg1[%c321_348] : memref<474xf32, #tpu.memory_space<smem>>
    %3189 = vector.broadcast %3188 : f32 to vector<8x128xf32>
    %3190 = arith.mulf %2115, %3189 : vector<8x128xf32>
    %c329_349 = arith.constant 329 : index
    %3191 = memref.load %arg1[%c329_349] : memref<474xf32, #tpu.memory_space<smem>>
    %3192 = vector.broadcast %3191 : f32 to vector<8x128xf32>
    %3193 = arith.mulf %2182, %3192 : vector<8x128xf32>
    %3194 = arith.addf %3190, %3193 : vector<8x128xf32>
    %c337_350 = arith.constant 337 : index
    %3195 = memref.load %arg1[%c337_350] : memref<474xf32, #tpu.memory_space<smem>>
    %3196 = vector.broadcast %3195 : f32 to vector<8x128xf32>
    %3197 = arith.mulf %2249, %3196 : vector<8x128xf32>
    %3198 = arith.addf %3194, %3197 : vector<8x128xf32>
    %c345_351 = arith.constant 345 : index
    %3199 = memref.load %arg1[%c345_351] : memref<474xf32, #tpu.memory_space<smem>>
    %3200 = vector.broadcast %3199 : f32 to vector<8x128xf32>
    %3201 = arith.mulf %2316, %3200 : vector<8x128xf32>
    %3202 = arith.addf %3198, %3201 : vector<8x128xf32>
    %c353_352 = arith.constant 353 : index
    %3203 = memref.load %arg1[%c353_352] : memref<474xf32, #tpu.memory_space<smem>>
    %3204 = vector.broadcast %3203 : f32 to vector<8x128xf32>
    %3205 = arith.mulf %2383, %3204 : vector<8x128xf32>
    %3206 = arith.addf %3202, %3205 : vector<8x128xf32>
    %c361_353 = arith.constant 361 : index
    %3207 = memref.load %arg1[%c361_353] : memref<474xf32, #tpu.memory_space<smem>>
    %3208 = vector.broadcast %3207 : f32 to vector<8x128xf32>
    %3209 = arith.mulf %2450, %3208 : vector<8x128xf32>
    %3210 = arith.addf %3206, %3209 : vector<8x128xf32>
    %c369_354 = arith.constant 369 : index
    %3211 = memref.load %arg1[%c369_354] : memref<474xf32, #tpu.memory_space<smem>>
    %3212 = vector.broadcast %3211 : f32 to vector<8x128xf32>
    %3213 = arith.mulf %2517, %3212 : vector<8x128xf32>
    %3214 = arith.addf %3210, %3213 : vector<8x128xf32>
    %c377_355 = arith.constant 377 : index
    %3215 = memref.load %arg1[%c377_355] : memref<474xf32, #tpu.memory_space<smem>>
    %3216 = vector.broadcast %3215 : f32 to vector<8x128xf32>
    %3217 = arith.mulf %2584, %3216 : vector<8x128xf32>
    %3218 = arith.addf %3214, %3217 : vector<8x128xf32>
    %c385_356 = arith.constant 385 : index
    %3219 = memref.load %arg1[%c385_356] : memref<474xf32, #tpu.memory_space<smem>>
    %3220 = vector.broadcast %3219 : f32 to vector<8x128xf32>
    %3221 = arith.mulf %2651, %3220 : vector<8x128xf32>
    %3222 = arith.addf %3218, %3221 : vector<8x128xf32>
    %c393_357 = arith.constant 393 : index
    %3223 = memref.load %arg1[%c393_357] : memref<474xf32, #tpu.memory_space<smem>>
    %3224 = vector.broadcast %3223 : f32 to vector<8x128xf32>
    %3225 = arith.mulf %2718, %3224 : vector<8x128xf32>
    %3226 = arith.addf %3222, %3225 : vector<8x128xf32>
    %c401_358 = arith.constant 401 : index
    %3227 = memref.load %arg1[%c401_358] : memref<474xf32, #tpu.memory_space<smem>>
    %3228 = vector.broadcast %3227 : f32 to vector<8x128xf32>
    %3229 = arith.mulf %2785, %3228 : vector<8x128xf32>
    %3230 = arith.addf %3226, %3229 : vector<8x128xf32>
    %c409_359 = arith.constant 409 : index
    %3231 = memref.load %arg1[%c409_359] : memref<474xf32, #tpu.memory_space<smem>>
    %3232 = vector.broadcast %3231 : f32 to vector<8x128xf32>
    %3233 = arith.mulf %2852, %3232 : vector<8x128xf32>
    %3234 = arith.addf %3230, %3233 : vector<8x128xf32>
    %c417_360 = arith.constant 417 : index
    %3235 = memref.load %arg1[%c417_360] : memref<474xf32, #tpu.memory_space<smem>>
    %3236 = vector.broadcast %3235 : f32 to vector<8x128xf32>
    %3237 = arith.mulf %2919, %3236 : vector<8x128xf32>
    %3238 = arith.addf %3234, %3237 : vector<8x128xf32>
    %c425_361 = arith.constant 425 : index
    %3239 = memref.load %arg1[%c425_361] : memref<474xf32, #tpu.memory_space<smem>>
    %3240 = vector.broadcast %3239 : f32 to vector<8x128xf32>
    %3241 = arith.mulf %2986, %3240 : vector<8x128xf32>
    %3242 = arith.addf %3238, %3241 : vector<8x128xf32>
    %c433_362 = arith.constant 433 : index
    %3243 = memref.load %arg1[%c433_362] : memref<474xf32, #tpu.memory_space<smem>>
    %3244 = vector.broadcast %3243 : f32 to vector<8x128xf32>
    %3245 = arith.mulf %3053, %3244 : vector<8x128xf32>
    %3246 = arith.addf %3242, %3245 : vector<8x128xf32>
    %c441_363 = arith.constant 441 : index
    %3247 = memref.load %arg1[%c441_363] : memref<474xf32, #tpu.memory_space<smem>>
    %3248 = vector.broadcast %3247 : f32 to vector<8x128xf32>
    %3249 = arith.mulf %3120, %3248 : vector<8x128xf32>
    %3250 = arith.addf %3246, %3249 : vector<8x128xf32>
    %c449_364 = arith.constant 449 : index
    %3251 = memref.load %arg1[%c449_364] : memref<474xf32, #tpu.memory_space<smem>>
    %3252 = vector.broadcast %3251 : f32 to vector<8x128xf32>
    %3253 = arith.addf %3250, %3252 : vector<8x128xf32>
    %3254 = math.tanh %3253 : vector<8x128xf32>
    %c322_365 = arith.constant 322 : index
    %3255 = memref.load %arg1[%c322_365] : memref<474xf32, #tpu.memory_space<smem>>
    %3256 = vector.broadcast %3255 : f32 to vector<8x128xf32>
    %3257 = arith.mulf %2115, %3256 : vector<8x128xf32>
    %c330_366 = arith.constant 330 : index
    %3258 = memref.load %arg1[%c330_366] : memref<474xf32, #tpu.memory_space<smem>>
    %3259 = vector.broadcast %3258 : f32 to vector<8x128xf32>
    %3260 = arith.mulf %2182, %3259 : vector<8x128xf32>
    %3261 = arith.addf %3257, %3260 : vector<8x128xf32>
    %c338_367 = arith.constant 338 : index
    %3262 = memref.load %arg1[%c338_367] : memref<474xf32, #tpu.memory_space<smem>>
    %3263 = vector.broadcast %3262 : f32 to vector<8x128xf32>
    %3264 = arith.mulf %2249, %3263 : vector<8x128xf32>
    %3265 = arith.addf %3261, %3264 : vector<8x128xf32>
    %c346_368 = arith.constant 346 : index
    %3266 = memref.load %arg1[%c346_368] : memref<474xf32, #tpu.memory_space<smem>>
    %3267 = vector.broadcast %3266 : f32 to vector<8x128xf32>
    %3268 = arith.mulf %2316, %3267 : vector<8x128xf32>
    %3269 = arith.addf %3265, %3268 : vector<8x128xf32>
    %c354_369 = arith.constant 354 : index
    %3270 = memref.load %arg1[%c354_369] : memref<474xf32, #tpu.memory_space<smem>>
    %3271 = vector.broadcast %3270 : f32 to vector<8x128xf32>
    %3272 = arith.mulf %2383, %3271 : vector<8x128xf32>
    %3273 = arith.addf %3269, %3272 : vector<8x128xf32>
    %c362_370 = arith.constant 362 : index
    %3274 = memref.load %arg1[%c362_370] : memref<474xf32, #tpu.memory_space<smem>>
    %3275 = vector.broadcast %3274 : f32 to vector<8x128xf32>
    %3276 = arith.mulf %2450, %3275 : vector<8x128xf32>
    %3277 = arith.addf %3273, %3276 : vector<8x128xf32>
    %c370_371 = arith.constant 370 : index
    %3278 = memref.load %arg1[%c370_371] : memref<474xf32, #tpu.memory_space<smem>>
    %3279 = vector.broadcast %3278 : f32 to vector<8x128xf32>
    %3280 = arith.mulf %2517, %3279 : vector<8x128xf32>
    %3281 = arith.addf %3277, %3280 : vector<8x128xf32>
    %c378_372 = arith.constant 378 : index
    %3282 = memref.load %arg1[%c378_372] : memref<474xf32, #tpu.memory_space<smem>>
    %3283 = vector.broadcast %3282 : f32 to vector<8x128xf32>
    %3284 = arith.mulf %2584, %3283 : vector<8x128xf32>
    %3285 = arith.addf %3281, %3284 : vector<8x128xf32>
    %c386_373 = arith.constant 386 : index
    %3286 = memref.load %arg1[%c386_373] : memref<474xf32, #tpu.memory_space<smem>>
    %3287 = vector.broadcast %3286 : f32 to vector<8x128xf32>
    %3288 = arith.mulf %2651, %3287 : vector<8x128xf32>
    %3289 = arith.addf %3285, %3288 : vector<8x128xf32>
    %c394_374 = arith.constant 394 : index
    %3290 = memref.load %arg1[%c394_374] : memref<474xf32, #tpu.memory_space<smem>>
    %3291 = vector.broadcast %3290 : f32 to vector<8x128xf32>
    %3292 = arith.mulf %2718, %3291 : vector<8x128xf32>
    %3293 = arith.addf %3289, %3292 : vector<8x128xf32>
    %c402_375 = arith.constant 402 : index
    %3294 = memref.load %arg1[%c402_375] : memref<474xf32, #tpu.memory_space<smem>>
    %3295 = vector.broadcast %3294 : f32 to vector<8x128xf32>
    %3296 = arith.mulf %2785, %3295 : vector<8x128xf32>
    %3297 = arith.addf %3293, %3296 : vector<8x128xf32>
    %c410_376 = arith.constant 410 : index
    %3298 = memref.load %arg1[%c410_376] : memref<474xf32, #tpu.memory_space<smem>>
    %3299 = vector.broadcast %3298 : f32 to vector<8x128xf32>
    %3300 = arith.mulf %2852, %3299 : vector<8x128xf32>
    %3301 = arith.addf %3297, %3300 : vector<8x128xf32>
    %c418_377 = arith.constant 418 : index
    %3302 = memref.load %arg1[%c418_377] : memref<474xf32, #tpu.memory_space<smem>>
    %3303 = vector.broadcast %3302 : f32 to vector<8x128xf32>
    %3304 = arith.mulf %2919, %3303 : vector<8x128xf32>
    %3305 = arith.addf %3301, %3304 : vector<8x128xf32>
    %c426_378 = arith.constant 426 : index
    %3306 = memref.load %arg1[%c426_378] : memref<474xf32, #tpu.memory_space<smem>>
    %3307 = vector.broadcast %3306 : f32 to vector<8x128xf32>
    %3308 = arith.mulf %2986, %3307 : vector<8x128xf32>
    %3309 = arith.addf %3305, %3308 : vector<8x128xf32>
    %c434_379 = arith.constant 434 : index
    %3310 = memref.load %arg1[%c434_379] : memref<474xf32, #tpu.memory_space<smem>>
    %3311 = vector.broadcast %3310 : f32 to vector<8x128xf32>
    %3312 = arith.mulf %3053, %3311 : vector<8x128xf32>
    %3313 = arith.addf %3309, %3312 : vector<8x128xf32>
    %c442_380 = arith.constant 442 : index
    %3314 = memref.load %arg1[%c442_380] : memref<474xf32, #tpu.memory_space<smem>>
    %3315 = vector.broadcast %3314 : f32 to vector<8x128xf32>
    %3316 = arith.mulf %3120, %3315 : vector<8x128xf32>
    %3317 = arith.addf %3313, %3316 : vector<8x128xf32>
    %c450_381 = arith.constant 450 : index
    %3318 = memref.load %arg1[%c450_381] : memref<474xf32, #tpu.memory_space<smem>>
    %3319 = vector.broadcast %3318 : f32 to vector<8x128xf32>
    %3320 = arith.addf %3317, %3319 : vector<8x128xf32>
    %3321 = math.tanh %3320 : vector<8x128xf32>
    %c323_382 = arith.constant 323 : index
    %3322 = memref.load %arg1[%c323_382] : memref<474xf32, #tpu.memory_space<smem>>
    %3323 = vector.broadcast %3322 : f32 to vector<8x128xf32>
    %3324 = arith.mulf %2115, %3323 : vector<8x128xf32>
    %c331_383 = arith.constant 331 : index
    %3325 = memref.load %arg1[%c331_383] : memref<474xf32, #tpu.memory_space<smem>>
    %3326 = vector.broadcast %3325 : f32 to vector<8x128xf32>
    %3327 = arith.mulf %2182, %3326 : vector<8x128xf32>
    %3328 = arith.addf %3324, %3327 : vector<8x128xf32>
    %c339_384 = arith.constant 339 : index
    %3329 = memref.load %arg1[%c339_384] : memref<474xf32, #tpu.memory_space<smem>>
    %3330 = vector.broadcast %3329 : f32 to vector<8x128xf32>
    %3331 = arith.mulf %2249, %3330 : vector<8x128xf32>
    %3332 = arith.addf %3328, %3331 : vector<8x128xf32>
    %c347_385 = arith.constant 347 : index
    %3333 = memref.load %arg1[%c347_385] : memref<474xf32, #tpu.memory_space<smem>>
    %3334 = vector.broadcast %3333 : f32 to vector<8x128xf32>
    %3335 = arith.mulf %2316, %3334 : vector<8x128xf32>
    %3336 = arith.addf %3332, %3335 : vector<8x128xf32>
    %c355_386 = arith.constant 355 : index
    %3337 = memref.load %arg1[%c355_386] : memref<474xf32, #tpu.memory_space<smem>>
    %3338 = vector.broadcast %3337 : f32 to vector<8x128xf32>
    %3339 = arith.mulf %2383, %3338 : vector<8x128xf32>
    %3340 = arith.addf %3336, %3339 : vector<8x128xf32>
    %c363_387 = arith.constant 363 : index
    %3341 = memref.load %arg1[%c363_387] : memref<474xf32, #tpu.memory_space<smem>>
    %3342 = vector.broadcast %3341 : f32 to vector<8x128xf32>
    %3343 = arith.mulf %2450, %3342 : vector<8x128xf32>
    %3344 = arith.addf %3340, %3343 : vector<8x128xf32>
    %c371_388 = arith.constant 371 : index
    %3345 = memref.load %arg1[%c371_388] : memref<474xf32, #tpu.memory_space<smem>>
    %3346 = vector.broadcast %3345 : f32 to vector<8x128xf32>
    %3347 = arith.mulf %2517, %3346 : vector<8x128xf32>
    %3348 = arith.addf %3344, %3347 : vector<8x128xf32>
    %c379_389 = arith.constant 379 : index
    %3349 = memref.load %arg1[%c379_389] : memref<474xf32, #tpu.memory_space<smem>>
    %3350 = vector.broadcast %3349 : f32 to vector<8x128xf32>
    %3351 = arith.mulf %2584, %3350 : vector<8x128xf32>
    %3352 = arith.addf %3348, %3351 : vector<8x128xf32>
    %c387_390 = arith.constant 387 : index
    %3353 = memref.load %arg1[%c387_390] : memref<474xf32, #tpu.memory_space<smem>>
    %3354 = vector.broadcast %3353 : f32 to vector<8x128xf32>
    %3355 = arith.mulf %2651, %3354 : vector<8x128xf32>
    %3356 = arith.addf %3352, %3355 : vector<8x128xf32>
    %c395_391 = arith.constant 395 : index
    %3357 = memref.load %arg1[%c395_391] : memref<474xf32, #tpu.memory_space<smem>>
    %3358 = vector.broadcast %3357 : f32 to vector<8x128xf32>
    %3359 = arith.mulf %2718, %3358 : vector<8x128xf32>
    %3360 = arith.addf %3356, %3359 : vector<8x128xf32>
    %c403_392 = arith.constant 403 : index
    %3361 = memref.load %arg1[%c403_392] : memref<474xf32, #tpu.memory_space<smem>>
    %3362 = vector.broadcast %3361 : f32 to vector<8x128xf32>
    %3363 = arith.mulf %2785, %3362 : vector<8x128xf32>
    %3364 = arith.addf %3360, %3363 : vector<8x128xf32>
    %c411_393 = arith.constant 411 : index
    %3365 = memref.load %arg1[%c411_393] : memref<474xf32, #tpu.memory_space<smem>>
    %3366 = vector.broadcast %3365 : f32 to vector<8x128xf32>
    %3367 = arith.mulf %2852, %3366 : vector<8x128xf32>
    %3368 = arith.addf %3364, %3367 : vector<8x128xf32>
    %c419_394 = arith.constant 419 : index
    %3369 = memref.load %arg1[%c419_394] : memref<474xf32, #tpu.memory_space<smem>>
    %3370 = vector.broadcast %3369 : f32 to vector<8x128xf32>
    %3371 = arith.mulf %2919, %3370 : vector<8x128xf32>
    %3372 = arith.addf %3368, %3371 : vector<8x128xf32>
    %c427_395 = arith.constant 427 : index
    %3373 = memref.load %arg1[%c427_395] : memref<474xf32, #tpu.memory_space<smem>>
    %3374 = vector.broadcast %3373 : f32 to vector<8x128xf32>
    %3375 = arith.mulf %2986, %3374 : vector<8x128xf32>
    %3376 = arith.addf %3372, %3375 : vector<8x128xf32>
    %c435_396 = arith.constant 435 : index
    %3377 = memref.load %arg1[%c435_396] : memref<474xf32, #tpu.memory_space<smem>>
    %3378 = vector.broadcast %3377 : f32 to vector<8x128xf32>
    %3379 = arith.mulf %3053, %3378 : vector<8x128xf32>
    %3380 = arith.addf %3376, %3379 : vector<8x128xf32>
    %c443_397 = arith.constant 443 : index
    %3381 = memref.load %arg1[%c443_397] : memref<474xf32, #tpu.memory_space<smem>>
    %3382 = vector.broadcast %3381 : f32 to vector<8x128xf32>
    %3383 = arith.mulf %3120, %3382 : vector<8x128xf32>
    %3384 = arith.addf %3380, %3383 : vector<8x128xf32>
    %c451_398 = arith.constant 451 : index
    %3385 = memref.load %arg1[%c451_398] : memref<474xf32, #tpu.memory_space<smem>>
    %3386 = vector.broadcast %3385 : f32 to vector<8x128xf32>
    %3387 = arith.addf %3384, %3386 : vector<8x128xf32>
    %3388 = math.tanh %3387 : vector<8x128xf32>
    %c324_399 = arith.constant 324 : index
    %3389 = memref.load %arg1[%c324_399] : memref<474xf32, #tpu.memory_space<smem>>
    %3390 = vector.broadcast %3389 : f32 to vector<8x128xf32>
    %3391 = arith.mulf %2115, %3390 : vector<8x128xf32>
    %c332_400 = arith.constant 332 : index
    %3392 = memref.load %arg1[%c332_400] : memref<474xf32, #tpu.memory_space<smem>>
    %3393 = vector.broadcast %3392 : f32 to vector<8x128xf32>
    %3394 = arith.mulf %2182, %3393 : vector<8x128xf32>
    %3395 = arith.addf %3391, %3394 : vector<8x128xf32>
    %c340_401 = arith.constant 340 : index
    %3396 = memref.load %arg1[%c340_401] : memref<474xf32, #tpu.memory_space<smem>>
    %3397 = vector.broadcast %3396 : f32 to vector<8x128xf32>
    %3398 = arith.mulf %2249, %3397 : vector<8x128xf32>
    %3399 = arith.addf %3395, %3398 : vector<8x128xf32>
    %c348_402 = arith.constant 348 : index
    %3400 = memref.load %arg1[%c348_402] : memref<474xf32, #tpu.memory_space<smem>>
    %3401 = vector.broadcast %3400 : f32 to vector<8x128xf32>
    %3402 = arith.mulf %2316, %3401 : vector<8x128xf32>
    %3403 = arith.addf %3399, %3402 : vector<8x128xf32>
    %c356_403 = arith.constant 356 : index
    %3404 = memref.load %arg1[%c356_403] : memref<474xf32, #tpu.memory_space<smem>>
    %3405 = vector.broadcast %3404 : f32 to vector<8x128xf32>
    %3406 = arith.mulf %2383, %3405 : vector<8x128xf32>
    %3407 = arith.addf %3403, %3406 : vector<8x128xf32>
    %c364_404 = arith.constant 364 : index
    %3408 = memref.load %arg1[%c364_404] : memref<474xf32, #tpu.memory_space<smem>>
    %3409 = vector.broadcast %3408 : f32 to vector<8x128xf32>
    %3410 = arith.mulf %2450, %3409 : vector<8x128xf32>
    %3411 = arith.addf %3407, %3410 : vector<8x128xf32>
    %c372_405 = arith.constant 372 : index
    %3412 = memref.load %arg1[%c372_405] : memref<474xf32, #tpu.memory_space<smem>>
    %3413 = vector.broadcast %3412 : f32 to vector<8x128xf32>
    %3414 = arith.mulf %2517, %3413 : vector<8x128xf32>
    %3415 = arith.addf %3411, %3414 : vector<8x128xf32>
    %c380_406 = arith.constant 380 : index
    %3416 = memref.load %arg1[%c380_406] : memref<474xf32, #tpu.memory_space<smem>>
    %3417 = vector.broadcast %3416 : f32 to vector<8x128xf32>
    %3418 = arith.mulf %2584, %3417 : vector<8x128xf32>
    %3419 = arith.addf %3415, %3418 : vector<8x128xf32>
    %c388_407 = arith.constant 388 : index
    %3420 = memref.load %arg1[%c388_407] : memref<474xf32, #tpu.memory_space<smem>>
    %3421 = vector.broadcast %3420 : f32 to vector<8x128xf32>
    %3422 = arith.mulf %2651, %3421 : vector<8x128xf32>
    %3423 = arith.addf %3419, %3422 : vector<8x128xf32>
    %c396_408 = arith.constant 396 : index
    %3424 = memref.load %arg1[%c396_408] : memref<474xf32, #tpu.memory_space<smem>>
    %3425 = vector.broadcast %3424 : f32 to vector<8x128xf32>
    %3426 = arith.mulf %2718, %3425 : vector<8x128xf32>
    %3427 = arith.addf %3423, %3426 : vector<8x128xf32>
    %c404_409 = arith.constant 404 : index
    %3428 = memref.load %arg1[%c404_409] : memref<474xf32, #tpu.memory_space<smem>>
    %3429 = vector.broadcast %3428 : f32 to vector<8x128xf32>
    %3430 = arith.mulf %2785, %3429 : vector<8x128xf32>
    %3431 = arith.addf %3427, %3430 : vector<8x128xf32>
    %c412_410 = arith.constant 412 : index
    %3432 = memref.load %arg1[%c412_410] : memref<474xf32, #tpu.memory_space<smem>>
    %3433 = vector.broadcast %3432 : f32 to vector<8x128xf32>
    %3434 = arith.mulf %2852, %3433 : vector<8x128xf32>
    %3435 = arith.addf %3431, %3434 : vector<8x128xf32>
    %c420_411 = arith.constant 420 : index
    %3436 = memref.load %arg1[%c420_411] : memref<474xf32, #tpu.memory_space<smem>>
    %3437 = vector.broadcast %3436 : f32 to vector<8x128xf32>
    %3438 = arith.mulf %2919, %3437 : vector<8x128xf32>
    %3439 = arith.addf %3435, %3438 : vector<8x128xf32>
    %c428_412 = arith.constant 428 : index
    %3440 = memref.load %arg1[%c428_412] : memref<474xf32, #tpu.memory_space<smem>>
    %3441 = vector.broadcast %3440 : f32 to vector<8x128xf32>
    %3442 = arith.mulf %2986, %3441 : vector<8x128xf32>
    %3443 = arith.addf %3439, %3442 : vector<8x128xf32>
    %c436_413 = arith.constant 436 : index
    %3444 = memref.load %arg1[%c436_413] : memref<474xf32, #tpu.memory_space<smem>>
    %3445 = vector.broadcast %3444 : f32 to vector<8x128xf32>
    %3446 = arith.mulf %3053, %3445 : vector<8x128xf32>
    %3447 = arith.addf %3443, %3446 : vector<8x128xf32>
    %c444_414 = arith.constant 444 : index
    %3448 = memref.load %arg1[%c444_414] : memref<474xf32, #tpu.memory_space<smem>>
    %3449 = vector.broadcast %3448 : f32 to vector<8x128xf32>
    %3450 = arith.mulf %3120, %3449 : vector<8x128xf32>
    %3451 = arith.addf %3447, %3450 : vector<8x128xf32>
    %c452_415 = arith.constant 452 : index
    %3452 = memref.load %arg1[%c452_415] : memref<474xf32, #tpu.memory_space<smem>>
    %3453 = vector.broadcast %3452 : f32 to vector<8x128xf32>
    %3454 = arith.addf %3451, %3453 : vector<8x128xf32>
    %3455 = math.tanh %3454 : vector<8x128xf32>
    %c325_416 = arith.constant 325 : index
    %3456 = memref.load %arg1[%c325_416] : memref<474xf32, #tpu.memory_space<smem>>
    %3457 = vector.broadcast %3456 : f32 to vector<8x128xf32>
    %3458 = arith.mulf %2115, %3457 : vector<8x128xf32>
    %c333_417 = arith.constant 333 : index
    %3459 = memref.load %arg1[%c333_417] : memref<474xf32, #tpu.memory_space<smem>>
    %3460 = vector.broadcast %3459 : f32 to vector<8x128xf32>
    %3461 = arith.mulf %2182, %3460 : vector<8x128xf32>
    %3462 = arith.addf %3458, %3461 : vector<8x128xf32>
    %c341_418 = arith.constant 341 : index
    %3463 = memref.load %arg1[%c341_418] : memref<474xf32, #tpu.memory_space<smem>>
    %3464 = vector.broadcast %3463 : f32 to vector<8x128xf32>
    %3465 = arith.mulf %2249, %3464 : vector<8x128xf32>
    %3466 = arith.addf %3462, %3465 : vector<8x128xf32>
    %c349_419 = arith.constant 349 : index
    %3467 = memref.load %arg1[%c349_419] : memref<474xf32, #tpu.memory_space<smem>>
    %3468 = vector.broadcast %3467 : f32 to vector<8x128xf32>
    %3469 = arith.mulf %2316, %3468 : vector<8x128xf32>
    %3470 = arith.addf %3466, %3469 : vector<8x128xf32>
    %c357_420 = arith.constant 357 : index
    %3471 = memref.load %arg1[%c357_420] : memref<474xf32, #tpu.memory_space<smem>>
    %3472 = vector.broadcast %3471 : f32 to vector<8x128xf32>
    %3473 = arith.mulf %2383, %3472 : vector<8x128xf32>
    %3474 = arith.addf %3470, %3473 : vector<8x128xf32>
    %c365_421 = arith.constant 365 : index
    %3475 = memref.load %arg1[%c365_421] : memref<474xf32, #tpu.memory_space<smem>>
    %3476 = vector.broadcast %3475 : f32 to vector<8x128xf32>
    %3477 = arith.mulf %2450, %3476 : vector<8x128xf32>
    %3478 = arith.addf %3474, %3477 : vector<8x128xf32>
    %c373_422 = arith.constant 373 : index
    %3479 = memref.load %arg1[%c373_422] : memref<474xf32, #tpu.memory_space<smem>>
    %3480 = vector.broadcast %3479 : f32 to vector<8x128xf32>
    %3481 = arith.mulf %2517, %3480 : vector<8x128xf32>
    %3482 = arith.addf %3478, %3481 : vector<8x128xf32>
    %c381_423 = arith.constant 381 : index
    %3483 = memref.load %arg1[%c381_423] : memref<474xf32, #tpu.memory_space<smem>>
    %3484 = vector.broadcast %3483 : f32 to vector<8x128xf32>
    %3485 = arith.mulf %2584, %3484 : vector<8x128xf32>
    %3486 = arith.addf %3482, %3485 : vector<8x128xf32>
    %c389_424 = arith.constant 389 : index
    %3487 = memref.load %arg1[%c389_424] : memref<474xf32, #tpu.memory_space<smem>>
    %3488 = vector.broadcast %3487 : f32 to vector<8x128xf32>
    %3489 = arith.mulf %2651, %3488 : vector<8x128xf32>
    %3490 = arith.addf %3486, %3489 : vector<8x128xf32>
    %c397_425 = arith.constant 397 : index
    %3491 = memref.load %arg1[%c397_425] : memref<474xf32, #tpu.memory_space<smem>>
    %3492 = vector.broadcast %3491 : f32 to vector<8x128xf32>
    %3493 = arith.mulf %2718, %3492 : vector<8x128xf32>
    %3494 = arith.addf %3490, %3493 : vector<8x128xf32>
    %c405_426 = arith.constant 405 : index
    %3495 = memref.load %arg1[%c405_426] : memref<474xf32, #tpu.memory_space<smem>>
    %3496 = vector.broadcast %3495 : f32 to vector<8x128xf32>
    %3497 = arith.mulf %2785, %3496 : vector<8x128xf32>
    %3498 = arith.addf %3494, %3497 : vector<8x128xf32>
    %c413_427 = arith.constant 413 : index
    %3499 = memref.load %arg1[%c413_427] : memref<474xf32, #tpu.memory_space<smem>>
    %3500 = vector.broadcast %3499 : f32 to vector<8x128xf32>
    %3501 = arith.mulf %2852, %3500 : vector<8x128xf32>
    %3502 = arith.addf %3498, %3501 : vector<8x128xf32>
    %c421_428 = arith.constant 421 : index
    %3503 = memref.load %arg1[%c421_428] : memref<474xf32, #tpu.memory_space<smem>>
    %3504 = vector.broadcast %3503 : f32 to vector<8x128xf32>
    %3505 = arith.mulf %2919, %3504 : vector<8x128xf32>
    %3506 = arith.addf %3502, %3505 : vector<8x128xf32>
    %c429_429 = arith.constant 429 : index
    %3507 = memref.load %arg1[%c429_429] : memref<474xf32, #tpu.memory_space<smem>>
    %3508 = vector.broadcast %3507 : f32 to vector<8x128xf32>
    %3509 = arith.mulf %2986, %3508 : vector<8x128xf32>
    %3510 = arith.addf %3506, %3509 : vector<8x128xf32>
    %c437_430 = arith.constant 437 : index
    %3511 = memref.load %arg1[%c437_430] : memref<474xf32, #tpu.memory_space<smem>>
    %3512 = vector.broadcast %3511 : f32 to vector<8x128xf32>
    %3513 = arith.mulf %3053, %3512 : vector<8x128xf32>
    %3514 = arith.addf %3510, %3513 : vector<8x128xf32>
    %c445_431 = arith.constant 445 : index
    %3515 = memref.load %arg1[%c445_431] : memref<474xf32, #tpu.memory_space<smem>>
    %3516 = vector.broadcast %3515 : f32 to vector<8x128xf32>
    %3517 = arith.mulf %3120, %3516 : vector<8x128xf32>
    %3518 = arith.addf %3514, %3517 : vector<8x128xf32>
    %c453_432 = arith.constant 453 : index
    %3519 = memref.load %arg1[%c453_432] : memref<474xf32, #tpu.memory_space<smem>>
    %3520 = vector.broadcast %3519 : f32 to vector<8x128xf32>
    %3521 = arith.addf %3518, %3520 : vector<8x128xf32>
    %3522 = math.tanh %3521 : vector<8x128xf32>
    %c326_433 = arith.constant 326 : index
    %3523 = memref.load %arg1[%c326_433] : memref<474xf32, #tpu.memory_space<smem>>
    %3524 = vector.broadcast %3523 : f32 to vector<8x128xf32>
    %3525 = arith.mulf %2115, %3524 : vector<8x128xf32>
    %c334_434 = arith.constant 334 : index
    %3526 = memref.load %arg1[%c334_434] : memref<474xf32, #tpu.memory_space<smem>>
    %3527 = vector.broadcast %3526 : f32 to vector<8x128xf32>
    %3528 = arith.mulf %2182, %3527 : vector<8x128xf32>
    %3529 = arith.addf %3525, %3528 : vector<8x128xf32>
    %c342_435 = arith.constant 342 : index
    %3530 = memref.load %arg1[%c342_435] : memref<474xf32, #tpu.memory_space<smem>>
    %3531 = vector.broadcast %3530 : f32 to vector<8x128xf32>
    %3532 = arith.mulf %2249, %3531 : vector<8x128xf32>
    %3533 = arith.addf %3529, %3532 : vector<8x128xf32>
    %c350_436 = arith.constant 350 : index
    %3534 = memref.load %arg1[%c350_436] : memref<474xf32, #tpu.memory_space<smem>>
    %3535 = vector.broadcast %3534 : f32 to vector<8x128xf32>
    %3536 = arith.mulf %2316, %3535 : vector<8x128xf32>
    %3537 = arith.addf %3533, %3536 : vector<8x128xf32>
    %c358_437 = arith.constant 358 : index
    %3538 = memref.load %arg1[%c358_437] : memref<474xf32, #tpu.memory_space<smem>>
    %3539 = vector.broadcast %3538 : f32 to vector<8x128xf32>
    %3540 = arith.mulf %2383, %3539 : vector<8x128xf32>
    %3541 = arith.addf %3537, %3540 : vector<8x128xf32>
    %c366_438 = arith.constant 366 : index
    %3542 = memref.load %arg1[%c366_438] : memref<474xf32, #tpu.memory_space<smem>>
    %3543 = vector.broadcast %3542 : f32 to vector<8x128xf32>
    %3544 = arith.mulf %2450, %3543 : vector<8x128xf32>
    %3545 = arith.addf %3541, %3544 : vector<8x128xf32>
    %c374_439 = arith.constant 374 : index
    %3546 = memref.load %arg1[%c374_439] : memref<474xf32, #tpu.memory_space<smem>>
    %3547 = vector.broadcast %3546 : f32 to vector<8x128xf32>
    %3548 = arith.mulf %2517, %3547 : vector<8x128xf32>
    %3549 = arith.addf %3545, %3548 : vector<8x128xf32>
    %c382_440 = arith.constant 382 : index
    %3550 = memref.load %arg1[%c382_440] : memref<474xf32, #tpu.memory_space<smem>>
    %3551 = vector.broadcast %3550 : f32 to vector<8x128xf32>
    %3552 = arith.mulf %2584, %3551 : vector<8x128xf32>
    %3553 = arith.addf %3549, %3552 : vector<8x128xf32>
    %c390_441 = arith.constant 390 : index
    %3554 = memref.load %arg1[%c390_441] : memref<474xf32, #tpu.memory_space<smem>>
    %3555 = vector.broadcast %3554 : f32 to vector<8x128xf32>
    %3556 = arith.mulf %2651, %3555 : vector<8x128xf32>
    %3557 = arith.addf %3553, %3556 : vector<8x128xf32>
    %c398_442 = arith.constant 398 : index
    %3558 = memref.load %arg1[%c398_442] : memref<474xf32, #tpu.memory_space<smem>>
    %3559 = vector.broadcast %3558 : f32 to vector<8x128xf32>
    %3560 = arith.mulf %2718, %3559 : vector<8x128xf32>
    %3561 = arith.addf %3557, %3560 : vector<8x128xf32>
    %c406_443 = arith.constant 406 : index
    %3562 = memref.load %arg1[%c406_443] : memref<474xf32, #tpu.memory_space<smem>>
    %3563 = vector.broadcast %3562 : f32 to vector<8x128xf32>
    %3564 = arith.mulf %2785, %3563 : vector<8x128xf32>
    %3565 = arith.addf %3561, %3564 : vector<8x128xf32>
    %c414_444 = arith.constant 414 : index
    %3566 = memref.load %arg1[%c414_444] : memref<474xf32, #tpu.memory_space<smem>>
    %3567 = vector.broadcast %3566 : f32 to vector<8x128xf32>
    %3568 = arith.mulf %2852, %3567 : vector<8x128xf32>
    %3569 = arith.addf %3565, %3568 : vector<8x128xf32>
    %c422_445 = arith.constant 422 : index
    %3570 = memref.load %arg1[%c422_445] : memref<474xf32, #tpu.memory_space<smem>>
    %3571 = vector.broadcast %3570 : f32 to vector<8x128xf32>
    %3572 = arith.mulf %2919, %3571 : vector<8x128xf32>
    %3573 = arith.addf %3569, %3572 : vector<8x128xf32>
    %c430_446 = arith.constant 430 : index
    %3574 = memref.load %arg1[%c430_446] : memref<474xf32, #tpu.memory_space<smem>>
    %3575 = vector.broadcast %3574 : f32 to vector<8x128xf32>
    %3576 = arith.mulf %2986, %3575 : vector<8x128xf32>
    %3577 = arith.addf %3573, %3576 : vector<8x128xf32>
    %c438_447 = arith.constant 438 : index
    %3578 = memref.load %arg1[%c438_447] : memref<474xf32, #tpu.memory_space<smem>>
    %3579 = vector.broadcast %3578 : f32 to vector<8x128xf32>
    %3580 = arith.mulf %3053, %3579 : vector<8x128xf32>
    %3581 = arith.addf %3577, %3580 : vector<8x128xf32>
    %c446_448 = arith.constant 446 : index
    %3582 = memref.load %arg1[%c446_448] : memref<474xf32, #tpu.memory_space<smem>>
    %3583 = vector.broadcast %3582 : f32 to vector<8x128xf32>
    %3584 = arith.mulf %3120, %3583 : vector<8x128xf32>
    %3585 = arith.addf %3581, %3584 : vector<8x128xf32>
    %c454_449 = arith.constant 454 : index
    %3586 = memref.load %arg1[%c454_449] : memref<474xf32, #tpu.memory_space<smem>>
    %3587 = vector.broadcast %3586 : f32 to vector<8x128xf32>
    %3588 = arith.addf %3585, %3587 : vector<8x128xf32>
    %3589 = math.tanh %3588 : vector<8x128xf32>
    %c327_450 = arith.constant 327 : index
    %3590 = memref.load %arg1[%c327_450] : memref<474xf32, #tpu.memory_space<smem>>
    %3591 = vector.broadcast %3590 : f32 to vector<8x128xf32>
    %3592 = arith.mulf %2115, %3591 : vector<8x128xf32>
    %c335_451 = arith.constant 335 : index
    %3593 = memref.load %arg1[%c335_451] : memref<474xf32, #tpu.memory_space<smem>>
    %3594 = vector.broadcast %3593 : f32 to vector<8x128xf32>
    %3595 = arith.mulf %2182, %3594 : vector<8x128xf32>
    %3596 = arith.addf %3592, %3595 : vector<8x128xf32>
    %c343_452 = arith.constant 343 : index
    %3597 = memref.load %arg1[%c343_452] : memref<474xf32, #tpu.memory_space<smem>>
    %3598 = vector.broadcast %3597 : f32 to vector<8x128xf32>
    %3599 = arith.mulf %2249, %3598 : vector<8x128xf32>
    %3600 = arith.addf %3596, %3599 : vector<8x128xf32>
    %c351_453 = arith.constant 351 : index
    %3601 = memref.load %arg1[%c351_453] : memref<474xf32, #tpu.memory_space<smem>>
    %3602 = vector.broadcast %3601 : f32 to vector<8x128xf32>
    %3603 = arith.mulf %2316, %3602 : vector<8x128xf32>
    %3604 = arith.addf %3600, %3603 : vector<8x128xf32>
    %c359_454 = arith.constant 359 : index
    %3605 = memref.load %arg1[%c359_454] : memref<474xf32, #tpu.memory_space<smem>>
    %3606 = vector.broadcast %3605 : f32 to vector<8x128xf32>
    %3607 = arith.mulf %2383, %3606 : vector<8x128xf32>
    %3608 = arith.addf %3604, %3607 : vector<8x128xf32>
    %c367_455 = arith.constant 367 : index
    %3609 = memref.load %arg1[%c367_455] : memref<474xf32, #tpu.memory_space<smem>>
    %3610 = vector.broadcast %3609 : f32 to vector<8x128xf32>
    %3611 = arith.mulf %2450, %3610 : vector<8x128xf32>
    %3612 = arith.addf %3608, %3611 : vector<8x128xf32>
    %c375_456 = arith.constant 375 : index
    %3613 = memref.load %arg1[%c375_456] : memref<474xf32, #tpu.memory_space<smem>>
    %3614 = vector.broadcast %3613 : f32 to vector<8x128xf32>
    %3615 = arith.mulf %2517, %3614 : vector<8x128xf32>
    %3616 = arith.addf %3612, %3615 : vector<8x128xf32>
    %c383_457 = arith.constant 383 : index
    %3617 = memref.load %arg1[%c383_457] : memref<474xf32, #tpu.memory_space<smem>>
    %3618 = vector.broadcast %3617 : f32 to vector<8x128xf32>
    %3619 = arith.mulf %2584, %3618 : vector<8x128xf32>
    %3620 = arith.addf %3616, %3619 : vector<8x128xf32>
    %c391_458 = arith.constant 391 : index
    %3621 = memref.load %arg1[%c391_458] : memref<474xf32, #tpu.memory_space<smem>>
    %3622 = vector.broadcast %3621 : f32 to vector<8x128xf32>
    %3623 = arith.mulf %2651, %3622 : vector<8x128xf32>
    %3624 = arith.addf %3620, %3623 : vector<8x128xf32>
    %c399_459 = arith.constant 399 : index
    %3625 = memref.load %arg1[%c399_459] : memref<474xf32, #tpu.memory_space<smem>>
    %3626 = vector.broadcast %3625 : f32 to vector<8x128xf32>
    %3627 = arith.mulf %2718, %3626 : vector<8x128xf32>
    %3628 = arith.addf %3624, %3627 : vector<8x128xf32>
    %c407_460 = arith.constant 407 : index
    %3629 = memref.load %arg1[%c407_460] : memref<474xf32, #tpu.memory_space<smem>>
    %3630 = vector.broadcast %3629 : f32 to vector<8x128xf32>
    %3631 = arith.mulf %2785, %3630 : vector<8x128xf32>
    %3632 = arith.addf %3628, %3631 : vector<8x128xf32>
    %c415_461 = arith.constant 415 : index
    %3633 = memref.load %arg1[%c415_461] : memref<474xf32, #tpu.memory_space<smem>>
    %3634 = vector.broadcast %3633 : f32 to vector<8x128xf32>
    %3635 = arith.mulf %2852, %3634 : vector<8x128xf32>
    %3636 = arith.addf %3632, %3635 : vector<8x128xf32>
    %c423_462 = arith.constant 423 : index
    %3637 = memref.load %arg1[%c423_462] : memref<474xf32, #tpu.memory_space<smem>>
    %3638 = vector.broadcast %3637 : f32 to vector<8x128xf32>
    %3639 = arith.mulf %2919, %3638 : vector<8x128xf32>
    %3640 = arith.addf %3636, %3639 : vector<8x128xf32>
    %c431_463 = arith.constant 431 : index
    %3641 = memref.load %arg1[%c431_463] : memref<474xf32, #tpu.memory_space<smem>>
    %3642 = vector.broadcast %3641 : f32 to vector<8x128xf32>
    %3643 = arith.mulf %2986, %3642 : vector<8x128xf32>
    %3644 = arith.addf %3640, %3643 : vector<8x128xf32>
    %c439_464 = arith.constant 439 : index
    %3645 = memref.load %arg1[%c439_464] : memref<474xf32, #tpu.memory_space<smem>>
    %3646 = vector.broadcast %3645 : f32 to vector<8x128xf32>
    %3647 = arith.mulf %3053, %3646 : vector<8x128xf32>
    %3648 = arith.addf %3644, %3647 : vector<8x128xf32>
    %c447_465 = arith.constant 447 : index
    %3649 = memref.load %arg1[%c447_465] : memref<474xf32, #tpu.memory_space<smem>>
    %3650 = vector.broadcast %3649 : f32 to vector<8x128xf32>
    %3651 = arith.mulf %3120, %3650 : vector<8x128xf32>
    %3652 = arith.addf %3648, %3651 : vector<8x128xf32>
    %c455_466 = arith.constant 455 : index
    %3653 = memref.load %arg1[%c455_466] : memref<474xf32, #tpu.memory_space<smem>>
    %3654 = vector.broadcast %3653 : f32 to vector<8x128xf32>
    %3655 = arith.addf %3652, %3654 : vector<8x128xf32>
    %3656 = math.tanh %3655 : vector<8x128xf32>
    %c456_467 = arith.constant 456 : index
    %3657 = memref.load %arg1[%c456_467] : memref<474xf32, #tpu.memory_space<smem>>
    %3658 = vector.broadcast %3657 : f32 to vector<8x128xf32>
    %3659 = arith.mulf %3187, %3658 : vector<8x128xf32>
    %c465_468 = arith.constant 465 : index
    %3660 = memref.load %arg1[%c465_468] : memref<474xf32, #tpu.memory_space<smem>>
    %3661 = vector.broadcast %3660 : f32 to vector<8x128xf32>
    %3662 = arith.mulf %3187, %3661 : vector<8x128xf32>
    %c457_469 = arith.constant 457 : index
    %3663 = memref.load %arg1[%c457_469] : memref<474xf32, #tpu.memory_space<smem>>
    %3664 = vector.broadcast %3663 : f32 to vector<8x128xf32>
    %3665 = arith.mulf %3254, %3664 : vector<8x128xf32>
    %3666 = arith.addf %3659, %3665 : vector<8x128xf32>
    %c466_470 = arith.constant 466 : index
    %3667 = memref.load %arg1[%c466_470] : memref<474xf32, #tpu.memory_space<smem>>
    %3668 = vector.broadcast %3667 : f32 to vector<8x128xf32>
    %3669 = arith.mulf %3254, %3668 : vector<8x128xf32>
    %3670 = arith.addf %3662, %3669 : vector<8x128xf32>
    %c458_471 = arith.constant 458 : index
    %3671 = memref.load %arg1[%c458_471] : memref<474xf32, #tpu.memory_space<smem>>
    %3672 = vector.broadcast %3671 : f32 to vector<8x128xf32>
    %3673 = arith.mulf %3321, %3672 : vector<8x128xf32>
    %3674 = arith.addf %3666, %3673 : vector<8x128xf32>
    %c467_472 = arith.constant 467 : index
    %3675 = memref.load %arg1[%c467_472] : memref<474xf32, #tpu.memory_space<smem>>
    %3676 = vector.broadcast %3675 : f32 to vector<8x128xf32>
    %3677 = arith.mulf %3321, %3676 : vector<8x128xf32>
    %3678 = arith.addf %3670, %3677 : vector<8x128xf32>
    %c459_473 = arith.constant 459 : index
    %3679 = memref.load %arg1[%c459_473] : memref<474xf32, #tpu.memory_space<smem>>
    %3680 = vector.broadcast %3679 : f32 to vector<8x128xf32>
    %3681 = arith.mulf %3388, %3680 : vector<8x128xf32>
    %3682 = arith.addf %3674, %3681 : vector<8x128xf32>
    %c468_474 = arith.constant 468 : index
    %3683 = memref.load %arg1[%c468_474] : memref<474xf32, #tpu.memory_space<smem>>
    %3684 = vector.broadcast %3683 : f32 to vector<8x128xf32>
    %3685 = arith.mulf %3388, %3684 : vector<8x128xf32>
    %3686 = arith.addf %3678, %3685 : vector<8x128xf32>
    %c460_475 = arith.constant 460 : index
    %3687 = memref.load %arg1[%c460_475] : memref<474xf32, #tpu.memory_space<smem>>
    %3688 = vector.broadcast %3687 : f32 to vector<8x128xf32>
    %3689 = arith.mulf %3455, %3688 : vector<8x128xf32>
    %3690 = arith.addf %3682, %3689 : vector<8x128xf32>
    %c469_476 = arith.constant 469 : index
    %3691 = memref.load %arg1[%c469_476] : memref<474xf32, #tpu.memory_space<smem>>
    %3692 = vector.broadcast %3691 : f32 to vector<8x128xf32>
    %3693 = arith.mulf %3455, %3692 : vector<8x128xf32>
    %3694 = arith.addf %3686, %3693 : vector<8x128xf32>
    %c461_477 = arith.constant 461 : index
    %3695 = memref.load %arg1[%c461_477] : memref<474xf32, #tpu.memory_space<smem>>
    %3696 = vector.broadcast %3695 : f32 to vector<8x128xf32>
    %3697 = arith.mulf %3522, %3696 : vector<8x128xf32>
    %3698 = arith.addf %3690, %3697 : vector<8x128xf32>
    %c470_478 = arith.constant 470 : index
    %3699 = memref.load %arg1[%c470_478] : memref<474xf32, #tpu.memory_space<smem>>
    %3700 = vector.broadcast %3699 : f32 to vector<8x128xf32>
    %3701 = arith.mulf %3522, %3700 : vector<8x128xf32>
    %3702 = arith.addf %3694, %3701 : vector<8x128xf32>
    %c462_479 = arith.constant 462 : index
    %3703 = memref.load %arg1[%c462_479] : memref<474xf32, #tpu.memory_space<smem>>
    %3704 = vector.broadcast %3703 : f32 to vector<8x128xf32>
    %3705 = arith.mulf %3589, %3704 : vector<8x128xf32>
    %3706 = arith.addf %3698, %3705 : vector<8x128xf32>
    %c471_480 = arith.constant 471 : index
    %3707 = memref.load %arg1[%c471_480] : memref<474xf32, #tpu.memory_space<smem>>
    %3708 = vector.broadcast %3707 : f32 to vector<8x128xf32>
    %3709 = arith.mulf %3589, %3708 : vector<8x128xf32>
    %3710 = arith.addf %3702, %3709 : vector<8x128xf32>
    %c463_481 = arith.constant 463 : index
    %3711 = memref.load %arg1[%c463_481] : memref<474xf32, #tpu.memory_space<smem>>
    %3712 = vector.broadcast %3711 : f32 to vector<8x128xf32>
    %3713 = arith.mulf %3656, %3712 : vector<8x128xf32>
    %3714 = arith.addf %3706, %3713 : vector<8x128xf32>
    %c472_482 = arith.constant 472 : index
    %3715 = memref.load %arg1[%c472_482] : memref<474xf32, #tpu.memory_space<smem>>
    %3716 = vector.broadcast %3715 : f32 to vector<8x128xf32>
    %3717 = arith.mulf %3656, %3716 : vector<8x128xf32>
    %3718 = arith.addf %3710, %3717 : vector<8x128xf32>
    %c464_483 = arith.constant 464 : index
    %3719 = memref.load %arg1[%c464_483] : memref<474xf32, #tpu.memory_space<smem>>
    %3720 = vector.broadcast %3719 : f32 to vector<8x128xf32>
    %3721 = arith.addf %3714, %3720 : vector<8x128xf32>
    %c473_484 = arith.constant 473 : index
    %3722 = memref.load %arg1[%c473_484] : memref<474xf32, #tpu.memory_space<smem>>
    %3723 = vector.broadcast %3722 : f32 to vector<8x128xf32>
    %3724 = arith.addf %3718, %3723 : vector<8x128xf32>
    %3725 = arith.mulf %3721, %3724 : vector<8x128xf32>
    %c0_485 = arith.constant 0 : index
    %3726 = arith.index_cast %1866 : i32 to index
    %c0_486 = arith.constant 0 : index
    %3727 = vector.load %arg3[%c0_485, %3726, %c0_486] : memref<1x16x128xf32, #tpu.memory_space<vmem>>, vector<1x8x128xf32>
    %3728 = vector.shape_cast %3727 : vector<1x8x128xf32> to vector<8x128xf32>
    %3729 = vector.shape_cast %3725 : vector<8x128xf32> to vector<1x8x128xf32>
    tpu.vector_store %arg3[%c0_485, %3726, %c0_486], %3729 {strides = array<i32>} : memref<1x16x128xf32, #tpu.memory_space<vmem>>, vector<1x8x128xf32>,
    %c2_i32 = arith.constant 2 : i32
    return
  }
  func.func @transform_0(%arg0: i32) -> i32 {
    %c0_i32 = arith.constant 0 : i32
    %c0_i32_0 = arith.constant 0 : i32
    return %c0_i32 : i32
  }
  func.func @transform_1(%arg0: i32) -> (i32, i32, i32) {
    %c0_i32 = arith.constant 0 : i32
    %c0_i32_0 = arith.constant 0 : i32
    %c0_i32_1 = arith.constant 0 : i32
    return %c0_i32, %arg0, %c0_i32_0 : i32, i32, i32
  }
  func.func @transform_2(%arg0: i32) -> (i32, i32, i32) {
    %c0_i32 = arith.constant 0 : i32
    %c0_i32_0 = arith.constant 0 : i32
    %c0_i32_1 = arith.constant 0 : i32
    return %c0_i32, %arg0, %c0_i32_0 : i32, i32, i32
  }
}

</mosaic_0001>

<llo_original>
// kernel: tpu_custom_call.1
$region0: #{tpu_custom_call.1}
  #allocation0 [shape = 'u32[]', space=smem, size = 0x4, offset = 0x4, fixed_abs, tag = 'smem constant byte address 0x4 - core index']
  #allocation1 [shape = 'u32[144,128]{1,0:T(1,128)}', space=vmem, size = 0x12000, scoped, tag = 'internal scratch']
  #allocation8 [shape = 's32[]', space=sflag, size = 0x4, offset = 0, fixed_abs, tag = 'sflag constant byte address 0x0 - dummy sync flag']
  %s0 = inlined_call_operand.hbm [shape: f32[474], index: 0, kind: input, shape index: {}]
  %s1 = inlined_call_operand.hbm [shape: f32[2,32,128], index: 1, kind: input, shape index: {}]
  %s2 = inlined_call_operand.hbm [shape: f32[1,32,128], index: 2, kind: output, shape index: {}]
  %s3 = sld [smem:[#allocation0]]
  $region49: #{tpu_custom_call.1} parent=0
    _
  %s5 = ssub.s32 1, %s3
  %s6 = scalar_select 0, %s5, %s3
  $region1: #{tpu_custom_call.1} parent=0
    #allocation2 [shape = 'u8[2048]{0}', space=smem, size = 0x800, scoped, tag = 'input window, operand 0, single buffered']
    #allocation3 [shape = 's32[2]{0}', space=sflag, size = 0x8, scoped, tag = 'scoped memory for tpu_custom_call.1']
    #allocation4 [shape = 's32[2]{0}', space=sflag, size = 0x8, scoped, tag = 'scoped memory for tpu_custom_call.1']
    #allocation5 [shape = 's32[2]{0}', space=sflag, size = 0x8, scoped, tag = 'scoped memory for tpu_custom_call.1']
    #allocation6 [shape = 'u8[32768]{0}', space=vmem, size = 0x8000, scoped, tag = 'input window, operand 1']
    #allocation7 [shape = 'u8[16384]{0}', space=vmem, size = 0x4000, scoped, tag = 'output window, operand 0']
    %7 = vsyncpa [#allocation5], 0
    %8 = vsyncpa [#allocation3], 0
    %s9 = scalar_lea.sflag [#allocation3], 1
    %10 = vsyncpa %s9, 0
    %11 = vsyncpa [#allocation4], 0
    %s12 = scalar_lea.sflag [#allocation4], 1
    %13 = vsyncpa %s12, 0
    loop: start=0, step=1, limit=4
    $region2: #{tpu_custom_call.1} parent=1 // loop_pre_header
      _
    $region3: #{tpu_custom_call.1} parent=1 // loop_header
      %s15 = sphi 0, %s19
      %p16 = scmp.ge.s32.totalorder %s15, 4
      %s23 = sphi 0, %s23
      %s25 = sphi 0, %s23
      %s26 = sphi 0, %s25
      %s40 = sphi 0, %s26
      %s46 = sphi 0, %s48
      %s49 = sphi 0, %s46
      %s50 = sphi 0, %s49
      %s66 = sphi 0, %s50
      %s72 = sphi 0, %s74
      %s75 = sphi 0, %s72
      %s76 = sphi 0, %s75
      %s92 = sphi 0, %s76
    $region4: #{tpu_custom_call.1} parent=1 // loop_header_branch
      %18 = sbr.rel (%p16) target = $region8
    $region5: #{tpu_custom_call.1} parent=1 // loop_body
      %s20 = ssub.s32 %s15, 1
      %s21 = ssub.s32 %s15, 2
      %s22 = sadd.s32 %s15, 1
      %s24 = sadd.s32 %s23, 1
      %p27 = scmp.eq.s32.totalorder %s15, 1
      %p28 = scmp.ne.s32.totalorder %s23, %s25
      %p29 = scmp.eq.s32.totalorder %s15, 0
      %p30 = por %p28, %p29
      %p31 = scmp.ne.s32.totalorder %s23, %s25
      %p32 = scmp.eq.s32.totalorder %s20, 1
      %p33 = por %p31, %p32
      %p34 = scmp.ne.s32.totalorder %s25, %s26
      %p35 = scmp.eq.s32.totalorder %s20, 0
      %p36 = por %p34, %p35
      %p37 = scmp.ne.s32.totalorder %s25, %s26
      %p38 = scmp.eq.s32.totalorder %s21, 1
      %p39 = por %p37, %p38
      %p41 = scmp.ne.s32.totalorder %s26, %s40
      %p42 = scmp.eq.s32.totalorder %s21, 0
      %p43 = por %p41, %p42
      %s44 = ssub.s32 %s15, %s22
      %p45 = scmp.eq.s32.totalorder %s44, 0
      %s47 = sadd.s32 %s46, 1
      %s48 = scalar_select %p45, %s46, %s47
      %p51 = pneg %p45
      %p52 = scmp.eq.s32.totalorder %s15, 1
      %p53 = por %p51, %p52
      %p54 = scmp.ne.s32.totalorder %s46, %s49
      %p55 = scmp.eq.s32.totalorder %s15, 0
      %p56 = por %p54, %p55
      %p57 = scmp.ne.s32.totalorder %s46, %s49
      %p58 = scmp.eq.s32.totalorder %s20, 1
      %p59 = por %p57, %p58
      %p60 = scmp.ne.s32.totalorder %s49, %s50
      %p61 = scmp.eq.s32.totalorder %s20, 0
      %p62 = por %p60, %p61
      %p63 = scmp.ne.s32.totalorder %s49, %s50
      %p64 = scmp.eq.s32.totalorder %s21, 1
      %p65 = por %p63, %p64
      %p67 = scmp.ne.s32.totalorder %s50, %s66
      %p68 = scmp.eq.s32.totalorder %s21, 0
      %p69 = por %p67, %p68
      %s70 = ssub.s32 %s15, %s22
      %p71 = scmp.eq.s32.totalorder %s70, 0
      %s73 = sadd.s32 %s72, 1
      %s74 = scalar_select %p71, %s72, %s73
      %p77 = pneg %p71
      %p78 = scmp.eq.s32.totalorder %s15, 1
      %p79 = por %p77, %p78
      %p80 = scmp.ne.s32.totalorder %s72, %s75
      %p81 = scmp.eq.s32.totalorder %s15, 0
      %p82 = por %p80, %p81
      %p83 = scmp.ne.s32.totalorder %s72, %s75
      %p84 = scmp.eq.s32.totalorder %s20, 1
      %p85 = por %p83, %p84
      %p86 = scmp.ne.s32.totalorder %s75, %s76
      %p87 = scmp.eq.s32.totalorder %s20, 0
      %p88 = por %p86, %p87
      %p89 = scmp.ne.s32.totalorder %s75, %s76
      %p90 = scmp.eq.s32.totalorder %s21, 1
      %p91 = por %p89, %p90
      %p93 = scmp.ne.s32.totalorder %s76, %s92
      %p94 = scmp.eq.s32.totalorder %s21, 0
      %p95 = por %p93, %p94
      %p96 = scmp.le.s32.totalorder 1, %s15
      %p97 = scmp.lt.s32.totalorder %s15, 3
      %p98 = pnand %p96, %p97
      %p99 = pneg %p98
      // Predicated region
      $region9: #{tpu_custom_call.1} parent=5 // pred_check
        _
      $region10: #{tpu_custom_call.1} parent=5 // pred_check_branch
        %101 = sbr.rel (%p98) target = $region12
      $region11: #{tpu_custom_call.1} parent=5 // pred_region
        %s102 = ssub.s32 %s15, 1
        // Predicated region
        $region13: #{tpu_custom_call.1} parent=11 // pred_check
          %p103 = pneg %p36
        $region14: #{tpu_custom_call.1} parent=11 // pred_check_branch
          %105 = sbr.rel (%p103) target = $region16
        $region15: #{tpu_custom_call.1} parent=11 // pred_region
          %s107 = ssub.s32 64, 64
          %108 = vsyncadd [#allocation5], %s107
          %111 = dma.hbm_to_smem %s0, 64, [#allocation2], [#allocation5]
        $region16: #{tpu_custom_call.1} parent=11 // pred_fallthru
          _
      $region12: #{tpu_custom_call.1} parent=5 // pred_fallthru
        _
      %p112 = scmp.lt.s32.totalorder %s15, 2
      // Predicated region
      $region17: #{tpu_custom_call.1} parent=5 // pred_check
        %p113 = pneg %p112
      $region18: #{tpu_custom_call.1} parent=5 // pred_check_branch
        %115 = sbr.rel (%p113) target = $region20
      $region19: #{tpu_custom_call.1} parent=5 // pred_region
        // Predicated region
        $region21: #{tpu_custom_call.1} parent=19 // pred_check
          %p116 = pneg %p56
        $region22: #{tpu_custom_call.1} parent=19 // pred_check_branch
          %118 = sbr.rel (%p116) target = $region24
        $region23: #{tpu_custom_call.1} parent=19 // pred_region
          #allocation9 [shape = 'u32[6]{0}', space=smem, size = 0x18, scoped, tag = 'DMA stride descriptor']
          %s119 = sand.u32 %s46, 1
          %s120 = scalar_lea.sflag [#allocation3], %s119
          %s121 = sand.u32 %s46, 1
          %s122 = smul.addr %s121, 32
          %s123 = scalar_lea.vmem [#allocation6], %s122
          %s124 = smul.u32 2, %s15
          %s126 = ssub.s32 512, 512
          %127 = vsyncadd %s120, %s126
          %s128 = smul.addr %s124, 128
          %s129 = scalar_lea.hbm %s1, %s128
          %s131 = sshll.u32 1, 14
          %s132 = sxor.u32 4294967295, %s131
          %s134 = sld [smem:[#allocation0]]
          %s135 = sadd.s32 2, %s134
          %s137 = sshll.u32 7, 26
          %s138 = sxor.u32 4294967295, %s137
          %s139 = sand.u32 0, %s138
          %s140 = sshll.u32 %s135, 26
          %s141 = sor.u32 %s139, %s140
          %s142 = sshll.u32 %s123, 4
          %s143 = int_to_ptr.vmem [resolvable:$true] %s142
          %149 = sst [smem:[#allocation9]] 512
          %s150 = scalar_lea.smem [#allocation9], 1
          %151 = sst [smem:[%s150]] 256
          %s152 = scalar_lea.smem [#allocation9], 2
          %153 = sst [smem:[%s152]] 2
          %s154 = scalar_lea.smem [#allocation9], 3
          %155 = sst [smem:[%s154]] 128
          %s156 = scalar_lea.smem [#allocation9], 4
          %157 = sst [smem:[%s156]] 128
          %s158 = scalar_lea.smem [#allocation9], 5
          %159 = sst [smem:[%s158]] 8
          %161 = dma.general %s129, 512, %s143, %s120, [#allocation8], [#allocation9], %s141, 0
        $region24: #{tpu_custom_call.1} parent=19 // pred_fallthru
          _
      $region20: #{tpu_custom_call.1} parent=5 // pred_fallthru
        _
      %p162 = scmp.le.s32.totalorder 1, %s15
      %p163 = scmp.lt.s32.totalorder %s15, 3
      %p164 = pnand %p162, %p163
      %p165 = pneg %p164
      // Predicated region
      $region25: #{tpu_custom_call.1} parent=5 // pred_check
        _
      $region26: #{tpu_custom_call.1} parent=5 // pred_check_branch
        %167 = sbr.rel (%p164) target = $region28
      $region27: #{tpu_custom_call.1} parent=5 // pred_region
        %s168 = ssub.s32 %s15, 1
        // Predicated region
        $region29: #{tpu_custom_call.1} parent=27 // pred_check
          %p169 = pneg %p36
        $region30: #{tpu_custom_call.1} parent=27 // pred_check_branch
          %171 = sbr.rel (%p169) target = $region32
        $region31: #{tpu_custom_call.1} parent=27 // pred_region
          %172 = dma.done [#allocation5], 64
        $region32: #{tpu_custom_call.1} parent=27 // pred_fallthru
          _
        %s173 = sand.u32 %s49, 1
        %s174 = scalar_lea.sflag [#allocation3], %s173
        %s175 = sand.u32 %s49, 1
        %s176 = smul.addr %s175, 32
        %s177 = scalar_lea.vmem [#allocation6], %s176
        // Predicated region
        $region33: #{tpu_custom_call.1} parent=27 // pred_check
          %p178 = pneg %p62
        $region34: #{tpu_custom_call.1} parent=27 // pred_check_branch
          %180 = sbr.rel (%p178) target = $region36
        $region35: #{tpu_custom_call.1} parent=27 // pred_region
          %181 = dma.done %s174, 512
        $region36: #{tpu_custom_call.1} parent=27 // pred_fallthru
          _
        %182 = sfence
        %p183 = pneg %p36
        %p184 = pneg %p33
        %s185 = sand.u32 %s49, 1
        %s186 = scalar_lea.sflag [#allocation3], %s185
        %s187 = sand.u32 %s49, 1
        %s188 = smul.addr %s187, 32
        %s189 = scalar_lea.vmem [#allocation6], %s188
        %p190 = pneg %p62
        %p191 = pneg %p59
        %p192 = pneg %p88
        %p193 = pneg %p85
        %s194 = sand.u32 %s75, 1
        %s195 = scalar_lea.sflag [#allocation4], %s194
        %s196 = sand.u32 %s75, 1
        %s197 = smul.addr %s196, 16
        %s198 = scalar_lea.vmem [#allocation7], %s197
        %s199 = smul.u32 2, %s20
        %s200 = smul.u32 2, %s20
        %v201 = vld [vmem:[%s177] sm:$0xff]
        %s202 = sadd.s32 0, 16
        %s203 = scalar_lea.vmem %s177, %s202 [#allocation6]
        %v204 = vld [vmem:[%s203] sm:$0xff]
        %s205 = sld [smem:[#allocation2]]
        %v206 = vstv %s205
        %v207 = vmul.f32 %v201, %v206
        %s208 = sld [smem:[#allocation2 + $0x10]]
        %v209 = vstv %s208
        %v210 = vmul.f32 %v204, %v209
        %v211 = vadd.f32 %v207, %v210
        %s212 = sld [smem:[#allocation2 + $0x20]]
        %v213 = vstv %s212
        %v214 = vadd.f32 %v211, %v213
        %v215 = vtanh.pop %v214
        %s216 = sld [smem:[#allocation2 + $0x1]]
        %v217 = vstv %s216
        %v218 = vmul.f32 %v201, %v217
        %s219 = sld [smem:[#allocation2 + $0x11]]
        %v220 = vstv %s219
        %v221 = vmul.f32 %v204, %v220
        %v222 = vadd.f32 %v218, %v221
        %s223 = sld [smem:[#allocation2 + $0x21]]
        %v224 = vstv %s223
        %v225 = vadd.f32 %v222, %v224
        %v226 = vtanh.pop %v225
        %s227 = sld [smem:[#allocation2 + $0x2]]
        %v228 = vstv %s227
        %v229 = vmul.f32 %v201, %v228
        %s230 = sld [smem:[#allocation2 + $0x12]]
        %v231 = vstv %s230
        %v232 = vmul.f32 %v204, %v231
        %v233 = vadd.f32 %v229, %v232
        %s234 = sld [smem:[#allocation2 + $0x22]]
        %v235 = vstv %s234
        %v236 = vadd.f32 %v233, %v235
        %v237 = vtanh.pop %v236
        %s238 = sld [smem:[#allocation2 + $0x3]]
        %v239 = vstv %s238
        %v240 = vmul.f32 %v201, %v239
        %s241 = sld [smem:[#allocation2 + $0x13]]
        %v242 = vstv %s241
        %v243 = vmul.f32 %v204, %v242
        %v244 = vadd.f32 %v240, %v243
        %s245 = sld [smem:[#allocation2 + $0x23]]
        %v246 = vstv %s245
        %v247 = vadd.f32 %v244, %v246
        %v248 = vtanh.pop %v247
        %s249 = sld [smem:[#allocation2 + $0x4]]
        %v250 = vstv %s249
        %v251 = vmul.f32 %v201, %v250
        %s252 = sld [smem:[#allocation2 + $0x14]]
        %v253 = vstv %s252
        %v254 = vmul.f32 %v204, %v253
        %v255 = vadd.f32 %v251, %v254
        %s256 = sld [smem:[#allocation2 + $0x24]]
        %v257 = vstv %s256
        %v258 = vadd.f32 %v255, %v257
        %v259 = vtanh.pop %v258
        %s260 = sld [smem:[#allocation2 + $0x5]]
        %v261 = vstv %s260
        %v262 = vmul.f32 %v201, %v261
        %s263 = sld [smem:[#allocation2 + $0x15]]
        %v264 = vstv %s263
        %v265 = vmul.f32 %v204, %v264
        %v266 = vadd.f32 %v262, %v265
        %s267 = sld [smem:[#allocation2 + $0x25]]
        %v268 = vstv %s267
        %v269 = vadd.f32 %v266, %v268
        %v270 = vtanh.pop %v269
        %s271 = sld [smem:[#allocation2 + $0x6]]
        %v272 = vstv %s271
        %v273 = vmul.f32 %v201, %v272
        %s274 = sld [smem:[#allocation2 + $0x16]]
        %v275 = vstv %s274
        %v276 = vmul.f32 %v204, %v275
        %v277 = vadd.f32 %v273, %v276
        %s278 = sld [smem:[#allocation2 + $0x26]]
        %v279 = vstv %s278
        %v280 = vadd.f32 %v277, %v279
        %v281 = vtanh.pop %v280
        %s282 = sld [smem:[#allocation2 + $0x7]]
        %v283 = vstv %s282
        %v284 = vmul.f32 %v201, %v283
        %s285 = sld [smem:[#allocation2 + $0x17]]
        %v286 = vstv %s285
        %v287 = vmul.f32 %v204, %v286
        %v288 = vadd.f32 %v284, %v287
        %s289 = sld [smem:[#allocation2 + $0x27]]
        %v290 = vstv %s289
        %v291 = vadd.f32 %v288, %v290
        %v292 = vtanh.pop %v291
        %s293 = sld [smem:[#allocation2 + $0x8]]
        %v294 = vstv %s293
        %v295 = vmul.f32 %v201, %v294
        %s296 = sld [smem:[#allocation2 + $0x18]]
        %v297 = vstv %s296
        %v298 = vmul.f32 %v204, %v297
        %v299 = vadd.f32 %v295, %v298
        %s300 = sld [smem:[#allocation2 + $0x28]]
        %v301 = vstv %s300
        %v302 = vadd.f32 %v299, %v301
        %v303 = vtanh.pop %v302
        %s304 = sld [smem:[#allocation2 + $0x9]]
        %v305 = vstv %s304
        %v306 = vmul.f32 %v201, %v305
        %s307 = sld [smem:[#allocation2 + $0x19]]
        %v308 = vstv %s307
        %v309 = vmul.f32 %v204, %v308
        %v310 = vadd.f32 %v306, %v309
        %s311 = sld [smem:[#allocation2 + $0x29]]
        %v312 = vstv %s311
        %v313 = vadd.f32 %v310, %v312
        %v314 = vtanh.pop %v313
        %s315 = sld [smem:[#allocation2 + $0xa]]
        %v316 = vstv %s315
        %v317 = vmul.f32 %v201, %v316
        %s318 = sld [smem:[#allocation2 + $0x1a]]
        %v319 = vstv %s318
        %v320 = vmul.f32 %v204, %v319
        %v321 = vadd.f32 %v317, %v320
        %s322 = sld [smem:[#allocation2 + $0x2a]]
        %v323 = vstv %s322
        %v324 = vadd.f32 %v321, %v323
        %v325 = vtanh.pop %v324
        %s326 = sld [smem:[#allocation2 + $0xb]]
        %v327 = vstv %s326
        %v328 = vmul.f32 %v201, %v327
        %s329 = sld [smem:[#allocation2 + $0x1b]]
        %v330 = vstv %s329
        %v331 = vmul.f32 %v204, %v330
        %v332 = vadd.f32 %v328, %v331
        %s333 = sld [smem:[#allocation2 + $0x2b]]
        %v334 = vstv %s333
        %v335 = vadd.f32 %v332, %v334
        %v336 = vtanh.pop %v335
        %s337 = sld [smem:[#allocation2 + $0xc]]
        %v338 = vstv %s337
        %v339 = vmul.f32 %v201, %v338
        %s340 = sld [smem:[#allocation2 + $0x1c]]
        %v341 = vstv %s340
        %v342 = vmul.f32 %v204, %v341
        %v343 = vadd.f32 %v339, %v342
        %s344 = sld [smem:[#allocation2 + $0x2c]]
        %v345 = vstv %s344
        %v346 = vadd.f32 %v343, %v345
        %v347 = vtanh.pop %v346
        %s348 = sld [smem:[#allocation2 + $0xd]]
        %v349 = vstv %s348
        %v350 = vmul.f32 %v201, %v349
        %s351 = sld [smem:[#allocation2 + $0x1d]]
        %v352 = vstv %s351
        %v353 = vmul.f32 %v204, %v352
        %v354 = vadd.f32 %v350, %v353
        %s355 = sld [smem:[#allocation2 + $0x2d]]
        %v356 = vstv %s355
        %v357 = vadd.f32 %v354, %v356
        %v358 = vtanh.pop %v357
        %s359 = sld [smem:[#allocation2 + $0xe]]
        %v360 = vstv %s359
        %v361 = vmul.f32 %v201, %v360
        %s362 = sld [smem:[#allocation2 + $0x1e]]
        %v363 = vstv %s362
        %v364 = vmul.f32 %v204, %v363
        %v365 = vadd.f32 %v361, %v364
        %s366 = sld [smem:[#allocation2 + $0x2e]]
        %v367 = vstv %s366
        %v368 = vadd.f32 %v365, %v367
        %v369 = vtanh.pop %v368
        %s370 = sld [smem:[#allocation2 + $0xf]]
        %v371 = vstv %s370
        %v372 = vmul.f32 %v201, %v371
        %s373 = sld [smem:[#allocation2 + $0x1f]]
        %v374 = vstv %s373
        %v375 = vmul.f32 %v204, %v374
        %v376 = vadd.f32 %v372, %v375
        %s377 = sld [smem:[#allocation2 + $0x2f]]
        %v378 = vstv %s377
        %v379 = vadd.f32 %v376, %v378
        %v380 = vtanh.pop %v379
        %s381 = sld [smem:[#allocation2 + $0x30]]
        %v382 = vstv %s381
        %v383 = vmul.f32 %v215, %v382
        %s384 = sld [smem:[#allocation2 + $0x40]]
        %v385 = vstv %s384
        %v386 = vmul.f32 %v226, %v385
        %v387 = vadd.f32 %v383, %v386
        %s388 = sld [smem:[#allocation2 + $0x50]]
        %v389 = vstv %s388
        %v390 = vmul.f32 %v237, %v389
        %v391 = vadd.f32 %v387, %v390
        %s392 = sld [smem:[#allocation2 + $0x60]]
        %v393 = vstv %s392
        %v394 = vmul.f32 %v248, %v393
        %v395 = vadd.f32 %v391, %v394
        %s396 = sld [smem:[#allocation2 + $0x70]]
        %v397 = vstv %s396
        %v398 = vmul.f32 %v259, %v397
        %v399 = vadd.f32 %v395, %v398
        %s400 = sld [smem:[#allocation2 + $0x80]]
        %v401 = vstv %s400
        %v402 = vmul.f32 %v270, %v401
        %v403 = vadd.f32 %v399, %v402
        %s404 = sld [smem:[#allocation2 + $0x90]]
        %v405 = vstv %s404
        %v406 = vmul.f32 %v281, %v405
        %v407 = vadd.f32 %v403, %v406
        %s408 = sld [smem:[#allocation2 + $0xa0]]
        %v409 = vstv %s408
        %v410 = vmul.f32 %v292, %v409
        %v411 = vadd.f32 %v407, %v410
        %s412 = sld [smem:[#allocation2 + $0xb0]]
        %v413 = vstv %s412
        %v414 = vmul.f32 %v303, %v413
        %v415 = vadd.f32 %v411, %v414
        %s416 = sld [smem:[#allocation2 + $0xc0]]
        %v417 = vstv %s416
        %v418 = vmul.f32 %v314, %v417
        %v419 = vadd.f32 %v415, %v418
        %s420 = sld [smem:[#allocation2 + $0xd0]]
        %v421 = vstv %s420
        %v422 = vmul.f32 %v325, %v421
        %v423 = vadd.f32 %v419, %v422
        %s424 = sld [smem:[#allocation2 + $0xe0]]
        %v425 = vstv %s424
        %v426 = vmul.f32 %v336, %v425
        %v427 = vadd.f32 %v423, %v426
        %s428 = sld [smem:[#allocation2 + $0xf0]]
        %v429 = vstv %s428
        %v430 = vmul.f32 %v347, %v429
        %v431 = vadd.f32 %v427, %v430
        %s432 = sld [smem:[#allocation2 + $0x100]]
        %v433 = vstv %s432
        %v434 = vmul.f32 %v358, %v433
        %v435 = vadd.f32 %v431, %v434
        %s436 = sld [smem:[#allocation2 + $0x110]]
        %v437 = vstv %s436
        %v438 = vmul.f32 %v369, %v437
        %v439 = vadd.f32 %v435, %v438
        %s440 = sld [smem:[#allocation2 + $0x120]]
        %v441 = vstv %s440
        %v442 = vmul.f32 %v380, %v441
        %v443 = vadd.f32 %v439, %v442
        %s444 = sld [smem:[#allocation2 + $0x130]]
        %v445 = vstv %s444
        %v446 = vadd.f32 %v443, %v445
        %v447 = vtanh.pop %v446
        %s448 = sld [smem:[#allocation2 + $0x31]]
        %v449 = vstv %s448
        %v450 = vmul.f32 %v215, %v449
        %s451 = sld [smem:[#allocation2 + $0x41]]
        %v452 = vstv %s451
        %v453 = vmul.f32 %v226, %v452
        %v454 = vadd.f32 %v450, %v453
        %s455 = sld [smem:[#allocation2 + $0x51]]
        %v456 = vstv %s455
        %v457 = vmul.f32 %v237, %v456
        %v458 = vadd.f32 %v454, %v457
        %s459 = sld [smem:[#allocation2 + $0x61]]
        %v460 = vstv %s459
        %v461 = vmul.f32 %v248, %v460
        %v462 = vadd.f32 %v458, %v461
        %s463 = sld [smem:[#allocation2 + $0x71]]
        %v464 = vstv %s463
        %v465 = vmul.f32 %v259, %v464
        %v466 = vadd.f32 %v462, %v465
        %s467 = sld [smem:[#allocation2 + $0x81]]
        %v468 = vstv %s467
        %v469 = vmul.f32 %v270, %v468
        %v470 = vadd.f32 %v466, %v469
        %s471 = sld [smem:[#allocation2 + $0x91]]
        %v472 = vstv %s471
        %v473 = vmul.f32 %v281, %v472
        %v474 = vadd.f32 %v470, %v473
        %s475 = sld [smem:[#allocation2 + $0xa1]]
        %v476 = vstv %s475
        %v477 = vmul.f32 %v292, %v476
        %v478 = vadd.f32 %v474, %v477
        %s479 = sld [smem:[#allocation2 + $0xb1]]
        %v480 = vstv %s479
        %v481 = vmul.f32 %v303, %v480
        %v482 = vadd.f32 %v478, %v481
        %s483 = sld [smem:[#allocation2 + $0xc1]]
        %v484 = vstv %s483
        %v485 = vmul.f32 %v314, %v484
        %v486 = vadd.f32 %v482, %v485
        %s487 = sld [smem:[#allocation2 + $0xd1]]
        %v488 = vstv %s487
        %v489 = vmul.f32 %v325, %v488
        %v490 = vadd.f32 %v486, %v489
        %s491 = sld [smem:[#allocation2 + $0xe1]]
        %v492 = vstv %s491
        %v493 = vmul.f32 %v336, %v492
        %v494 = vadd.f32 %v490, %v493
        %s495 = sld [smem:[#allocation2 + $0xf1]]
        %v496 = vstv %s495
        %v497 = vmul.f32 %v347, %v496
        %v498 = vadd.f32 %v494, %v497
        %s499 = sld [smem:[#allocation2 + $0x101]]
        %v500 = vstv %s499
        %v501 = vmul.f32 %v358, %v500
        %v502 = vadd.f32 %v498, %v501
        %s503 = sld [smem:[#allocation2 + $0x111]]
        %v504 = vstv %s503
        %v505 = vmul.f32 %v369, %v504
        %v506 = vadd.f32 %v502, %v505
        %s507 = sld [smem:[#allocation2 + $0x121]]
        %v508 = vstv %s507
        %v509 = vmul.f32 %v380, %v508
        %v510 = vadd.f32 %v506, %v509
        %s511 = sld [smem:[#allocation2 + $0x131]]
        %v512 = vstv %s511
        %v513 = vadd.f32 %v510, %v512
        %v514 = vtanh.pop %v513
        %s515 = sld [smem:[#allocation2 + $0x32]]
        %v516 = vstv %s515
        %v517 = vmul.f32 %v215, %v516
        %s518 = sld [smem:[#allocation2 + $0x42]]
        %v519 = vstv %s518
        %v520 = vmul.f32 %v226, %v519
        %v521 = vadd.f32 %v517, %v520
        %s522 = sld [smem:[#allocation2 + $0x52]]
        %v523 = vstv %s522
        %v524 = vmul.f32 %v237, %v523
        %v525 = vadd.f32 %v521, %v524
        %s526 = sld [smem:[#allocation2 + $0x62]]
        %v527 = vstv %s526
        %v528 = vmul.f32 %v248, %v527
        %v529 = vadd.f32 %v525, %v528
        %s530 = sld [smem:[#allocation2 + $0x72]]
        %v531 = vstv %s530
        %v532 = vmul.f32 %v259, %v531
        %v533 = vadd.f32 %v529, %v532
        %s534 = sld [smem:[#allocation2 + $0x82]]
        %v535 = vstv %s534
        %v536 = vmul.f32 %v270, %v535
        %v537 = vadd.f32 %v533, %v536
        %s538 = sld [smem:[#allocation2 + $0x92]]
        %v539 = vstv %s538
        %v540 = vmul.f32 %v281, %v539
        %v541 = vadd.f32 %v537, %v540
        %s542 = sld [smem:[#allocation2 + $0xa2]]
        %v543 = vstv %s542
        %v544 = vmul.f32 %v292, %v543
        %v545 = vadd.f32 %v541, %v544
        %s546 = sld [smem:[#allocation2 + $0xb2]]
        %v547 = vstv %s546
        %v548 = vmul.f32 %v303, %v547
        %v549 = vadd.f32 %v545, %v548
        %s550 = sld [smem:[#allocation2 + $0xc2]]
        %v551 = vstv %s550
        %v552 = vmul.f32 %v314, %v551
        %v553 = vadd.f32 %v549, %v552
        %s554 = sld [smem:[#allocation2 + $0xd2]]
        %v555 = vstv %s554
        %v556 = vmul.f32 %v325, %v555
        %v557 = vadd.f32 %v553, %v556
        %s558 = sld [smem:[#allocation2 + $0xe2]]
        %v559 = vstv %s558
        %v560 = vmul.f32 %v336, %v559
        %v561 = vadd.f32 %v557, %v560
        %s562 = sld [smem:[#allocation2 + $0xf2]]
        %v563 = vstv %s562
        %v564 = vmul.f32 %v347, %v563
        %v565 = vadd.f32 %v561, %v564
        %s566 = sld [smem:[#allocation2 + $0x102]]
        %v567 = vstv %s566
        %v568 = vmul.f32 %v358, %v567
        %v569 = vadd.f32 %v565, %v568
        %s570 = sld [smem:[#allocation2 + $0x112]]
        %v571 = vstv %s570
        %v572 = vmul.f32 %v369, %v571
        %v573 = vadd.f32 %v569, %v572
        %s574 = sld [smem:[#allocation2 + $0x122]]
        %v575 = vstv %s574
        %v576 = vmul.f32 %v380, %v575
        %v577 = vadd.f32 %v573, %v576
        %s578 = sld [smem:[#allocation2 + $0x132]]
        %v579 = vstv %s578
        %v580 = vadd.f32 %v577, %v579
        %v581 = vtanh.pop %v580
        %s582 = sld [smem:[#allocation2 + $0x33]]
        %v583 = vstv %s582
        %v584 = vmul.f32 %v215, %v583
        %s585 = sld [smem:[#allocation2 + $0x43]]
        %v586 = vstv %s585
        %v587 = vmul.f32 %v226, %v586
        %v588 = vadd.f32 %v584, %v587
        %s589 = sld [smem:[#allocation2 + $0x53]]
        %v590 = vstv %s589
        %v591 = vmul.f32 %v237, %v590
        %v592 = vadd.f32 %v588, %v591
        %s593 = sld [smem:[#allocation2 + $0x63]]
        %v594 = vstv %s593
        %v595 = vmul.f32 %v248, %v594
        %v596 = vadd.f32 %v592, %v595
        %s597 = sld [smem:[#allocation2 + $0x73]]
        %v598 = vstv %s597
        %v599 = vmul.f32 %v259, %v598
        %v600 = vadd.f32 %v596, %v599
        %s601 = sld [smem:[#allocation2 + $0x83]]
        %v602 = vstv %s601
        %v603 = vmul.f32 %v270, %v602
        %v604 = vadd.f32 %v600, %v603
        %s605 = sld [smem:[#allocation2 + $0x93]]
        %v606 = vstv %s605
        %v607 = vmul.f32 %v281, %v606
        %v608 = vadd.f32 %v604, %v607
        %s609 = sld [smem:[#allocation2 + $0xa3]]
        %v610 = vstv %s609
        %v611 = vmul.f32 %v292, %v610
        %v612 = vadd.f32 %v608, %v611
        %s613 = sld [smem:[#allocation2 + $0xb3]]
        %v614 = vstv %s613
        %v615 = vmul.f32 %v303, %v614
        %v616 = vadd.f32 %v612, %v615
        %s617 = sld [smem:[#allocation2 + $0xc3]]
        %v618 = vstv %s617
        %v619 = vmul.f32 %v314, %v618
        %v620 = vadd.f32 %v616, %v619
        %s621 = sld [smem:[#allocation2 + $0xd3]]
        %v622 = vstv %s621
        %v623 = vmul.f32 %v325, %v622
        %v624 = vadd.f32 %v620, %v623
        %s625 = sld [smem:[#allocation2 + $0xe3]]
        %v626 = vstv %s625
        %v627 = vmul.f32 %v336, %v626
        %v628 = vadd.f32 %v624, %v627
        %s629 = sld [smem:[#allocation2 + $0xf3]]
        %v630 = vstv %s629
        %v631 = vmul.f32 %v347, %v630
        %v632 = vadd.f32 %v628, %v631
        %s633 = sld [smem:[#allocation2 + $0x103]]
        %v634 = vstv %s633
        %v635 = vmul.f32 %v358, %v634
        %v636 = vadd.f32 %v632, %v635
        %s637 = sld [smem:[#allocation2 + $0x113]]
        %v638 = vstv %s637
        %v639 = vmul.f32 %v369, %v638
        %v640 = vadd.f32 %v636, %v639
        %s641 = sld [smem:[#allocation2 + $0x123]]
        %v642 = vstv %s641
        %v643 = vmul.f32 %v380, %v642
        %v644 = vadd.f32 %v640, %v643
        %s645 = sld [smem:[#allocation2 + $0x133]]
        %v646 = vstv %s645
        %v647 = vadd.f32 %v644, %v646
        %v648 = vtanh.pop %v647
        %s649 = sld [smem:[#allocation2 + $0x34]]
        %v650 = vstv %s649
        %v651 = vmul.f32 %v215, %v650
        %s652 = sld [smem:[#allocation2 + $0x44]]
        %v653 = vstv %s652
        %v654 = vmul.f32 %v226, %v653
        %v655 = vadd.f32 %v651, %v654
        %s656 = sld [smem:[#allocation2 + $0x54]]
        %v657 = vstv %s656
        %v658 = vmul.f32 %v237, %v657
        %v659 = vadd.f32 %v655, %v658
        %s660 = sld [smem:[#allocation2 + $0x64]]
        %v661 = vstv %s660
        %v662 = vmul.f32 %v248, %v661
        %v663 = vadd.f32 %v659, %v662
        %s664 = sld [smem:[#allocation2 + $0x74]]
        %v665 = vstv %s664
        %v666 = vmul.f32 %v259, %v665
        %v667 = vadd.f32 %v663, %v666
        %s668 = sld [smem:[#allocation2 + $0x84]]
        %v669 = vstv %s668
        %v670 = vmul.f32 %v270, %v669
        %v671 = vadd.f32 %v667, %v670
        %s672 = sld [smem:[#allocation2 + $0x94]]
        %v673 = vstv %s672
        %v674 = vmul.f32 %v281, %v673
        %v675 = vadd.f32 %v671, %v674
        %s676 = sld [smem:[#allocation2 + $0xa4]]
        %v677 = vstv %s676
        %v678 = vmul.f32 %v292, %v677
        %v679 = vadd.f32 %v675, %v678
        %s680 = sld [smem:[#allocation2 + $0xb4]]
        %v681 = vstv %s680
        %v682 = vmul.f32 %v303, %v681
        %v683 = vadd.f32 %v679, %v682
        %s684 = sld [smem:[#allocation2 + $0xc4]]
        %v685 = vstv %s684
        %v686 = vmul.f32 %v314, %v685
        %v687 = vadd.f32 %v683, %v686
        %s688 = sld [smem:[#allocation2 + $0xd4]]
        %v689 = vstv %s688
        %v690 = vmul.f32 %v325, %v689
        %v691 = vadd.f32 %v687, %v690
        %s692 = sld [smem:[#allocation2 + $0xe4]]
        %v693 = vstv %s692
        %v694 = vmul.f32 %v336, %v693
        %v695 = vadd.f32 %v691, %v694
        %s696 = sld [smem:[#allocation2 + $0xf4]]
        %v697 = vstv %s696
        %v698 = vmul.f32 %v347, %v697
        %v699 = vadd.f32 %v695, %v698
        %s700 = sld [smem:[#allocation2 + $0x104]]
        %v701 = vstv %s700
        %v702 = vmul.f32 %v358, %v701
        %v703 = vadd.f32 %v699, %v702
        %s704 = sld [smem:[#allocation2 + $0x114]]
        %v705 = vstv %s704
        %v706 = vmul.f32 %v369, %v705
        %v707 = vadd.f32 %v703, %v706
        %s708 = sld [smem:[#allocation2 + $0x124]]
        %v709 = vstv %s708
        %v710 = vmul.f32 %v380, %v709
        %v711 = vadd.f32 %v707, %v710
        %s712 = sld [smem:[#allocation2 + $0x134]]
        %v713 = vstv %s712
        %v714 = vadd.f32 %v711, %v713
        %v715 = vtanh.pop %v714
        %s716 = sld [smem:[#allocation2 + $0x35]]
        %v717 = vstv %s716
        %v718 = vmul.f32 %v215, %v717
        %s719 = sld [smem:[#allocation2 + $0x45]]
        %v720 = vstv %s719
        %v721 = vmul.f32 %v226, %v720
        %v722 = vadd.f32 %v718, %v721
        %s723 = sld [smem:[#allocation2 + $0x55]]
        %v724 = vstv %s723
        %v725 = vmul.f32 %v237, %v724
        %v726 = vadd.f32 %v722, %v725
        %s727 = sld [smem:[#allocation2 + $0x65]]
        %v728 = vstv %s727
        %v729 = vmul.f32 %v248, %v728
        %v730 = vadd.f32 %v726, %v729
        %s731 = sld [smem:[#allocation2 + $0x75]]
        %v732 = vstv %s731
        %v733 = vmul.f32 %v259, %v732
        %v734 = vadd.f32 %v730, %v733
        %s735 = sld [smem:[#allocation2 + $0x85]]
        %v736 = vstv %s735
        %v737 = vmul.f32 %v270, %v736
        %v738 = vadd.f32 %v734, %v737
        %s739 = sld [smem:[#allocation2 + $0x95]]
        %v740 = vstv %s739
        %v741 = vmul.f32 %v281, %v740
        %v742 = vadd.f32 %v738, %v741
        %s743 = sld [smem:[#allocation2 + $0xa5]]
        %v744 = vstv %s743
        %v745 = vmul.f32 %v292, %v744
        %v746 = vadd.f32 %v742, %v745
        %s747 = sld [smem:[#allocation2 + $0xb5]]
        %v748 = vstv %s747
        %v749 = vmul.f32 %v303, %v748
        %v750 = vadd.f32 %v746, %v749
        %s751 = sld [smem:[#allocation2 + $0xc5]]
        %v752 = vstv %s751
        %v753 = vmul.f32 %v314, %v752
        %v754 = vadd.f32 %v750, %v753
        %s755 = sld [smem:[#allocation2 + $0xd5]]
        %v756 = vstv %s755
        %v757 = vmul.f32 %v325, %v756
        %v758 = vadd.f32 %v754, %v757
        %s759 = sld [smem:[#allocation2 + $0xe5]]
        %v760 = vstv %s759
        %v761 = vmul.f32 %v336, %v760
        %v762 = vadd.f32 %v758, %v761
        %s763 = sld [smem:[#allocation2 + $0xf5]]
        %v764 = vstv %s763
        %v765 = vmul.f32 %v347, %v764
        %v766 = vadd.f32 %v762, %v765
        %s767 = sld [smem:[#allocation2 + $0x105]]
        %v768 = vstv %s767
        %v769 = vmul.f32 %v358, %v768
        %v770 = vadd.f32 %v766, %v769
        %s771 = sld [smem:[#allocation2 + $0x115]]
        %v772 = vstv %s771
        %v773 = vmul.f32 %v369, %v772
        %v774 = vadd.f32 %v770, %v773
        %s775 = sld [smem:[#allocation2 + $0x125]]
        %v776 = vstv %s775
        %v777 = vmul.f32 %v380, %v776
        %v778 = vadd.f32 %v774, %v777
        %s779 = sld [smem:[#allocation2 + $0x135]]
        %v780 = vstv %s779
        %v781 = vadd.f32 %v778, %v780
        %v782 = vtanh.pop %v781
        %s783 = sld [smem:[#allocation2 + $0x36]]
        %v784 = vstv %s783
        %v785 = vmul.f32 %v215, %v784
        %s786 = sld [smem:[#allocation2 + $0x46]]
        %v787 = vstv %s786
        %v788 = vmul.f32 %v226, %v787
        %v789 = vadd.f32 %v785, %v788
        %s790 = sld [smem:[#allocation2 + $0x56]]
        %v791 = vstv %s790
        %v792 = vmul.f32 %v237, %v791
        %v793 = vadd.f32 %v789, %v792
        %s794 = sld [smem:[#allocation2 + $0x66]]
        %v795 = vstv %s794
        %v796 = vmul.f32 %v248, %v795
        %v797 = vadd.f32 %v793, %v796
        %s798 = sld [smem:[#allocation2 + $0x76]]
        %v799 = vstv %s798
        %v800 = vmul.f32 %v259, %v799
        %v801 = vadd.f32 %v797, %v800
        %s802 = sld [smem:[#allocation2 + $0x86]]
        %v803 = vstv %s802
        %v804 = vmul.f32 %v270, %v803
        %v805 = vadd.f32 %v801, %v804
        %s806 = sld [smem:[#allocation2 + $0x96]]
        %v807 = vstv %s806
        %v808 = vmul.f32 %v281, %v807
        %v809 = vadd.f32 %v805, %v808
        %s810 = sld [smem:[#allocation2 + $0xa6]]
        %v811 = vstv %s810
        %v812 = vmul.f32 %v292, %v811
        %v813 = vadd.f32 %v809, %v812
        %s814 = sld [smem:[#allocation2 + $0xb6]]
        %v815 = vstv %s814
        %v816 = vmul.f32 %v303, %v815
        %v817 = vadd.f32 %v813, %v816
        %s818 = sld [smem:[#allocation2 + $0xc6]]
        %v819 = vstv %s818
        %v820 = vmul.f32 %v314, %v819
        %v821 = vadd.f32 %v817, %v820
        %s822 = sld [smem:[#allocation2 + $0xd6]]
        %v823 = vstv %s822
        %v824 = vmul.f32 %v325, %v823
        %v825 = vadd.f32 %v821, %v824
        %s826 = sld [smem:[#allocation2 + $0xe6]]
        %v827 = vstv %s826
        %v828 = vmul.f32 %v336, %v827
        %v829 = vadd.f32 %v825, %v828
        %s830 = sld [smem:[#allocation2 + $0xf6]]
        %v831 = vstv %s830
        %v832 = vmul.f32 %v347, %v831
        %v833 = vadd.f32 %v829, %v832
        %s834 = sld [smem:[#allocation2 + $0x106]]
        %v835 = vstv %s834
        %v836 = vmul.f32 %v358, %v835
        %v837 = vadd.f32 %v833, %v836
        %s838 = sld [smem:[#allocation2 + $0x116]]
        %v839 = vstv %s838
        %v840 = vmul.f32 %v369, %v839
        %v841 = vadd.f32 %v837, %v840
        %s842 = sld [smem:[#allocation2 + $0x126]]
        %v843 = vstv %s842
        %v844 = vmul.f32 %v380, %v843
        %v845 = vadd.f32 %v841, %v844
        %s846 = sld [smem:[#allocation2 + $0x136]]
        %v847 = vstv %s846
        %v848 = vadd.f32 %v845, %v847
        %v849 = vtanh.pop %v848
        %s850 = sld [smem:[#allocation2 + $0x37]]
        %v851 = vstv %s850
        %v852 = vmul.f32 %v215, %v851
        %s853 = sld [smem:[#allocation2 + $0x47]]
        %v854 = vstv %s853
        %v855 = vmul.f32 %v226, %v854
        %v856 = vadd.f32 %v852, %v855
        %s857 = sld [smem:[#allocation2 + $0x57]]
        %v858 = vstv %s857
        %v859 = vmul.f32 %v237, %v858
        %v860 = vadd.f32 %v856, %v859
        %s861 = sld [smem:[#allocation2 + $0x67]]
        %v862 = vstv %s861
        %v863 = vmul.f32 %v248, %v862
        %v864 = vadd.f32 %v860, %v863
        %s865 = sld [smem:[#allocation2 + $0x77]]
        %v866 = vstv %s865
        %v867 = vmul.f32 %v259, %v866
        %v868 = vadd.f32 %v864, %v867
        %s869 = sld [smem:[#allocation2 + $0x87]]
        %v870 = vstv %s869
        %v871 = vmul.f32 %v270, %v870
        %v872 = vadd.f32 %v868, %v871
        %s873 = sld [smem:[#allocation2 + $0x97]]
        %v874 = vstv %s873
        %v875 = vmul.f32 %v281, %v874
        %v876 = vadd.f32 %v872, %v875
        %s877 = sld [smem:[#allocation2 + $0xa7]]
        %v878 = vstv %s877
        %v879 = vmul.f32 %v292, %v878
        %v880 = vadd.f32 %v876, %v879
        %s881 = sld [smem:[#allocation2 + $0xb7]]
        %v882 = vstv %s881
        %v883 = vmul.f32 %v303, %v882
        %v884 = vadd.f32 %v880, %v883
        %s885 = sld [smem:[#allocation2 + $0xc7]]
        %v886 = vstv %s885
        %v887 = vmul.f32 %v314, %v886
        %v888 = vadd.f32 %v884, %v887
        %s889 = sld [smem:[#allocation2 + $0xd7]]
        %v890 = vstv %s889
        %v891 = vmul.f32 %v325, %v890
        %v892 = vadd.f32 %v888, %v891
        %s893 = sld [smem:[#allocation2 + $0xe7]]
        %v894 = vstv %s893
        %v895 = vmul.f32 %v336, %v894
        %v896 = vadd.f32 %v892, %v895
        %s897 = sld [smem:[#allocation2 + $0xf7]]
        %v898 = vstv %s897
        %v899 = vmul.f32 %v347, %v898
        %v900 = vadd.f32 %v896, %v899
        %s901 = sld [smem:[#allocation2 + $0x107]]
        %v902 = vstv %s901
        %v903 = vmul.f32 %v358, %v902
        %v904 = vadd.f32 %v900, %v903
        %s905 = sld [smem:[#allocation2 + $0x117]]
        %v906 = vstv %s905
        %v907 = vmul.f32 %v369, %v906
        %v908 = vadd.f32 %v904, %v907
        %s909 = sld [smem:[#allocation2 + $0x127]]
        %v910 = vstv %s909
        %v911 = vmul.f32 %v380, %v910
        %v912 = vadd.f32 %v908, %v911
        %s913 = sld [smem:[#allocation2 + $0x137]]
        %v914 = vstv %s913
        %v915 = vadd.f32 %v912, %v914
        %v916 = vtanh.pop %v915
        %s917 = sld [smem:[#allocation2 + $0x38]]
        %v918 = vstv %s917
        %v919 = vmul.f32 %v215, %v918
        %s920 = sld [smem:[#allocation2 + $0x48]]
        %v921 = vstv %s920
        %v922 = vmul.f32 %v226, %v921
        %v923 = vadd.f32 %v919, %v922
        %s924 = sld [smem:[#allocation2 + $0x58]]
        %v925 = vstv %s924
        %v926 = vmul.f32 %v237, %v925
        %v927 = vadd.f32 %v923, %v926
        %s928 = sld [smem:[#allocation2 + $0x68]]
        %v929 = vstv %s928
        %v930 = vmul.f32 %v248, %v929
        %v931 = vadd.f32 %v927, %v930
        %s932 = sld [smem:[#allocation2 + $0x78]]
        %v933 = vstv %s932
        %v934 = vmul.f32 %v259, %v933
        %v935 = vadd.f32 %v931, %v934
        %s936 = sld [smem:[#allocation2 + $0x88]]
        %v937 = vstv %s936
        %v938 = vmul.f32 %v270, %v937
        %v939 = vadd.f32 %v935, %v938
        %s940 = sld [smem:[#allocation2 + $0x98]]
        %v941 = vstv %s940
        %v942 = vmul.f32 %v281, %v941
        %v943 = vadd.f32 %v939, %v942
        %s944 = sld [smem:[#allocation2 + $0xa8]]
        %v945 = vstv %s944
        %v946 = vmul.f32 %v292, %v945
        %v947 = vadd.f32 %v943, %v946
        %s948 = sld [smem:[#allocation2 + $0xb8]]
        %v949 = vstv %s948
        %v950 = vmul.f32 %v303, %v949
        %v951 = vadd.f32 %v947, %v950
        %s952 = sld [smem:[#allocation2 + $0xc8]]
        %v953 = vstv %s952
        %v954 = vmul.f32 %v314, %v953
        %v955 = vadd.f32 %v951, %v954
        %s956 = sld [smem:[#allocation2 + $0xd8]]
        %v957 = vstv %s956
        %v958 = vmul.f32 %v325, %v957
        %v959 = vadd.f32 %v955, %v958
        %s960 = sld [smem:[#allocation2 + $0xe8]]
        %v961 = vstv %s960
        %v962 = vmul.f32 %v336, %v961
        %v963 = vadd.f32 %v959, %v962
        %s964 = sld [smem:[#allocation2 + $0xf8]]
        %v965 = vstv %s964
        %v966 = vmul.f32 %v347, %v965
        %v967 = vadd.f32 %v963, %v966
        %s968 = sld [smem:[#allocation2 + $0x108]]
        %v969 = vstv %s968
        %v970 = vmul.f32 %v358, %v969
        %v971 = vadd.f32 %v967, %v970
        %s972 = sld [smem:[#allocation2 + $0x118]]
        %v973 = vstv %s972
        %v974 = vmul.f32 %v369, %v973
        %v975 = vadd.f32 %v971, %v974
        %s976 = sld [smem:[#allocation2 + $0x128]]
        %v977 = vstv %s976
        %v978 = vmul.f32 %v380, %v977
        %v979 = vadd.f32 %v975, %v978
        %s980 = sld [smem:[#allocation2 + $0x138]]
        %v981 = vstv %s980
        %v982 = vadd.f32 %v979, %v981
        %v983 = vtanh.pop %v982
        %s984 = sld [smem:[#allocation2 + $0x39]]
        %v985 = vstv %s984
        %v986 = vmul.f32 %v215, %v985
        %s987 = sld [smem:[#allocation2 + $0x49]]
        %v988 = vstv %s987
        %v989 = vmul.f32 %v226, %v988
        %v990 = vadd.f32 %v986, %v989
        %s991 = sld [smem:[#allocation2 + $0x59]]
        %v992 = vstv %s991
        %v993 = vmul.f32 %v237, %v992
        %v994 = vadd.f32 %v990, %v993
        %s995 = sld [smem:[#allocation2 + $0x69]]
        %v996 = vstv %s995
        %v997 = vmul.f32 %v248, %v996
        %v998 = vadd.f32 %v994, %v997
        %s999 = sld [smem:[#allocation2 + $0x79]]
        %v1000 = vstv %s999
        %v1001 = vmul.f32 %v259, %v1000
        %v1002 = vadd.f32 %v998, %v1001
        %s1003 = sld [smem:[#allocation2 + $0x89]]
        %v1004 = vstv %s1003
        %v1005 = vmul.f32 %v270, %v1004
        %v1006 = vadd.f32 %v1002, %v1005
        %s1007 = sld [smem:[#allocation2 + $0x99]]
        %v1008 = vstv %s1007
        %v1009 = vmul.f32 %v281, %v1008
        %v1010 = vadd.f32 %v1006, %v1009
        %s1011 = sld [smem:[#allocation2 + $0xa9]]
        %v1012 = vstv %s1011
        %v1013 = vmul.f32 %v292, %v1012
        %v1014 = vadd.f32 %v1010, %v1013
        %s1015 = sld [smem:[#allocation2 + $0xb9]]
        %v1016 = vstv %s1015
        %v1017 = vmul.f32 %v303, %v1016
        %v1018 = vadd.f32 %v1014, %v1017
        %s1019 = sld [smem:[#allocation2 + $0xc9]]
        %v1020 = vstv %s1019
        %v1021 = vmul.f32 %v314, %v1020
        %v1022 = vadd.f32 %v1018, %v1021
        %s1023 = sld [smem:[#allocation2 + $0xd9]]
        %v1024 = vstv %s1023
        %v1025 = vmul.f32 %v325, %v1024
        %v1026 = vadd.f32 %v1022, %v1025
        %s1027 = sld [smem:[#allocation2 + $0xe9]]
        %v1028 = vstv %s1027
        %v1029 = vmul.f32 %v336, %v1028
        %v1030 = vadd.f32 %v1026, %v1029
        %s1031 = sld [smem:[#allocation2 + $0xf9]]
        %v1032 = vstv %s1031
        %v1033 = vmul.f32 %v347, %v1032
        %v1034 = vadd.f32 %v1030, %v1033
        %s1035 = sld [smem:[#allocation2 + $0x109]]
        %v1036 = vstv %s1035
        %v1037 = vmul.f32 %v358, %v1036
        %v1038 = vadd.f32 %v1034, %v1037
        %s1039 = sld [smem:[#allocation2 + $0x119]]
        %v1040 = vstv %s1039
        %v1041 = vmul.f32 %v369, %v1040
        %v1042 = vadd.f32 %v1038, %v1041
        %s1043 = sld [smem:[#allocation2 + $0x129]]
        %v1044 = vstv %s1043
        %v1045 = vmul.f32 %v380, %v1044
        %v1046 = vadd.f32 %v1042, %v1045
        %s1047 = sld [smem:[#allocation2 + $0x139]]
        %v1048 = vstv %s1047
        %v1049 = vadd.f32 %v1046, %v1048
        %v1050 = vtanh.pop %v1049
        %s1051 = sld [smem:[#allocation2 + $0x3a]]
        %v1052 = vstv %s1051
        %v1053 = vmul.f32 %v215, %v1052
        %s1054 = sld [smem:[#allocation2 + $0x4a]]
        %v1055 = vstv %s1054
        %v1056 = vmul.f32 %v226, %v1055
        %v1057 = vadd.f32 %v1053, %v1056
        %s1058 = sld [smem:[#allocation2 + $0x5a]]
        %v1059 = vstv %s1058
        %v1060 = vmul.f32 %v237, %v1059
        %v1061 = vadd.f32 %v1057, %v1060
        %s1062 = sld [smem:[#allocation2 + $0x6a]]
        %v1063 = vstv %s1062
        %v1064 = vmul.f32 %v248, %v1063
        %v1065 = vadd.f32 %v1061, %v1064
        %s1066 = sld [smem:[#allocation2 + $0x7a]]
        %v1067 = vstv %s1066
        %v1068 = vmul.f32 %v259, %v1067
        %v1069 = vadd.f32 %v1065, %v1068
        %s1070 = sld [smem:[#allocation2 + $0x8a]]
        %v1071 = vstv %s1070
        %v1072 = vmul.f32 %v270, %v1071
        %v1073 = vadd.f32 %v1069, %v1072
        %s1074 = sld [smem:[#allocation2 + $0x9a]]
        %v1075 = vstv %s1074
        %v1076 = vmul.f32 %v281, %v1075
        %v1077 = vadd.f32 %v1073, %v1076
        %s1078 = sld [smem:[#allocation2 + $0xaa]]
        %v1079 = vstv %s1078
        %v1080 = vmul.f32 %v292, %v1079
        %v1081 = vadd.f32 %v1077, %v1080
        %s1082 = sld [smem:[#allocation2 + $0xba]]
        %v1083 = vstv %s1082
        %v1084 = vmul.f32 %v303, %v1083
        %v1085 = vadd.f32 %v1081, %v1084
        %s1086 = sld [smem:[#allocation2 + $0xca]]
        %v1087 = vstv %s1086
        %v1088 = vmul.f32 %v314, %v1087
        %v1089 = vadd.f32 %v1085, %v1088
        %s1090 = sld [smem:[#allocation2 + $0xda]]
        %v1091 = vstv %s1090
        %v1092 = vmul.f32 %v325, %v1091
        %v1093 = vadd.f32 %v1089, %v1092
        %s1094 = sld [smem:[#allocation2 + $0xea]]
        %v1095 = vstv %s1094
        %v1096 = vmul.f32 %v336, %v1095
        %v1097 = vadd.f32 %v1093, %v1096
        %s1098 = sld [smem:[#allocation2 + $0xfa]]
        %v1099 = vstv %s1098
        %v1100 = vmul.f32 %v347, %v1099
        %v1101 = vadd.f32 %v1097, %v1100
        %s1102 = sld [smem:[#allocation2 + $0x10a]]
        %v1103 = vstv %s1102
        %v1104 = vmul.f32 %v358, %v1103
        %v1105 = vadd.f32 %v1101, %v1104
        %s1106 = sld [smem:[#allocation2 + $0x11a]]
        %v1107 = vstv %s1106
        %v1108 = vmul.f32 %v369, %v1107
        %v1109 = vadd.f32 %v1105, %v1108
        %s1110 = sld [smem:[#allocation2 + $0x12a]]
        %v1111 = vstv %s1110
        %v1112 = vmul.f32 %v380, %v1111
        %v1113 = vadd.f32 %v1109, %v1112
        %s1114 = sld [smem:[#allocation2 + $0x13a]]
        %v1115 = vstv %s1114
        %v1116 = vadd.f32 %v1113, %v1115
        %v1117 = vtanh.pop %v1116
        %s1118 = sld [smem:[#allocation2 + $0x3b]]
        %v1119 = vstv %s1118
        %v1120 = vmul.f32 %v215, %v1119
        %s1121 = sld [smem:[#allocation2 + $0x4b]]
        %v1122 = vstv %s1121
        %v1123 = vmul.f32 %v226, %v1122
        %v1124 = vadd.f32 %v1120, %v1123
        %s1125 = sld [smem:[#allocation2 + $0x5b]]
        %v1126 = vstv %s1125
        %v1127 = vmul.f32 %v237, %v1126
        %v1128 = vadd.f32 %v1124, %v1127
        %s1129 = sld [smem:[#allocation2 + $0x6b]]
        %v1130 = vstv %s1129
        %v1131 = vmul.f32 %v248, %v1130
        %v1132 = vadd.f32 %v1128, %v1131
        %s1133 = sld [smem:[#allocation2 + $0x7b]]
        %v1134 = vstv %s1133
        %v1135 = vmul.f32 %v259, %v1134
        %v1136 = vadd.f32 %v1132, %v1135
        %s1137 = sld [smem:[#allocation2 + $0x8b]]
        %v1138 = vstv %s1137
        %v1139 = vmul.f32 %v270, %v1138
        %v1140 = vadd.f32 %v1136, %v1139
        %s1141 = sld [smem:[#allocation2 + $0x9b]]
        %v1142 = vstv %s1141
        %v1143 = vmul.f32 %v281, %v1142
        %v1144 = vadd.f32 %v1140, %v1143
        %s1145 = sld [smem:[#allocation2 + $0xab]]
        %v1146 = vstv %s1145
        %v1147 = vmul.f32 %v292, %v1146
        %v1148 = vadd.f32 %v1144, %v1147
        %s1149 = sld [smem:[#allocation2 + $0xbb]]
        %v1150 = vstv %s1149
        %v1151 = vmul.f32 %v303, %v1150
        %v1152 = vadd.f32 %v1148, %v1151
        %s1153 = sld [smem:[#allocation2 + $0xcb]]
        %v1154 = vstv %s1153
        %v1155 = vmul.f32 %v314, %v1154
        %v1156 = vadd.f32 %v1152, %v1155
        %s1157 = sld [smem:[#allocation2 + $0xdb]]
        %v1158 = vstv %s1157
        %v1159 = vmul.f32 %v325, %v1158
        %v1160 = vadd.f32 %v1156, %v1159
        %s1161 = sld [smem:[#allocation2 + $0xeb]]
        %v1162 = vstv %s1161
        %v1163 = vmul.f32 %v336, %v1162
        %v1164 = vadd.f32 %v1160, %v1163
        %s1165 = sld [smem:[#allocation2 + $0xfb]]
        %v1166 = vstv %s1165
        %v1167 = vmul.f32 %v347, %v1166
        %v1168 = vadd.f32 %v1164, %v1167
        %s1169 = sld [smem:[#allocation2 + $0x10b]]
        %v1170 = vstv %s1169
        %v1171 = vmul.f32 %v358, %v1170
        %v1172 = vadd.f32 %v1168, %v1171
        %s1173 = sld [smem:[#allocation2 + $0x11b]]
        %v1174 = vstv %s1173
        %v1175 = vmul.f32 %v369, %v1174
        %v1176 = vadd.f32 %v1172, %v1175
        %s1177 = sld [smem:[#allocation2 + $0x12b]]
        %v1178 = vstv %s1177
        %v1179 = vmul.f32 %v380, %v1178
        %v1180 = vadd.f32 %v1176, %v1179
        %s1181 = sld [smem:[#allocation2 + $0x13b]]
        %v1182 = vstv %s1181
        %v1183 = vadd.f32 %v1180, %v1182
        %v1184 = vtanh.pop %v1183
        %s1185 = sld [smem:[#allocation2 + $0x3c]]
        %v1186 = vstv %s1185
        %v1187 = vmul.f32 %v215, %v1186
        %s1188 = sld [smem:[#allocation2 + $0x4c]]
        %v1189 = vstv %s1188
        %v1190 = vmul.f32 %v226, %v1189
        %v1191 = vadd.f32 %v1187, %v1190
        %s1192 = sld [smem:[#allocation2 + $0x5c]]
        %v1193 = vstv %s1192
        %v1194 = vmul.f32 %v237, %v1193
        %v1195 = vadd.f32 %v1191, %v1194
        %s1196 = sld [smem:[#allocation2 + $0x6c]]
        %v1197 = vstv %s1196
        %v1198 = vmul.f32 %v248, %v1197
        %v1199 = vadd.f32 %v1195, %v1198
        %s1200 = sld [smem:[#allocation2 + $0x7c]]
        %v1201 = vstv %s1200
        %v1202 = vmul.f32 %v259, %v1201
        %v1203 = vadd.f32 %v1199, %v1202
        %s1204 = sld [smem:[#allocation2 + $0x8c]]
        %v1205 = vstv %s1204
        %v1206 = vmul.f32 %v270, %v1205
        %v1207 = vadd.f32 %v1203, %v1206
        %s1208 = sld [smem:[#allocation2 + $0x9c]]
        %v1209 = vstv %s1208
        %v1210 = vmul.f32 %v281, %v1209
        %v1211 = vadd.f32 %v1207, %v1210
        %s1212 = sld [smem:[#allocation2 + $0xac]]
        %v1213 = vstv %s1212
        %v1214 = vmul.f32 %v292, %v1213
        %v1215 = vadd.f32 %v1211, %v1214
        %s1216 = sld [smem:[#allocation2 + $0xbc]]
        %v1217 = vstv %s1216
        %v1218 = vmul.f32 %v303, %v1217
        %v1219 = vadd.f32 %v1215, %v1218
        %s1220 = sld [smem:[#allocation2 + $0xcc]]
        %v1221 = vstv %s1220
        %v1222 = vmul.f32 %v314, %v1221
        %v1223 = vadd.f32 %v1219, %v1222
        %s1224 = sld [smem:[#allocation2 + $0xdc]]
        %v1225 = vstv %s1224
        %v1226 = vmul.f32 %v325, %v1225
        %v1227 = vadd.f32 %v1223, %v1226
        %s1228 = sld [smem:[#allocation2 + $0xec]]
        %v1229 = vstv %s1228
        %v1230 = vmul.f32 %v336, %v1229
        %v1231 = vadd.f32 %v1227, %v1230
        %s1232 = sld [smem:[#allocation2 + $0xfc]]
        %v1233 = vstv %s1232
        %v1234 = vmul.f32 %v347, %v1233
        %v1235 = vadd.f32 %v1231, %v1234
        %s1236 = sld [smem:[#allocation2 + $0x10c]]
        %v1237 = vstv %s1236
        %v1238 = vmul.f32 %v358, %v1237
        %v1239 = vadd.f32 %v1235, %v1238
        %s1240 = sld [smem:[#allocation2 + $0x11c]]
        %v1241 = vstv %s1240
        %v1242 = vmul.f32 %v369, %v1241
        %v1243 = vadd.f32 %v1239, %v1242
        %s1244 = sld [smem:[#allocation2 + $0x12c]]
        %v1245 = vstv %s1244
        %v1246 = vmul.f32 %v380, %v1245
        %v1247 = vadd.f32 %v1243, %v1246
        %s1248 = sld [smem:[#allocation2 + $0x13c]]
        %v1249 = vstv %s1248
        %v1250 = vadd.f32 %v1247, %v1249
        %v1251 = vtanh.pop %v1250
        %s1252 = sld [smem:[#allocation2 + $0x3d]]
        %v1253 = vstv %s1252
        %v1254 = vmul.f32 %v215, %v1253
        %s1255 = sld [smem:[#allocation2 + $0x4d]]
        %v1256 = vstv %s1255
        %v1257 = vmul.f32 %v226, %v1256
        %v1258 = vadd.f32 %v1254, %v1257
        %s1259 = sld [smem:[#allocation2 + $0x5d]]
        %v1260 = vstv %s1259
        %v1261 = vmul.f32 %v237, %v1260
        %v1262 = vadd.f32 %v1258, %v1261
        %s1263 = sld [smem:[#allocation2 + $0x6d]]
        %v1264 = vstv %s1263
        %v1265 = vmul.f32 %v248, %v1264
        %v1266 = vadd.f32 %v1262, %v1265
        %s1267 = sld [smem:[#allocation2 + $0x7d]]
        %v1268 = vstv %s1267
        %v1269 = vmul.f32 %v259, %v1268
        %v1270 = vadd.f32 %v1266, %v1269
        %s1271 = sld [smem:[#allocation2 + $0x8d]]
        %v1272 = vstv %s1271
        %v1273 = vmul.f32 %v270, %v1272
        %v1274 = vadd.f32 %v1270, %v1273
        %s1275 = sld [smem:[#allocation2 + $0x9d]]
        %v1276 = vstv %s1275
        %v1277 = vmul.f32 %v281, %v1276
        %v1278 = vadd.f32 %v1274, %v1277
        %s1279 = sld [smem:[#allocation2 + $0xad]]
        %v1280 = vstv %s1279
        %v1281 = vmul.f32 %v292, %v1280
        %v1282 = vadd.f32 %v1278, %v1281
        %s1283 = sld [smem:[#allocation2 + $0xbd]]
        %v1284 = vstv %s1283
        %v1285 = vmul.f32 %v303, %v1284
        %v1286 = vadd.f32 %v1282, %v1285
        %s1287 = sld [smem:[#allocation2 + $0xcd]]
        %v1288 = vstv %s1287
        %v1289 = vmul.f32 %v314, %v1288
        %v1290 = vadd.f32 %v1286, %v1289
        %s1291 = sld [smem:[#allocation2 + $0xdd]]
        %v1292 = vstv %s1291
        %v1293 = vmul.f32 %v325, %v1292
        %v1294 = vadd.f32 %v1290, %v1293
        %s1295 = sld [smem:[#allocation2 + $0xed]]
        %v1296 = vstv %s1295
        %v1297 = vmul.f32 %v336, %v1296
        %v1298 = vadd.f32 %v1294, %v1297
        %s1299 = sld [smem:[#allocation2 + $0xfd]]
        %v1300 = vstv %s1299
        %v1301 = vmul.f32 %v347, %v1300
        %v1302 = vadd.f32 %v1298, %v1301
        %s1303 = sld [smem:[#allocation2 + $0x10d]]
        %v1304 = vstv %s1303
        %v1305 = vmul.f32 %v358, %v1304
        %v1306 = vadd.f32 %v1302, %v1305
        %s1307 = sld [smem:[#allocation2 + $0x11d]]
        %v1308 = vstv %s1307
        %v1309 = vmul.f32 %v369, %v1308
        %v1310 = vadd.f32 %v1306, %v1309
        %s1311 = sld [smem:[#allocation2 + $0x12d]]
        %v1312 = vstv %s1311
        %v1313 = vmul.f32 %v380, %v1312
        %v1314 = vadd.f32 %v1310, %v1313
        %s1315 = sld [smem:[#allocation2 + $0x13d]]
        %v1316 = vstv %s1315
        %v1317 = vadd.f32 %v1314, %v1316
        %v1318 = vtanh.pop %v1317
        %s1319 = sld [smem:[#allocation2 + $0x3e]]
        %v1320 = vstv %s1319
        %v1321 = vmul.f32 %v215, %v1320
        %s1322 = sld [smem:[#allocation2 + $0x4e]]
        %v1323 = vstv %s1322
        %v1324 = vmul.f32 %v226, %v1323
        %v1325 = vadd.f32 %v1321, %v1324
        %s1326 = sld [smem:[#allocation2 + $0x5e]]
        %v1327 = vstv %s1326
        %v1328 = vmul.f32 %v237, %v1327
        %v1329 = vadd.f32 %v1325, %v1328
        %s1330 = sld [smem:[#allocation2 + $0x6e]]
        %v1331 = vstv %s1330
        %v1332 = vmul.f32 %v248, %v1331
        %v1333 = vadd.f32 %v1329, %v1332
        %s1334 = sld [smem:[#allocation2 + $0x7e]]
        %v1335 = vstv %s1334
        %v1336 = vmul.f32 %v259, %v1335
        %v1337 = vadd.f32 %v1333, %v1336
        %s1338 = sld [smem:[#allocation2 + $0x8e]]
        %v1339 = vstv %s1338
        %v1340 = vmul.f32 %v270, %v1339
        %v1341 = vadd.f32 %v1337, %v1340
        %s1342 = sld [smem:[#allocation2 + $0x9e]]
        %v1343 = vstv %s1342
        %v1344 = vmul.f32 %v281, %v1343
        %v1345 = vadd.f32 %v1341, %v1344
        %s1346 = sld [smem:[#allocation2 + $0xae]]
        %v1347 = vstv %s1346
        %v1348 = vmul.f32 %v292, %v1347
        %v1349 = vadd.f32 %v1345, %v1348
        %s1350 = sld [smem:[#allocation2 + $0xbe]]
        %v1351 = vstv %s1350
        %v1352 = vmul.f32 %v303, %v1351
        %v1353 = vadd.f32 %v1349, %v1352
        %s1354 = sld [smem:[#allocation2 + $0xce]]
        %v1355 = vstv %s1354
        %v1356 = vmul.f32 %v314, %v1355
        %v1357 = vadd.f32 %v1353, %v1356
        %s1358 = sld [smem:[#allocation2 + $0xde]]
        %v1359 = vstv %s1358
        %v1360 = vmul.f32 %v325, %v1359
        %v1361 = vadd.f32 %v1357, %v1360
        %s1362 = sld [smem:[#allocation2 + $0xee]]
        %v1363 = vstv %s1362
        %v1364 = vmul.f32 %v336, %v1363
        %v1365 = vadd.f32 %v1361, %v1364
        %s1366 = sld [smem:[#allocation2 + $0xfe]]
        %v1367 = vstv %s1366
        %v1368 = vmul.f32 %v347, %v1367
        %v1369 = vadd.f32 %v1365, %v1368
        %s1370 = sld [smem:[#allocation2 + $0x10e]]
        %v1371 = vstv %s1370
        %v1372 = vmul.f32 %v358, %v1371
        %v1373 = vadd.f32 %v1369, %v1372
        %s1374 = sld [smem:[#allocation2 + $0x11e]]
        %v1375 = vstv %s1374
        %v1376 = vmul.f32 %v369, %v1375
        %v1377 = vadd.f32 %v1373, %v1376
        %s1378 = sld [smem:[#allocation2 + $0x12e]]
        %v1379 = vstv %s1378
        %v1380 = vmul.f32 %v380, %v1379
        %v1381 = vadd.f32 %v1377, %v1380
        %s1382 = sld [smem:[#allocation2 + $0x13e]]
        %v1383 = vstv %s1382
        %v1384 = vadd.f32 %v1381, %v1383
        %v1385 = vtanh.pop %v1384
        %s1386 = sld [smem:[#allocation2 + $0x3f]]
        %v1387 = vstv %s1386
        %v1388 = vmul.f32 %v215, %v1387
        %s1389 = sld [smem:[#allocation2 + $0x4f]]
        %v1390 = vstv %s1389
        %v1391 = vmul.f32 %v226, %v1390
        %v1392 = vadd.f32 %v1388, %v1391
        %s1393 = sld [smem:[#allocation2 + $0x5f]]
        %v1394 = vstv %s1393
        %v1395 = vmul.f32 %v237, %v1394
        %v1396 = vadd.f32 %v1392, %v1395
        %s1397 = sld [smem:[#allocation2 + $0x6f]]
        %v1398 = vstv %s1397
        %v1399 = vmul.f32 %v248, %v1398
        %v1400 = vadd.f32 %v1396, %v1399
        %s1401 = sld [smem:[#allocation2 + $0x7f]]
        %v1402 = vstv %s1401
        %v1403 = vmul.f32 %v259, %v1402
        %v1404 = vadd.f32 %v1400, %v1403
        %s1405 = sld [smem:[#allocation2 + $0x8f]]
        %v1406 = vstv %s1405
        %v1407 = vmul.f32 %v270, %v1406
        %v1408 = vadd.f32 %v1404, %v1407
        %s1409 = sld [smem:[#allocation2 + $0x9f]]
        %v1410 = vstv %s1409
        %v1411 = vmul.f32 %v281, %v1410
        %v1412 = vadd.f32 %v1408, %v1411
        %s1413 = sld [smem:[#allocation2 + $0xaf]]
        %v1414 = vstv %s1413
        %v1415 = vmul.f32 %v292, %v1414
        %v1416 = vadd.f32 %v1412, %v1415
        %s1417 = sld [smem:[#allocation2 + $0xbf]]
        %v1418 = vstv %s1417
        %v1419 = vmul.f32 %v303, %v1418
        %v1420 = vadd.f32 %v1416, %v1419
        %s1421 = sld [smem:[#allocation2 + $0xcf]]
        %v1422 = vstv %s1421
        %v1423 = vmul.f32 %v314, %v1422
        %v1424 = vadd.f32 %v1420, %v1423
        %s1425 = sld [smem:[#allocation2 + $0xdf]]
        %v1426 = vstv %s1425
        %v1427 = vmul.f32 %v325, %v1426
        %v1428 = vadd.f32 %v1424, %v1427
        %s1429 = sld [smem:[#allocation2 + $0xef]]
        %v1430 = vstv %s1429
        %v1431 = vmul.f32 %v336, %v1430
        %v1432 = vadd.f32 %v1428, %v1431
        %s1433 = sld [smem:[#allocation2 + $0xff]]
        %v1434 = vstv %s1433
        %v1435 = vmul.f32 %v347, %v1434
        %v1436 = vadd.f32 %v1432, %v1435
        %s1437 = sld [smem:[#allocation2 + $0x10f]]
        %v1438 = vstv %s1437
        %v1439 = vmul.f32 %v358, %v1438
        %v1440 = vadd.f32 %v1436, %v1439
        %s1441 = sld [smem:[#allocation2 + $0x11f]]
        %v1442 = vstv %s1441
        %v1443 = vmul.f32 %v369, %v1442
        %v1444 = vadd.f32 %v1440, %v1443
        %s1445 = sld [smem:[#allocation2 + $0x12f]]
        %v1446 = vstv %s1445
        %v1447 = vmul.f32 %v380, %v1446
        %v1448 = vadd.f32 %v1444, %v1447
        %s1449 = sld [smem:[#allocation2 + $0x13f]]
        %v1450 = vstv %s1449
        %v1451 = vadd.f32 %v1448, %v1450
        %v1452 = vtanh.pop %v1451
        %s1453 = sld [smem:[#allocation2 + $0x140]]
        %v1454 = vstv %s1453
        %v1455 = vmul.f32 %v447, %v1454
        %s1456 = sld [smem:[#allocation2 + $0x148]]
        %v1457 = vstv %s1456
        %v1458 = vmul.f32 %v514, %v1457
        %v1459 = vadd.f32 %v1455, %v1458
        %s1460 = sld [smem:[#allocation2 + $0x150]]
        %v1461 = vstv %s1460
        %v1462 = vmul.f32 %v581, %v1461
        %v1463 = vadd.f32 %v1459, %v1462
        %s1464 = sld [smem:[#allocation2 + $0x158]]
        %v1465 = vstv %s1464
        %v1466 = vmul.f32 %v648, %v1465
        %v1467 = vadd.f32 %v1463, %v1466
        %s1468 = sld [smem:[#allocation2 + $0x160]]
        %v1469 = vstv %s1468
        %v1470 = vmul.f32 %v715, %v1469
        %v1471 = vadd.f32 %v1467, %v1470
        %s1472 = sld [smem:[#allocation2 + $0x168]]
        %v1473 = vstv %s1472
        %v1474 = vmul.f32 %v782, %v1473
        %v1475 = vadd.f32 %v1471, %v1474
        %s1476 = sld [smem:[#allocation2 + $0x170]]
        %v1477 = vstv %s1476
        %v1478 = vmul.f32 %v849, %v1477
        %v1479 = vadd.f32 %v1475, %v1478
        %s1480 = sld [smem:[#allocation2 + $0x178]]
        %v1481 = vstv %s1480
        %v1482 = vmul.f32 %v916, %v1481
        %v1483 = vadd.f32 %v1479, %v1482
        %s1484 = sld [smem:[#allocation2 + $0x180]]
        %v1485 = vstv %s1484
        %v1486 = vmul.f32 %v983, %v1485
        %v1487 = vadd.f32 %v1483, %v1486
        %s1488 = sld [smem:[#allocation2 + $0x188]]
        %v1489 = vstv %s1488
        %v1490 = vmul.f32 %v1050, %v1489
        %v1491 = vadd.f32 %v1487, %v1490
        %s1492 = sld [smem:[#allocation2 + $0x190]]
        %v1493 = vstv %s1492
        %v1494 = vmul.f32 %v1117, %v1493
        %v1495 = vadd.f32 %v1491, %v1494
        %s1496 = sld [smem:[#allocation2 + $0x198]]
        %v1497 = vstv %s1496
        %v1498 = vmul.f32 %v1184, %v1497
        %v1499 = vadd.f32 %v1495, %v1498
        %s1500 = sld [smem:[#allocation2 + $0x1a0]]
        %v1501 = vstv %s1500
        %v1502 = vmul.f32 %v1251, %v1501
        %v1503 = vadd.f32 %v1499, %v1502
        %s1504 = sld [smem:[#allocation2 + $0x1a8]]
        %v1505 = vstv %s1504
        %v1506 = vmul.f32 %v1318, %v1505
        %v1507 = vadd.f32 %v1503, %v1506
        %s1508 = sld [smem:[#allocation2 + $0x1b0]]
        %v1509 = vstv %s1508
        %v1510 = vmul.f32 %v1385, %v1509
        %v1511 = vadd.f32 %v1507, %v1510
        %s1512 = sld [smem:[#allocation2 + $0x1b8]]
        %v1513 = vstv %s1512
        %v1514 = vmul.f32 %v1452, %v1513
        %v1515 = vadd.f32 %v1511, %v1514
        %s1516 = sld [smem:[#allocation2 + $0x1c0]]
        %v1517 = vstv %s1516
        %v1518 = vadd.f32 %v1515, %v1517
        %v1519 = vtanh.pop %v1518
        %s1520 = sld [smem:[#allocation2 + $0x141]]
        %v1521 = vstv %s1520
        %v1522 = vmul.f32 %v447, %v1521
        %s1523 = sld [smem:[#allocation2 + $0x149]]
        %v1524 = vstv %s1523
        %v1525 = vmul.f32 %v514, %v1524
        %v1526 = vadd.f32 %v1522, %v1525
        %s1527 = sld [smem:[#allocation2 + $0x151]]
        %v1528 = vstv %s1527
        %v1529 = vmul.f32 %v581, %v1528
        %v1530 = vadd.f32 %v1526, %v1529
        %s1531 = sld [smem:[#allocation2 + $0x159]]
        %v1532 = vstv %s1531
        %v1533 = vmul.f32 %v648, %v1532
        %v1534 = vadd.f32 %v1530, %v1533
        %s1535 = sld [smem:[#allocation2 + $0x161]]
        %v1536 = vstv %s1535
        %v1537 = vmul.f32 %v715, %v1536
        %v1538 = vadd.f32 %v1534, %v1537
        %s1539 = sld [smem:[#allocation2 + $0x169]]
        %v1540 = vstv %s1539
        %v1541 = vmul.f32 %v782, %v1540
        %v1542 = vadd.f32 %v1538, %v1541
        %s1543 = sld [smem:[#allocation2 + $0x171]]
        %v1544 = vstv %s1543
        %v1545 = vmul.f32 %v849, %v1544
        %v1546 = vadd.f32 %v1542, %v1545
        %s1547 = sld [smem:[#allocation2 + $0x179]]
        %v1548 = vstv %s1547
        %v1549 = vmul.f32 %v916, %v1548
        %v1550 = vadd.f32 %v1546, %v1549
        %s1551 = sld [smem:[#allocation2 + $0x181]]
        %v1552 = vstv %s1551
        %v1553 = vmul.f32 %v983, %v1552
        %v1554 = vadd.f32 %v1550, %v1553
        %s1555 = sld [smem:[#allocation2 + $0x189]]
        %v1556 = vstv %s1555
        %v1557 = vmul.f32 %v1050, %v1556
        %v1558 = vadd.f32 %v1554, %v1557
        %s1559 = sld [smem:[#allocation2 + $0x191]]
        %v1560 = vstv %s1559
        %v1561 = vmul.f32 %v1117, %v1560
        %v1562 = vadd.f32 %v1558, %v1561
        %s1563 = sld [smem:[#allocation2 + $0x199]]
        %v1564 = vstv %s1563
        %v1565 = vmul.f32 %v1184, %v1564
        %v1566 = vadd.f32 %v1562, %v1565
        %s1567 = sld [smem:[#allocation2 + $0x1a1]]
        %v1568 = vstv %s1567
        %v1569 = vmul.f32 %v1251, %v1568
        %v1570 = vadd.f32 %v1566, %v1569
        %s1571 = sld [smem:[#allocation2 + $0x1a9]]
        %v1572 = vstv %s1571
        %v1573 = vmul.f32 %v1318, %v1572
        %v1574 = vadd.f32 %v1570, %v1573
        %s1575 = sld [smem:[#allocation2 + $0x1b1]]
        %v1576 = vstv %s1575
        %v1577 = vmul.f32 %v1385, %v1576
        %v1578 = vadd.f32 %v1574, %v1577
        %s1579 = sld [smem:[#allocation2 + $0x1b9]]
        %v1580 = vstv %s1579
        %v1581 = vmul.f32 %v1452, %v1580
        %v1582 = vadd.f32 %v1578, %v1581
        %s1583 = sld [smem:[#allocation2 + $0x1c1]]
        %v1584 = vstv %s1583
        %v1585 = vadd.f32 %v1582, %v1584
        %v1586 = vtanh.pop %v1585
        %s1587 = sld [smem:[#allocation2 + $0x142]]
        %v1588 = vstv %s1587
        %v1589 = vmul.f32 %v447, %v1588
        %s1590 = sld [smem:[#allocation2 + $0x14a]]
        %v1591 = vstv %s1590
        %v1592 = vmul.f32 %v514, %v1591
        %v1593 = vadd.f32 %v1589, %v1592
        %s1594 = sld [smem:[#allocation2 + $0x152]]
        %v1595 = vstv %s1594
        %v1596 = vmul.f32 %v581, %v1595
        %v1597 = vadd.f32 %v1593, %v1596
        %s1598 = sld [smem:[#allocation2 + $0x15a]]
        %v1599 = vstv %s1598
        %v1600 = vmul.f32 %v648, %v1599
        %v1601 = vadd.f32 %v1597, %v1600
        %s1602 = sld [smem:[#allocation2 + $0x162]]
        %v1603 = vstv %s1602
        %v1604 = vmul.f32 %v715, %v1603
        %v1605 = vadd.f32 %v1601, %v1604
        %s1606 = sld [smem:[#allocation2 + $0x16a]]
        %v1607 = vstv %s1606
        %v1608 = vmul.f32 %v782, %v1607
        %v1609 = vadd.f32 %v1605, %v1608
        %s1610 = sld [smem:[#allocation2 + $0x172]]
        %v1611 = vstv %s1610
        %v1612 = vmul.f32 %v849, %v1611
        %v1613 = vadd.f32 %v1609, %v1612
        %s1614 = sld [smem:[#allocation2 + $0x17a]]
        %v1615 = vstv %s1614
        %v1616 = vmul.f32 %v916, %v1615
        %v1617 = vadd.f32 %v1613, %v1616
        %s1618 = sld [smem:[#allocation2 + $0x182]]
        %v1619 = vstv %s1618
        %v1620 = vmul.f32 %v983, %v1619
        %v1621 = vadd.f32 %v1617, %v1620
        %s1622 = sld [smem:[#allocation2 + $0x18a]]
        %v1623 = vstv %s1622
        %v1624 = vmul.f32 %v1050, %v1623
        %v1625 = vadd.f32 %v1621, %v1624
        %s1626 = sld [smem:[#allocation2 + $0x192]]
        %v1627 = vstv %s1626
        %v1628 = vmul.f32 %v1117, %v1627
        %v1629 = vadd.f32 %v1625, %v1628
        %s1630 = sld [smem:[#allocation2 + $0x19a]]
        %v1631 = vstv %s1630
        %v1632 = vmul.f32 %v1184, %v1631
        %v1633 = vadd.f32 %v1629, %v1632
        %s1634 = sld [smem:[#allocation2 + $0x1a2]]
        %v1635 = vstv %s1634
        %v1636 = vmul.f32 %v1251, %v1635
        %v1637 = vadd.f32 %v1633, %v1636
        %s1638 = sld [smem:[#allocation2 + $0x1aa]]
        %v1639 = vstv %s1638
        %v1640 = vmul.f32 %v1318, %v1639
        %v1641 = vadd.f32 %v1637, %v1640
        %s1642 = sld [smem:[#allocation2 + $0x1b2]]
        %v1643 = vstv %s1642
        %v1644 = vmul.f32 %v1385, %v1643
        %v1645 = vadd.f32 %v1641, %v1644
        %s1646 = sld [smem:[#allocation2 + $0x1ba]]
        %v1647 = vstv %s1646
        %v1648 = vmul.f32 %v1452, %v1647
        %v1649 = vadd.f32 %v1645, %v1648
        %s1650 = sld [smem:[#allocation2 + $0x1c2]]
        %v1651 = vstv %s1650
        %v1652 = vadd.f32 %v1649, %v1651
        %v1653 = vtanh.pop %v1652
        %s1654 = sld [smem:[#allocation2 + $0x143]]
        %v1655 = vstv %s1654
        %v1656 = vmul.f32 %v447, %v1655
        %s1657 = sld [smem:[#allocation2 + $0x14b]]
        %v1658 = vstv %s1657
        %v1659 = vmul.f32 %v514, %v1658
        %v1660 = vadd.f32 %v1656, %v1659
        %s1661 = sld [smem:[#allocation2 + $0x153]]
        %v1662 = vstv %s1661
        %v1663 = vmul.f32 %v581, %v1662
        %v1664 = vadd.f32 %v1660, %v1663
        %s1665 = sld [smem:[#allocation2 + $0x15b]]
        %v1666 = vstv %s1665
        %v1667 = vmul.f32 %v648, %v1666
        %v1668 = vadd.f32 %v1664, %v1667
        %s1669 = sld [smem:[#allocation2 + $0x163]]
        %v1670 = vstv %s1669
        %v1671 = vmul.f32 %v715, %v1670
        %v1672 = vadd.f32 %v1668, %v1671
        %s1673 = sld [smem:[#allocation2 + $0x16b]]
        %v1674 = vstv %s1673
        %v1675 = vmul.f32 %v782, %v1674
        %v1676 = vadd.f32 %v1672, %v1675
        %s1677 = sld [smem:[#allocation2 + $0x173]]
        %v1678 = vstv %s1677
        %v1679 = vmul.f32 %v849, %v1678
        %v1680 = vadd.f32 %v1676, %v1679
        %s1681 = sld [smem:[#allocation2 + $0x17b]]
        %v1682 = vstv %s1681
        %v1683 = vmul.f32 %v916, %v1682
        %v1684 = vadd.f32 %v1680, %v1683
        %s1685 = sld [smem:[#allocation2 + $0x183]]
        %v1686 = vstv %s1685
        %v1687 = vmul.f32 %v983, %v1686
        %v1688 = vadd.f32 %v1684, %v1687
        %s1689 = sld [smem:[#allocation2 + $0x18b]]
        %v1690 = vstv %s1689
        %v1691 = vmul.f32 %v1050, %v1690
        %v1692 = vadd.f32 %v1688, %v1691
        %s1693 = sld [smem:[#allocation2 + $0x193]]
        %v1694 = vstv %s1693
        %v1695 = vmul.f32 %v1117, %v1694
        %v1696 = vadd.f32 %v1692, %v1695
        %s1697 = sld [smem:[#allocation2 + $0x19b]]
        %v1698 = vstv %s1697
        %v1699 = vmul.f32 %v1184, %v1698
        %v1700 = vadd.f32 %v1696, %v1699
        %s1701 = sld [smem:[#allocation2 + $0x1a3]]
        %v1702 = vstv %s1701
        %v1703 = vmul.f32 %v1251, %v1702
        %v1704 = vadd.f32 %v1700, %v1703
        %s1705 = sld [smem:[#allocation2 + $0x1ab]]
        %v1706 = vstv %s1705
        %v1707 = vmul.f32 %v1318, %v1706
        %v1708 = vadd.f32 %v1704, %v1707
        %s1709 = sld [smem:[#allocation2 + $0x1b3]]
        %v1710 = vstv %s1709
        %v1711 = vmul.f32 %v1385, %v1710
        %v1712 = vadd.f32 %v1708, %v1711
        %s1713 = sld [smem:[#allocation2 + $0x1bb]]
        %v1714 = vstv %s1713
        %v1715 = vmul.f32 %v1452, %v1714
        %v1716 = vadd.f32 %v1712, %v1715
        %s1717 = sld [smem:[#allocation2 + $0x1c3]]
        %v1718 = vstv %s1717
        %v1719 = vadd.f32 %v1716, %v1718
        %v1720 = vtanh.pop %v1719
        %s1721 = sld [smem:[#allocation2 + $0x144]]
        %v1722 = vstv %s1721
        %v1723 = vmul.f32 %v447, %v1722
        %s1724 = sld [smem:[#allocation2 + $0x14c]]
        %v1725 = vstv %s1724
        %v1726 = vmul.f32 %v514, %v1725
        %v1727 = vadd.f32 %v1723, %v1726
        %s1728 = sld [smem:[#allocation2 + $0x154]]
        %v1729 = vstv %s1728
        %v1730 = vmul.f32 %v581, %v1729
        %v1731 = vadd.f32 %v1727, %v1730
        %s1732 = sld [smem:[#allocation2 + $0x15c]]
        %v1733 = vstv %s1732
        %v1734 = vmul.f32 %v648, %v1733
        %v1735 = vadd.f32 %v1731, %v1734
        %s1736 = sld [smem:[#allocation2 + $0x164]]
        %v1737 = vstv %s1736
        %v1738 = vmul.f32 %v715, %v1737
        %v1739 = vadd.f32 %v1735, %v1738
        %s1740 = sld [smem:[#allocation2 + $0x16c]]
        %v1741 = vstv %s1740
        %v1742 = vmul.f32 %v782, %v1741
        %v1743 = vadd.f32 %v1739, %v1742
        %s1744 = sld [smem:[#allocation2 + $0x174]]
        %v1745 = vstv %s1744
        %v1746 = vmul.f32 %v849, %v1745
        %v1747 = vadd.f32 %v1743, %v1746
        %s1748 = sld [smem:[#allocation2 + $0x17c]]
        %v1749 = vstv %s1748
        %v1750 = vmul.f32 %v916, %v1749
        %v1751 = vadd.f32 %v1747, %v1750
        %s1752 = sld [smem:[#allocation2 + $0x184]]
        %v1753 = vstv %s1752
        %v1754 = vmul.f32 %v983, %v1753
        %v1755 = vadd.f32 %v1751, %v1754
        %s1756 = sld [smem:[#allocation2 + $0x18c]]
        %v1757 = vstv %s1756
        %v1758 = vmul.f32 %v1050, %v1757
        %v1759 = vadd.f32 %v1755, %v1758
        %s1760 = sld [smem:[#allocation2 + $0x194]]
        %v1761 = vstv %s1760
        %v1762 = vmul.f32 %v1117, %v1761
        %v1763 = vadd.f32 %v1759, %v1762
        %s1764 = sld [smem:[#allocation2 + $0x19c]]
        %v1765 = vstv %s1764
        %v1766 = vmul.f32 %v1184, %v1765
        %v1767 = vadd.f32 %v1763, %v1766
        %s1768 = sld [smem:[#allocation2 + $0x1a4]]
        %v1769 = vstv %s1768
        %v1770 = vmul.f32 %v1251, %v1769
        %v1771 = vadd.f32 %v1767, %v1770
        %s1772 = sld [smem:[#allocation2 + $0x1ac]]
        %v1773 = vstv %s1772
        %v1774 = vmul.f32 %v1318, %v1773
        %v1775 = vadd.f32 %v1771, %v1774
        %s1776 = sld [smem:[#allocation2 + $0x1b4]]
        %v1777 = vstv %s1776
        %v1778 = vmul.f32 %v1385, %v1777
        %v1779 = vadd.f32 %v1775, %v1778
        %s1780 = sld [smem:[#allocation2 + $0x1bc]]
        %v1781 = vstv %s1780
        %v1782 = vmul.f32 %v1452, %v1781
        %v1783 = vadd.f32 %v1779, %v1782
        %s1784 = sld [smem:[#allocation2 + $0x1c4]]
        %v1785 = vstv %s1784
        %v1786 = vadd.f32 %v1783, %v1785
        %v1787 = vtanh.pop %v1786
        %s1788 = sld [smem:[#allocation2 + $0x145]]
        %v1789 = vstv %s1788
        %v1790 = vmul.f32 %v447, %v1789
        %s1791 = sld [smem:[#allocation2 + $0x14d]]
        %v1792 = vstv %s1791
        %v1793 = vmul.f32 %v514, %v1792
        %v1794 = vadd.f32 %v1790, %v1793
        %s1795 = sld [smem:[#allocation2 + $0x155]]
        %v1796 = vstv %s1795
        %v1797 = vmul.f32 %v581, %v1796
        %v1798 = vadd.f32 %v1794, %v1797
        %s1799 = sld [smem:[#allocation2 + $0x15d]]
        %v1800 = vstv %s1799
        %v1801 = vmul.f32 %v648, %v1800
        %v1802 = vadd.f32 %v1798, %v1801
        %s1803 = sld [smem:[#allocation2 + $0x165]]
        %v1804 = vstv %s1803
        %v1805 = vmul.f32 %v715, %v1804
        %v1806 = vadd.f32 %v1802, %v1805
        %s1807 = sld [smem:[#allocation2 + $0x16d]]
        %v1808 = vstv %s1807
        %v1809 = vmul.f32 %v782, %v1808
        %v1810 = vadd.f32 %v1806, %v1809
        %s1811 = sld [smem:[#allocation2 + $0x175]]
        %v1812 = vstv %s1811
        %v1813 = vmul.f32 %v849, %v1812
        %v1814 = vadd.f32 %v1810, %v1813
        %s1815 = sld [smem:[#allocation2 + $0x17d]]
        %v1816 = vstv %s1815
        %v1817 = vmul.f32 %v916, %v1816
        %v1818 = vadd.f32 %v1814, %v1817
        %s1819 = sld [smem:[#allocation2 + $0x185]]
        %v1820 = vstv %s1819
        %v1821 = vmul.f32 %v983, %v1820
        %v1822 = vadd.f32 %v1818, %v1821
        %s1823 = sld [smem:[#allocation2 + $0x18d]]
        %v1824 = vstv %s1823
        %v1825 = vmul.f32 %v1050, %v1824
        %v1826 = vadd.f32 %v1822, %v1825
        %s1827 = sld [smem:[#allocation2 + $0x195]]
        %v1828 = vstv %s1827
        %v1829 = vmul.f32 %v1117, %v1828
        %v1830 = vadd.f32 %v1826, %v1829
        %s1831 = sld [smem:[#allocation2 + $0x19d]]
        %v1832 = vstv %s1831
        %v1833 = vmul.f32 %v1184, %v1832
        %v1834 = vadd.f32 %v1830, %v1833
        %s1835 = sld [smem:[#allocation2 + $0x1a5]]
        %v1836 = vstv %s1835
        %v1837 = vmul.f32 %v1251, %v1836
        %v1838 = vadd.f32 %v1834, %v1837
        %s1839 = sld [smem:[#allocation2 + $0x1ad]]
        %v1840 = vstv %s1839
        %v1841 = vmul.f32 %v1318, %v1840
        %v1842 = vadd.f32 %v1838, %v1841
        %s1843 = sld [smem:[#allocation2 + $0x1b5]]
        %v1844 = vstv %s1843
        %v1845 = vmul.f32 %v1385, %v1844
        %v1846 = vadd.f32 %v1842, %v1845
        %s1847 = sld [smem:[#allocation2 + $0x1bd]]
        %v1848 = vstv %s1847
        %v1849 = vmul.f32 %v1452, %v1848
        %v1850 = vadd.f32 %v1846, %v1849
        %s1851 = sld [smem:[#allocation2 + $0x1c5]]
        %v1852 = vstv %s1851
        %v1853 = vadd.f32 %v1850, %v1852
        %v1854 = vtanh.pop %v1853
        %s1855 = sld [smem:[#allocation2 + $0x146]]
        %v1856 = vstv %s1855
        %v1857 = vmul.f32 %v447, %v1856
        %s1858 = sld [smem:[#allocation2 + $0x14e]]
        %v1859 = vstv %s1858
        %v1860 = vmul.f32 %v514, %v1859
        %v1861 = vadd.f32 %v1857, %v1860
        %s1862 = sld [smem:[#allocation2 + $0x156]]
        %v1863 = vstv %s1862
        %v1864 = vmul.f32 %v581, %v1863
        %v1865 = vadd.f32 %v1861, %v1864
        %s1866 = sld [smem:[#allocation2 + $0x15e]]
        %v1867 = vstv %s1866
        %v1868 = vmul.f32 %v648, %v1867
        %v1869 = vadd.f32 %v1865, %v1868
        %s1870 = sld [smem:[#allocation2 + $0x166]]
        %v1871 = vstv %s1870
        %v1872 = vmul.f32 %v715, %v1871
        %v1873 = vadd.f32 %v1869, %v1872
        %s1874 = sld [smem:[#allocation2 + $0x16e]]
        %v1875 = vstv %s1874
        %v1876 = vmul.f32 %v782, %v1875
        %v1877 = vadd.f32 %v1873, %v1876
        %s1878 = sld [smem:[#allocation2 + $0x176]]
        %v1879 = vstv %s1878
        %v1880 = vmul.f32 %v849, %v1879
        %v1881 = vadd.f32 %v1877, %v1880
        %s1882 = sld [smem:[#allocation2 + $0x17e]]
        %v1883 = vstv %s1882
        %v1884 = vmul.f32 %v916, %v1883
        %v1885 = vadd.f32 %v1881, %v1884
        %s1886 = sld [smem:[#allocation2 + $0x186]]
        %v1887 = vstv %s1886
        %v1888 = vmul.f32 %v983, %v1887
        %v1889 = vadd.f32 %v1885, %v1888
        %s1890 = sld [smem:[#allocation2 + $0x18e]]
        %v1891 = vstv %s1890
        %v1892 = vmul.f32 %v1050, %v1891
        %v1893 = vadd.f32 %v1889, %v1892
        %s1894 = sld [smem:[#allocation2 + $0x196]]
        %v1895 = vstv %s1894
        %v1896 = vmul.f32 %v1117, %v1895
        %v1897 = vadd.f32 %v1893, %v1896
        %s1898 = sld [smem:[#allocation2 + $0x19e]]
        %v1899 = vstv %s1898
        %v1900 = vmul.f32 %v1184, %v1899
        %v1901 = vadd.f32 %v1897, %v1900
        %s1902 = sld [smem:[#allocation2 + $0x1a6]]
        %v1903 = vstv %s1902
        %v1904 = vmul.f32 %v1251, %v1903
        %v1905 = vadd.f32 %v1901, %v1904
        %s1906 = sld [smem:[#allocation2 + $0x1ae]]
        %v1907 = vstv %s1906
        %v1908 = vmul.f32 %v1318, %v1907
        %v1909 = vadd.f32 %v1905, %v1908
        %s1910 = sld [smem:[#allocation2 + $0x1b6]]
        %v1911 = vstv %s1910
        %v1912 = vmul.f32 %v1385, %v1911
        %v1913 = vadd.f32 %v1909, %v1912
        %s1914 = sld [smem:[#allocation2 + $0x1be]]
        %v1915 = vstv %s1914
        %v1916 = vmul.f32 %v1452, %v1915
        %v1917 = vadd.f32 %v1913, %v1916
        %s1918 = sld [smem:[#allocation2 + $0x1c6]]
        %v1919 = vstv %s1918
        %v1920 = vadd.f32 %v1917, %v1919
        %v1921 = vtanh.pop %v1920
        %s1922 = sld [smem:[#allocation2 + $0x147]]
        %v1923 = vstv %s1922
        %v1924 = vmul.f32 %v447, %v1923
        %s1925 = sld [smem:[#allocation2 + $0x14f]]
        %v1926 = vstv %s1925
        %v1927 = vmul.f32 %v514, %v1926
        %v1928 = vadd.f32 %v1924, %v1927
        %s1929 = sld [smem:[#allocation2 + $0x157]]
        %v1930 = vstv %s1929
        %v1931 = vmul.f32 %v581, %v1930
        %v1932 = vadd.f32 %v1928, %v1931
        %s1933 = sld [smem:[#allocation2 + $0x15f]]
        %v1934 = vstv %s1933
        %v1935 = vmul.f32 %v648, %v1934
        %v1936 = vadd.f32 %v1932, %v1935
        %s1937 = sld [smem:[#allocation2 + $0x167]]
        %v1938 = vstv %s1937
        %v1939 = vmul.f32 %v715, %v1938
        %v1940 = vadd.f32 %v1936, %v1939
        %s1941 = sld [smem:[#allocation2 + $0x16f]]
        %v1942 = vstv %s1941
        %v1943 = vmul.f32 %v782, %v1942
        %v1944 = vadd.f32 %v1940, %v1943
        %s1945 = sld [smem:[#allocation2 + $0x177]]
        %v1946 = vstv %s1945
        %v1947 = vmul.f32 %v849, %v1946
        %v1948 = vadd.f32 %v1944, %v1947
        %s1949 = sld [smem:[#allocation2 + $0x17f]]
        %v1950 = vstv %s1949
        %v1951 = vmul.f32 %v916, %v1950
        %v1952 = vadd.f32 %v1948, %v1951
        %s1953 = sld [smem:[#allocation2 + $0x187]]
        %v1954 = vstv %s1953
        %v1955 = vmul.f32 %v983, %v1954
        %v1956 = vadd.f32 %v1952, %v1955
        %s1957 = sld [smem:[#allocation2 + $0x18f]]
        %v1958 = vstv %s1957
        %v1959 = vmul.f32 %v1050, %v1958
        %v1960 = vadd.f32 %v1956, %v1959
        %s1961 = sld [smem:[#allocation2 + $0x197]]
        %v1962 = vstv %s1961
        %v1963 = vmul.f32 %v1117, %v1962
        %v1964 = vadd.f32 %v1960, %v1963
        %s1965 = sld [smem:[#allocation2 + $0x19f]]
        %v1966 = vstv %s1965
        %v1967 = vmul.f32 %v1184, %v1966
        %v1968 = vadd.f32 %v1964, %v1967
        %s1969 = sld [smem:[#allocation2 + $0x1a7]]
        %v1970 = vstv %s1969
        %v1971 = vmul.f32 %v1251, %v1970
        %v1972 = vadd.f32 %v1968, %v1971
        %s1973 = sld [smem:[#allocation2 + $0x1af]]
        %v1974 = vstv %s1973
        %v1975 = vmul.f32 %v1318, %v1974
        %v1976 = vadd.f32 %v1972, %v1975
        %s1977 = sld [smem:[#allocation2 + $0x1b7]]
        %v1978 = vstv %s1977
        %v1979 = vmul.f32 %v1385, %v1978
        %v1980 = vadd.f32 %v1976, %v1979
        %s1981 = sld [smem:[#allocation2 + $0x1bf]]
        %v1982 = vstv %s1981
        %v1983 = vmul.f32 %v1452, %v1982
        %v1984 = vadd.f32 %v1980, %v1983
        %s1985 = sld [smem:[#allocation2 + $0x1c7]]
        %v1986 = vstv %s1985
        %v1987 = vadd.f32 %v1984, %v1986
        %v1988 = vtanh.pop %v1987
        %s1989 = sld [smem:[#allocation2 + $0x1c8]]
        %v1990 = vstv %s1989
        %v1991 = vmul.f32 %v1519, %v1990
        %s1992 = sld [smem:[#allocation2 + $0x1d1]]
        %v1993 = vstv %s1992
        %v1994 = vmul.f32 %v1519, %v1993
        %s1995 = sld [smem:[#allocation2 + $0x1c9]]
        %v1996 = vstv %s1995
        %v1997 = vmul.f32 %v1586, %v1996
        %v1998 = vadd.f32 %v1991, %v1997
        %s1999 = sld [smem:[#allocation2 + $0x1d2]]
        %v2000 = vstv %s1999
        %v2001 = vmul.f32 %v1586, %v2000
        %v2002 = vadd.f32 %v1994, %v2001
        %s2003 = sld [smem:[#allocation2 + $0x1ca]]
        %v2004 = vstv %s2003
        %v2005 = vmul.f32 %v1653, %v2004
        %v2006 = vadd.f32 %v1998, %v2005
        %s2007 = sld [smem:[#allocation2 + $0x1d3]]
        %v2008 = vstv %s2007
        %v2009 = vmul.f32 %v1653, %v2008
        %v2010 = vadd.f32 %v2002, %v2009
        %s2011 = sld [smem:[#allocation2 + $0x1cb]]
        %v2012 = vstv %s2011
        %v2013 = vmul.f32 %v1720, %v2012
        %v2014 = vadd.f32 %v2006, %v2013
        %s2015 = sld [smem:[#allocation2 + $0x1d4]]
        %v2016 = vstv %s2015
        %v2017 = vmul.f32 %v1720, %v2016
        %v2018 = vadd.f32 %v2010, %v2017
        %s2019 = sld [smem:[#allocation2 + $0x1cc]]
        %v2020 = vstv %s2019
        %v2021 = vmul.f32 %v1787, %v2020
        %v2022 = vadd.f32 %v2014, %v2021
        %s2023 = sld [smem:[#allocation2 + $0x1d5]]
        %v2024 = vstv %s2023
        %v2025 = vmul.f32 %v1787, %v2024
        %v2026 = vadd.f32 %v2018, %v2025
        %s2027 = sld [smem:[#allocation2 + $0x1cd]]
        %v2028 = vstv %s2027
        %v2029 = vmul.f32 %v1854, %v2028
        %v2030 = vadd.f32 %v2022, %v2029
        %s2031 = sld [smem:[#allocation2 + $0x1d6]]
        %v2032 = vstv %s2031
        %v2033 = vmul.f32 %v1854, %v2032
        %v2034 = vadd.f32 %v2026, %v2033
        %s2035 = sld [smem:[#allocation2 + $0x1ce]]
        %v2036 = vstv %s2035
        %v2037 = vmul.f32 %v1921, %v2036
        %v2038 = vadd.f32 %v2030, %v2037
        %s2039 = sld [smem:[#allocation2 + $0x1d7]]
        %v2040 = vstv %s2039
        %v2041 = vmul.f32 %v1921, %v2040
        %v2042 = vadd.f32 %v2034, %v2041
        %s2043 = sld [smem:[#allocation2 + $0x1cf]]
        %v2044 = vstv %s2043
        %v2045 = vmul.f32 %v1988, %v2044
        %v2046 = vadd.f32 %v2038, %v2045
        %s2047 = sld [smem:[#allocation2 + $0x1d8]]
        %v2048 = vstv %s2047
        %v2049 = vmul.f32 %v1988, %v2048
        %v2050 = vadd.f32 %v2042, %v2049
        %s2051 = sld [smem:[#allocation2 + $0x1d0]]
        %v2052 = vstv %s2051
        %v2053 = vadd.f32 %v2046, %v2052
        %s2054 = sld [smem:[#allocation2 + $0x1d9]]
        %v2055 = vstv %s2054
        %v2056 = vadd.f32 %v2050, %v2055
        %v2057 = vmul.f32 %v2053, %v2056
        %2058 = vst [vmem:[%s198] sm:$0xff] %v2057
        %s2059 = scalar_lea.vmem %s177, 8 [#allocation6]
        %v2060 = vld [vmem:[%s2059] sm:$0xff]
        %s2061 = sadd.s32 8, 16
        %s2062 = scalar_lea.vmem %s177, %s2061 [#allocation6]
        %v2063 = vld [vmem:[%s2062] sm:$0xff]
        %s2064 = sld [smem:[#allocation2]]
        %v2065 = vstv %s2064
        %v2066 = vmul.f32 %v2060, %v2065
        %s2067 = sld [smem:[#allocation2 + $0x10]]
        %v2068 = vstv %s2067
        %v2069 = vmul.f32 %v2063, %v2068
        %v2070 = vadd.f32 %v2066, %v2069
        %s2071 = sld [smem:[#allocation2 + $0x20]]
        %v2072 = vstv %s2071
        %v2073 = vadd.f32 %v2070, %v2072
        %v2074 = vtanh.pop %v2073
        %s2075 = sld [smem:[#allocation2 + $0x1]]
        %v2076 = vstv %s2075
        %v2077 = vmul.f32 %v2060, %v2076
        %s2078 = sld [smem:[#allocation2 + $0x11]]
        %v2079 = vstv %s2078
        %v2080 = vmul.f32 %v2063, %v2079
        %v2081 = vadd.f32 %v2077, %v2080
        %s2082 = sld [smem:[#allocation2 + $0x21]]
        %v2083 = vstv %s2082
        %v2084 = vadd.f32 %v2081, %v2083
        %v2085 = vtanh.pop %v2084
        %s2086 = sld [smem:[#allocation2 + $0x2]]
        %v2087 = vstv %s2086
        %v2088 = vmul.f32 %v2060, %v2087
        %s2089 = sld [smem:[#allocation2 + $0x12]]
        %v2090 = vstv %s2089
        %v2091 = vmul.f32 %v2063, %v2090
        %v2092 = vadd.f32 %v2088, %v2091
        %s2093 = sld [smem:[#allocation2 + $0x22]]
        %v2094 = vstv %s2093
        %v2095 = vadd.f32 %v2092, %v2094
        %v2096 = vtanh.pop %v2095
        %s2097 = sld [smem:[#allocation2 + $0x3]]
        %v2098 = vstv %s2097
        %v2099 = vmul.f32 %v2060, %v2098
        %s2100 = sld [smem:[#allocation2 + $0x13]]
        %v2101 = vstv %s2100
        %v2102 = vmul.f32 %v2063, %v2101
        %v2103 = vadd.f32 %v2099, %v2102
        %s2104 = sld [smem:[#allocation2 + $0x23]]
        %v2105 = vstv %s2104
        %v2106 = vadd.f32 %v2103, %v2105
        %v2107 = vtanh.pop %v2106
        %s2108 = sld [smem:[#allocation2 + $0x4]]
        %v2109 = vstv %s2108
        %v2110 = vmul.f32 %v2060, %v2109
        %s2111 = sld [smem:[#allocation2 + $0x14]]
        %v2112 = vstv %s2111
        %v2113 = vmul.f32 %v2063, %v2112
        %v2114 = vadd.f32 %v2110, %v2113
        %s2115 = sld [smem:[#allocation2 + $0x24]]
        %v2116 = vstv %s2115
        %v2117 = vadd.f32 %v2114, %v2116
        %v2118 = vtanh.pop %v2117
        %s2119 = sld [smem:[#allocation2 + $0x5]]
        %v2120 = vstv %s2119
        %v2121 = vmul.f32 %v2060, %v2120
        %s2122 = sld [smem:[#allocation2 + $0x15]]
        %v2123 = vstv %s2122
        %v2124 = vmul.f32 %v2063, %v2123
        %v2125 = vadd.f32 %v2121, %v2124
        %s2126 = sld [smem:[#allocation2 + $0x25]]
        %v2127 = vstv %s2126
        %v2128 = vadd.f32 %v2125, %v2127
        %v2129 = vtanh.pop %v2128
        %s2130 = sld [smem:[#allocation2 + $0x6]]
        %v2131 = vstv %s2130
        %v2132 = vmul.f32 %v2060, %v2131
        %s2133 = sld [smem:[#allocation2 + $0x16]]
        %v2134 = vstv %s2133
        %v2135 = vmul.f32 %v2063, %v2134
        %v2136 = vadd.f32 %v2132, %v2135
        %s2137 = sld [smem:[#allocation2 + $0x26]]
        %v2138 = vstv %s2137
        %v2139 = vadd.f32 %v2136, %v2138
        %v2140 = vtanh.pop %v2139
        %s2141 = sld [smem:[#allocation2 + $0x7]]
        %v2142 = vstv %s2141
        %v2143 = vmul.f32 %v2060, %v2142
        %s2144 = sld [smem:[#allocation2 + $0x17]]
        %v2145 = vstv %s2144
        %v2146 = vmul.f32 %v2063, %v2145
        %v2147 = vadd.f32 %v2143, %v2146
        %s2148 = sld [smem:[#allocation2 + $0x27]]
        %v2149 = vstv %s2148
        %v2150 = vadd.f32 %v2147, %v2149
        %v2151 = vtanh.pop %v2150
        %s2152 = sld [smem:[#allocation2 + $0x8]]
        %v2153 = vstv %s2152
        %v2154 = vmul.f32 %v2060, %v2153
        %s2155 = sld [smem:[#allocation2 + $0x18]]
        %v2156 = vstv %s2155
        %v2157 = vmul.f32 %v2063, %v2156
        %v2158 = vadd.f32 %v2154, %v2157
        %s2159 = sld [smem:[#allocation2 + $0x28]]
        %v2160 = vstv %s2159
        %v2161 = vadd.f32 %v2158, %v2160
        %v2162 = vtanh.pop %v2161
        %s2163 = sld [smem:[#allocation2 + $0x9]]
        %v2164 = vstv %s2163
        %v2165 = vmul.f32 %v2060, %v2164
        %s2166 = sld [smem:[#allocation2 + $0x19]]
        %v2167 = vstv %s2166
        %v2168 = vmul.f32 %v2063, %v2167
        %v2169 = vadd.f32 %v2165, %v2168
        %s2170 = sld [smem:[#allocation2 + $0x29]]
        %v2171 = vstv %s2170
        %v2172 = vadd.f32 %v2169, %v2171
        %v2173 = vtanh.pop %v2172
        %s2174 = sld [smem:[#allocation2 + $0xa]]
        %v2175 = vstv %s2174
        %v2176 = vmul.f32 %v2060, %v2175
        %s2177 = sld [smem:[#allocation2 + $0x1a]]
        %v2178 = vstv %s2177
        %v2179 = vmul.f32 %v2063, %v2178
        %v2180 = vadd.f32 %v2176, %v2179
        %s2181 = sld [smem:[#allocation2 + $0x2a]]
        %v2182 = vstv %s2181
        %v2183 = vadd.f32 %v2180, %v2182
        %v2184 = vtanh.pop %v2183
        %s2185 = sld [smem:[#allocation2 + $0xb]]
        %v2186 = vstv %s2185
        %v2187 = vmul.f32 %v2060, %v2186
        %s2188 = sld [smem:[#allocation2 + $0x1b]]
        %v2189 = vstv %s2188
        %v2190 = vmul.f32 %v2063, %v2189
        %v2191 = vadd.f32 %v2187, %v2190
        %s2192 = sld [smem:[#allocation2 + $0x2b]]
        %v2193 = vstv %s2192
        %v2194 = vadd.f32 %v2191, %v2193
        %v2195 = vtanh.pop %v2194
        %s2196 = sld [smem:[#allocation2 + $0xc]]
        %v2197 = vstv %s2196
        %v2198 = vmul.f32 %v2060, %v2197
        %s2199 = sld [smem:[#allocation2 + $0x1c]]
        %v2200 = vstv %s2199
        %v2201 = vmul.f32 %v2063, %v2200
        %v2202 = vadd.f32 %v2198, %v2201
        %s2203 = sld [smem:[#allocation2 + $0x2c]]
        %v2204 = vstv %s2203
        %v2205 = vadd.f32 %v2202, %v2204
        %v2206 = vtanh.pop %v2205
        %s2207 = sld [smem:[#allocation2 + $0xd]]
        %v2208 = vstv %s2207
        %v2209 = vmul.f32 %v2060, %v2208
        %s2210 = sld [smem:[#allocation2 + $0x1d]]
        %v2211 = vstv %s2210
        %v2212 = vmul.f32 %v2063, %v2211
        %v2213 = vadd.f32 %v2209, %v2212
        %s2214 = sld [smem:[#allocation2 + $0x2d]]
        %v2215 = vstv %s2214
        %v2216 = vadd.f32 %v2213, %v2215
        %v2217 = vtanh.pop %v2216
        %s2218 = sld [smem:[#allocation2 + $0xe]]
        %v2219 = vstv %s2218
        %v2220 = vmul.f32 %v2060, %v2219
        %s2221 = sld [smem:[#allocation2 + $0x1e]]
        %v2222 = vstv %s2221
        %v2223 = vmul.f32 %v2063, %v2222
        %v2224 = vadd.f32 %v2220, %v2223
        %s2225 = sld [smem:[#allocation2 + $0x2e]]
        %v2226 = vstv %s2225
        %v2227 = vadd.f32 %v2224, %v2226
        %v2228 = vtanh.pop %v2227
        %s2229 = sld [smem:[#allocation2 + $0xf]]
        %v2230 = vstv %s2229
        %v2231 = vmul.f32 %v2060, %v2230
        %s2232 = sld [smem:[#allocation2 + $0x1f]]
        %v2233 = vstv %s2232
        %v2234 = vmul.f32 %v2063, %v2233
        %v2235 = vadd.f32 %v2231, %v2234
        %s2236 = sld [smem:[#allocation2 + $0x2f]]
        %v2237 = vstv %s2236
        %v2238 = vadd.f32 %v2235, %v2237
        %v2239 = vtanh.pop %v2238
        %s2240 = sld [smem:[#allocation2 + $0x30]]
        %v2241 = vstv %s2240
        %v2242 = vmul.f32 %v2074, %v2241
        %s2243 = sld [smem:[#allocation2 + $0x40]]
        %v2244 = vstv %s2243
        %v2245 = vmul.f32 %v2085, %v2244
        %v2246 = vadd.f32 %v2242, %v2245
        %s2247 = sld [smem:[#allocation2 + $0x50]]
        %v2248 = vstv %s2247
        %v2249 = vmul.f32 %v2096, %v2248
        %v2250 = vadd.f32 %v2246, %v2249
        %s2251 = sld [smem:[#allocation2 + $0x60]]
        %v2252 = vstv %s2251
        %v2253 = vmul.f32 %v2107, %v2252
        %v2254 = vadd.f32 %v2250, %v2253
        %s2255 = sld [smem:[#allocation2 + $0x70]]
        %v2256 = vstv %s2255
        %v2257 = vmul.f32 %v2118, %v2256
        %v2258 = vadd.f32 %v2254, %v2257
        %s2259 = sld [smem:[#allocation2 + $0x80]]
        %v2260 = vstv %s2259
        %v2261 = vmul.f32 %v2129, %v2260
        %v2262 = vadd.f32 %v2258, %v2261
        %s2263 = sld [smem:[#allocation2 + $0x90]]
        %v2264 = vstv %s2263
        %v2265 = vmul.f32 %v2140, %v2264
        %v2266 = vadd.f32 %v2262, %v2265
        %s2267 = sld [smem:[#allocation2 + $0xa0]]
        %v2268 = vstv %s2267
        %v2269 = vmul.f32 %v2151, %v2268
        %v2270 = vadd.f32 %v2266, %v2269
        %s2271 = sld [smem:[#allocation2 + $0xb0]]
        %v2272 = vstv %s2271
        %v2273 = vmul.f32 %v2162, %v2272
        %v2274 = vadd.f32 %v2270, %v2273
        %s2275 = sld [smem:[#allocation2 + $0xc0]]
        %v2276 = vstv %s2275
        %v2277 = vmul.f32 %v2173, %v2276
        %v2278 = vadd.f32 %v2274, %v2277
        %s2279 = sld [smem:[#allocation2 + $0xd0]]
        %v2280 = vstv %s2279
        %v2281 = vmul.f32 %v2184, %v2280
        %v2282 = vadd.f32 %v2278, %v2281
        %s2283 = sld [smem:[#allocation2 + $0xe0]]
        %v2284 = vstv %s2283
        %v2285 = vmul.f32 %v2195, %v2284
        %v2286 = vadd.f32 %v2282, %v2285
        %s2287 = sld [smem:[#allocation2 + $0xf0]]
        %v2288 = vstv %s2287
        %v2289 = vmul.f32 %v2206, %v2288
        %v2290 = vadd.f32 %v2286, %v2289
        %s2291 = sld [smem:[#allocation2 + $0x100]]
        %v2292 = vstv %s2291
        %v2293 = vmul.f32 %v2217, %v2292
        %v2294 = vadd.f32 %v2290, %v2293
        %s2295 = sld [smem:[#allocation2 + $0x110]]
        %v2296 = vstv %s2295
        %v2297 = vmul.f32 %v2228, %v2296
        %v2298 = vadd.f32 %v2294, %v2297
        %s2299 = sld [smem:[#allocation2 + $0x120]]
        %v2300 = vstv %s2299
        %v2301 = vmul.f32 %v2239, %v2300
        %v2302 = vadd.f32 %v2298, %v2301
        %s2303 = sld [smem:[#allocation2 + $0x130]]
        %v2304 = vstv %s2303
        %v2305 = vadd.f32 %v2302, %v2304
        %v2306 = vtanh.pop %v2305
        %s2307 = sld [smem:[#allocation2 + $0x31]]
        %v2308 = vstv %s2307
        %v2309 = vmul.f32 %v2074, %v2308
        %s2310 = sld [smem:[#allocation2 + $0x41]]
        %v2311 = vstv %s2310
        %v2312 = vmul.f32 %v2085, %v2311
        %v2313 = vadd.f32 %v2309, %v2312
        %s2314 = sld [smem:[#allocation2 + $0x51]]
        %v2315 = vstv %s2314
        %v2316 = vmul.f32 %v2096, %v2315
        %v2317 = vadd.f32 %v2313, %v2316
        %s2318 = sld [smem:[#allocation2 + $0x61]]
        %v2319 = vstv %s2318
        %v2320 = vmul.f32 %v2107, %v2319
        %v2321 = vadd.f32 %v2317, %v2320
        %s2322 = sld [smem:[#allocation2 + $0x71]]
        %v2323 = vstv %s2322
        %v2324 = vmul.f32 %v2118, %v2323
        %v2325 = vadd.f32 %v2321, %v2324
        %s2326 = sld [smem:[#allocation2 + $0x81]]
        %v2327 = vstv %s2326
        %v2328 = vmul.f32 %v2129, %v2327
        %v2329 = vadd.f32 %v2325, %v2328
        %s2330 = sld [smem:[#allocation2 + $0x91]]
        %v2331 = vstv %s2330
        %v2332 = vmul.f32 %v2140, %v2331
        %v2333 = vadd.f32 %v2329, %v2332
        %s2334 = sld [smem:[#allocation2 + $0xa1]]
        %v2335 = vstv %s2334
        %v2336 = vmul.f32 %v2151, %v2335
        %v2337 = vadd.f32 %v2333, %v2336
        %s2338 = sld [smem:[#allocation2 + $0xb1]]
        %v2339 = vstv %s2338
        %v2340 = vmul.f32 %v2162, %v2339
        %v2341 = vadd.f32 %v2337, %v2340
        %s2342 = sld [smem:[#allocation2 + $0xc1]]
        %v2343 = vstv %s2342
        %v2344 = vmul.f32 %v2173, %v2343
        %v2345 = vadd.f32 %v2341, %v2344
        %s2346 = sld [smem:[#allocation2 + $0xd1]]
        %v2347 = vstv %s2346
        %v2348 = vmul.f32 %v2184, %v2347
        %v2349 = vadd.f32 %v2345, %v2348
        %s2350 = sld [smem:[#allocation2 + $0xe1]]
        %v2351 = vstv %s2350
        %v2352 = vmul.f32 %v2195, %v2351
        %v2353 = vadd.f32 %v2349, %v2352
        %s2354 = sld [smem:[#allocation2 + $0xf1]]
        %v2355 = vstv %s2354
        %v2356 = vmul.f32 %v2206, %v2355
        %v2357 = vadd.f32 %v2353, %v2356
        %s2358 = sld [smem:[#allocation2 + $0x101]]
        %v2359 = vstv %s2358
        %v2360 = vmul.f32 %v2217, %v2359
        %v2361 = vadd.f32 %v2357, %v2360
        %s2362 = sld [smem:[#allocation2 + $0x111]]
        %v2363 = vstv %s2362
        %v2364 = vmul.f32 %v2228, %v2363
        %v2365 = vadd.f32 %v2361, %v2364
        %s2366 = sld [smem:[#allocation2 + $0x121]]
        %v2367 = vstv %s2366
        %v2368 = vmul.f32 %v2239, %v2367
        %v2369 = vadd.f32 %v2365, %v2368
        %s2370 = sld [smem:[#allocation2 + $0x131]]
        %v2371 = vstv %s2370
        %v2372 = vadd.f32 %v2369, %v2371
        %v2373 = vtanh.pop %v2372
        %s2374 = sld [smem:[#allocation2 + $0x32]]
        %v2375 = vstv %s2374
        %v2376 = vmul.f32 %v2074, %v2375
        %s2377 = sld [smem:[#allocation2 + $0x42]]
        %v2378 = vstv %s2377
        %v2379 = vmul.f32 %v2085, %v2378
        %v2380 = vadd.f32 %v2376, %v2379
        %s2381 = sld [smem:[#allocation2 + $0x52]]
        %v2382 = vstv %s2381
        %v2383 = vmul.f32 %v2096, %v2382
        %v2384 = vadd.f32 %v2380, %v2383
        %s2385 = sld [smem:[#allocation2 + $0x62]]
        %v2386 = vstv %s2385
        %v2387 = vmul.f32 %v2107, %v2386
        %v2388 = vadd.f32 %v2384, %v2387
        %s2389 = sld [smem:[#allocation2 + $0x72]]
        %v2390 = vstv %s2389
        %v2391 = vmul.f32 %v2118, %v2390
        %v2392 = vadd.f32 %v2388, %v2391
        %s2393 = sld [smem:[#allocation2 + $0x82]]
        %v2394 = vstv %s2393
        %v2395 = vmul.f32 %v2129, %v2394
        %v2396 = vadd.f32 %v2392, %v2395
        %s2397 = sld [smem:[#allocation2 + $0x92]]
        %v2398 = vstv %s2397
        %v2399 = vmul.f32 %v2140, %v2398
        %v2400 = vadd.f32 %v2396, %v2399
        %s2401 = sld [smem:[#allocation2 + $0xa2]]
        %v2402 = vstv %s2401
        %v2403 = vmul.f32 %v2151, %v2402
        %v2404 = vadd.f32 %v2400, %v2403
        %s2405 = sld [smem:[#allocation2 + $0xb2]]
        %v2406 = vstv %s2405
        %v2407 = vmul.f32 %v2162, %v2406
        %v2408 = vadd.f32 %v2404, %v2407
        %s2409 = sld [smem:[#allocation2 + $0xc2]]
        %v2410 = vstv %s2409
        %v2411 = vmul.f32 %v2173, %v2410
        %v2412 = vadd.f32 %v2408, %v2411
        %s2413 = sld [smem:[#allocation2 + $0xd2]]
        %v2414 = vstv %s2413
        %v2415 = vmul.f32 %v2184, %v2414
        %v2416 = vadd.f32 %v2412, %v2415
        %s2417 = sld [smem:[#allocation2 + $0xe2]]
        %v2418 = vstv %s2417
        %v2419 = vmul.f32 %v2195, %v2418
        %v2420 = vadd.f32 %v2416, %v2419
        %s2421 = sld [smem:[#allocation2 + $0xf2]]
        %v2422 = vstv %s2421
        %v2423 = vmul.f32 %v2206, %v2422
        %v2424 = vadd.f32 %v2420, %v2423
        %s2425 = sld [smem:[#allocation2 + $0x102]]
        %v2426 = vstv %s2425
        %v2427 = vmul.f32 %v2217, %v2426
        %v2428 = vadd.f32 %v2424, %v2427
        %s2429 = sld [smem:[#allocation2 + $0x112]]
        %v2430 = vstv %s2429
        %v2431 = vmul.f32 %v2228, %v2430
        %v2432 = vadd.f32 %v2428, %v2431
        %s2433 = sld [smem:[#allocation2 + $0x122]]
        %v2434 = vstv %s2433
        %v2435 = vmul.f32 %v2239, %v2434
        %v2436 = vadd.f32 %v2432, %v2435
        %s2437 = sld [smem:[#allocation2 + $0x132]]
        %v2438 = vstv %s2437
        %v2439 = vadd.f32 %v2436, %v2438
        %v2440 = vtanh.pop %v2439
        %s2441 = sld [smem:[#allocation2 + $0x33]]
        %v2442 = vstv %s2441
        %v2443 = vmul.f32 %v2074, %v2442
        %s2444 = sld [smem:[#allocation2 + $0x43]]
        %v2445 = vstv %s2444
        %v2446 = vmul.f32 %v2085, %v2445
        %v2447 = vadd.f32 %v2443, %v2446
        %s2448 = sld [smem:[#allocation2 + $0x53]]
        %v2449 = vstv %s2448
        %v2450 = vmul.f32 %v2096, %v2449
        %v2451 = vadd.f32 %v2447, %v2450
        %s2452 = sld [smem:[#allocation2 + $0x63]]
        %v2453 = vstv %s2452
        %v2454 = vmul.f32 %v2107, %v2453
        %v2455 = vadd.f32 %v2451, %v2454
        %s2456 = sld [smem:[#allocation2 + $0x73]]
        %v2457 = vstv %s2456
        %v2458 = vmul.f32 %v2118, %v2457
        %v2459 = vadd.f32 %v2455, %v2458
        %s2460 = sld [smem:[#allocation2 + $0x83]]
        %v2461 = vstv %s2460
        %v2462 = vmul.f32 %v2129, %v2461
        %v2463 = vadd.f32 %v2459, %v2462
        %s2464 = sld [smem:[#allocation2 + $0x93]]
        %v2465 = vstv %s2464
        %v2466 = vmul.f32 %v2140, %v2465
        %v2467 = vadd.f32 %v2463, %v2466
        %s2468 = sld [smem:[#allocation2 + $0xa3]]
        %v2469 = vstv %s2468
        %v2470 = vmul.f32 %v2151, %v2469
        %v2471 = vadd.f32 %v2467, %v2470
        %s2472 = sld [smem:[#allocation2 + $0xb3]]
        %v2473 = vstv %s2472
        %v2474 = vmul.f32 %v2162, %v2473
        %v2475 = vadd.f32 %v2471, %v2474
        %s2476 = sld [smem:[#allocation2 + $0xc3]]
        %v2477 = vstv %s2476
        %v2478 = vmul.f32 %v2173, %v2477
        %v2479 = vadd.f32 %v2475, %v2478
        %s2480 = sld [smem:[#allocation2 + $0xd3]]
        %v2481 = vstv %s2480
        %v2482 = vmul.f32 %v2184, %v2481
        %v2483 = vadd.f32 %v2479, %v2482
        %s2484 = sld [smem:[#allocation2 + $0xe3]]
        %v2485 = vstv %s2484
        %v2486 = vmul.f32 %v2195, %v2485
        %v2487 = vadd.f32 %v2483, %v2486
        %s2488 = sld [smem:[#allocation2 + $0xf3]]
        %v2489 = vstv %s2488
        %v2490 = vmul.f32 %v2206, %v2489
        %v2491 = vadd.f32 %v2487, %v2490
        %s2492 = sld [smem:[#allocation2 + $0x103]]
        %v2493 = vstv %s2492
        %v2494 = vmul.f32 %v2217, %v2493
        %v2495 = vadd.f32 %v2491, %v2494
        %s2496 = sld [smem:[#allocation2 + $0x113]]
        %v2497 = vstv %s2496
        %v2498 = vmul.f32 %v2228, %v2497
        %v2499 = vadd.f32 %v2495, %v2498
        %s2500 = sld [smem:[#allocation2 + $0x123]]
        %v2501 = vstv %s2500
        %v2502 = vmul.f32 %v2239, %v2501
        %v2503 = vadd.f32 %v2499, %v2502
        %s2504 = sld [smem:[#allocation2 + $0x133]]
        %v2505 = vstv %s2504
        %v2506 = vadd.f32 %v2503, %v2505
        %v2507 = vtanh.pop %v2506
        %s2508 = sld [smem:[#allocation2 + $0x34]]
        %v2509 = vstv %s2508
        %v2510 = vmul.f32 %v2074, %v2509
        %s2511 = sld [smem:[#allocation2 + $0x44]]
        %v2512 = vstv %s2511
        %v2513 = vmul.f32 %v2085, %v2512
        %v2514 = vadd.f32 %v2510, %v2513
        %s2515 = sld [smem:[#allocation2 + $0x54]]
        %v2516 = vstv %s2515
        %v2517 = vmul.f32 %v2096, %v2516
        %v2518 = vadd.f32 %v2514, %v2517
        %s2519 = sld [smem:[#allocation2 + $0x64]]
        %v2520 = vstv %s2519
        %v2521 = vmul.f32 %v2107, %v2520
        %v2522 = vadd.f32 %v2518, %v2521
        %s2523 = sld [smem:[#allocation2 + $0x74]]
        %v2524 = vstv %s2523
        %v2525 = vmul.f32 %v2118, %v2524
        %v2526 = vadd.f32 %v2522, %v2525
        %s2527 = sld [smem:[#allocation2 + $0x84]]
        %v2528 = vstv %s2527
        %v2529 = vmul.f32 %v2129, %v2528
        %v2530 = vadd.f32 %v2526, %v2529
        %s2531 = sld [smem:[#allocation2 + $0x94]]
        %v2532 = vstv %s2531
        %v2533 = vmul.f32 %v2140, %v2532
        %v2534 = vadd.f32 %v2530, %v2533
        %s2535 = sld [smem:[#allocation2 + $0xa4]]
        %v2536 = vstv %s2535
        %v2537 = vmul.f32 %v2151, %v2536
        %v2538 = vadd.f32 %v2534, %v2537
        %s2539 = sld [smem:[#allocation2 + $0xb4]]
        %v2540 = vstv %s2539
        %v2541 = vmul.f32 %v2162, %v2540
        %v2542 = vadd.f32 %v2538, %v2541
        %s2543 = sld [smem:[#allocation2 + $0xc4]]
        %v2544 = vstv %s2543
        %v2545 = vmul.f32 %v2173, %v2544
        %v2546 = vadd.f32 %v2542, %v2545
        %s2547 = sld [smem:[#allocation2 + $0xd4]]
        %v2548 = vstv %s2547
        %v2549 = vmul.f32 %v2184, %v2548
        %v2550 = vadd.f32 %v2546, %v2549
        %s2551 = sld [smem:[#allocation2 + $0xe4]]
        %v2552 = vstv %s2551
        %v2553 = vmul.f32 %v2195, %v2552
        %v2554 = vadd.f32 %v2550, %v2553
        %s2555 = sld [smem:[#allocation2 + $0xf4]]
        %v2556 = vstv %s2555
        %v2557 = vmul.f32 %v2206, %v2556
        %v2558 = vadd.f32 %v2554, %v2557
        %s2559 = sld [smem:[#allocation2 + $0x104]]
        %v2560 = vstv %s2559
        %v2561 = vmul.f32 %v2217, %v2560
        %v2562 = vadd.f32 %v2558, %v2561
        %s2563 = sld [smem:[#allocation2 + $0x114]]
        %v2564 = vstv %s2563
        %v2565 = vmul.f32 %v2228, %v2564
        %v2566 = vadd.f32 %v2562, %v2565
        %s2567 = sld [smem:[#allocation2 + $0x124]]
        %v2568 = vstv %s2567
        %v2569 = vmul.f32 %v2239, %v2568
        %v2570 = vadd.f32 %v2566, %v2569
        %s2571 = sld [smem:[#allocation2 + $0x134]]
        %v2572 = vstv %s2571
        %v2573 = vadd.f32 %v2570, %v2572
        %v2574 = vtanh.pop %v2573
        %s2575 = sld [smem:[#allocation2 + $0x35]]
        %v2576 = vstv %s2575
        %v2577 = vmul.f32 %v2074, %v2576
        %s2578 = sld [smem:[#allocation2 + $0x45]]
        %v2579 = vstv %s2578
        %v2580 = vmul.f32 %v2085, %v2579
        %v2581 = vadd.f32 %v2577, %v2580
        %s2582 = sld [smem:[#allocation2 + $0x55]]
        %v2583 = vstv %s2582
        %v2584 = vmul.f32 %v2096, %v2583
        %v2585 = vadd.f32 %v2581, %v2584
        %s2586 = sld [smem:[#allocation2 + $0x65]]
        %v2587 = vstv %s2586
        %v2588 = vmul.f32 %v2107, %v2587
        %v2589 = vadd.f32 %v2585, %v2588
        %s2590 = sld [smem:[#allocation2 + $0x75]]
        %v2591 = vstv %s2590
        %v2592 = vmul.f32 %v2118, %v2591
        %v2593 = vadd.f32 %v2589, %v2592
        %s2594 = sld [smem:[#allocation2 + $0x85]]
        %v2595 = vstv %s2594
        %v2596 = vmul.f32 %v2129, %v2595
        %v2597 = vadd.f32 %v2593, %v2596
        %s2598 = sld [smem:[#allocation2 + $0x95]]
        %v2599 = vstv %s2598
        %v2600 = vmul.f32 %v2140, %v2599
        %v2601 = vadd.f32 %v2597, %v2600
        %s2602 = sld [smem:[#allocation2 + $0xa5]]
        %v2603 = vstv %s2602
        %v2604 = vmul.f32 %v2151, %v2603
        %v2605 = vadd.f32 %v2601, %v2604
        %s2606 = sld [smem:[#allocation2 + $0xb5]]
        %v2607 = vstv %s2606
        %v2608 = vmul.f32 %v2162, %v2607
        %v2609 = vadd.f32 %v2605, %v2608
        %s2610 = sld [smem:[#allocation2 + $0xc5]]
        %v2611 = vstv %s2610
        %v2612 = vmul.f32 %v2173, %v2611
        %v2613 = vadd.f32 %v2609, %v2612
        %s2614 = sld [smem:[#allocation2 + $0xd5]]
        %v2615 = vstv %s2614
        %v2616 = vmul.f32 %v2184, %v2615
        %v2617 = vadd.f32 %v2613, %v2616
        %s2618 = sld [smem:[#allocation2 + $0xe5]]
        %v2619 = vstv %s2618
        %v2620 = vmul.f32 %v2195, %v2619
        %v2621 = vadd.f32 %v2617, %v2620
        %s2622 = sld [smem:[#allocation2 + $0xf5]]
        %v2623 = vstv %s2622
        %v2624 = vmul.f32 %v2206, %v2623
        %v2625 = vadd.f32 %v2621, %v2624
        %s2626 = sld [smem:[#allocation2 + $0x105]]
        %v2627 = vstv %s2626
        %v2628 = vmul.f32 %v2217, %v2627
        %v2629 = vadd.f32 %v2625, %v2628
        %s2630 = sld [smem:[#allocation2 + $0x115]]
        %v2631 = vstv %s2630
        %v2632 = vmul.f32 %v2228, %v2631
        %v2633 = vadd.f32 %v2629, %v2632
        %s2634 = sld [smem:[#allocation2 + $0x125]]
        %v2635 = vstv %s2634
        %v2636 = vmul.f32 %v2239, %v2635
        %v2637 = vadd.f32 %v2633, %v2636
        %s2638 = sld [smem:[#allocation2 + $0x135]]
        %v2639 = vstv %s2638
        %v2640 = vadd.f32 %v2637, %v2639
        %v2641 = vtanh.pop %v2640
        %s2642 = sld [smem:[#allocation2 + $0x36]]
        %v2643 = vstv %s2642
        %v2644 = vmul.f32 %v2074, %v2643
        %s2645 = sld [smem:[#allocation2 + $0x46]]
        %v2646 = vstv %s2645
        %v2647 = vmul.f32 %v2085, %v2646
        %v2648 = vadd.f32 %v2644, %v2647
        %s2649 = sld [smem:[#allocation2 + $0x56]]
        %v2650 = vstv %s2649
        %v2651 = vmul.f32 %v2096, %v2650
        %v2652 = vadd.f32 %v2648, %v2651
        %s2653 = sld [smem:[#allocation2 + $0x66]]
        %v2654 = vstv %s2653
        %v2655 = vmul.f32 %v2107, %v2654
        %v2656 = vadd.f32 %v2652, %v2655
        %s2657 = sld [smem:[#allocation2 + $0x76]]
        %v2658 = vstv %s2657
        %v2659 = vmul.f32 %v2118, %v2658
        %v2660 = vadd.f32 %v2656, %v2659
        %s2661 = sld [smem:[#allocation2 + $0x86]]
        %v2662 = vstv %s2661
        %v2663 = vmul.f32 %v2129, %v2662
        %v2664 = vadd.f32 %v2660, %v2663
        %s2665 = sld [smem:[#allocation2 + $0x96]]
        %v2666 = vstv %s2665
        %v2667 = vmul.f32 %v2140, %v2666
        %v2668 = vadd.f32 %v2664, %v2667
        %s2669 = sld [smem:[#allocation2 + $0xa6]]
        %v2670 = vstv %s2669
        %v2671 = vmul.f32 %v2151, %v2670
        %v2672 = vadd.f32 %v2668, %v2671
        %s2673 = sld [smem:[#allocation2 + $0xb6]]
        %v2674 = vstv %s2673
        %v2675 = vmul.f32 %v2162, %v2674
        %v2676 = vadd.f32 %v2672, %v2675
        %s2677 = sld [smem:[#allocation2 + $0xc6]]
        %v2678 = vstv %s2677
        %v2679 = vmul.f32 %v2173, %v2678
        %v2680 = vadd.f32 %v2676, %v2679
        %s2681 = sld [smem:[#allocation2 + $0xd6]]
        %v2682 = vstv %s2681
        %v2683 = vmul.f32 %v2184, %v2682
        %v2684 = vadd.f32 %v2680, %v2683
        %s2685 = sld [smem:[#allocation2 + $0xe6]]
        %v2686 = vstv %s2685
        %v2687 = vmul.f32 %v2195, %v2686
        %v2688 = vadd.f32 %v2684, %v2687
        %s2689 = sld [smem:[#allocation2 + $0xf6]]
        %v2690 = vstv %s2689
        %v2691 = vmul.f32 %v2206, %v2690
        %v2692 = vadd.f32 %v2688, %v2691
        %s2693 = sld [smem:[#allocation2 + $0x106]]
        %v2694 = vstv %s2693
        %v2695 = vmul.f32 %v2217, %v2694
        %v2696 = vadd.f32 %v2692, %v2695
        %s2697 = sld [smem:[#allocation2 + $0x116]]
        %v2698 = vstv %s2697
        %v2699 = vmul.f32 %v2228, %v2698
        %v2700 = vadd.f32 %v2696, %v2699
        %s2701 = sld [smem:[#allocation2 + $0x126]]
        %v2702 = vstv %s2701
        %v2703 = vmul.f32 %v2239, %v2702
        %v2704 = vadd.f32 %v2700, %v2703
        %s2705 = sld [smem:[#allocation2 + $0x136]]
        %v2706 = vstv %s2705
        %v2707 = vadd.f32 %v2704, %v2706
        %v2708 = vtanh.pop %v2707
        %s2709 = sld [smem:[#allocation2 + $0x37]]
        %v2710 = vstv %s2709
        %v2711 = vmul.f32 %v2074, %v2710
        %s2712 = sld [smem:[#allocation2 + $0x47]]
        %v2713 = vstv %s2712
        %v2714 = vmul.f32 %v2085, %v2713
        %v2715 = vadd.f32 %v2711, %v2714
        %s2716 = sld [smem:[#allocation2 + $0x57]]
        %v2717 = vstv %s2716
        %v2718 = vmul.f32 %v2096, %v2717
        %v2719 = vadd.f32 %v2715, %v2718
        %s2720 = sld [smem:[#allocation2 + $0x67]]
        %v2721 = vstv %s2720
        %v2722 = vmul.f32 %v2107, %v2721
        %v2723 = vadd.f32 %v2719, %v2722
        %s2724 = sld [smem:[#allocation2 + $0x77]]
        %v2725 = vstv %s2724
        %v2726 = vmul.f32 %v2118, %v2725
        %v2727 = vadd.f32 %v2723, %v2726
        %s2728 = sld [smem:[#allocation2 + $0x87]]
        %v2729 = vstv %s2728
        %v2730 = vmul.f32 %v2129, %v2729
        %v2731 = vadd.f32 %v2727, %v2730
        %s2732 = sld [smem:[#allocation2 + $0x97]]
        %v2733 = vstv %s2732
        %v2734 = vmul.f32 %v2140, %v2733
        %v2735 = vadd.f32 %v2731, %v2734
        %s2736 = sld [smem:[#allocation2 + $0xa7]]
        %v2737 = vstv %s2736
        %v2738 = vmul.f32 %v2151, %v2737
        %v2739 = vadd.f32 %v2735, %v2738
        %s2740 = sld [smem:[#allocation2 + $0xb7]]
        %v2741 = vstv %s2740
        %v2742 = vmul.f32 %v2162, %v2741
        %v2743 = vadd.f32 %v2739, %v2742
        %s2744 = sld [smem:[#allocation2 + $0xc7]]
        %v2745 = vstv %s2744
        %v2746 = vmul.f32 %v2173, %v2745
        %v2747 = vadd.f32 %v2743, %v2746
        %s2748 = sld [smem:[#allocation2 + $0xd7]]
        %v2749 = vstv %s2748
        %v2750 = vmul.f32 %v2184, %v2749
        %v2751 = vadd.f32 %v2747, %v2750
        %s2752 = sld [smem:[#allocation2 + $0xe7]]
        %v2753 = vstv %s2752
        %v2754 = vmul.f32 %v2195, %v2753
        %v2755 = vadd.f32 %v2751, %v2754
        %s2756 = sld [smem:[#allocation2 + $0xf7]]
        %v2757 = vstv %s2756
        %v2758 = vmul.f32 %v2206, %v2757
        %v2759 = vadd.f32 %v2755, %v2758
        %s2760 = sld [smem:[#allocation2 + $0x107]]
        %v2761 = vstv %s2760
        %v2762 = vmul.f32 %v2217, %v2761
        %v2763 = vadd.f32 %v2759, %v2762
        %s2764 = sld [smem:[#allocation2 + $0x117]]
        %v2765 = vstv %s2764
        %v2766 = vmul.f32 %v2228, %v2765
        %v2767 = vadd.f32 %v2763, %v2766
        %s2768 = sld [smem:[#allocation2 + $0x127]]
        %v2769 = vstv %s2768
        %v2770 = vmul.f32 %v2239, %v2769
        %v2771 = vadd.f32 %v2767, %v2770
        %s2772 = sld [smem:[#allocation2 + $0x137]]
        %v2773 = vstv %s2772
        %v2774 = vadd.f32 %v2771, %v2773
        %v2775 = vtanh.pop %v2774
        %s2776 = sld [smem:[#allocation2 + $0x38]]
        %v2777 = vstv %s2776
        %v2778 = vmul.f32 %v2074, %v2777
        %s2779 = sld [smem:[#allocation2 + $0x48]]
        %v2780 = vstv %s2779
        %v2781 = vmul.f32 %v2085, %v2780
        %v2782 = vadd.f32 %v2778, %v2781
        %s2783 = sld [smem:[#allocation2 + $0x58]]
        %v2784 = vstv %s2783
        %v2785 = vmul.f32 %v2096, %v2784
        %v2786 = vadd.f32 %v2782, %v2785
        %s2787 = sld [smem:[#allocation2 + $0x68]]
        %v2788 = vstv %s2787
        %v2789 = vmul.f32 %v2107, %v2788
        %v2790 = vadd.f32 %v2786, %v2789
        %s2791 = sld [smem:[#allocation2 + $0x78]]
        %v2792 = vstv %s2791
        %v2793 = vmul.f32 %v2118, %v2792
        %v2794 = vadd.f32 %v2790, %v2793
        %s2795 = sld [smem:[#allocation2 + $0x88]]
        %v2796 = vstv %s2795
        %v2797 = vmul.f32 %v2129, %v2796
        %v2798 = vadd.f32 %v2794, %v2797
        %s2799 = sld [smem:[#allocation2 + $0x98]]
        %v2800 = vstv %s2799
        %v2801 = vmul.f32 %v2140, %v2800
        %v2802 = vadd.f32 %v2798, %v2801
        %s2803 = sld [smem:[#allocation2 + $0xa8]]
        %v2804 = vstv %s2803
        %v2805 = vmul.f32 %v2151, %v2804
        %v2806 = vadd.f32 %v2802, %v2805
        %s2807 = sld [smem:[#allocation2 + $0xb8]]
        %v2808 = vstv %s2807
        %v2809 = vmul.f32 %v2162, %v2808
        %v2810 = vadd.f32 %v2806, %v2809
        %s2811 = sld [smem:[#allocation2 + $0xc8]]
        %v2812 = vstv %s2811
        %v2813 = vmul.f32 %v2173, %v2812
        %v2814 = vadd.f32 %v2810, %v2813
        %s2815 = sld [smem:[#allocation2 + $0xd8]]
        %v2816 = vstv %s2815
        %v2817 = vmul.f32 %v2184, %v2816
        %v2818 = vadd.f32 %v2814, %v2817
        %s2819 = sld [smem:[#allocation2 + $0xe8]]
        %v2820 = vstv %s2819
        %v2821 = vmul.f32 %v2195, %v2820
        %v2822 = vadd.f32 %v2818, %v2821
        %s2823 = sld [smem:[#allocation2 + $0xf8]]
        %v2824 = vstv %s2823
        %v2825 = vmul.f32 %v2206, %v2824
        %v2826 = vadd.f32 %v2822, %v2825
        %s2827 = sld [smem:[#allocation2 + $0x108]]
        %v2828 = vstv %s2827
        %v2829 = vmul.f32 %v2217, %v2828
        %v2830 = vadd.f32 %v2826, %v2829
        %s2831 = sld [smem:[#allocation2 + $0x118]]
        %v2832 = vstv %s2831
        %v2833 = vmul.f32 %v2228, %v2832
        %v2834 = vadd.f32 %v2830, %v2833
        %s2835 = sld [smem:[#allocation2 + $0x128]]
        %v2836 = vstv %s2835
        %v2837 = vmul.f32 %v2239, %v2836
        %v2838 = vadd.f32 %v2834, %v2837
        %s2839 = sld [smem:[#allocation2 + $0x138]]
        %v2840 = vstv %s2839
        %v2841 = vadd.f32 %v2838, %v2840
        %v2842 = vtanh.pop %v2841
        %s2843 = sld [smem:[#allocation2 + $0x39]]
        %v2844 = vstv %s2843
        %v2845 = vmul.f32 %v2074, %v2844
        %s2846 = sld [smem:[#allocation2 + $0x49]]
        %v2847 = vstv %s2846
        %v2848 = vmul.f32 %v2085, %v2847
        %v2849 = vadd.f32 %v2845, %v2848
        %s2850 = sld [smem:[#allocation2 + $0x59]]
        %v2851 = vstv %s2850
        %v2852 = vmul.f32 %v2096, %v2851
        %v2853 = vadd.f32 %v2849, %v2852
        %s2854 = sld [smem:[#allocation2 + $0x69]]
        %v2855 = vstv %s2854
        %v2856 = vmul.f32 %v2107, %v2855
        %v2857 = vadd.f32 %v2853, %v2856
        %s2858 = sld [smem:[#allocation2 + $0x79]]
        %v2859 = vstv %s2858
        %v2860 = vmul.f32 %v2118, %v2859
        %v2861 = vadd.f32 %v2857, %v2860
        %s2862 = sld [smem:[#allocation2 + $0x89]]
        %v2863 = vstv %s2862
        %v2864 = vmul.f32 %v2129, %v2863
        %v2865 = vadd.f32 %v2861, %v2864
        %s2866 = sld [smem:[#allocation2 + $0x99]]
        %v2867 = vstv %s2866
        %v2868 = vmul.f32 %v2140, %v2867
        %v2869 = vadd.f32 %v2865, %v2868
        %s2870 = sld [smem:[#allocation2 + $0xa9]]
        %v2871 = vstv %s2870
        %v2872 = vmul.f32 %v2151, %v2871
        %v2873 = vadd.f32 %v2869, %v2872
        %s2874 = sld [smem:[#allocation2 + $0xb9]]
        %v2875 = vstv %s2874
        %v2876 = vmul.f32 %v2162, %v2875
        %v2877 = vadd.f32 %v2873, %v2876
        %s2878 = sld [smem:[#allocation2 + $0xc9]]
        %v2879 = vstv %s2878
        %v2880 = vmul.f32 %v2173, %v2879
        %v2881 = vadd.f32 %v2877, %v2880
        %s2882 = sld [smem:[#allocation2 + $0xd9]]
        %v2883 = vstv %s2882
        %v2884 = vmul.f32 %v2184, %v2883
        %v2885 = vadd.f32 %v2881, %v2884
        %s2886 = sld [smem:[#allocation2 + $0xe9]]
        %v2887 = vstv %s2886
        %v2888 = vmul.f32 %v2195, %v2887
        %v2889 = vadd.f32 %v2885, %v2888
        %s2890 = sld [smem:[#allocation2 + $0xf9]]
        %v2891 = vstv %s2890
        %v2892 = vmul.f32 %v2206, %v2891
        %v2893 = vadd.f32 %v2889, %v2892
        %s2894 = sld [smem:[#allocation2 + $0x109]]
        %v2895 = vstv %s2894
        %v2896 = vmul.f32 %v2217, %v2895
        %v2897 = vadd.f32 %v2893, %v2896
        %s2898 = sld [smem:[#allocation2 + $0x119]]
        %v2899 = vstv %s2898
        %v2900 = vmul.f32 %v2228, %v2899
        %v2901 = vadd.f32 %v2897, %v2900
        %s2902 = sld [smem:[#allocation2 + $0x129]]
        %v2903 = vstv %s2902
        %v2904 = vmul.f32 %v2239, %v2903
        %v2905 = vadd.f32 %v2901, %v2904
        %s2906 = sld [smem:[#allocation2 + $0x139]]
        %v2907 = vstv %s2906
        %v2908 = vadd.f32 %v2905, %v2907
        %v2909 = vtanh.pop %v2908
        %s2910 = sld [smem:[#allocation2 + $0x3a]]
        %v2911 = vstv %s2910
        %v2912 = vmul.f32 %v2074, %v2911
        %s2913 = sld [smem:[#allocation2 + $0x4a]]
        %v2914 = vstv %s2913
        %v2915 = vmul.f32 %v2085, %v2914
        %v2916 = vadd.f32 %v2912, %v2915
        %s2917 = sld [smem:[#allocation2 + $0x5a]]
        %v2918 = vstv %s2917
        %v2919 = vmul.f32 %v2096, %v2918
        %v2920 = vadd.f32 %v2916, %v2919
        %s2921 = sld [smem:[#allocation2 + $0x6a]]
        %v2922 = vstv %s2921
        %v2923 = vmul.f32 %v2107, %v2922
        %v2924 = vadd.f32 %v2920, %v2923
        %s2925 = sld [smem:[#allocation2 + $0x7a]]
        %v2926 = vstv %s2925
        %v2927 = vmul.f32 %v2118, %v2926
        %v2928 = vadd.f32 %v2924, %v2927
        %s2929 = sld [smem:[#allocation2 + $0x8a]]
        %v2930 = vstv %s2929
        %v2931 = vmul.f32 %v2129, %v2930
        %v2932 = vadd.f32 %v2928, %v2931
        %s2933 = sld [smem:[#allocation2 + $0x9a]]
        %v2934 = vstv %s2933
        %v2935 = vmul.f32 %v2140, %v2934
        %v2936 = vadd.f32 %v2932, %v2935
        %s2937 = sld [smem:[#allocation2 + $0xaa]]
        %v2938 = vstv %s2937
        %v2939 = vmul.f32 %v2151, %v2938
        %v2940 = vadd.f32 %v2936, %v2939
        %s2941 = sld [smem:[#allocation2 + $0xba]]
        %v2942 = vstv %s2941
        %v2943 = vmul.f32 %v2162, %v2942
        %v2944 = vadd.f32 %v2940, %v2943
        %s2945 = sld [smem:[#allocation2 + $0xca]]
        %v2946 = vstv %s2945
        %v2947 = vmul.f32 %v2173, %v2946
        %v2948 = vadd.f32 %v2944, %v2947
        %s2949 = sld [smem:[#allocation2 + $0xda]]
        %v2950 = vstv %s2949
        %v2951 = vmul.f32 %v2184, %v2950
        %v2952 = vadd.f32 %v2948, %v2951
        %s2953 = sld [smem:[#allocation2 + $0xea]]
        %v2954 = vstv %s2953
        %v2955 = vmul.f32 %v2195, %v2954
        %v2956 = vadd.f32 %v2952, %v2955
        %s2957 = sld [smem:[#allocation2 + $0xfa]]
        %v2958 = vstv %s2957
        %v2959 = vmul.f32 %v2206, %v2958
        %v2960 = vadd.f32 %v2956, %v2959
        %s2961 = sld [smem:[#allocation2 + $0x10a]]
        %v2962 = vstv %s2961
        %v2963 = vmul.f32 %v2217, %v2962
        %v2964 = vadd.f32 %v2960, %v2963
        %s2965 = sld [smem:[#allocation2 + $0x11a]]
        %v2966 = vstv %s2965
        %v2967 = vmul.f32 %v2228, %v2966
        %v2968 = vadd.f32 %v2964, %v2967
        %s2969 = sld [smem:[#allocation2 + $0x12a]]
        %v2970 = vstv %s2969
        %v2971 = vmul.f32 %v2239, %v2970
        %v2972 = vadd.f32 %v2968, %v2971
        %s2973 = sld [smem:[#allocation2 + $0x13a]]
        %v2974 = vstv %s2973
        %v2975 = vadd.f32 %v2972, %v2974
        %v2976 = vtanh.pop %v2975
        %s2977 = sld [smem:[#allocation2 + $0x3b]]
        %v2978 = vstv %s2977
        %v2979 = vmul.f32 %v2074, %v2978
        %s2980 = sld [smem:[#allocation2 + $0x4b]]
        %v2981 = vstv %s2980
        %v2982 = vmul.f32 %v2085, %v2981
        %v2983 = vadd.f32 %v2979, %v2982
        %s2984 = sld [smem:[#allocation2 + $0x5b]]
        %v2985 = vstv %s2984
        %v2986 = vmul.f32 %v2096, %v2985
        %v2987 = vadd.f32 %v2983, %v2986
        %s2988 = sld [smem:[#allocation2 + $0x6b]]
        %v2989 = vstv %s2988
        %v2990 = vmul.f32 %v2107, %v2989
        %v2991 = vadd.f32 %v2987, %v2990
        %s2992 = sld [smem:[#allocation2 + $0x7b]]
        %v2993 = vstv %s2992
        %v2994 = vmul.f32 %v2118, %v2993
        %v2995 = vadd.f32 %v2991, %v2994
        %s2996 = sld [smem:[#allocation2 + $0x8b]]
        %v2997 = vstv %s2996
        %v2998 = vmul.f32 %v2129, %v2997
        %v2999 = vadd.f32 %v2995, %v2998
        %s3000 = sld [smem:[#allocation2 + $0x9b]]
        %v3001 = vstv %s3000
        %v3002 = vmul.f32 %v2140, %v3001
        %v3003 = vadd.f32 %v2999, %v3002
        %s3004 = sld [smem:[#allocation2 + $0xab]]
        %v3005 = vstv %s3004
        %v3006 = vmul.f32 %v2151, %v3005
        %v3007 = vadd.f32 %v3003, %v3006
        %s3008 = sld [smem:[#allocation2 + $0xbb]]
        %v3009 = vstv %s3008
        %v3010 = vmul.f32 %v2162, %v3009
        %v3011 = vadd.f32 %v3007, %v3010
        %s3012 = sld [smem:[#allocation2 + $0xcb]]
        %v3013 = vstv %s3012
        %v3014 = vmul.f32 %v2173, %v3013
        %v3015 = vadd.f32 %v3011, %v3014
        %s3016 = sld [smem:[#allocation2 + $0xdb]]
        %v3017 = vstv %s3016
        %v3018 = vmul.f32 %v2184, %v3017
        %v3019 = vadd.f32 %v3015, %v3018
        %s3020 = sld [smem:[#allocation2 + $0xeb]]
        %v3021 = vstv %s3020
        %v3022 = vmul.f32 %v2195, %v3021
        %v3023 = vadd.f32 %v3019, %v3022
        %s3024 = sld [smem:[#allocation2 + $0xfb]]
        %v3025 = vstv %s3024
        %v3026 = vmul.f32 %v2206, %v3025
        %v3027 = vadd.f32 %v3023, %v3026
        %s3028 = sld [smem:[#allocation2 + $0x10b]]
        %v3029 = vstv %s3028
        %v3030 = vmul.f32 %v2217, %v3029
        %v3031 = vadd.f32 %v3027, %v3030
        %s3032 = sld [smem:[#allocation2 + $0x11b]]
        %v3033 = vstv %s3032
        %v3034 = vmul.f32 %v2228, %v3033
        %v3035 = vadd.f32 %v3031, %v3034
        %s3036 = sld [smem:[#allocation2 + $0x12b]]
        %v3037 = vstv %s3036
        %v3038 = vmul.f32 %v2239, %v3037
        %v3039 = vadd.f32 %v3035, %v3038
        %s3040 = sld [smem:[#allocation2 + $0x13b]]
        %v3041 = vstv %s3040
        %v3042 = vadd.f32 %v3039, %v3041
        %v3043 = vtanh.pop %v3042
        %s3044 = sld [smem:[#allocation2 + $0x3c]]
        %v3045 = vstv %s3044
        %v3046 = vmul.f32 %v2074, %v3045
        %s3047 = sld [smem:[#allocation2 + $0x4c]]
        %v3048 = vstv %s3047
        %v3049 = vmul.f32 %v2085, %v3048
        %v3050 = vadd.f32 %v3046, %v3049
        %s3051 = sld [smem:[#allocation2 + $0x5c]]
        %v3052 = vstv %s3051
        %v3053 = vmul.f32 %v2096, %v3052
        %v3054 = vadd.f32 %v3050, %v3053
        %s3055 = sld [smem:[#allocation2 + $0x6c]]
        %v3056 = vstv %s3055
        %v3057 = vmul.f32 %v2107, %v3056
        %v3058 = vadd.f32 %v3054, %v3057
        %s3059 = sld [smem:[#allocation2 + $0x7c]]
        %v3060 = vstv %s3059
        %v3061 = vmul.f32 %v2118, %v3060
        %v3062 = vadd.f32 %v3058, %v3061
        %s3063 = sld [smem:[#allocation2 + $0x8c]]
        %v3064 = vstv %s3063
        %v3065 = vmul.f32 %v2129, %v3064
        %v3066 = vadd.f32 %v3062, %v3065
        %s3067 = sld [smem:[#allocation2 + $0x9c]]
        %v3068 = vstv %s3067
        %v3069 = vmul.f32 %v2140, %v3068
        %v3070 = vadd.f32 %v3066, %v3069
        %s3071 = sld [smem:[#allocation2 + $0xac]]
        %v3072 = vstv %s3071
        %v3073 = vmul.f32 %v2151, %v3072
        %v3074 = vadd.f32 %v3070, %v3073
        %s3075 = sld [smem:[#allocation2 + $0xbc]]
        %v3076 = vstv %s3075
        %v3077 = vmul.f32 %v2162, %v3076
        %v3078 = vadd.f32 %v3074, %v3077
        %s3079 = sld [smem:[#allocation2 + $0xcc]]
        %v3080 = vstv %s3079
        %v3081 = vmul.f32 %v2173, %v3080
        %v3082 = vadd.f32 %v3078, %v3081
        %s3083 = sld [smem:[#allocation2 + $0xdc]]
        %v3084 = vstv %s3083
        %v3085 = vmul.f32 %v2184, %v3084
        %v3086 = vadd.f32 %v3082, %v3085
        %s3087 = sld [smem:[#allocation2 + $0xec]]
        %v3088 = vstv %s3087
        %v3089 = vmul.f32 %v2195, %v3088
        %v3090 = vadd.f32 %v3086, %v3089
        %s3091 = sld [smem:[#allocation2 + $0xfc]]
        %v3092 = vstv %s3091
        %v3093 = vmul.f32 %v2206, %v3092
        %v3094 = vadd.f32 %v3090, %v3093
        %s3095 = sld [smem:[#allocation2 + $0x10c]]
        %v3096 = vstv %s3095
        %v3097 = vmul.f32 %v2217, %v3096
        %v3098 = vadd.f32 %v3094, %v3097
        %s3099 = sld [smem:[#allocation2 + $0x11c]]
        %v3100 = vstv %s3099
        %v3101 = vmul.f32 %v2228, %v3100
        %v3102 = vadd.f32 %v3098, %v3101
        %s3103 = sld [smem:[#allocation2 + $0x12c]]
        %v3104 = vstv %s3103
        %v3105 = vmul.f32 %v2239, %v3104
        %v3106 = vadd.f32 %v3102, %v3105
        %s3107 = sld [smem:[#allocation2 + $0x13c]]
        %v3108 = vstv %s3107
        %v3109 = vadd.f32 %v3106, %v3108
        %v3110 = vtanh.pop %v3109
        %s3111 = sld [smem:[#allocation2 + $0x3d]]
        %v3112 = vstv %s3111
        %v3113 = vmul.f32 %v2074, %v3112
        %s3114 = sld [smem:[#allocation2 + $0x4d]]
        %v3115 = vstv %s3114
        %v3116 = vmul.f32 %v2085, %v3115
        %v3117 = vadd.f32 %v3113, %v3116
        %s3118 = sld [smem:[#allocation2 + $0x5d]]
        %v3119 = vstv %s3118
        %v3120 = vmul.f32 %v2096, %v3119
        %v3121 = vadd.f32 %v3117, %v3120
        %s3122 = sld [smem:[#allocation2 + $0x6d]]
        %v3123 = vstv %s3122
        %v3124 = vmul.f32 %v2107, %v3123
        %v3125 = vadd.f32 %v3121, %v3124
        %s3126 = sld [smem:[#allocation2 + $0x7d]]
        %v3127 = vstv %s3126
        %v3128 = vmul.f32 %v2118, %v3127
        %v3129 = vadd.f32 %v3125, %v3128
        %s3130 = sld [smem:[#allocation2 + $0x8d]]
        %v3131 = vstv %s3130
        %v3132 = vmul.f32 %v2129, %v3131
        %v3133 = vadd.f32 %v3129, %v3132
        %s3134 = sld [smem:[#allocation2 + $0x9d]]
        %v3135 = vstv %s3134
        %v3136 = vmul.f32 %v2140, %v3135
        %v3137 = vadd.f32 %v3133, %v3136
        %s3138 = sld [smem:[#allocation2 + $0xad]]
        %v3139 = vstv %s3138
        %v3140 = vmul.f32 %v2151, %v3139
        %v3141 = vadd.f32 %v3137, %v3140
        %s3142 = sld [smem:[#allocation2 + $0xbd]]
        %v3143 = vstv %s3142
        %v3144 = vmul.f32 %v2162, %v3143
        %v3145 = vadd.f32 %v3141, %v3144
        %s3146 = sld [smem:[#allocation2 + $0xcd]]
        %v3147 = vstv %s3146
        %v3148 = vmul.f32 %v2173, %v3147
        %v3149 = vadd.f32 %v3145, %v3148
        %s3150 = sld [smem:[#allocation2 + $0xdd]]
        %v3151 = vstv %s3150
        %v3152 = vmul.f32 %v2184, %v3151
        %v3153 = vadd.f32 %v3149, %v3152
        %s3154 = sld [smem:[#allocation2 + $0xed]]
        %v3155 = vstv %s3154
        %v3156 = vmul.f32 %v2195, %v3155
        %v3157 = vadd.f32 %v3153, %v3156
        %s3158 = sld [smem:[#allocation2 + $0xfd]]
        %v3159 = vstv %s3158
        %v3160 = vmul.f32 %v2206, %v3159
        %v3161 = vadd.f32 %v3157, %v3160
        %s3162 = sld [smem:[#allocation2 + $0x10d]]
        %v3163 = vstv %s3162
        %v3164 = vmul.f32 %v2217, %v3163
        %v3165 = vadd.f32 %v3161, %v3164
        %s3166 = sld [smem:[#allocation2 + $0x11d]]
        %v3167 = vstv %s3166
        %v3168 = vmul.f32 %v2228, %v3167
        %v3169 = vadd.f32 %v3165, %v3168
        %s3170 = sld [smem:[#allocation2 + $0x12d]]
        %v3171 = vstv %s3170
        %v3172 = vmul.f32 %v2239, %v3171
        %v3173 = vadd.f32 %v3169, %v3172
        %s3174 = sld [smem:[#allocation2 + $0x13d]]
        %v3175 = vstv %s3174
        %v3176 = vadd.f32 %v3173, %v3175
        %v3177 = vtanh.pop %v3176
        %s3178 = sld [smem:[#allocation2 + $0x3e]]
        %v3179 = vstv %s3178
        %v3180 = vmul.f32 %v2074, %v3179
        %s3181 = sld [smem:[#allocation2 + $0x4e]]
        %v3182 = vstv %s3181
        %v3183 = vmul.f32 %v2085, %v3182
        %v3184 = vadd.f32 %v3180, %v3183
        %s3185 = sld [smem:[#allocation2 + $0x5e]]
        %v3186 = vstv %s3185
        %v3187 = vmul.f32 %v2096, %v3186
        %v3188 = vadd.f32 %v3184, %v3187
        %s3189 = sld [smem:[#allocation2 + $0x6e]]
        %v3190 = vstv %s3189
        %v3191 = vmul.f32 %v2107, %v3190
        %v3192 = vadd.f32 %v3188, %v3191
        %s3193 = sld [smem:[#allocation2 + $0x7e]]
        %v3194 = vstv %s3193
        %v3195 = vmul.f32 %v2118, %v3194
        %v3196 = vadd.f32 %v3192, %v3195
        %s3197 = sld [smem:[#allocation2 + $0x8e]]
        %v3198 = vstv %s3197
        %v3199 = vmul.f32 %v2129, %v3198
        %v3200 = vadd.f32 %v3196, %v3199
        %s3201 = sld [smem:[#allocation2 + $0x9e]]
        %v3202 = vstv %s3201
        %v3203 = vmul.f32 %v2140, %v3202
        %v3204 = vadd.f32 %v3200, %v3203
        %s3205 = sld [smem:[#allocation2 + $0xae]]
        %v3206 = vstv %s3205
        %v3207 = vmul.f32 %v2151, %v3206
        %v3208 = vadd.f32 %v3204, %v3207
        %s3209 = sld [smem:[#allocation2 + $0xbe]]
        %v3210 = vstv %s3209
        %v3211 = vmul.f32 %v2162, %v3210
        %v3212 = vadd.f32 %v3208, %v3211
        %s3213 = sld [smem:[#allocation2 + $0xce]]
        %v3214 = vstv %s3213
        %v3215 = vmul.f32 %v2173, %v3214
        %v3216 = vadd.f32 %v3212, %v3215
        %s3217 = sld [smem:[#allocation2 + $0xde]]
        %v3218 = vstv %s3217
        %v3219 = vmul.f32 %v2184, %v3218
        %v3220 = vadd.f32 %v3216, %v3219
        %s3221 = sld [smem:[#allocation2 + $0xee]]
        %v3222 = vstv %s3221
        %v3223 = vmul.f32 %v2195, %v3222
        %v3224 = vadd.f32 %v3220, %v3223
        %s3225 = sld [smem:[#allocation2 + $0xfe]]
        %v3226 = vstv %s3225
        %v3227 = vmul.f32 %v2206, %v3226
        %v3228 = vadd.f32 %v3224, %v3227
        %s3229 = sld [smem:[#allocation2 + $0x10e]]
        %v3230 = vstv %s3229
        %v3231 = vmul.f32 %v2217, %v3230
        %v3232 = vadd.f32 %v3228, %v3231
        %s3233 = sld [smem:[#allocation2 + $0x11e]]
        %v3234 = vstv %s3233
        %v3235 = vmul.f32 %v2228, %v3234
        %v3236 = vadd.f32 %v3232, %v3235
        %s3237 = sld [smem:[#allocation2 + $0x12e]]
        %v3238 = vstv %s3237
        %v3239 = vmul.f32 %v2239, %v3238
        %v3240 = vadd.f32 %v3236, %v3239
        %s3241 = sld [smem:[#allocation2 + $0x13e]]
        %v3242 = vstv %s3241
        %v3243 = vadd.f32 %v3240, %v3242
        %v3244 = vtanh.pop %v3243
        %s3245 = sld [smem:[#allocation2 + $0x3f]]
        %v3246 = vstv %s3245
        %v3247 = vmul.f32 %v2074, %v3246
        %s3248 = sld [smem:[#allocation2 + $0x4f]]
        %v3249 = vstv %s3248
        %v3250 = vmul.f32 %v2085, %v3249
        %v3251 = vadd.f32 %v3247, %v3250
        %s3252 = sld [smem:[#allocation2 + $0x5f]]
        %v3253 = vstv %s3252
        %v3254 = vmul.f32 %v2096, %v3253
        %v3255 = vadd.f32 %v3251, %v3254
        %s3256 = sld [smem:[#allocation2 + $0x6f]]
        %v3257 = vstv %s3256
        %v3258 = vmul.f32 %v2107, %v3257
        %v3259 = vadd.f32 %v3255, %v3258
        %s3260 = sld [smem:[#allocation2 + $0x7f]]
        %v3261 = vstv %s3260
        %v3262 = vmul.f32 %v2118, %v3261
        %v3263 = vadd.f32 %v3259, %v3262
        %s3264 = sld [smem:[#allocation2 + $0x8f]]
        %v3265 = vstv %s3264
        %v3266 = vmul.f32 %v2129, %v3265
        %v3267 = vadd.f32 %v3263, %v3266
        %s3268 = sld [smem:[#allocation2 + $0x9f]]
        %v3269 = vstv %s3268
        %v3270 = vmul.f32 %v2140, %v3269
        %v3271 = vadd.f32 %v3267, %v3270
        %s3272 = sld [smem:[#allocation2 + $0xaf]]
        %v3273 = vstv %s3272
        %v3274 = vmul.f32 %v2151, %v3273
        %v3275 = vadd.f32 %v3271, %v3274
        %s3276 = sld [smem:[#allocation2 + $0xbf]]
        %v3277 = vstv %s3276
        %v3278 = vmul.f32 %v2162, %v3277
        %v3279 = vadd.f32 %v3275, %v3278
        %s3280 = sld [smem:[#allocation2 + $0xcf]]
        %v3281 = vstv %s3280
        %v3282 = vmul.f32 %v2173, %v3281
        %v3283 = vadd.f32 %v3279, %v3282
        %s3284 = sld [smem:[#allocation2 + $0xdf]]
        %v3285 = vstv %s3284
        %v3286 = vmul.f32 %v2184, %v3285
        %v3287 = vadd.f32 %v3283, %v3286
        %s3288 = sld [smem:[#allocation2 + $0xef]]
        %v3289 = vstv %s3288
        %v3290 = vmul.f32 %v2195, %v3289
        %v3291 = vadd.f32 %v3287, %v3290
        %s3292 = sld [smem:[#allocation2 + $0xff]]
        %v3293 = vstv %s3292
        %v3294 = vmul.f32 %v2206, %v3293
        %v3295 = vadd.f32 %v3291, %v3294
        %s3296 = sld [smem:[#allocation2 + $0x10f]]
        %v3297 = vstv %s3296
        %v3298 = vmul.f32 %v2217, %v3297
        %v3299 = vadd.f32 %v3295, %v3298
        %s3300 = sld [smem:[#allocation2 + $0x11f]]
        %v3301 = vstv %s3300
        %v3302 = vmul.f32 %v2228, %v3301
        %v3303 = vadd.f32 %v3299, %v3302
        %s3304 = sld [smem:[#allocation2 + $0x12f]]
        %v3305 = vstv %s3304
        %v3306 = vmul.f32 %v2239, %v3305
        %v3307 = vadd.f32 %v3303, %v3306
        %s3308 = sld [smem:[#allocation2 + $0x13f]]
        %v3309 = vstv %s3308
        %v3310 = vadd.f32 %v3307, %v3309
        %v3311 = vtanh.pop %v3310
        %s3312 = sld [smem:[#allocation2 + $0x140]]
        %v3313 = vstv %s3312
        %v3314 = vmul.f32 %v2306, %v3313
        %s3315 = sld [smem:[#allocation2 + $0x148]]
        %v3316 = vstv %s3315
        %v3317 = vmul.f32 %v2373, %v3316
        %v3318 = vadd.f32 %v3314, %v3317
        %s3319 = sld [smem:[#allocation2 + $0x150]]
        %v3320 = vstv %s3319
        %v3321 = vmul.f32 %v2440, %v3320
        %v3322 = vadd.f32 %v3318, %v3321
        %s3323 = sld [smem:[#allocation2 + $0x158]]
        %v3324 = vstv %s3323
        %v3325 = vmul.f32 %v2507, %v3324
        %v3326 = vadd.f32 %v3322, %v3325
        %s3327 = sld [smem:[#allocation2 + $0x160]]
        %v3328 = vstv %s3327
        %v3329 = vmul.f32 %v2574, %v3328
        %v3330 = vadd.f32 %v3326, %v3329
        %s3331 = sld [smem:[#allocation2 + $0x168]]
        %v3332 = vstv %s3331
        %v3333 = vmul.f32 %v2641, %v3332
        %v3334 = vadd.f32 %v3330, %v3333
        %s3335 = sld [smem:[#allocation2 + $0x170]]
        %v3336 = vstv %s3335
        %v3337 = vmul.f32 %v2708, %v3336
        %v3338 = vadd.f32 %v3334, %v3337
        %s3339 = sld [smem:[#allocation2 + $0x178]]
        %v3340 = vstv %s3339
        %v3341 = vmul.f32 %v2775, %v3340
        %v3342 = vadd.f32 %v3338, %v3341
        %s3343 = sld [smem:[#allocation2 + $0x180]]
        %v3344 = vstv %s3343
        %v3345 = vmul.f32 %v2842, %v3344
        %v3346 = vadd.f32 %v3342, %v3345
        %s3347 = sld [smem:[#allocation2 + $0x188]]
        %v3348 = vstv %s3347
        %v3349 = vmul.f32 %v2909, %v3348
        %v3350 = vadd.f32 %v3346, %v3349
        %s3351 = sld [smem:[#allocation2 + $0x190]]
        %v3352 = vstv %s3351
        %v3353 = vmul.f32 %v2976, %v3352
        %v3354 = vadd.f32 %v3350, %v3353
        %s3355 = sld [smem:[#allocation2 + $0x198]]
        %v3356 = vstv %s3355
        %v3357 = vmul.f32 %v3043, %v3356
        %v3358 = vadd.f32 %v3354, %v3357
        %s3359 = sld [smem:[#allocation2 + $0x1a0]]
        %v3360 = vstv %s3359
        %v3361 = vmul.f32 %v3110, %v3360
        %v3362 = vadd.f32 %v3358, %v3361
        %s3363 = sld [smem:[#allocation2 + $0x1a8]]
        %v3364 = vstv %s3363
        %v3365 = vmul.f32 %v3177, %v3364
        %v3366 = vadd.f32 %v3362, %v3365
        %s3367 = sld [smem:[#allocation2 + $0x1b0]]
        %v3368 = vstv %s3367
        %v3369 = vmul.f32 %v3244, %v3368
        %v3370 = vadd.f32 %v3366, %v3369
        %s3371 = sld [smem:[#allocation2 + $0x1b8]]
        %v3372 = vstv %s3371
        %v3373 = vmul.f32 %v3311, %v3372
        %v3374 = vadd.f32 %v3370, %v3373
        %s3375 = sld [smem:[#allocation2 + $0x1c0]]
        %v3376 = vstv %s3375
        %v3377 = vadd.f32 %v3374, %v3376
        %v3378 = vtanh.pop %v3377
        %s3379 = sld [smem:[#allocation2 + $0x141]]
        %v3380 = vstv %s3379
        %v3381 = vmul.f32 %v2306, %v3380
        %s3382 = sld [smem:[#allocation2 + $0x149]]
        %v3383 = vstv %s3382
        %v3384 = vmul.f32 %v2373, %v3383
        %v3385 = vadd.f32 %v3381, %v3384
        %s3386 = sld [smem:[#allocation2 + $0x151]]
        %v3387 = vstv %s3386
        %v3388 = vmul.f32 %v2440, %v3387
        %v3389 = vadd.f32 %v3385, %v3388
        %s3390 = sld [smem:[#allocation2 + $0x159]]
        %v3391 = vstv %s3390
        %v3392 = vmul.f32 %v2507, %v3391
        %v3393 = vadd.f32 %v3389, %v3392
        %s3394 = sld [smem:[#allocation2 + $0x161]]
        %v3395 = vstv %s3394
        %v3396 = vmul.f32 %v2574, %v3395
        %v3397 = vadd.f32 %v3393, %v3396
        %s3398 = sld [smem:[#allocation2 + $0x169]]
        %v3399 = vstv %s3398
        %v3400 = vmul.f32 %v2641, %v3399
        %v3401 = vadd.f32 %v3397, %v3400
        %s3402 = sld [smem:[#allocation2 + $0x171]]
        %v3403 = vstv %s3402
        %v3404 = vmul.f32 %v2708, %v3403
        %v3405 = vadd.f32 %v3401, %v3404
        %s3406 = sld [smem:[#allocation2 + $0x179]]
        %v3407 = vstv %s3406
        %v3408 = vmul.f32 %v2775, %v3407
        %v3409 = vadd.f32 %v3405, %v3408
        %s3410 = sld [smem:[#allocation2 + $0x181]]
        %v3411 = vstv %s3410
        %v3412 = vmul.f32 %v2842, %v3411
        %v3413 = vadd.f32 %v3409, %v3412
        %s3414 = sld [smem:[#allocation2 + $0x189]]
        %v3415 = vstv %s3414
        %v3416 = vmul.f32 %v2909, %v3415
        %v3417 = vadd.f32 %v3413, %v3416
        %s3418 = sld [smem:[#allocation2 + $0x191]]
        %v3419 = vstv %s3418
        %v3420 = vmul.f32 %v2976, %v3419
        %v3421 = vadd.f32 %v3417, %v3420
        %s3422 = sld [smem:[#allocation2 + $0x199]]
        %v3423 = vstv %s3422
        %v3424 = vmul.f32 %v3043, %v3423
        %v3425 = vadd.f32 %v3421, %v3424
        %s3426 = sld [smem:[#allocation2 + $0x1a1]]
        %v3427 = vstv %s3426
        %v3428 = vmul.f32 %v3110, %v3427
        %v3429 = vadd.f32 %v3425, %v3428
        %s3430 = sld [smem:[#allocation2 + $0x1a9]]
        %v3431 = vstv %s3430
        %v3432 = vmul.f32 %v3177, %v3431
        %v3433 = vadd.f32 %v3429, %v3432
        %s3434 = sld [smem:[#allocation2 + $0x1b1]]
        %v3435 = vstv %s3434
        %v3436 = vmul.f32 %v3244, %v3435
        %v3437 = vadd.f32 %v3433, %v3436
        %s3438 = sld [smem:[#allocation2 + $0x1b9]]
        %v3439 = vstv %s3438
        %v3440 = vmul.f32 %v3311, %v3439
        %v3441 = vadd.f32 %v3437, %v3440
        %s3442 = sld [smem:[#allocation2 + $0x1c1]]
        %v3443 = vstv %s3442
        %v3444 = vadd.f32 %v3441, %v3443
        %v3445 = vtanh.pop %v3444
        %s3446 = sld [smem:[#allocation2 + $0x142]]
        %v3447 = vstv %s3446
        %v3448 = vmul.f32 %v2306, %v3447
        %s3449 = sld [smem:[#allocation2 + $0x14a]]
        %v3450 = vstv %s3449
        %v3451 = vmul.f32 %v2373, %v3450
        %v3452 = vadd.f32 %v3448, %v3451
        %s3453 = sld [smem:[#allocation2 + $0x152]]
        %v3454 = vstv %s3453
        %v3455 = vmul.f32 %v2440, %v3454
        %v3456 = vadd.f32 %v3452, %v3455
        %s3457 = sld [smem:[#allocation2 + $0x15a]]
        %v3458 = vstv %s3457
        %v3459 = vmul.f32 %v2507, %v3458
        %v3460 = vadd.f32 %v3456, %v3459
        %s3461 = sld [smem:[#allocation2 + $0x162]]
        %v3462 = vstv %s3461
        %v3463 = vmul.f32 %v2574, %v3462
        %v3464 = vadd.f32 %v3460, %v3463
        %s3465 = sld [smem:[#allocation2 + $0x16a]]
        %v3466 = vstv %s3465
        %v3467 = vmul.f32 %v2641, %v3466
        %v3468 = vadd.f32 %v3464, %v3467
        %s3469 = sld [smem:[#allocation2 + $0x172]]
        %v3470 = vstv %s3469
        %v3471 = vmul.f32 %v2708, %v3470
        %v3472 = vadd.f32 %v3468, %v3471
        %s3473 = sld [smem:[#allocation2 + $0x17a]]
        %v3474 = vstv %s3473
        %v3475 = vmul.f32 %v2775, %v3474
        %v3476 = vadd.f32 %v3472, %v3475
        %s3477 = sld [smem:[#allocation2 + $0x182]]
        %v3478 = vstv %s3477
        %v3479 = vmul.f32 %v2842, %v3478
        %v3480 = vadd.f32 %v3476, %v3479
        %s3481 = sld [smem:[#allocation2 + $0x18a]]
        %v3482 = vstv %s3481
        %v3483 = vmul.f32 %v2909, %v3482
        %v3484 = vadd.f32 %v3480, %v3483
        %s3485 = sld [smem:[#allocation2 + $0x192]]
        %v3486 = vstv %s3485
        %v3487 = vmul.f32 %v2976, %v3486
        %v3488 = vadd.f32 %v3484, %v3487
        %s3489 = sld [smem:[#allocation2 + $0x19a]]
        %v3490 = vstv %s3489
        %v3491 = vmul.f32 %v3043, %v3490
        %v3492 = vadd.f32 %v3488, %v3491
        %s3493 = sld [smem:[#allocation2 + $0x1a2]]
        %v3494 = vstv %s3493
        %v3495 = vmul.f32 %v3110, %v3494
        %v3496 = vadd.f32 %v3492, %v3495
        %s3497 = sld [smem:[#allocation2 + $0x1aa]]
        %v3498 = vstv %s3497
        %v3499 = vmul.f32 %v3177, %v3498
        %v3500 = vadd.f32 %v3496, %v3499
        %s3501 = sld [smem:[#allocation2 + $0x1b2]]
        %v3502 = vstv %s3501
        %v3503 = vmul.f32 %v3244, %v3502
        %v3504 = vadd.f32 %v3500, %v3503
        %s3505 = sld [smem:[#allocation2 + $0x1ba]]
        %v3506 = vstv %s3505
        %v3507 = vmul.f32 %v3311, %v3506
        %v3508 = vadd.f32 %v3504, %v3507
        %s3509 = sld [smem:[#allocation2 + $0x1c2]]
        %v3510 = vstv %s3509
        %v3511 = vadd.f32 %v3508, %v3510
        %v3512 = vtanh.pop %v3511
        %s3513 = sld [smem:[#allocation2 + $0x143]]
        %v3514 = vstv %s3513
        %v3515 = vmul.f32 %v2306, %v3514
        %s3516 = sld [smem:[#allocation2 + $0x14b]]
        %v3517 = vstv %s3516
        %v3518 = vmul.f32 %v2373, %v3517
        %v3519 = vadd.f32 %v3515, %v3518
        %s3520 = sld [smem:[#allocation2 + $0x153]]
        %v3521 = vstv %s3520
        %v3522 = vmul.f32 %v2440, %v3521
        %v3523 = vadd.f32 %v3519, %v3522
        %s3524 = sld [smem:[#allocation2 + $0x15b]]
        %v3525 = vstv %s3524
        %v3526 = vmul.f32 %v2507, %v3525
        %v3527 = vadd.f32 %v3523, %v3526
        %s3528 = sld [smem:[#allocation2 + $0x163]]
        %v3529 = vstv %s3528
        %v3530 = vmul.f32 %v2574, %v3529
        %v3531 = vadd.f32 %v3527, %v3530
        %s3532 = sld [smem:[#allocation2 + $0x16b]]
        %v3533 = vstv %s3532
        %v3534 = vmul.f32 %v2641, %v3533
        %v3535 = vadd.f32 %v3531, %v3534
        %s3536 = sld [smem:[#allocation2 + $0x173]]
        %v3537 = vstv %s3536
        %v3538 = vmul.f32 %v2708, %v3537
        %v3539 = vadd.f32 %v3535, %v3538
        %s3540 = sld [smem:[#allocation2 + $0x17b]]
        %v3541 = vstv %s3540
        %v3542 = vmul.f32 %v2775, %v3541
        %v3543 = vadd.f32 %v3539, %v3542
        %s3544 = sld [smem:[#allocation2 + $0x183]]
        %v3545 = vstv %s3544
        %v3546 = vmul.f32 %v2842, %v3545
        %v3547 = vadd.f32 %v3543, %v3546
        %s3548 = sld [smem:[#allocation2 + $0x18b]]
        %v3549 = vstv %s3548
        %v3550 = vmul.f32 %v2909, %v3549
        %v3551 = vadd.f32 %v3547, %v3550
        %s3552 = sld [smem:[#allocation2 + $0x193]]
        %v3553 = vstv %s3552
        %v3554 = vmul.f32 %v2976, %v3553
        %v3555 = vadd.f32 %v3551, %v3554
        %s3556 = sld [smem:[#allocation2 + $0x19b]]
        %v3557 = vstv %s3556
        %v3558 = vmul.f32 %v3043, %v3557
        %v3559 = vadd.f32 %v3555, %v3558
        %s3560 = sld [smem:[#allocation2 + $0x1a3]]
        %v3561 = vstv %s3560
        %v3562 = vmul.f32 %v3110, %v3561
        %v3563 = vadd.f32 %v3559, %v3562
        %s3564 = sld [smem:[#allocation2 + $0x1ab]]
        %v3565 = vstv %s3564
        %v3566 = vmul.f32 %v3177, %v3565
        %v3567 = vadd.f32 %v3563, %v3566
        %s3568 = sld [smem:[#allocation2 + $0x1b3]]
        %v3569 = vstv %s3568
        %v3570 = vmul.f32 %v3244, %v3569
        %v3571 = vadd.f32 %v3567, %v3570
        %s3572 = sld [smem:[#allocation2 + $0x1bb]]
        %v3573 = vstv %s3572
        %v3574 = vmul.f32 %v3311, %v3573
        %v3575 = vadd.f32 %v3571, %v3574
        %s3576 = sld [smem:[#allocation2 + $0x1c3]]
        %v3577 = vstv %s3576
        %v3578 = vadd.f32 %v3575, %v3577
        %v3579 = vtanh.pop %v3578
        %s3580 = sld [smem:[#allocation2 + $0x144]]
        %v3581 = vstv %s3580
        %v3582 = vmul.f32 %v2306, %v3581
        %s3583 = sld [smem:[#allocation2 + $0x14c]]
        %v3584 = vstv %s3583
        %v3585 = vmul.f32 %v2373, %v3584
        %v3586 = vadd.f32 %v3582, %v3585
        %s3587 = sld [smem:[#allocation2 + $0x154]]
        %v3588 = vstv %s3587
        %v3589 = vmul.f32 %v2440, %v3588
        %v3590 = vadd.f32 %v3586, %v3589
        %s3591 = sld [smem:[#allocation2 + $0x15c]]
        %v3592 = vstv %s3591
        %v3593 = vmul.f32 %v2507, %v3592
        %v3594 = vadd.f32 %v3590, %v3593
        %s3595 = sld [smem:[#allocation2 + $0x164]]
        %v3596 = vstv %s3595
        %v3597 = vmul.f32 %v2574, %v3596
        %v3598 = vadd.f32 %v3594, %v3597
        %s3599 = sld [smem:[#allocation2 + $0x16c]]
        %v3600 = vstv %s3599
        %v3601 = vmul.f32 %v2641, %v3600
        %v3602 = vadd.f32 %v3598, %v3601
        %s3603 = sld [smem:[#allocation2 + $0x174]]
        %v3604 = vstv %s3603
        %v3605 = vmul.f32 %v2708, %v3604
        %v3606 = vadd.f32 %v3602, %v3605
        %s3607 = sld [smem:[#allocation2 + $0x17c]]
        %v3608 = vstv %s3607
        %v3609 = vmul.f32 %v2775, %v3608
        %v3610 = vadd.f32 %v3606, %v3609
        %s3611 = sld [smem:[#allocation2 + $0x184]]
        %v3612 = vstv %s3611
        %v3613 = vmul.f32 %v2842, %v3612
        %v3614 = vadd.f32 %v3610, %v3613
        %s3615 = sld [smem:[#allocation2 + $0x18c]]
        %v3616 = vstv %s3615
        %v3617 = vmul.f32 %v2909, %v3616
        %v3618 = vadd.f32 %v3614, %v3617
        %s3619 = sld [smem:[#allocation2 + $0x194]]
        %v3620 = vstv %s3619
        %v3621 = vmul.f32 %v2976, %v3620
        %v3622 = vadd.f32 %v3618, %v3621
        %s3623 = sld [smem:[#allocation2 + $0x19c]]
        %v3624 = vstv %s3623
        %v3625 = vmul.f32 %v3043, %v3624
        %v3626 = vadd.f32 %v3622, %v3625
        %s3627 = sld [smem:[#allocation2 + $0x1a4]]
        %v3628 = vstv %s3627
        %v3629 = vmul.f32 %v3110, %v3628
        %v3630 = vadd.f32 %v3626, %v3629
        %s3631 = sld [smem:[#allocation2 + $0x1ac]]
        %v3632 = vstv %s3631
        %v3633 = vmul.f32 %v3177, %v3632
        %v3634 = vadd.f32 %v3630, %v3633
        %s3635 = sld [smem:[#allocation2 + $0x1b4]]
        %v3636 = vstv %s3635
        %v3637 = vmul.f32 %v3244, %v3636
        %v3638 = vadd.f32 %v3634, %v3637
        %s3639 = sld [smem:[#allocation2 + $0x1bc]]
        %v3640 = vstv %s3639
        %v3641 = vmul.f32 %v3311, %v3640
        %v3642 = vadd.f32 %v3638, %v3641
        %s3643 = sld [smem:[#allocation2 + $0x1c4]]
        %v3644 = vstv %s3643
        %v3645 = vadd.f32 %v3642, %v3644
        %v3646 = vtanh.pop %v3645
        %s3647 = sld [smem:[#allocation2 + $0x145]]
        %v3648 = vstv %s3647
        %v3649 = vmul.f32 %v2306, %v3648
        %s3650 = sld [smem:[#allocation2 + $0x14d]]
        %v3651 = vstv %s3650
        %v3652 = vmul.f32 %v2373, %v3651
        %v3653 = vadd.f32 %v3649, %v3652
        %s3654 = sld [smem:[#allocation2 + $0x155]]
        %v3655 = vstv %s3654
        %v3656 = vmul.f32 %v2440, %v3655
        %v3657 = vadd.f32 %v3653, %v3656
        %s3658 = sld [smem:[#allocation2 + $0x15d]]
        %v3659 = vstv %s3658
        %v3660 = vmul.f32 %v2507, %v3659
        %v3661 = vadd.f32 %v3657, %v3660
        %s3662 = sld [smem:[#allocation2 + $0x165]]
        %v3663 = vstv %s3662
        %v3664 = vmul.f32 %v2574, %v3663
        %v3665 = vadd.f32 %v3661, %v3664
        %s3666 = sld [smem:[#allocation2 + $0x16d]]
        %v3667 = vstv %s3666
        %v3668 = vmul.f32 %v2641, %v3667
        %v3669 = vadd.f32 %v3665, %v3668
        %s3670 = sld [smem:[#allocation2 + $0x175]]
        %v3671 = vstv %s3670
        %v3672 = vmul.f32 %v2708, %v3671
        %v3673 = vadd.f32 %v3669, %v3672
        %s3674 = sld [smem:[#allocation2 + $0x17d]]
        %v3675 = vstv %s3674
        %v3676 = vmul.f32 %v2775, %v3675
        %v3677 = vadd.f32 %v3673, %v3676
        %s3678 = sld [smem:[#allocation2 + $0x185]]
        %v3679 = vstv %s3678
        %v3680 = vmul.f32 %v2842, %v3679
        %v3681 = vadd.f32 %v3677, %v3680
        %s3682 = sld [smem:[#allocation2 + $0x18d]]
        %v3683 = vstv %s3682
        %v3684 = vmul.f32 %v2909, %v3683
        %v3685 = vadd.f32 %v3681, %v3684
        %s3686 = sld [smem:[#allocation2 + $0x195]]
        %v3687 = vstv %s3686
        %v3688 = vmul.f32 %v2976, %v3687
        %v3689 = vadd.f32 %v3685, %v3688
        %s3690 = sld [smem:[#allocation2 + $0x19d]]
        %v3691 = vstv %s3690
        %v3692 = vmul.f32 %v3043, %v3691
        %v3693 = vadd.f32 %v3689, %v3692
        %s3694 = sld [smem:[#allocation2 + $0x1a5]]
        %v3695 = vstv %s3694
        %v3696 = vmul.f32 %v3110, %v3695
        %v3697 = vadd.f32 %v3693, %v3696
        %s3698 = sld [smem:[#allocation2 + $0x1ad]]
        %v3699 = vstv %s3698
        %v3700 = vmul.f32 %v3177, %v3699
        %v3701 = vadd.f32 %v3697, %v3700
        %s3702 = sld [smem:[#allocation2 + $0x1b5]]
        %v3703 = vstv %s3702
        %v3704 = vmul.f32 %v3244, %v3703
        %v3705 = vadd.f32 %v3701, %v3704
        %s3706 = sld [smem:[#allocation2 + $0x1bd]]
        %v3707 = vstv %s3706
        %v3708 = vmul.f32 %v3311, %v3707
        %v3709 = vadd.f32 %v3705, %v3708
        %s3710 = sld [smem:[#allocation2 + $0x1c5]]
        %v3711 = vstv %s3710
        %v3712 = vadd.f32 %v3709, %v3711
        %v3713 = vtanh.pop %v3712
        %s3714 = sld [smem:[#allocation2 + $0x146]]
        %v3715 = vstv %s3714
        %v3716 = vmul.f32 %v2306, %v3715
        %s3717 = sld [smem:[#allocation2 + $0x14e]]
        %v3718 = vstv %s3717
        %v3719 = vmul.f32 %v2373, %v3718
        %v3720 = vadd.f32 %v3716, %v3719
        %s3721 = sld [smem:[#allocation2 + $0x156]]
        %v3722 = vstv %s3721
        %v3723 = vmul.f32 %v2440, %v3722
        %v3724 = vadd.f32 %v3720, %v3723
        %s3725 = sld [smem:[#allocation2 + $0x15e]]
        %v3726 = vstv %s3725
        %v3727 = vmul.f32 %v2507, %v3726
        %v3728 = vadd.f32 %v3724, %v3727
        %s3729 = sld [smem:[#allocation2 + $0x166]]
        %v3730 = vstv %s3729
        %v3731 = vmul.f32 %v2574, %v3730
        %v3732 = vadd.f32 %v3728, %v3731
        %s3733 = sld [smem:[#allocation2 + $0x16e]]
        %v3734 = vstv %s3733
        %v3735 = vmul.f32 %v2641, %v3734
        %v3736 = vadd.f32 %v3732, %v3735
        %s3737 = sld [smem:[#allocation2 + $0x176]]
        %v3738 = vstv %s3737
        %v3739 = vmul.f32 %v2708, %v3738
        %v3740 = vadd.f32 %v3736, %v3739
        %s3741 = sld [smem:[#allocation2 + $0x17e]]
        %v3742 = vstv %s3741
        %v3743 = vmul.f32 %v2775, %v3742
        %v3744 = vadd.f32 %v3740, %v3743
        %s3745 = sld [smem:[#allocation2 + $0x186]]
        %v3746 = vstv %s3745
        %v3747 = vmul.f32 %v2842, %v3746
        %v3748 = vadd.f32 %v3744, %v3747
        %s3749 = sld [smem:[#allocation2 + $0x18e]]
        %v3750 = vstv %s3749
        %v3751 = vmul.f32 %v2909, %v3750
        %v3752 = vadd.f32 %v3748, %v3751
        %s3753 = sld [smem:[#allocation2 + $0x196]]
        %v3754 = vstv %s3753
        %v3755 = vmul.f32 %v2976, %v3754
        %v3756 = vadd.f32 %v3752, %v3755
        %s3757 = sld [smem:[#allocation2 + $0x19e]]
        %v3758 = vstv %s3757
        %v3759 = vmul.f32 %v3043, %v3758
        %v3760 = vadd.f32 %v3756, %v3759
        %s3761 = sld [smem:[#allocation2 + $0x1a6]]
        %v3762 = vstv %s3761
        %v3763 = vmul.f32 %v3110, %v3762
        %v3764 = vadd.f32 %v3760, %v3763
        %s3765 = sld [smem:[#allocation2 + $0x1ae]]
        %v3766 = vstv %s3765
        %v3767 = vmul.f32 %v3177, %v3766
        %v3768 = vadd.f32 %v3764, %v3767
        %s3769 = sld [smem:[#allocation2 + $0x1b6]]
        %v3770 = vstv %s3769
        %v3771 = vmul.f32 %v3244, %v3770
        %v3772 = vadd.f32 %v3768, %v3771
        %s3773 = sld [smem:[#allocation2 + $0x1be]]
        %v3774 = vstv %s3773
        %v3775 = vmul.f32 %v3311, %v3774
        %v3776 = vadd.f32 %v3772, %v3775
        %s3777 = sld [smem:[#allocation2 + $0x1c6]]
        %v3778 = vstv %s3777
        %v3779 = vadd.f32 %v3776, %v3778
        %v3780 = vtanh.pop %v3779
        %s3781 = sld [smem:[#allocation2 + $0x147]]
        %v3782 = vstv %s3781
        %v3783 = vmul.f32 %v2306, %v3782
        %s3784 = sld [smem:[#allocation2 + $0x14f]]
        %v3785 = vstv %s3784
        %v3786 = vmul.f32 %v2373, %v3785
        %v3787 = vadd.f32 %v3783, %v3786
        %s3788 = sld [smem:[#allocation2 + $0x157]]
        %v3789 = vstv %s3788
        %v3790 = vmul.f32 %v2440, %v3789
        %v3791 = vadd.f32 %v3787, %v3790
        %s3792 = sld [smem:[#allocation2 + $0x15f]]
        %v3793 = vstv %s3792
        %v3794 = vmul.f32 %v2507, %v3793
        %v3795 = vadd.f32 %v3791, %v3794
        %s3796 = sld [smem:[#allocation2 + $0x167]]
        %v3797 = vstv %s3796
        %v3798 = vmul.f32 %v2574, %v3797
        %v3799 = vadd.f32 %v3795, %v3798
        %s3800 = sld [smem:[#allocation2 + $0x16f]]
        %v3801 = vstv %s3800
        %v3802 = vmul.f32 %v2641, %v3801
        %v3803 = vadd.f32 %v3799, %v3802
        %s3804 = sld [smem:[#allocation2 + $0x177]]
        %v3805 = vstv %s3804
        %v3806 = vmul.f32 %v2708, %v3805
        %v3807 = vadd.f32 %v3803, %v3806
        %s3808 = sld [smem:[#allocation2 + $0x17f]]
        %v3809 = vstv %s3808
        %v3810 = vmul.f32 %v2775, %v3809
        %v3811 = vadd.f32 %v3807, %v3810
        %s3812 = sld [smem:[#allocation2 + $0x187]]
        %v3813 = vstv %s3812
        %v3814 = vmul.f32 %v2842, %v3813
        %v3815 = vadd.f32 %v3811, %v3814
        %s3816 = sld [smem:[#allocation2 + $0x18f]]
        %v3817 = vstv %s3816
        %v3818 = vmul.f32 %v2909, %v3817
        %v3819 = vadd.f32 %v3815, %v3818
        %s3820 = sld [smem:[#allocation2 + $0x197]]
        %v3821 = vstv %s3820
        %v3822 = vmul.f32 %v2976, %v3821
        %v3823 = vadd.f32 %v3819, %v3822
        %s3824 = sld [smem:[#allocation2 + $0x19f]]
        %v3825 = vstv %s3824
        %v3826 = vmul.f32 %v3043, %v3825
        %v3827 = vadd.f32 %v3823, %v3826
        %s3828 = sld [smem:[#allocation2 + $0x1a7]]
        %v3829 = vstv %s3828
        %v3830 = vmul.f32 %v3110, %v3829
        %v3831 = vadd.f32 %v3827, %v3830
        %s3832 = sld [smem:[#allocation2 + $0x1af]]
        %v3833 = vstv %s3832
        %v3834 = vmul.f32 %v3177, %v3833
        %v3835 = vadd.f32 %v3831, %v3834
        %s3836 = sld [smem:[#allocation2 + $0x1b7]]
        %v3837 = vstv %s3836
        %v3838 = vmul.f32 %v3244, %v3837
        %v3839 = vadd.f32 %v3835, %v3838
        %s3840 = sld [smem:[#allocation2 + $0x1bf]]
        %v3841 = vstv %s3840
        %v3842 = vmul.f32 %v3311, %v3841
        %v3843 = vadd.f32 %v3839, %v3842
        %s3844 = sld [smem:[#allocation2 + $0x1c7]]
        %v3845 = vstv %s3844
        %v3846 = vadd.f32 %v3843, %v3845
        %v3847 = vtanh.pop %v3846
        %s3848 = sld [smem:[#allocation2 + $0x1c8]]
        %v3849 = vstv %s3848
        %v3850 = vmul.f32 %v3378, %v3849
        %s3851 = sld [smem:[#allocation2 + $0x1d1]]
        %v3852 = vstv %s3851
        %v3853 = vmul.f32 %v3378, %v3852
        %s3854 = sld [smem:[#allocation2 + $0x1c9]]
        %v3855 = vstv %s3854
        %v3856 = vmul.f32 %v3445, %v3855
        %v3857 = vadd.f32 %v3850, %v3856
        %s3858 = sld [smem:[#allocation2 + $0x1d2]]
        %v3859 = vstv %s3858
        %v3860 = vmul.f32 %v3445, %v3859
        %v3861 = vadd.f32 %v3853, %v3860
        %s3862 = sld [smem:[#allocation2 + $0x1ca]]
        %v3863 = vstv %s3862
        %v3864 = vmul.f32 %v3512, %v3863
        %v3865 = vadd.f32 %v3857, %v3864
        %s3866 = sld [smem:[#allocation2 + $0x1d3]]
        %v3867 = vstv %s3866
        %v3868 = vmul.f32 %v3512, %v3867
        %v3869 = vadd.f32 %v3861, %v3868
        %s3870 = sld [smem:[#allocation2 + $0x1cb]]
        %v3871 = vstv %s3870
        %v3872 = vmul.f32 %v3579, %v3871
        %v3873 = vadd.f32 %v3865, %v3872
        %s3874 = sld [smem:[#allocation2 + $0x1d4]]
        %v3875 = vstv %s3874
        %v3876 = vmul.f32 %v3579, %v3875
        %v3877 = vadd.f32 %v3869, %v3876
        %s3878 = sld [smem:[#allocation2 + $0x1cc]]
        %v3879 = vstv %s3878
        %v3880 = vmul.f32 %v3646, %v3879
        %v3881 = vadd.f32 %v3873, %v3880
        %s3882 = sld [smem:[#allocation2 + $0x1d5]]
        %v3883 = vstv %s3882
        %v3884 = vmul.f32 %v3646, %v3883
        %v3885 = vadd.f32 %v3877, %v3884
        %s3886 = sld [smem:[#allocation2 + $0x1cd]]
        %v3887 = vstv %s3886
        %v3888 = vmul.f32 %v3713, %v3887
        %v3889 = vadd.f32 %v3881, %v3888
        %s3890 = sld [smem:[#allocation2 + $0x1d6]]
        %v3891 = vstv %s3890
        %v3892 = vmul.f32 %v3713, %v3891
        %v3893 = vadd.f32 %v3885, %v3892
        %s3894 = sld [smem:[#allocation2 + $0x1ce]]
        %v3895 = vstv %s3894
        %v3896 = vmul.f32 %v3780, %v3895
        %v3897 = vadd.f32 %v3889, %v3896
        %s3898 = sld [smem:[#allocation2 + $0x1d7]]
        %v3899 = vstv %s3898
        %v3900 = vmul.f32 %v3780, %v3899
        %v3901 = vadd.f32 %v3893, %v3900
        %s3902 = sld [smem:[#allocation2 + $0x1cf]]
        %v3903 = vstv %s3902
        %v3904 = vmul.f32 %v3847, %v3903
        %v3905 = vadd.f32 %v3897, %v3904
        %s3906 = sld [smem:[#allocation2 + $0x1d8]]
        %v3907 = vstv %s3906
        %v3908 = vmul.f32 %v3847, %v3907
        %v3909 = vadd.f32 %v3901, %v3908
        %s3910 = sld [smem:[#allocation2 + $0x1d0]]
        %v3911 = vstv %s3910
        %v3912 = vadd.f32 %v3905, %v3911
        %s3913 = sld [smem:[#allocation2 + $0x1d9]]
        %v3914 = vstv %s3913
        %v3915 = vadd.f32 %v3909, %v3914
        %v3916 = vmul.f32 %v3912, %v3915
        %s3917 = scalar_lea.vmem %s198, 8 [#allocation7]
        %3918 = vst [vmem:[%s3917] sm:$0xff] %v3916
        %s3919 = sand.u32 %s75, 1
        %s3920 = scalar_lea.sflag [#allocation4], %s3919
        %s3921 = sand.u32 %s75, 1
        %s3922 = smul.addr %s3921, 16
        %s3923 = scalar_lea.vmem [#allocation7], %s3922
        // Predicated region
        $region37: #{tpu_custom_call.1} parent=27 // pred_check
          %p3924 = pneg %p85
        $region38: #{tpu_custom_call.1} parent=27 // pred_check_branch
          %3926 = sbr.rel (%p3924) target = $region40
        $region39: #{tpu_custom_call.1} parent=27 // pred_region
          %s3927 = smul.u32 2, %s20
          %s3929 = ssub.s32 256, 256
          %3930 = vsyncadd %s3920, %s3929
          %s3931 = smul.addr %s3927, 128
          %s3932 = scalar_lea.hbm %s2, %s3931
          %s3933 = sshll.u32 %s3923, 4
          %s3934 = int_to_ptr.vmem [resolvable:$true] %s3933
          %3939 = dma.vmem_to_hbm [thread:$0]  %s3934, 256, %s3932, %s3920, 128, 128, 8
        $region40: #{tpu_custom_call.1} parent=27 // pred_fallthru
          _
      $region28: #{tpu_custom_call.1} parent=5 // pred_fallthru
        _
      %p3940 = scmp.le.s32.totalorder 2, %s15
      // Predicated region
      $region41: #{tpu_custom_call.1} parent=5 // pred_check
        %p3941 = pneg %p3940
      $region42: #{tpu_custom_call.1} parent=5 // pred_check_branch
        %3943 = sbr.rel (%p3941) target = $region44
      $region43: #{tpu_custom_call.1} parent=5 // pred_region
        %s3944 = ssub.s32 %s15, 2
        // Predicated region
        $region45: #{tpu_custom_call.1} parent=43 // pred_check
          %p3945 = pneg %p91
        $region46: #{tpu_custom_call.1} parent=43 // pred_check_branch
          %3947 = sbr.rel (%p3945) target = $region48
        $region47: #{tpu_custom_call.1} parent=43 // pred_region
          %s3948 = sand.u32 %s76, 1
          %s3949 = scalar_lea.sflag [#allocation4], %s3948
          %s3950 = sand.u32 %s76, 1
          %s3951 = smul.addr %s3950, 16
          %s3952 = scalar_lea.vmem [#allocation7], %s3951
          %3953 = dma.done %s3949, 256
        $region48: #{tpu_custom_call.1} parent=43 // pred_fallthru
          _
      $region44: #{tpu_custom_call.1} parent=5 // pred_fallthru
        _
    $region6: #{tpu_custom_call.1} parent=1 // loop_footer
      %s19 = sadd.s32 1, %s15
    $region7: #{tpu_custom_call.1} parent=1 // loop_footer_branch
      %14 = sbr.rel target = $region3
    $region8: #{tpu_custom_call.1} parent=1 // loop_exit
      _
    %3954 = vsyncpa [#allocation3], 1
    %s3955 = scalar_lea.sflag [#allocation3], 1
    %3956 = vsyncpa %s3955, 1
    %3957 = vsyncpa [#allocation4], 1
    %s3958 = scalar_lea.sflag [#allocation4], 1
    %3959 = vsyncpa %s3958, 1
    %3960 = vsyncpa [#allocation5], 1
    %s3961 = scalar_lea.sflag [#allocation5], 1
    %3962 = vsyncpa %s3961, 1

</llo_original>
